<compile_context>
chip_gen: v6e
topology: v6e:2x2x1
jax: 0.10.0
libtpu: 0.0.40
codegen_flags: <defaults>
</compile_context>

<pallas_src>
import functools

import jax
import jax.numpy as jnp
from jax.experimental import pallas as pl
from jax.experimental.pallas import tpu as pltpu


# ----------------------------------------------------------------------------
# Fused per-block Pallas kernel:
#   [conv3x3 + ReLU] * n_convs  (+ optional 2x2 average pool)
# for one batch image, with all intermediates kept in VMEM.
# ----------------------------------------------------------------------------
def _encoder_block_kernel(x_ref, *rest, H, W, Cin, Cout, Cmax, n_convs,
                          do_pool):
    """Fused encoder block for one image.

    x_ref : (1, H, W, Cin)            bf16 NHWC input tile
    rest  : n_convs * [w_ref (9*Cmax, Cout) bf16, b_ref (1, Cout) f32],
            then o_ref (1, Ho, Wo, Cout) bf16 NHWC output tile,
            then pbuf  (H+2, W+2, Cmax)  bf16 VMEM scratch (padded activation).
    """
    o_ref = rest[2 * n_convs]
    pbuf = rest[2 * n_convs + 1]

    # Zero once per image: gives the 1-pixel zero halo used by every conv in
    # the block (the interior is overwritten below, the border never is).
    pbuf[...] = jnp.zeros(pbuf.shape, dtype=pbuf.dtype)
    pbuf[1:H + 1, 1:W + 1, :Cin] = x_ref[0].astype(pbuf.dtype)

    act = None
    for j in range(n_convs):
        w_ref = rest[2 * j]        # (9*Cmax, Cout) folded HWIO weights, bf16
        b_ref = rest[2 * j + 1]    # (1, Cout) f32

        xp = pbuf[...]             # (H+2, W+2, Cmax) bf16, halo already zero
        # im2col: one (H*W, 9*Cmax) x (9*Cmax, Cout) MXU matmul per conv.
        cols = jnp.concatenate(
            [xp[kh:kh + H, kw:kw + W, :].reshape(H * W, Cmax)
             for kh in range(3) for kw in range(3)],
            axis=-1)                                        # (H*W, 9*Cmax)
        acc = jnp.dot(cols, w_ref[...],
                      preferred_element_type=jnp.float32)   # (H*W, Cout) f32
        act = jnp.maximum(acc + b_ref[...], 0.0)            # bias + ReLU, f32

        if j + 1 < n_convs:
            # Write back into the (still zero-haloed) padded buffer for the
            # next conv of this block.  Channels [Cout:Cmax] may hold stale
            # data, but the folded weights are zero there.
            pbuf[1:H + 1, 1:W + 1, :Cout] = (
                act.reshape(H, W, Cout).astype(pbuf.dtype))

    if do_pool:
        # AvgPool2d(kernel=2, stride=2) fused into the block epilogue.
        a4 = act.reshape(H // 2, 2, W // 2, 2, Cout)
        pooled = (a4[:, 0, :, 0, :] + a4[:, 0, :, 1, :]
                  + a4[:, 1, :, 0, :] + a4[:, 1, :, 1, :]) * 0.25
        o_ref[0] = pooled.astype(o_ref.dtype)
    else:
        o_ref[0] = act.reshape(H, W, Cout).astype(o_ref.dtype)


# ----------------------------------------------------------------------------
# pallas_call wrapper for one fused encoder block over the batch.
# ----------------------------------------------------------------------------
def encoder_block(x_nhwc, wfolds, biases, *, do_pool):
    N, H, W, Cin = x_nhwc.shape
    n_convs = len(wfolds)
    Cout = wfolds[0].shape[-1]
    Cmax = wfolds[0].shape[0] // 9

    if do_pool:
        # TODO(synk): AvgPool2d ceil_mode=True partial edge windows (odd H/W)
        # are not implemented; for even spatial sizes this pool is exact.
        assert H % 2 == 0 and W % 2 == 0
        Ho, Wo = H // 2, W // 2
    else:
        Ho, Wo = H, W

    in_specs = [pl.BlockSpec((1, H, W, Cin), lambda n: (n, 0, 0, 0))]
    operands = [x_nhwc]
    for wf, b in zip(wfolds, biases):
        in_specs.append(pl.BlockSpec(wf.shape, lambda n: (0, 0)))
        in_specs.append(pl.BlockSpec(b.shape, lambda n: (0, 0)))
        operands += [wf, b]

    kernel = functools.partial(
        _encoder_block_kernel, H=H, W=W, Cin=Cin, Cout=Cout, Cmax=Cmax,
        n_convs=n_convs, do_pool=do_pool)

    return pl.pallas_call(
        kernel,
        out_shape=jax.ShapeDtypeStruct((N, Ho, Wo, Cout), jnp.bfloat16),
        grid=(N,),
        in_specs=in_specs,
        out_specs=pl.BlockSpec((1, Ho, Wo, Cout), lambda n: (n, 0, 0, 0)),
        scratch_shapes=[pltpu.VMEM((H + 2, W + 2, Cmax), jnp.bfloat16)],
        compiler_params=pltpu.CompilerParams(
            dimension_semantics=("parallel",),
            vmem_limit_bytes=32 * 1024 * 1024),
    )(*operands)


# ----------------------------------------------------------------------------
# Parameter construction (deterministic, mirrors the module __init__)
# ----------------------------------------------------------------------------
def make_encoder_params(key, input_channels, num_filters, no_convs_per_block,
                        posterior=False):
    """Deterministic init mirroring the PyTorch module (HWIO conv weights)."""
    # TODO(synk): loading real PyTorch OIHW checkpoints requires a
    # transpose(2, 3, 1, 0) to HWIO before fold_encoder_params.
    in_ch = input_channels + (1 if posterior else 0)
    params = []
    for i, out_ch in enumerate(num_filters):
        block = []
        cin = in_ch if i == 0 else num_filters[i - 1]
        for j in range(no_convs_per_block):
            c_in = cin if j == 0 else out_ch
            key, kw_key, kb_key = jax.random.split(key, 3)
            fan_in = c_in * 3 * 3
            std = (2.0 / fan_in) ** 0.5   # kaiming_normal_, fan_in, relu
            w = jax.random.normal(kw_key, (3, 3, c_in, out_ch),
                                  jnp.float32) * std
            b = jax.random.truncated_normal(
                kb_key, -2.0, 2.0, (out_ch,), jnp.float32) * 0.001
            block.append((w, b))
        params.append(block)
    return params


def fold_encoder_params(params):
    """Fold HWIO weights into the fused-kernel format.

    Each conv weight (3, 3, cin, Cout) is zero-padded on the input-channel
    axis up to the block-wide Cmax and reshaped to (9*Cmax, Cout) bf16 so that
    every conv in a block is a single im2col matmul against the shared
    (H+2, W+2, Cmax) VMEM activation buffer.  Biases become (1, Cout) f32.
    """
    folded = []
    for block in params:
        cout = block[0][0].shape[3]
        cmax = max(max(w.shape[2] for w, _ in block), cout)
        fblock = []
        for w, b in block:
            cin = w.shape[2]
            wpad = jnp.pad(w, ((0, 0), (0, 0), (0, cmax - cin), (0, 0)))
            wfold = wpad.reshape(9 * cmax, cout).astype(jnp.bfloat16)
            fblock.append((wfold, b.reshape(1, cout).astype(jnp.float32)))
        folded.append(fblock)
    return folded


# ----------------------------------------------------------------------------
# Forward pass (glue in plain JAX, hot path in fused Pallas blocks)
# ----------------------------------------------------------------------------
@jax.jit
def encoder_forward(x_nchw, folded_params):
    # layout: NCHW -> NHWC (channels on lanes) for the TPU kernels; the whole
    # matmul path runs in bf16 with f32 accumulation.
    x = jnp.transpose(x_nchw, (0, 2, 3, 1)).astype(jnp.bfloat16)
    n_blocks = len(folded_params)
    for i, block in enumerate(folded_params):
        wfolds = [w for w, _ in block]
        biases = [b for _, b in block]
        # The AvgPool that PyTorch applies at the START of block i+1 is fused
        # into the EPILOGUE of block i (identical computation, 4x less HBM
        # output traffic per block boundary).
        x = encoder_block(x, wfolds, biases, do_pool=(i + 1 < n_blocks))
    return jnp.transpose(x, (0, 3, 1, 2)).astype(jnp.float32)


# ----------------------------------------------------------------------------
if __name__ == "__main__":
    key = jax.random.PRNGKey(0)
    k_in, k_params = jax.random.split(key)

    # Small shapes consistent with the module.
    batch, input_channels, H, W = 2, 4, 16, 16
    num_filters = [8, 16]
    no_convs_per_block = 2

    x = jax.random.normal(k_in, (batch, input_channels, H, W), jnp.float32)
    params = make_encoder_params(k_params, input_channels, num_filters,
                                 no_convs_per_block)
    folded = fold_encoder_params(params)

    out = encoder_forward(x, folded)
    out = jax.block_until_ready(out)

    # Expected output: (2, 16, 8, 8) NCHW (one 2x2 pool between the 2 blocks).
    assert out.shape == (batch, num_filters[-1], H // 2, W // 2), out.shape
    assert out.dtype == jnp.float32
    print("KERNEL_OK")
</pallas_src>

<mosaic_0001>
module attributes {stable_mosaic.version = 11 : i64} {
  func.func @_encoder_block_kernel(%arg0: i32, %arg1: memref<1x16x16x4xbf16, #tpu.memory_space<vmem>>, %arg2: memref<72x8xbf16, #tpu.memory_space<vmem>>, %arg3: memref<1x8xf32, #tpu.memory_space<vmem>>, %arg4: memref<72x8xbf16, #tpu.memory_space<vmem>>, %arg5: memref<1x8xf32, #tpu.memory_space<vmem>>, %arg6: memref<1x8x8x8xbf16, #tpu.memory_space<vmem>>, %arg7: memref<18x18x8xbf16, #tpu.memory_space<vmem>>) attributes {dimension_semantics = [#tpu.dimension_semantics<parallel>], iteration_bounds = array<i64: 2>, scalar_prefetch = 0 : i64, scratch_operands = 1 : i64, tpu.core_type = #tpu.core_type<tc>, window_params = [{transform_indices = @transform_0, window_bounds = array<i64: 1, 16, 16, 4>}, {pipeline_mode = #tpu.pipeline_mode<synchronous>, transform_indices = @transform_1, window_bounds = array<i64: 72, 8>}, {pipeline_mode = #tpu.pipeline_mode<synchronous>, transform_indices = @transform_2, window_bounds = array<i64: 1, 8>}, {pipeline_mode = #tpu.pipeline_mode<synchronous>, transform_indices = @transform_3, window_bounds = array<i64: 72, 8>}, {pipeline_mode = #tpu.pipeline_mode<synchronous>, transform_indices = @transform_4, window_bounds = array<i64: 1, 8>}, {transform_indices = @transform_5, window_bounds = array<i64: 1, 8, 8, 8>}]} {
    %cst = arith.constant 0.000000e+00 : bf16
    %0 = vector.broadcast %cst : bf16 to vector<18x18x8xbf16>
    %c0 = arith.constant 0 : index
    %c0_0 = arith.constant 0 : index
    %c0_1 = arith.constant 0 : index
    %1 = vector.load %arg7[%c0, %c0_0, %c0_1] : memref<18x18x8xbf16, #tpu.memory_space<vmem>>, vector<18x18x8xbf16>
    tpu.vector_store %arg7[%c0, %c0_0, %c0_1], %0 {strides = array<i32>} : memref<18x18x8xbf16, #tpu.memory_space<vmem>>, vector<18x18x8xbf16>,
    %c0_2 = arith.constant 0 : index
    %c0_3 = arith.constant 0 : index
    %c0_4 = arith.constant 0 : index
    %c0_5 = arith.constant 0 : index
    %2 = vector.load %arg1[%c0_2, %c0_3, %c0_4, %c0_5] : memref<1x16x16x4xbf16, #tpu.memory_space<vmem>>, vector<1x16x16x4xbf16>
    %3 = vector.shape_cast %2 : vector<1x16x16x4xbf16> to vector<16x16x4xbf16>
    %c1 = arith.constant 1 : index
    %c1_6 = arith.constant 1 : index
    %c0_7 = arith.constant 0 : index
    %4 = vector.load %arg7[%c1, %c1_6, %c0_7] : memref<18x18x8xbf16, #tpu.memory_space<vmem>>, vector<16x16x4xbf16>
    tpu.vector_store %arg7[%c1, %c1_6, %c0_7], %3 {strides = array<i32>} : memref<18x18x8xbf16, #tpu.memory_space<vmem>>, vector<16x16x4xbf16>,
    %c0_8 = arith.constant 0 : index
    %c0_9 = arith.constant 0 : index
    %c0_10 = arith.constant 0 : index
    %5 = vector.load %arg7[%c0_8, %c0_9, %c0_10] : memref<18x18x8xbf16, #tpu.memory_space<vmem>>, vector<18x18x8xbf16>
    %6 = vector.extract_strided_slice %5 {offsets = [0, 0, 0], sizes = [16, 16, 8], strides = [1, 1, 1]} : vector<18x18x8xbf16> to vector<16x16x8xbf16>
    %7 = vector.shape_cast %6 : vector<16x16x8xbf16> to vector<256x8xbf16>
    %8 = vector.extract_strided_slice %5 {offsets = [0, 1, 0], sizes = [16, 16, 8], strides = [1, 1, 1]} : vector<18x18x8xbf16> to vector<16x16x8xbf16>
    %9 = vector.shape_cast %8 : vector<16x16x8xbf16> to vector<256x8xbf16>
    %10 = vector.extract_strided_slice %5 {offsets = [0, 2, 0], sizes = [16, 16, 8], strides = [1, 1, 1]} : vector<18x18x8xbf16> to vector<16x16x8xbf16>
    %11 = vector.shape_cast %10 : vector<16x16x8xbf16> to vector<256x8xbf16>
    %12 = vector.extract_strided_slice %5 {offsets = [1, 0, 0], sizes = [16, 16, 8], strides = [1, 1, 1]} : vector<18x18x8xbf16> to vector<16x16x8xbf16>
    %13 = vector.shape_cast %12 : vector<16x16x8xbf16> to vector<256x8xbf16>
    %14 = vector.extract_strided_slice %5 {offsets = [1, 1, 0], sizes = [16, 16, 8], strides = [1, 1, 1]} : vector<18x18x8xbf16> to vector<16x16x8xbf16>
    %15 = vector.shape_cast %14 : vector<16x16x8xbf16> to vector<256x8xbf16>
    %16 = vector.extract_strided_slice %5 {offsets = [1, 2, 0], sizes = [16, 16, 8], strides = [1, 1, 1]} : vector<18x18x8xbf16> to vector<16x16x8xbf16>
    %17 = vector.shape_cast %16 : vector<16x16x8xbf16> to vector<256x8xbf16>
    %18 = vector.extract_strided_slice %5 {offsets = [2, 0, 0], sizes = [16, 16, 8], strides = [1, 1, 1]} : vector<18x18x8xbf16> to vector<16x16x8xbf16>
    %19 = vector.shape_cast %18 : vector<16x16x8xbf16> to vector<256x8xbf16>
    %20 = vector.extract_strided_slice %5 {offsets = [2, 1, 0], sizes = [16, 16, 8], strides = [1, 1, 1]} : vector<18x18x8xbf16> to vector<16x16x8xbf16>
    %21 = vector.shape_cast %20 : vector<16x16x8xbf16> to vector<256x8xbf16>
    %22 = vector.extract_strided_slice %5 {offsets = [2, 2, 0], sizes = [16, 16, 8], strides = [1, 1, 1]} : vector<18x18x8xbf16> to vector<16x16x8xbf16>
    %23 = vector.shape_cast %22 : vector<16x16x8xbf16> to vector<256x8xbf16>
    %24 = tpu.concatenate %7, %9, %11, %13, %15, %17, %19, %21, %23 in 1 : vector<256x8xbf16>, vector<256x8xbf16>, vector<256x8xbf16>, vector<256x8xbf16>, vector<256x8xbf16>, vector<256x8xbf16>, vector<256x8xbf16>, vector<256x8xbf16>, vector<256x8xbf16> -> vector<256x72xbf16>
    %c0_11 = arith.constant 0 : index
    %c0_12 = arith.constant 0 : index
    %25 = vector.load %arg2[%c0_11, %c0_12] : memref<72x8xbf16, #tpu.memory_space<vmem>>, vector<72x8xbf16>
    %cst_13 = arith.constant dense<0.000000e+00> : vector<256x8xf32>
    %26 = tpu.matmul %24, %25, %cst_13 {dimension_numbers = #tpu.dot_dimension_numbers<[1], [0], [0], [1], [0, 0, 1, 1], [], []>} : vector<256x72xbf16>, vector<72x8xbf16>, vector<256x8xf32> -> vector<256x8xf32>
    %c0_14 = arith.constant 0 : index
    %c0_15 = arith.constant 0 : index
    %27 = vector.load %arg3[%c0_14, %c0_15] : memref<1x8xf32, #tpu.memory_space<vmem>>, vector<1x8xf32>
    %28 = vector.broadcast %27 : vector<1x8xf32> to vector<256x8xf32>
    %29 = arith.addf %26, %28 : vector<256x8xf32>
    %cst_16 = arith.constant 0.000000e+00 : f32
    %30 = vector.broadcast %cst_16 : f32 to vector<256x8xf32>
    %31 = arith.maximumf %29, %30 : vector<256x8xf32>
    %32 = vector.shape_cast %31 : vector<256x8xf32> to vector<16x16x8xf32>
    %33 = arith.truncf %32 : vector<16x16x8xf32> to vector<16x16x8xbf16>
    %c1_17 = arith.constant 1 : index
    %c1_18 = arith.constant 1 : index
    %c0_19 = arith.constant 0 : index
    %34 = vector.load %arg7[%c1_17, %c1_18, %c0_19] : memref<18x18x8xbf16, #tpu.memory_space<vmem>>, vector<16x16x8xbf16>
    tpu.vector_store %arg7[%c1_17, %c1_18, %c0_19], %33 {strides = array<i32>} : memref<18x18x8xbf16, #tpu.memory_space<vmem>>, vector<16x16x8xbf16>,
    %c0_20 = arith.constant 0 : index
    %c0_21 = arith.constant 0 : index
    %c0_22 = arith.constant 0 : index
    %35 = vector.load %arg7[%c0_20, %c0_21, %c0_22] : memref<18x18x8xbf16, #tpu.memory_space<vmem>>, vector<18x18x8xbf16>
    %36 = vector.extract_strided_slice %35 {offsets = [0, 0, 0], sizes = [16, 16, 8], strides = [1, 1, 1]} : vector<18x18x8xbf16> to vector<16x16x8xbf16>
    %37 = vector.shape_cast %36 : vector<16x16x8xbf16> to vector<256x8xbf16>
    %38 = vector.extract_strided_slice %35 {offsets = [0, 1, 0], sizes = [16, 16, 8], strides = [1, 1, 1]} : vector<18x18x8xbf16> to vector<16x16x8xbf16>
    %39 = vector.shape_cast %38 : vector<16x16x8xbf16> to vector<256x8xbf16>
    %40 = vector.extract_strided_slice %35 {offsets = [0, 2, 0], sizes = [16, 16, 8], strides = [1, 1, 1]} : vector<18x18x8xbf16> to vector<16x16x8xbf16>
    %41 = vector.shape_cast %40 : vector<16x16x8xbf16> to vector<256x8xbf16>
    %42 = vector.extract_strided_slice %35 {offsets = [1, 0, 0], sizes = [16, 16, 8], strides = [1, 1, 1]} : vector<18x18x8xbf16> to vector<16x16x8xbf16>
    %43 = vector.shape_cast %42 : vector<16x16x8xbf16> to vector<256x8xbf16>
    %44 = vector.extract_strided_slice %35 {offsets = [1, 1, 0], sizes = [16, 16, 8], strides = [1, 1, 1]} : vector<18x18x8xbf16> to vector<16x16x8xbf16>
    %45 = vector.shape_cast %44 : vector<16x16x8xbf16> to vector<256x8xbf16>
    %46 = vector.extract_strided_slice %35 {offsets = [1, 2, 0], sizes = [16, 16, 8], strides = [1, 1, 1]} : vector<18x18x8xbf16> to vector<16x16x8xbf16>
    %47 = vector.shape_cast %46 : vector<16x16x8xbf16> to vector<256x8xbf16>
    %48 = vector.extract_strided_slice %35 {offsets = [2, 0, 0], sizes = [16, 16, 8], strides = [1, 1, 1]} : vector<18x18x8xbf16> to vector<16x16x8xbf16>
    %49 = vector.shape_cast %48 : vector<16x16x8xbf16> to vector<256x8xbf16>
    %50 = vector.extract_strided_slice %35 {offsets = [2, 1, 0], sizes = [16, 16, 8], strides = [1, 1, 1]} : vector<18x18x8xbf16> to vector<16x16x8xbf16>
    %51 = vector.shape_cast %50 : vector<16x16x8xbf16> to vector<256x8xbf16>
    %52 = vector.extract_strided_slice %35 {offsets = [2, 2, 0], sizes = [16, 16, 8], strides = [1, 1, 1]} : vector<18x18x8xbf16> to vector<16x16x8xbf16>
    %53 = vector.shape_cast %52 : vector<16x16x8xbf16> to vector<256x8xbf16>
    %54 = tpu.concatenate %37, %39, %41, %43, %45, %47, %49, %51, %53 in 1 : vector<256x8xbf16>, vector<256x8xbf16>, vector<256x8xbf16>, vector<256x8xbf16>, vector<256x8xbf16>, vector<256x8xbf16>, vector<256x8xbf16>, vector<256x8xbf16>, vector<256x8xbf16> -> vector<256x72xbf16>
    %c0_23 = arith.constant 0 : index
    %c0_24 = arith.constant 0 : index
    %55 = vector.load %arg4[%c0_23, %c0_24] : memref<72x8xbf16, #tpu.memory_space<vmem>>, vector<72x8xbf16>
    %cst_25 = arith.constant dense<0.000000e+00> : vector<256x8xf32>
    %56 = tpu.matmul %54, %55, %cst_25 {dimension_numbers = #tpu.dot_dimension_numbers<[1], [0], [0], [1], [0, 0, 1, 1], [], []>} : vector<256x72xbf16>, vector<72x8xbf16>, vector<256x8xf32> -> vector<256x8xf32>
    %c0_26 = arith.constant 0 : index
    %c0_27 = arith.constant 0 : index
    %57 = vector.load %arg5[%c0_26, %c0_27] : memref<1x8xf32, #tpu.memory_space<vmem>>, vector<1x8xf32>
    %58 = vector.broadcast %57 : vector<1x8xf32> to vector<256x8xf32>
    %59 = arith.addf %56, %58 : vector<256x8xf32>
    %cst_28 = arith.constant 0.000000e+00 : f32
    %60 = vector.broadcast %cst_28 : f32 to vector<256x8xf32>
    %61 = arith.maximumf %59, %60 : vector<256x8xf32>
    %62 = vector.shape_cast %61 : vector<256x8xf32> to vector<8x2x8x2x8xf32>
    %63 = vector.extract_strided_slice %62 {offsets = [0, 0, 0, 0, 0], sizes = [8, 1, 8, 1, 8], strides = [1, 1, 1, 1, 1]} : vector<8x2x8x2x8xf32> to vector<8x1x8x1x8xf32>
    %64 = vector.shape_cast %63 : vector<8x1x8x1x8xf32> to vector<8x8x8xf32>
    %65 = vector.extract_strided_slice %62 {offsets = [0, 0, 0, 1, 0], sizes = [8, 1, 8, 1, 8], strides = [1, 1, 1, 1, 1]} : vector<8x2x8x2x8xf32> to vector<8x1x8x1x8xf32>
    %66 = vector.shape_cast %65 : vector<8x1x8x1x8xf32> to vector<8x8x8xf32>
    %67 = arith.addf %64, %66 : vector<8x8x8xf32>
    %68 = vector.extract_strided_slice %62 {offsets = [0, 1, 0, 0, 0], sizes = [8, 1, 8, 1, 8], strides = [1, 1, 1, 1, 1]} : vector<8x2x8x2x8xf32> to vector<8x1x8x1x8xf32>
    %69 = vector.shape_cast %68 : vector<8x1x8x1x8xf32> to vector<8x8x8xf32>
    %70 = arith.addf %67, %69 : vector<8x8x8xf32>
    %71 = vector.extract_strided_slice %62 {offsets = [0, 1, 0, 1, 0], sizes = [8, 1, 8, 1, 8], strides = [1, 1, 1, 1, 1]} : vector<8x2x8x2x8xf32> to vector<8x1x8x1x8xf32>
    %72 = vector.shape_cast %71 : vector<8x1x8x1x8xf32> to vector<8x8x8xf32>
    %73 = arith.addf %70, %72 : vector<8x8x8xf32>
    %cst_29 = arith.constant 2.500000e-01 : f32
    %74 = vector.broadcast %cst_29 : f32 to vector<8x8x8xf32>
    %75 = arith.mulf %73, %74 : vector<8x8x8xf32>
    %76 = arith.truncf %75 : vector<8x8x8xf32> to vector<8x8x8xbf16>
    %c0_30 = arith.constant 0 : index
    %c0_31 = arith.constant 0 : index
    %c0_32 = arith.constant 0 : index
    %c0_33 = arith.constant 0 : index
    %77 = vector.load %arg6[%c0_30, %c0_31, %c0_32, %c0_33] : memref<1x8x8x8xbf16, #tpu.memory_space<vmem>>, vector<1x8x8x8xbf16>
    %78 = vector.shape_cast %77 : vector<1x8x8x8xbf16> to vector<8x8x8xbf16>
    %79 = vector.shape_cast %76 : vector<8x8x8xbf16> to vector<1x8x8x8xbf16>
    tpu.vector_store %arg6[%c0_30, %c0_31, %c0_32, %c0_33], %79 {strides = array<i32>} : memref<1x8x8x8xbf16, #tpu.memory_space<vmem>>, vector<1x8x8x8xbf16>,
    return
  }
  func.func @transform_0(%arg0: i32) -> (i32, i32, i32, i32) {
    %c0_i32 = arith.constant 0 : i32
    %c0_i32_0 = arith.constant 0 : i32
    %c0_i32_1 = arith.constant 0 : i32
    %c0_i32_2 = arith.constant 0 : i32
    return %arg0, %c0_i32, %c0_i32_0, %c0_i32_1 : i32, i32, i32, i32
  }
  func.func @transform_1(%arg0: i32) -> (i32, i32) {
    %c0_i32 = arith.constant 0 : i32
    %c0_i32_0 = arith.constant 0 : i32
    %c0_i32_1 = arith.constant 0 : i32
    return %c0_i32, %c0_i32_0 : i32, i32
  }
  func.func @transform_2(%arg0: i32) -> (i32, i32) {
    %c0_i32 = arith.constant 0 : i32
    %c0_i32_0 = arith.constant 0 : i32
    %c0_i32_1 = arith.constant 0 : i32
    return %c0_i32, %c0_i32_0 : i32, i32
  }
  func.func @transform_3(%arg0: i32) -> (i32, i32) {
    %c0_i32 = arith.constant 0 : i32
    %c0_i32_0 = arith.constant 0 : i32
    %c0_i32_1 = arith.constant 0 : i32
    return %c0_i32, %c0_i32_0 : i32, i32
  }
  func.func @transform_4(%arg0: i32) -> (i32, i32) {
    %c0_i32 = arith.constant 0 : i32
    %c0_i32_0 = arith.constant 0 : i32
    %c0_i32_1 = arith.constant 0 : i32
    return %c0_i32, %c0_i32_0 : i32, i32
  }
  func.func @transform_5(%arg0: i32) -> (i32, i32, i32, i32) {
    %c0_i32 = arith.constant 0 : i32
    %c0_i32_0 = arith.constant 0 : i32
    %c0_i32_1 = arith.constant 0 : i32
    %c0_i32_2 = arith.constant 0 : i32
    return %arg0, %c0_i32, %c0_i32_0, %c0_i32_1 : i32, i32, i32, i32
  }
}

module attributes {stable_mosaic.version = 11 : i64} {
  func.func @_encoder_block_kernel(%arg0: i32, %arg1: memref<1x8x8x8xbf16, #tpu.memory_space<vmem>>, %arg2: memref<144x16xbf16, #tpu.memory_space<vmem>>, %arg3: memref<1x16xf32, #tpu.memory_space<vmem>>, %arg4: memref<144x16xbf16, #tpu.memory_space<vmem>>, %arg5: memref<1x16xf32, #tpu.memory_space<vmem>>, %arg6: memref<1x8x8x16xbf16, #tpu.memory_space<vmem>>, %arg7: memref<10x10x16xbf16, #tpu.memory_space<vmem>>) attributes {dimension_semantics = [#tpu.dimension_semantics<parallel>], iteration_bounds = array<i64: 2>, scalar_prefetch = 0 : i64, scratch_operands = 1 : i64, tpu.core_type = #tpu.core_type<tc>, window_params = [{transform_indices = @transform_0, window_bounds = array<i64: 1, 8, 8, 8>}, {pipeline_mode = #tpu.pipeline_mode<synchronous>, transform_indices = @transform_1, window_bounds = array<i64: 144, 16>}, {pipeline_mode = #tpu.pipeline_mode<synchronous>, transform_indices = @transform_2, window_bounds = array<i64: 1, 16>}, {pipeline_mode = #tpu.pipeline_mode<synchronous>, transform_indices = @transform_3, window_bounds = array<i64: 144, 16>}, {pipeline_mode = #tpu.pipeline_mode<synchronous>, transform_indices = @transform_4, window_bounds = array<i64: 1, 16>}, {transform_indices = @transform_5, window_bounds = array<i64: 1, 8, 8, 16>}]} {
    %cst = arith.constant 0.000000e+00 : bf16
    %0 = vector.broadcast %cst : bf16 to vector<10x10x16xbf16>
    %c0 = arith.constant 0 : index
    %c0_0 = arith.constant 0 : index
    %c0_1 = arith.constant 0 : index
    %1 = vector.load %arg7[%c0, %c0_0, %c0_1] : memref<10x10x16xbf16, #tpu.memory_space<vmem>>, vector<10x10x16xbf16>
    tpu.vector_store %arg7[%c0, %c0_0, %c0_1], %0 {strides = array<i32>} : memref<10x10x16xbf16, #tpu.memory_space<vmem>>, vector<10x10x16xbf16>,
    %c0_2 = arith.constant 0 : index
    %c0_3 = arith.constant 0 : index
    %c0_4 = arith.constant 0 : index
    %c0_5 = arith.constant 0 : index
    %2 = vector.load %arg1[%c0_2, %c0_3, %c0_4, %c0_5] : memref<1x8x8x8xbf16, #tpu.memory_space<vmem>>, vector<1x8x8x8xbf16>
    %3 = vector.shape_cast %2 : vector<1x8x8x8xbf16> to vector<8x8x8xbf16>
    %c1 = arith.constant 1 : index
    %c1_6 = arith.constant 1 : index
    %c0_7 = arith.constant 0 : index
    %4 = vector.load %arg7[%c1, %c1_6, %c0_7] : memref<10x10x16xbf16, #tpu.memory_space<vmem>>, vector<8x8x8xbf16>
    tpu.vector_store %arg7[%c1, %c1_6, %c0_7], %3 {strides = array<i32>} : memref<10x10x16xbf16, #tpu.memory_space<vmem>>, vector<8x8x8xbf16>,
    %c0_8 = arith.constant 0 : index
    %c0_9 = arith.constant 0 : index
    %c0_10 = arith.constant 0 : index
    %5 = vector.load %arg7[%c0_8, %c0_9, %c0_10] : memref<10x10x16xbf16, #tpu.memory_space<vmem>>, vector<10x10x16xbf16>
    %6 = vector.extract_strided_slice %5 {offsets = [0, 0, 0], sizes = [8, 8, 16], strides = [1, 1, 1]} : vector<10x10x16xbf16> to vector<8x8x16xbf16>
    %7 = vector.shape_cast %6 : vector<8x8x16xbf16> to vector<64x16xbf16>
    %8 = vector.extract_strided_slice %5 {offsets = [0, 1, 0], sizes = [8, 8, 16], strides = [1, 1, 1]} : vector<10x10x16xbf16> to vector<8x8x16xbf16>
    %9 = vector.shape_cast %8 : vector<8x8x16xbf16> to vector<64x16xbf16>
    %10 = vector.extract_strided_slice %5 {offsets = [0, 2, 0], sizes = [8, 8, 16], strides = [1, 1, 1]} : vector<10x10x16xbf16> to vector<8x8x16xbf16>
    %11 = vector.shape_cast %10 : vector<8x8x16xbf16> to vector<64x16xbf16>
    %12 = vector.extract_strided_slice %5 {offsets = [1, 0, 0], sizes = [8, 8, 16], strides = [1, 1, 1]} : vector<10x10x16xbf16> to vector<8x8x16xbf16>
    %13 = vector.shape_cast %12 : vector<8x8x16xbf16> to vector<64x16xbf16>
    %14 = vector.extract_strided_slice %5 {offsets = [1, 1, 0], sizes = [8, 8, 16], strides = [1, 1, 1]} : vector<10x10x16xbf16> to vector<8x8x16xbf16>
    %15 = vector.shape_cast %14 : vector<8x8x16xbf16> to vector<64x16xbf16>
    %16 = vector.extract_strided_slice %5 {offsets = [1, 2, 0], sizes = [8, 8, 16], strides = [1, 1, 1]} : vector<10x10x16xbf16> to vector<8x8x16xbf16>
    %17 = vector.shape_cast %16 : vector<8x8x16xbf16> to vector<64x16xbf16>
    %18 = vector.extract_strided_slice %5 {offsets = [2, 0, 0], sizes = [8, 8, 16], strides = [1, 1, 1]} : vector<10x10x16xbf16> to vector<8x8x16xbf16>
    %19 = vector.shape_cast %18 : vector<8x8x16xbf16> to vector<64x16xbf16>
    %20 = vector.extract_strided_slice %5 {offsets = [2, 1, 0], sizes = [8, 8, 16], strides = [1, 1, 1]} : vector<10x10x16xbf16> to vector<8x8x16xbf16>
    %21 = vector.shape_cast %20 : vector<8x8x16xbf16> to vector<64x16xbf16>
    %22 = vector.extract_strided_slice %5 {offsets = [2, 2, 0], sizes = [8, 8, 16], strides = [1, 1, 1]} : vector<10x10x16xbf16> to vector<8x8x16xbf16>
    %23 = vector.shape_cast %22 : vector<8x8x16xbf16> to vector<64x16xbf16>
    %24 = tpu.concatenate %7, %9, %11, %13, %15, %17, %19, %21, %23 in 1 : vector<64x16xbf16>, vector<64x16xbf16>, vector<64x16xbf16>, vector<64x16xbf16>, vector<64x16xbf16>, vector<64x16xbf16>, vector<64x16xbf16>, vector<64x16xbf16>, vector<64x16xbf16> -> vector<64x144xbf16>
    %c0_11 = arith.constant 0 : index
    %c0_12 = arith.constant 0 : index
    %25 = vector.load %arg2[%c0_11, %c0_12] : memref<144x16xbf16, #tpu.memory_space<vmem>>, vector<144x16xbf16>
    %cst_13 = arith.constant dense<0.000000e+00> : vector<64x16xf32>
    %26 = tpu.matmul %24, %25, %cst_13 {dimension_numbers = #tpu.dot_dimension_numbers<[1], [0], [0], [1], [0, 0, 1, 1], [], []>} : vector<64x144xbf16>, vector<144x16xbf16>, vector<64x16xf32> -> vector<64x16xf32>
    %c0_14 = arith.constant 0 : index
    %c0_15 = arith.constant 0 : index
    %27 = vector.load %arg3[%c0_14, %c0_15] : memref<1x16xf32, #tpu.memory_space<vmem>>, vector<1x16xf32>
    %28 = vector.broadcast %27 : vector<1x16xf32> to vector<64x16xf32>
    %29 = arith.addf %26, %28 : vector<64x16xf32>
    %cst_16 = arith.constant 0.000000e+00 : f32
    %30 = vector.broadcast %cst_16 : f32 to vector<64x16xf32>
    %31 = arith.maximumf %29, %30 : vector<64x16xf32>
    %32 = vector.shape_cast %31 : vector<64x16xf32> to vector<8x8x16xf32>
    %33 = arith.truncf %32 : vector<8x8x16xf32> to vector<8x8x16xbf16>
    %c1_17 = arith.constant 1 : index
    %c1_18 = arith.constant 1 : index
    %c0_19 = arith.constant 0 : index
    %34 = vector.load %arg7[%c1_17, %c1_18, %c0_19] : memref<10x10x16xbf16, #tpu.memory_space<vmem>>, vector<8x8x16xbf16>
    tpu.vector_store %arg7[%c1_17, %c1_18, %c0_19], %33 {strides = array<i32>} : memref<10x10x16xbf16, #tpu.memory_space<vmem>>, vector<8x8x16xbf16>,
    %c0_20 = arith.constant 0 : index
    %c0_21 = arith.constant 0 : index
    %c0_22 = arith.constant 0 : index
    %35 = vector.load %arg7[%c0_20, %c0_21, %c0_22] : memref<10x10x16xbf16, #tpu.memory_space<vmem>>, vector<10x10x16xbf16>
    %36 = vector.extract_strided_slice %35 {offsets = [0, 0, 0], sizes = [8, 8, 16], strides = [1, 1, 1]} : vector<10x10x16xbf16> to vector<8x8x16xbf16>
    %37 = vector.shape_cast %36 : vector<8x8x16xbf16> to vector<64x16xbf16>
    %38 = vector.extract_strided_slice %35 {offsets = [0, 1, 0], sizes = [8, 8, 16], strides = [1, 1, 1]} : vector<10x10x16xbf16> to vector<8x8x16xbf16>
    %39 = vector.shape_cast %38 : vector<8x8x16xbf16> to vector<64x16xbf16>
    %40 = vector.extract_strided_slice %35 {offsets = [0, 2, 0], sizes = [8, 8, 16], strides = [1, 1, 1]} : vector<10x10x16xbf16> to vector<8x8x16xbf16>
    %41 = vector.shape_cast %40 : vector<8x8x16xbf16> to vector<64x16xbf16>
    %42 = vector.extract_strided_slice %35 {offsets = [1, 0, 0], sizes = [8, 8, 16], strides = [1, 1, 1]} : vector<10x10x16xbf16> to vector<8x8x16xbf16>
    %43 = vector.shape_cast %42 : vector<8x8x16xbf16> to vector<64x16xbf16>
    %44 = vector.extract_strided_slice %35 {offsets = [1, 1, 0], sizes = [8, 8, 16], strides = [1, 1, 1]} : vector<10x10x16xbf16> to vector<8x8x16xbf16>
    %45 = vector.shape_cast %44 : vector<8x8x16xbf16> to vector<64x16xbf16>
    %46 = vector.extract_strided_slice %35 {offsets = [1, 2, 0], sizes = [8, 8, 16], strides = [1, 1, 1]} : vector<10x10x16xbf16> to vector<8x8x16xbf16>
    %47 = vector.shape_cast %46 : vector<8x8x16xbf16> to vector<64x16xbf16>
    %48 = vector.extract_strided_slice %35 {offsets = [2, 0, 0], sizes = [8, 8, 16], strides = [1, 1, 1]} : vector<10x10x16xbf16> to vector<8x8x16xbf16>
    %49 = vector.shape_cast %48 : vector<8x8x16xbf16> to vector<64x16xbf16>
    %50 = vector.extract_strided_slice %35 {offsets = [2, 1, 0], sizes = [8, 8, 16], strides = [1, 1, 1]} : vector<10x10x16xbf16> to vector<8x8x16xbf16>
    %51 = vector.shape_cast %50 : vector<8x8x16xbf16> to vector<64x16xbf16>
    %52 = vector.extract_strided_slice %35 {offsets = [2, 2, 0], sizes = [8, 8, 16], strides = [1, 1, 1]} : vector<10x10x16xbf16> to vector<8x8x16xbf16>
    %53 = vector.shape_cast %52 : vector<8x8x16xbf16> to vector<64x16xbf16>
    %54 = tpu.concatenate %37, %39, %41, %43, %45, %47, %49, %51, %53 in 1 : vector<64x16xbf16>, vector<64x16xbf16>, vector<64x16xbf16>, vector<64x16xbf16>, vector<64x16xbf16>, vector<64x16xbf16>, vector<64x16xbf16>, vector<64x16xbf16>, vector<64x16xbf16> -> vector<64x144xbf16>
    %c0_23 = arith.constant 0 : index
    %c0_24 = arith.constant 0 : index
    %55 = vector.load %arg4[%c0_23, %c0_24] : memref<144x16xbf16, #tpu.memory_space<vmem>>, vector<144x16xbf16>
    %cst_25 = arith.constant dense<0.000000e+00> : vector<64x16xf32>
    %56 = tpu.matmul %54, %55, %cst_25 {dimension_numbers = #tpu.dot_dimension_numbers<[1], [0], [0], [1], [0, 0, 1, 1], [], []>} : vector<64x144xbf16>, vector<144x16xbf16>, vector<64x16xf32> -> vector<64x16xf32>
    %c0_26 = arith.constant 0 : index
    %c0_27 = arith.constant 0 : index
    %57 = vector.load %arg5[%c0_26, %c0_27] : memref<1x16xf32, #tpu.memory_space<vmem>>, vector<1x16xf32>
    %58 = vector.broadcast %57 : vector<1x16xf32> to vector<64x16xf32>
    %59 = arith.addf %56, %58 : vector<64x16xf32>
    %cst_28 = arith.constant 0.000000e+00 : f32
    %60 = vector.broadcast %cst_28 : f32 to vector<64x16xf32>
    %61 = arith.maximumf %59, %60 : vector<64x16xf32>
    %62 = vector.shape_cast %61 : vector<64x16xf32> to vector<8x8x16xf32>
    %63 = arith.truncf %62 : vector<8x8x16xf32> to vector<8x8x16xbf16>
    %c0_29 = arith.constant 0 : index
    %c0_30 = arith.constant 0 : index
    %c0_31 = arith.constant 0 : index
    %c0_32 = arith.constant 0 : index
    %64 = vector.load %arg6[%c0_29, %c0_30, %c0_31, %c0_32] : memref<1x8x8x16xbf16, #tpu.memory_space<vmem>>, vector<1x8x8x16xbf16>
    %65 = vector.shape_cast %64 : vector<1x8x8x16xbf16> to vector<8x8x16xbf16>
    %66 = vector.shape_cast %63 : vector<8x8x16xbf16> to vector<1x8x8x16xbf16>
    tpu.vector_store %arg6[%c0_29, %c0_30, %c0_31, %c0_32], %66 {strides = array<i32>} : memref<1x8x8x16xbf16, #tpu.memory_space<vmem>>, vector<1x8x8x16xbf16>,
    return
  }
  func.func @transform_0(%arg0: i32) -> (i32, i32, i32, i32) {
    %c0_i32 = arith.constant 0 : i32
    %c0_i32_0 = arith.constant 0 : i32
    %c0_i32_1 = arith.constant 0 : i32
    %c0_i32_2 = arith.constant 0 : i32
    return %arg0, %c0_i32, %c0_i32_0, %c0_i32_1 : i32, i32, i32, i32
  }
  func.func @transform_1(%arg0: i32) -> (i32, i32) {
    %c0_i32 = arith.constant 0 : i32
    %c0_i32_0 = arith.constant 0 : i32
    %c0_i32_1 = arith.constant 0 : i32
    return %c0_i32, %c0_i32_0 : i32, i32
  }
  func.func @transform_2(%arg0: i32) -> (i32, i32) {
    %c0_i32 = arith.constant 0 : i32
    %c0_i32_0 = arith.constant 0 : i32
    %c0_i32_1 = arith.constant 0 : i32
    return %c0_i32, %c0_i32_0 : i32, i32
  }
  func.func @transform_3(%arg0: i32) -> (i32, i32) {
    %c0_i32 = arith.constant 0 : i32
    %c0_i32_0 = arith.constant 0 : i32
    %c0_i32_1 = arith.constant 0 : i32
    return %c0_i32, %c0_i32_0 : i32, i32
  }
  func.func @transform_4(%arg0: i32) -> (i32, i32) {
    %c0_i32 = arith.constant 0 : i32
    %c0_i32_0 = arith.constant 0 : i32
    %c0_i32_1 = arith.constant 0 : i32
    return %c0_i32, %c0_i32_0 : i32, i32
  }
  func.func @transform_5(%arg0: i32) -> (i32, i32, i32, i32) {
    %c0_i32 = arith.constant 0 : i32
    %c0_i32_0 = arith.constant 0 : i32
    %c0_i32_1 = arith.constant 0 : i32
    %c0_i32_2 = arith.constant 0 : i32
    return %arg0, %c0_i32, %c0_i32_0, %c0_i32_1 : i32, i32, i32, i32
  }
}

</mosaic_0001>

<llo_original>
// kernel: encoder_forward.3
$region0: #{encoder_forward.3}
  #allocation0 [shape = 'u32[]', space=smem, size = 0x4, offset = 0x4, fixed_abs, tag = 'smem constant byte address 0x4 - core index']
  #allocation1 [shape = 'u32[144,128]{1,0:T(1,128)}', space=vmem, size = 0x12000, scoped, tag = 'internal scratch']
  #allocation2 [shape = 'bf16[10,10,16]{2,1,0:T(8,128)(2,1)}', space=vmem, size = 0xa000, scoped, tag = 'scratch operand']
  %s0 = inlined_call_operand.vmem [shape: bf16[2,8,8,8], index: 0, kind: input, shape index: {}]
  %s1 = inlined_call_operand.vmem [shape: bf16[144,16], index: 1, kind: input, shape index: {}]
  %s2 = inlined_call_operand.vmem [shape: f32[1,16], index: 2, kind: input, shape index: {}]
  %s3 = inlined_call_operand.vmem [shape: bf16[144,16], index: 3, kind: input, shape index: {}]
  %s4 = inlined_call_operand.vmem [shape: f32[1,16], index: 4, kind: input, shape index: {}]
  %s5 = inlined_call_operand.vmem [shape: bf16[2,8,8,16], index: 5, kind: output, shape index: {}]
  %s6 = sld [smem:[#allocation0]]
  $region53: #{encoder_forward.3} parent=0
    _
  %s8 = ssub.s32 1, %s6
  %s9 = scalar_select 0, %s8, %s6
  loop: start=0, step=1, limit=4
  $region2: #{encoder_forward.3} parent=0 // loop_pre_header
    _
  $region3: #{encoder_forward.3} parent=0 // loop_header
    %s11 = sphi 0, %s15
    %p12 = scmp.ge.s32.totalorder %s11, 4
    %s21 = sphi 0, %s23
    %s24 = sphi 0, %s21
    %s25 = sphi 0, %s24
    %s41 = sphi 0, %s25
    %s45 = sphi 0, %s45
    %s47 = sphi 0, %s45
    %s48 = sphi 0, %s47
    %s62 = sphi 0, %s48
    %s66 = sphi 0, %s66
    %s68 = sphi 0, %s66
    %s69 = sphi 0, %s68
    %s83 = sphi 0, %s69
    %s87 = sphi 0, %s87
    %s89 = sphi 0, %s87
    %s90 = sphi 0, %s89
    %s104 = sphi 0, %s90
    %s108 = sphi 0, %s108
    %s110 = sphi 0, %s108
    %s111 = sphi 0, %s110
    %s125 = sphi 0, %s111
    %s131 = sphi 0, %s133
    %s134 = sphi 0, %s131
    %s135 = sphi 0, %s134
    %s151 = sphi 0, %s135
  $region4: #{encoder_forward.3} parent=0 // loop_header_branch
    %14 = sbr.rel (%p12) target = $region8
  $region5: #{encoder_forward.3} parent=0 // loop_body
    %s16 = ssub.s32 %s11, 1
    %s17 = ssub.s32 %s11, 2
    %s18 = sadd.s32 %s11, 1
    %s19 = ssub.s32 %s11, %s18
    %p20 = scmp.eq.s32.totalorder %s19, 0
    %s22 = sadd.s32 %s21, 1
    %s23 = scalar_select %p20, %s21, %s22
    %p26 = pneg %p20
    %p27 = scmp.eq.s32.totalorder %s11, 1
    %p28 = por %p26, %p27
    %p29 = scmp.ne.s32.totalorder %s21, %s24
    %p30 = scmp.eq.s32.totalorder %s11, 0
    %p31 = por %p29, %p30
    %p32 = scmp.ne.s32.totalorder %s21, %s24
    %p33 = scmp.eq.s32.totalorder %s16, 1
    %p34 = por %p32, %p33
    %p35 = scmp.ne.s32.totalorder %s24, %s25
    %p36 = scmp.eq.s32.totalorder %s16, 0
    %p37 = por %p35, %p36
    %p38 = scmp.ne.s32.totalorder %s24, %s25
    %p39 = scmp.eq.s32.totalorder %s17, 1
    %p40 = por %p38, %p39
    %p42 = scmp.ne.s32.totalorder %s25, %s41
    %p43 = scmp.eq.s32.totalorder %s17, 0
    %p44 = por %p42, %p43
    %s46 = sadd.s32 %s45, 1
    %p49 = scmp.eq.s32.totalorder %s11, 1
    %p50 = scmp.ne.s32.totalorder %s45, %s47
    %p51 = scmp.eq.s32.totalorder %s11, 0
    %p52 = por %p50, %p51
    %p53 = scmp.ne.s32.totalorder %s45, %s47
    %p54 = scmp.eq.s32.totalorder %s16, 1
    %p55 = por %p53, %p54
    %p56 = scmp.ne.s32.totalorder %s47, %s48
    %p57 = scmp.eq.s32.totalorder %s16, 0
    %p58 = por %p56, %p57
    %p59 = scmp.ne.s32.totalorder %s47, %s48
    %p60 = scmp.eq.s32.totalorder %s17, 1
    %p61 = por %p59, %p60
    %p63 = scmp.ne.s32.totalorder %s48, %s62
    %p64 = scmp.eq.s32.totalorder %s17, 0
    %p65 = por %p63, %p64
    %s67 = sadd.s32 %s66, 1
    %p70 = scmp.eq.s32.totalorder %s11, 1
    %p71 = scmp.ne.s32.totalorder %s66, %s68
    %p72 = scmp.eq.s32.totalorder %s11, 0
    %p73 = por %p71, %p72
    %p74 = scmp.ne.s32.totalorder %s66, %s68
    %p75 = scmp.eq.s32.totalorder %s16, 1
    %p76 = por %p74, %p75
    %p77 = scmp.ne.s32.totalorder %s68, %s69
    %p78 = scmp.eq.s32.totalorder %s16, 0
    %p79 = por %p77, %p78
    %p80 = scmp.ne.s32.totalorder %s68, %s69
    %p81 = scmp.eq.s32.totalorder %s17, 1
    %p82 = por %p80, %p81
    %p84 = scmp.ne.s32.totalorder %s69, %s83
    %p85 = scmp.eq.s32.totalorder %s17, 0
    %p86 = por %p84, %p85
    %s88 = sadd.s32 %s87, 1
    %p91 = scmp.eq.s32.totalorder %s11, 1
    %p92 = scmp.ne.s32.totalorder %s87, %s89
    %p93 = scmp.eq.s32.totalorder %s11, 0
    %p94 = por %p92, %p93
    %p95 = scmp.ne.s32.totalorder %s87, %s89
    %p96 = scmp.eq.s32.totalorder %s16, 1
    %p97 = por %p95, %p96
    %p98 = scmp.ne.s32.totalorder %s89, %s90
    %p99 = scmp.eq.s32.totalorder %s16, 0
    %p100 = por %p98, %p99
    %p101 = scmp.ne.s32.totalorder %s89, %s90
    %p102 = scmp.eq.s32.totalorder %s17, 1
    %p103 = por %p101, %p102
    %p105 = scmp.ne.s32.totalorder %s90, %s104
    %p106 = scmp.eq.s32.totalorder %s17, 0
    %p107 = por %p105, %p106
    %s109 = sadd.s32 %s108, 1
    %p112 = scmp.eq.s32.totalorder %s11, 1
    %p113 = scmp.ne.s32.totalorder %s108, %s110
    %p114 = scmp.eq.s32.totalorder %s11, 0
    %p115 = por %p113, %p114
    %p116 = scmp.ne.s32.totalorder %s108, %s110
    %p117 = scmp.eq.s32.totalorder %s16, 1
    %p118 = por %p116, %p117
    %p119 = scmp.ne.s32.totalorder %s110, %s111
    %p120 = scmp.eq.s32.totalorder %s16, 0
    %p121 = por %p119, %p120
    %p122 = scmp.ne.s32.totalorder %s110, %s111
    %p123 = scmp.eq.s32.totalorder %s17, 1
    %p124 = por %p122, %p123
    %p126 = scmp.ne.s32.totalorder %s111, %s125
    %p127 = scmp.eq.s32.totalorder %s17, 0
    %p128 = por %p126, %p127
    %s129 = ssub.s32 %s11, %s18
    %p130 = scmp.eq.s32.totalorder %s129, 0
    %s132 = sadd.s32 %s131, 1
    %s133 = scalar_select %p130, %s131, %s132
    %p136 = pneg %p130
    %p137 = scmp.eq.s32.totalorder %s11, 1
    %p138 = por %p136, %p137
    %p139 = scmp.ne.s32.totalorder %s131, %s134
    %p140 = scmp.eq.s32.totalorder %s11, 0
    %p141 = por %p139, %p140
    %p142 = scmp.ne.s32.totalorder %s131, %s134
    %p143 = scmp.eq.s32.totalorder %s16, 1
    %p144 = por %p142, %p143
    %p145 = scmp.ne.s32.totalorder %s134, %s135
    %p146 = scmp.eq.s32.totalorder %s16, 0
    %p147 = por %p145, %p146
    %p148 = scmp.ne.s32.totalorder %s134, %s135
    %p149 = scmp.eq.s32.totalorder %s17, 1
    %p150 = por %p148, %p149
    %p152 = scmp.ne.s32.totalorder %s135, %s151
    %p153 = scmp.eq.s32.totalorder %s17, 0
    %p154 = por %p152, %p153
    %p155 = scmp.le.s32.totalorder 1, %s11
    %p156 = scmp.lt.s32.totalorder %s11, 3
    %p157 = pnand %p155, %p156
    %p158 = pneg %p157
    // Predicated region
    $region9: #{encoder_forward.3} parent=5 // pred_check
      _
    $region10: #{encoder_forward.3} parent=5 // pred_check_branch
      %160 = sbr.rel (%p157) target = $region12
    $region11: #{encoder_forward.3} parent=5 // pred_region
      %s161 = ssub.s32 %s11, 1
      // Predicated region
      $region13: #{encoder_forward.3} parent=11 // pred_check
        %p162 = pneg %p58
      $region14: #{encoder_forward.3} parent=11 // pred_check_branch
        %164 = sbr.rel (%p162) target = $region16
      $region15: #{encoder_forward.3} parent=11 // pred_region
        _
      $region16: #{encoder_forward.3} parent=11 // pred_fallthru
        _
      // Predicated region
      $region17: #{encoder_forward.3} parent=11 // pred_check
        %p165 = pneg %p79
      $region18: #{encoder_forward.3} parent=11 // pred_check_branch
        %167 = sbr.rel (%p165) target = $region20
      $region19: #{encoder_forward.3} parent=11 // pred_region
        _
      $region20: #{encoder_forward.3} parent=11 // pred_fallthru
        _
      // Predicated region
      $region21: #{encoder_forward.3} parent=11 // pred_check
        %p168 = pneg %p100
      $region22: #{encoder_forward.3} parent=11 // pred_check_branch
        %170 = sbr.rel (%p168) target = $region24
      $region23: #{encoder_forward.3} parent=11 // pred_region
        _
      $region24: #{encoder_forward.3} parent=11 // pred_fallthru
        _
      // Predicated region
      $region25: #{encoder_forward.3} parent=11 // pred_check
        %p171 = pneg %p121
      $region26: #{encoder_forward.3} parent=11 // pred_check_branch
        %173 = sbr.rel (%p171) target = $region28
      $region27: #{encoder_forward.3} parent=11 // pred_region
        _
      $region28: #{encoder_forward.3} parent=11 // pred_fallthru
        _
    $region12: #{encoder_forward.3} parent=5 // pred_fallthru
      _
    %p174 = scmp.lt.s32.totalorder %s11, 2
    // Predicated region
    $region29: #{encoder_forward.3} parent=5 // pred_check
      %p175 = pneg %p174
    $region30: #{encoder_forward.3} parent=5 // pred_check_branch
      %177 = sbr.rel (%p175) target = $region32
    $region31: #{encoder_forward.3} parent=5 // pred_region
      // Predicated region
      $region33: #{encoder_forward.3} parent=31 // pred_check
        %p178 = pneg %p31
      $region34: #{encoder_forward.3} parent=31 // pred_check_branch
        %180 = sbr.rel (%p178) target = $region36
      $region35: #{encoder_forward.3} parent=31 // pred_region
        %p181 = scmp.lt.s32.totalorder %s11, 1
        %s182 = scalar_select %p181, %s11, 1
        %s183 = smul.addr %s182, 8
        %s184 = smul.addr %s183, 4
        %s185 = scalar_lea.vmem %s0, %s184
      $region36: #{encoder_forward.3} parent=31 // pred_fallthru
        _
    $region32: #{encoder_forward.3} parent=5 // pred_fallthru
      _
    %p186 = scmp.le.s32.totalorder 1, %s11
    %p187 = scmp.lt.s32.totalorder %s11, 3
    %p188 = pnand %p186, %p187
    %p189 = pneg %p188
    // Predicated region
    $region37: #{encoder_forward.3} parent=5 // pred_check
      _
    $region38: #{encoder_forward.3} parent=5 // pred_check_branch
      %191 = sbr.rel (%p188) target = $region40
    $region39: #{encoder_forward.3} parent=5 // pred_region
      %s192 = ssub.s32 %s11, 1
      %p193 = scmp.lt.s32.totalorder %s16, 1
      %s194 = scalar_select %p193, %s16, 1
      %s195 = smul.addr %s194, 8
      %s196 = smul.addr %s195, 4
      %s197 = scalar_lea.vmem %s0, %s196
      %p198 = pneg %p37
      %p199 = pneg %p34
      %p200 = pneg %p58
      %p201 = pneg %p55
      %p202 = pneg %p79
      %p203 = pneg %p76
      %p204 = pneg %p100
      %p205 = pneg %p97
      %p206 = pneg %p121
      %p207 = pneg %p118
      %p208 = pneg %p147
      %p209 = pneg %p144
      %p210 = scmp.lt.s32.totalorder %s16, 1
      %s211 = scalar_select %p210, %s16, 1
      %s212 = smul.addr %s211, 8
      %s213 = smul.addr %s212, 4
      %s214 = scalar_lea.vmem %s5, %s213
      %p215 = scmp.lt.s32.totalorder %s16, 1
      %s216 = scalar_select %p215, %s16, 1
      %s217 = smul.addr %s216, 8
      %s218 = smul.addr %s217, 4
      %s219 = scalar_lea.vmem %s0, %s218
      %p220 = scmp.lt.s32.totalorder %s16, 1
      %s221 = scalar_select %p220, %s16, 1
      %s222 = smul.addr %s221, 8
      %s223 = smul.addr %s222, 4
      %s224 = scalar_lea.vmem %s5, %s223
      %vm226 = vcmask 125952
      %227 = vst.msk [vmem:[#allocation2] sm:$0xf] %vm226, 0
      %vm228 = vcmask 122880
      %229 = vst.msk [vmem:[#allocation2 + $0x4] sm:$0x1] %vm228, 0
      %230 = vst.msk [vmem:[#allocation2 + $0x8] sm:$0xf] %vm226, 0
      %231 = vst.msk [vmem:[#allocation2 + $0xc] sm:$0x1] %vm228, 0
      %232 = vst.msk [vmem:[#allocation2 + $0x10] sm:$0xf] %vm226, 0
      %233 = vst.msk [vmem:[#allocation2 + $0x14] sm:$0x1] %vm228, 0
      %234 = vst.msk [vmem:[#allocation2 + $0x18] sm:$0xf] %vm226, 0
      %235 = vst.msk [vmem:[#allocation2 + $0x1c] sm:$0x1] %vm228, 0
      %236 = vst.msk [vmem:[#allocation2 + $0x20] sm:$0xf] %vm226, 0
      %237 = vst.msk [vmem:[#allocation2 + $0x24] sm:$0x1] %vm228, 0
      %238 = vst.msk [vmem:[#allocation2 + $0x28] sm:$0xf] %vm226, 0
      %239 = vst.msk [vmem:[#allocation2 + $0x2c] sm:$0x1] %vm228, 0
      %240 = vst.msk [vmem:[#allocation2 + $0x30] sm:$0xf] %vm226, 0
      %241 = vst.msk [vmem:[#allocation2 + $0x34] sm:$0x1] %vm228, 0
      %242 = vst.msk [vmem:[#allocation2 + $0x38] sm:$0xf] %vm226, 0
      %243 = vst.msk [vmem:[#allocation2 + $0x3c] sm:$0x1] %vm228, 0
      %244 = vst.msk [vmem:[#allocation2 + $0x40] sm:$0xf] %vm226, 0
      %245 = vst.msk [vmem:[#allocation2 + $0x44] sm:$0x1] %vm228, 0
      %246 = vst.msk [vmem:[#allocation2 + $0x48] sm:$0xf] %vm226, 0
      %247 = vst.msk [vmem:[#allocation2 + $0x4c] sm:$0x1] %vm228, 0
      %v248 = vld [vmem:[%s219] sm:$0xf]
      %v249 = vld [vmem:[%s219 + $0x4] sm:$0xf]
      %v250 = vld [vmem:[%s219 + $0x8] sm:$0xf]
      %v251 = vld [vmem:[%s219 + $0xc] sm:$0xf]
      %v252 = vld [vmem:[%s219 + $0x10] sm:$0xf]
      %v253 = vld [vmem:[%s219 + $0x14] sm:$0xf]
      %v254 = vld [vmem:[%s219 + $0x18] sm:$0xf]
      %v255 = vld [vmem:[%s219 + $0x1c] sm:$0xf]
      %v257 = vshrl.u32 %v248, 16
      %v259 = vrot.slane %v257, 7
      %v260 = vshll.u32 %v248, 16
      %v262 = vor.u32 %v259, %v260
      %v263 = vrot.slane %v259, 4
      %v265 = vshrl.u32 %v249, 16
      %v267 = vrot.slane %v265, 7
      %v268 = vshll.u32 %v249, 16
      %v270 = vor.u32 %v267, %v268
      %v271 = vrot.slane %v267, 4
      %v273 = vshrl.u32 %v250, 16
      %v275 = vrot.slane %v273, 7
      %v276 = vshll.u32 %v250, 16
      %v278 = vor.u32 %v275, %v276
      %v279 = vrot.slane %v275, 4
      %v281 = vshrl.u32 %v251, 16
      %v283 = vrot.slane %v281, 7
      %v284 = vshll.u32 %v251, 16
      %v286 = vor.u32 %v283, %v284
      %v287 = vrot.slane %v283, 4
      %v289 = vshrl.u32 %v252, 16
      %v291 = vrot.slane %v289, 7
      %v292 = vshll.u32 %v252, 16
      %v294 = vor.u32 %v291, %v292
      %v295 = vrot.slane %v291, 4
      %v297 = vshrl.u32 %v253, 16
      %v299 = vrot.slane %v297, 7
      %v300 = vshll.u32 %v253, 16
      %v302 = vor.u32 %v299, %v300
      %v303 = vrot.slane %v299, 4
      %v305 = vshrl.u32 %v254, 16
      %v307 = vrot.slane %v305, 7
      %v308 = vshll.u32 %v254, 16
      %v310 = vor.u32 %v307, %v308
      %v311 = vrot.slane %v307, 4
      %v313 = vshrl.u32 %v255, 16
      %v315 = vrot.slane %v313, 7
      %v316 = vshll.u32 %v255, 16
      %v318 = vor.u32 %v315, %v316
      %v319 = vrot.slane %v315, 4
      %s336 = scalar_lea.vmem [#allocation2], 8
      %vm337 = vcmask 60416
      %vm338 = vsmask.f32 7938
      %vm339 = vmand %vm337, %vm338
      %v340 = vld [vmem:[%s336] sm:$0xf]
      %v341 = vsel %vm339, %v262, %v340
      %342 = vst [vmem:[%s336] sm:$0xf] %v341
      %vm343 = vcmask 57344
      %vm344 = vsmask.f32 256
      %vm345 = vmand %vm343, %vm344
      %v346 = vld [vmem:[%s336 + $0x4] sm:$0x1]
      %v347 = vsel %vm345, %v263, %v346
      %348 = vst [vmem:[%s336 + $0x4] sm:$0x1] %v347
      %v349 = vld [vmem:[%s336 + $0x8] sm:$0xf]
      %v350 = vsel %vm339, %v270, %v349
      %351 = vst [vmem:[%s336 + $0x8] sm:$0xf] %v350
      %v352 = vld [vmem:[%s336 + $0xc] sm:$0x1]
      %v353 = vsel %vm345, %v271, %v352
      %354 = vst [vmem:[%s336 + $0xc] sm:$0x1] %v353
      %v355 = vld [vmem:[%s336 + $0x10] sm:$0xf]
      %v356 = vsel %vm339, %v278, %v355
      %357 = vst [vmem:[%s336 + $0x10] sm:$0xf] %v356
      %v358 = vld [vmem:[%s336 + $0x14] sm:$0x1]
      %v359 = vsel %vm345, %v279, %v358
      %360 = vst [vmem:[%s336 + $0x14] sm:$0x1] %v359
      %v361 = vld [vmem:[%s336 + $0x18] sm:$0xf]
      %v362 = vsel %vm339, %v286, %v361
      %363 = vst [vmem:[%s336 + $0x18] sm:$0xf] %v362
      %v364 = vld [vmem:[%s336 + $0x1c] sm:$0x1]
      %v365 = vsel %vm345, %v287, %v364
      %366 = vst [vmem:[%s336 + $0x1c] sm:$0x1] %v365
      %v367 = vld [vmem:[%s336 + $0x20] sm:$0xf]
      %v368 = vsel %vm339, %v294, %v367
      %369 = vst [vmem:[%s336 + $0x20] sm:$0xf] %v368
      %v370 = vld [vmem:[%s336 + $0x24] sm:$0x1]
      %v371 = vsel %vm345, %v295, %v370
      %372 = vst [vmem:[%s336 + $0x24] sm:$0x1] %v371
      %v373 = vld [vmem:[%s336 + $0x28] sm:$0xf]
      %v374 = vsel %vm339, %v302, %v373
      %375 = vst [vmem:[%s336 + $0x28] sm:$0xf] %v374
      %v376 = vld [vmem:[%s336 + $0x2c] sm:$0x1]
      %v377 = vsel %vm345, %v303, %v376
      %378 = vst [vmem:[%s336 + $0x2c] sm:$0x1] %v377
      %v379 = vld [vmem:[%s336 + $0x30] sm:$0xf]
      %v380 = vsel %vm339, %v310, %v379
      %381 = vst [vmem:[%s336 + $0x30] sm:$0xf] %v380
      %v382 = vld [vmem:[%s336 + $0x34] sm:$0x1]
      %v383 = vsel %vm345, %v311, %v382
      %384 = vst [vmem:[%s336 + $0x34] sm:$0x1] %v383
      %v385 = vld [vmem:[%s336 + $0x38] sm:$0xf]
      %v386 = vsel %vm339, %v318, %v385
      %387 = vst [vmem:[%s336 + $0x38] sm:$0xf] %v386
      %v388 = vld [vmem:[%s336 + $0x3c] sm:$0x1]
      %v389 = vsel %vm345, %v319, %v388
      %390 = vst [vmem:[%s336 + $0x3c] sm:$0x1] %v389
      %v391 = vld [vmem:[#allocation2] sm:$0xf]
      %v392 = vld [vmem:[#allocation2 + $0x4] sm:$0x1]
      %v393 = vld [vmem:[#allocation2 + $0x8] sm:$0xf]
      %v394 = vld [vmem:[#allocation2 + $0xc] sm:$0x1]
      %v395 = vld [vmem:[#allocation2 + $0x10] sm:$0xf]
      %v396 = vld [vmem:[#allocation2 + $0x14] sm:$0x1]
      %v397 = vld [vmem:[#allocation2 + $0x18] sm:$0xf]
      %v398 = vld [vmem:[#allocation2 + $0x1c] sm:$0x1]
      %v399 = vld [vmem:[#allocation2 + $0x20] sm:$0xf]
      %v400 = vld [vmem:[#allocation2 + $0x24] sm:$0x1]
      %v401 = vld [vmem:[#allocation2 + $0x28] sm:$0xf]
      %v402 = vld [vmem:[#allocation2 + $0x2c] sm:$0x1]
      %v403 = vld [vmem:[#allocation2 + $0x30] sm:$0xf]
      %v404 = vld [vmem:[#allocation2 + $0x34] sm:$0x1]
      %v405 = vld [vmem:[#allocation2 + $0x38] sm:$0xf]
      %v406 = vld [vmem:[#allocation2 + $0x3c] sm:$0x1]
      %v407 = vld [vmem:[#allocation2 + $0x40] sm:$0xf]
      %v408 = vld [vmem:[#allocation2 + $0x44] sm:$0x1]
      %v409 = vld [vmem:[#allocation2 + $0x48] sm:$0xf]
      %v410 = vld [vmem:[#allocation2 + $0x4c] sm:$0x1]
      %vm411 = vsmask.f32 3328
      %vm412 = vsmask.f32 7440
      %vm413 = vmor %vm411, %vm412
      %v415 = vshrl.u32 %v391, 16
      %v417 = vrot.slane %v415, 4
      %v418 = vshll.u32 %v391, 16
      %v420 = vrot.slane %v418, 5
      %v421 = vor.u32 %v417, %v420
      %v422 = vrot.slane %v421, 4
      %v424 = vshll.u32 %v392, 16
      %v426 = vrot.slane %v424, 5
      %v427 = vsel %vm413, %v422, %v426
      %v429 = vshrl.u32 %v393, 16
      %v431 = vrot.slane %v429, 4
      %v432 = vshll.u32 %v393, 16
      %v434 = vrot.slane %v432, 5
      %v435 = vor.u32 %v431, %v434
      %v436 = vrot.slane %v435, 4
      %v438 = vshll.u32 %v394, 16
      %v440 = vrot.slane %v438, 5
      %v441 = vsel %vm413, %v436, %v440
      %v443 = vshrl.u32 %v395, 16
      %v445 = vrot.slane %v443, 4
      %v446 = vshll.u32 %v395, 16
      %v448 = vrot.slane %v446, 5
      %v449 = vor.u32 %v445, %v448
      %v450 = vrot.slane %v449, 4
      %v452 = vshll.u32 %v396, 16
      %v454 = vrot.slane %v452, 5
      %v455 = vsel %vm413, %v450, %v454
      %v457 = vshrl.u32 %v397, 16
      %v459 = vrot.slane %v457, 4
      %v460 = vshll.u32 %v397, 16
      %v462 = vrot.slane %v460, 5
      %v463 = vor.u32 %v459, %v462
      %v464 = vrot.slane %v463, 4
      %v466 = vshll.u32 %v398, 16
      %v468 = vrot.slane %v466, 5
      %v469 = vsel %vm413, %v464, %v468
      %v471 = vshrl.u32 %v399, 16
      %v473 = vrot.slane %v471, 4
      %v474 = vshll.u32 %v399, 16
      %v476 = vrot.slane %v474, 5
      %v477 = vor.u32 %v473, %v476
      %v478 = vrot.slane %v477, 4
      %v480 = vshll.u32 %v400, 16
      %v482 = vrot.slane %v480, 5
      %v483 = vsel %vm413, %v478, %v482
      %v485 = vshrl.u32 %v401, 16
      %v487 = vrot.slane %v485, 4
      %v488 = vshll.u32 %v401, 16
      %v490 = vrot.slane %v488, 5
      %v491 = vor.u32 %v487, %v490
      %v492 = vrot.slane %v491, 4
      %v494 = vshll.u32 %v402, 16
      %v496 = vrot.slane %v494, 5
      %v497 = vsel %vm413, %v492, %v496
      %v499 = vshrl.u32 %v403, 16
      %v501 = vrot.slane %v499, 4
      %v502 = vshll.u32 %v403, 16
      %v504 = vrot.slane %v502, 5
      %v505 = vor.u32 %v501, %v504
      %v506 = vrot.slane %v505, 4
      %v508 = vshll.u32 %v404, 16
      %v510 = vrot.slane %v508, 5
      %v511 = vsel %vm413, %v506, %v510
      %v513 = vshrl.u32 %v405, 16
      %v515 = vrot.slane %v513, 4
      %v516 = vshll.u32 %v405, 16
      %v518 = vrot.slane %v516, 5
      %v519 = vor.u32 %v515, %v518
      %v520 = vrot.slane %v519, 4
      %v522 = vshll.u32 %v406, 16
      %v524 = vrot.slane %v522, 5
      %v525 = vsel %vm413, %v520, %v524
      %vm542 = vcmask 1042432
      %vm543 = vcmask 1046532
      %vm544 = vmor %vm542, %vm543
      %v545 = vrot.slane %v391, 5
      %v546 = vrot.slane %v545, 4
      %v547 = vrot.slane %v392, 5
      %v548 = vsel %vm544, %v546, %v547
      %v549 = vrot.slane %v393, 5
      %v550 = vrot.slane %v549, 4
      %v551 = vrot.slane %v394, 5
      %v552 = vsel %vm544, %v550, %v551
      %v553 = vrot.slane %v395, 5
      %v554 = vrot.slane %v553, 4
      %v555 = vrot.slane %v396, 5
      %v556 = vsel %vm544, %v554, %v555
      %v557 = vrot.slane %v397, 5
      %v558 = vrot.slane %v557, 4
      %v559 = vrot.slane %v398, 5
      %v560 = vsel %vm544, %v558, %v559
      %v561 = vrot.slane %v399, 5
      %v562 = vrot.slane %v561, 4
      %v563 = vrot.slane %v400, 5
      %v564 = vsel %vm544, %v562, %v563
      %v565 = vrot.slane %v401, 5
      %v566 = vrot.slane %v565, 4
      %v567 = vrot.slane %v402, 5
      %v568 = vsel %vm544, %v566, %v567
      %v569 = vrot.slane %v403, 5
      %v570 = vrot.slane %v569, 4
      %v571 = vrot.slane %v404, 5
      %v572 = vsel %vm544, %v570, %v571
      %v573 = vrot.slane %v405, 5
      %v574 = vrot.slane %v573, 4
      %v575 = vrot.slane %v406, 5
      %v576 = vsel %vm544, %v574, %v575
      %v578 = vshrl.u32 %v407, 16
      %v580 = vrot.slane %v578, 4
      %v581 = vshll.u32 %v407, 16
      %v583 = vrot.slane %v581, 5
      %v584 = vor.u32 %v580, %v583
      %v585 = vrot.slane %v584, 4
      %v587 = vshll.u32 %v408, 16
      %v589 = vrot.slane %v587, 5
      %v590 = vsel %vm413, %v585, %v589
      %v593 = vrot.slane %v407, 5
      %v594 = vrot.slane %v593, 4
      %v595 = vrot.slane %v408, 5
      %v596 = vsel %vm544, %v594, %v595
      %v598 = vshrl.u32 %v409, 16
      %v600 = vrot.slane %v598, 4
      %v601 = vshll.u32 %v409, 16
      %v603 = vrot.slane %v601, 5
      %v604 = vor.u32 %v600, %v603
      %v605 = vrot.slane %v604, 4
      %v607 = vshll.u32 %v410, 16
      %v609 = vrot.slane %v607, 5
      %v610 = vsel %vm413, %v605, %v609
      %v613 = vrot.slane %v409, 5
      %v614 = vrot.slane %v613, 4
      %v615 = vrot.slane %v410, 5
      %v616 = vsel %vm544, %v614, %v615
      %v617 = vunpack.c.l.b16 %v391
      %v618 = vunpack.c.l.b16 %v393
      %v619 = vunpack.c.l.b16 %v395
      %v620 = vunpack.c.l.b16 %v397
      %v621 = vunpack.c.l.b16 %v399
      %v622 = vunpack.c.l.b16 %v401
      %v623 = vunpack.c.l.b16 %v403
      %v624 = vunpack.c.l.b16 %v405
      %v625 = vpack.c.b16 %v618, %v617
      %v626 = vpack.c.b16 %v620, %v619
      %v627 = vpack.c.b16 %v622, %v621
      %v628 = vpack.c.b16 %v624, %v623
      %v629 = vunpack.c.l.b16 %v427
      %v630 = vunpack.c.l.b16 %v441
      %v631 = vunpack.c.l.b16 %v455
      %v632 = vunpack.c.l.b16 %v469
      %v633 = vunpack.c.l.b16 %v483
      %v634 = vunpack.c.l.b16 %v497
      %v635 = vunpack.c.l.b16 %v511
      %v636 = vunpack.c.l.b16 %v525
      %v637 = vpack.c.b16 %v630, %v629
      %v638 = vpack.c.b16 %v632, %v631
      %v639 = vpack.c.b16 %v634, %v633
      %v640 = vpack.c.b16 %v636, %v635
      %641 = vrot.lane.b32.xlu0 %v637, 16
      %v642 = vpop.permute.xlu0 %641
      %643 = vrot.lane.b32.xlu0 %v638, 16
      %v644 = vpop.permute.xlu0 %643
      %645 = vrot.lane.b32.xlu0 %v639, 16
      %v646 = vpop.permute.xlu0 %645
      %647 = vrot.lane.b32.xlu0 %v640, 16
      %v648 = vpop.permute.xlu0 %647
      %v649 = vunpack.c.l.b16 %v548
      %v650 = vunpack.c.l.b16 %v552
      %v651 = vunpack.c.l.b16 %v556
      %v652 = vunpack.c.l.b16 %v560
      %v653 = vunpack.c.l.b16 %v564
      %v654 = vunpack.c.l.b16 %v568
      %v655 = vunpack.c.l.b16 %v572
      %v656 = vunpack.c.l.b16 %v576
      %v657 = vpack.c.b16 %v650, %v649
      %v658 = vpack.c.b16 %v652, %v651
      %v659 = vpack.c.b16 %v654, %v653
      %v660 = vpack.c.b16 %v656, %v655
      %661 = vrot.lane.b32.xlu0 %v657, 32
      %v662 = vpop.permute.xlu0 %661
      %663 = vrot.lane.b32.xlu0 %v658, 32
      %v664 = vpop.permute.xlu0 %663
      %665 = vrot.lane.b32.xlu0 %v659, 32
      %v666 = vpop.permute.xlu0 %665
      %667 = vrot.lane.b32.xlu0 %v660, 32
      %v668 = vpop.permute.xlu0 %667
      %v669 = vunpack.c.l.b16 %v407
      %v670 = vpack.c.b16 %v619, %v618
      %v671 = vpack.c.b16 %v621, %v620
      %v672 = vpack.c.b16 %v623, %v622
      %v673 = vpack.c.b16 %v669, %v624
      %674 = vrot.lane.b32.xlu0 %v670, 48
      %v675 = vpop.permute.xlu0 %674
      %676 = vrot.lane.b32.xlu0 %v671, 48
      %v677 = vpop.permute.xlu0 %676
      %678 = vrot.lane.b32.xlu0 %v672, 48
      %v679 = vpop.permute.xlu0 %678
      %680 = vrot.lane.b32.xlu0 %v673, 48
      %v681 = vpop.permute.xlu0 %680
      %v682 = vunpack.c.l.b16 %v590
      %v683 = vpack.c.b16 %v631, %v630
      %v684 = vpack.c.b16 %v633, %v632
      %v685 = vpack.c.b16 %v635, %v634
      %v686 = vpack.c.b16 %v682, %v636
      %687 = vrot.lane.b32.xlu0 %v683, 64
      %v688 = vpop.permute.xlu0 %687
      %689 = vrot.lane.b32.xlu0 %v684, 64
      %v690 = vpop.permute.xlu0 %689
      %691 = vrot.lane.b32.xlu0 %v685, 64
      %v692 = vpop.permute.xlu0 %691
      %693 = vrot.lane.b32.xlu0 %v686, 64
      %v694 = vpop.permute.xlu0 %693
      %v695 = vunpack.c.l.b16 %v596
      %v696 = vpack.c.b16 %v651, %v650
      %v697 = vpack.c.b16 %v653, %v652
      %v698 = vpack.c.b16 %v655, %v654
      %v699 = vpack.c.b16 %v695, %v656
      %700 = vrot.lane.b32.xlu0 %v696, 80
      %v701 = vpop.permute.xlu0 %700
      %702 = vrot.lane.b32.xlu0 %v697, 80
      %v703 = vpop.permute.xlu0 %702
      %704 = vrot.lane.b32.xlu0 %v698, 80
      %v705 = vpop.permute.xlu0 %704
      %706 = vrot.lane.b32.xlu0 %v699, 80
      %v707 = vpop.permute.xlu0 %706
      %v708 = vunpack.c.l.b16 %v409
      %v709 = vpack.c.b16 %v708, %v669
      %710 = vrot.lane.b32.xlu0 %v626, 96
      %v711 = vpop.permute.xlu0 %710
      %712 = vrot.lane.b32.xlu0 %v627, 96
      %v713 = vpop.permute.xlu0 %712
      %714 = vrot.lane.b32.xlu0 %v628, 96
      %v715 = vpop.permute.xlu0 %714
      %716 = vrot.lane.b32.xlu0 %v709, 96
      %v717 = vpop.permute.xlu0 %716
      %v718 = vunpack.c.l.b16 %v610
      %v719 = vpack.c.b16 %v718, %v682
      %720 = vrot.lane.b32.xlu0 %v638, 112
      %v721 = vpop.permute.xlu0 %720
      %722 = vrot.lane.b32.xlu0 %v639, 112
      %v723 = vpop.permute.xlu0 %722
      %724 = vrot.lane.b32.xlu0 %v640, 112
      %v725 = vpop.permute.xlu0 %724
      %726 = vrot.lane.b32.xlu0 %v719, 112
      %v727 = vpop.permute.xlu0 %726
      %v728 = vunpack.c.l.b16 %v616
      %v729 = vpack.c.b16 %v728, %v695
      %vm730 = vcmask 130048
      %v733 = vsel %vm730, %v625, %v642
      %v736 = vsel %vm730, %v626, %v644
      %v739 = vsel %vm730, %v627, %v646
      %v742 = vsel %vm730, %v628, %v648
      %vm743 = vcmask 261120
      %v745 = vsel %vm743, %v733, %v662
      %v747 = vsel %vm743, %v736, %v664
      %v749 = vsel %vm743, %v739, %v666
      %v751 = vsel %vm743, %v742, %v668
      %vm752 = vcmask 392192
      %v754 = vsel %vm752, %v745, %v675
      %v756 = vsel %vm752, %v747, %v677
      %v758 = vsel %vm752, %v749, %v679
      %v760 = vsel %vm752, %v751, %v681
      %vm761 = vcmask 523264
      %v763 = vsel %vm761, %v754, %v688
      %v765 = vsel %vm761, %v756, %v690
      %v767 = vsel %vm761, %v758, %v692
      %v769 = vsel %vm761, %v760, %v694
      %vm770 = vcmask 654336
      %v772 = vsel %vm770, %v763, %v701
      %v774 = vsel %vm770, %v765, %v703
      %v776 = vsel %vm770, %v767, %v705
      %v778 = vsel %vm770, %v769, %v707
      %vm779 = vcmask 785408
      %v781 = vsel %vm779, %v772, %v711
      %v783 = vsel %vm779, %v774, %v713
      %v785 = vsel %vm779, %v776, %v715
      %v787 = vsel %vm779, %v778, %v717
      %vm788 = vcmask 916480
      %v790 = vsel %vm788, %v781, %v721
      %v793 = vsel %vm788, %v783, %v723
      %v796 = vsel %vm788, %v785, %v725
      %v799 = vsel %vm788, %v787, %v727
      %v801 = vld [vmem:[%s1] sm:$0xf]
      %v802 = vld [vmem:[%s1 + $0x4] sm:$0xf]
      %v803 = vld [vmem:[%s1 + $0x8] sm:$0xf]
      %v804 = vld [vmem:[%s1 + $0xc] sm:$0xf]
      %v805 = vld [vmem:[%s1 + $0x10] sm:$0xf]
      %v806 = vld [vmem:[%s1 + $0x14] sm:$0xf]
      %v807 = vld [vmem:[%s1 + $0x18] sm:$0xf]
      %v808 = vld [vmem:[%s1 + $0x1c] sm:$0xf]
      %v809 = vld [vmem:[%s1 + $0x20] sm:$0xf]
      %v810 = vld [vmem:[%s1 + $0x24] sm:$0xf]
      %v811 = vld [vmem:[%s1 + $0x28] sm:$0xf]
      %v812 = vld [vmem:[%s1 + $0x2c] sm:$0xf]
      %v813 = vld [vmem:[%s1 + $0x30] sm:$0xf]
      %v814 = vld [vmem:[%s1 + $0x34] sm:$0xf]
      %v815 = vld [vmem:[%s1 + $0x38] sm:$0xf]
      %v816 = vld [vmem:[%s1 + $0x3c] sm:$0xf]
      %v817 = vld [vmem:[%s1 + $0x40] sm:$0xf]
      %v818 = vld [vmem:[%s1 + $0x44] sm:$0xf]
      %v819 = vld [vmem:[%s2] sm:$0x1]
      %v821 = vlaneseq
      %v822 = vshrl.u32 %v821, 7
      %v823 = vsub.s32 0, %v822
      %v824 = vrot.slane %v819, %v823
      %v844 = vunpack.c.l.b16 %v801
      %v845 = vunpack.c.l.b16 %v802
      %v846 = vunpack.c.l.b16 %v803
      %v847 = vunpack.c.l.b16 %v804
      %v848 = vunpack.c.l.b16 %v805
      %v849 = vunpack.c.l.b16 %v806
      %v850 = vunpack.c.l.b16 %v807
      %v851 = vunpack.c.l.b16 %v808
      %v852 = vunpack.c.l.b16 %v809
      %v853 = vunpack.c.l.b16 %v810
      %v854 = vunpack.c.l.b16 %v811
      %v855 = vunpack.c.l.b16 %v812
      %v856 = vunpack.c.l.b16 %v813
      %v857 = vunpack.c.l.b16 %v814
      %v858 = vunpack.c.l.b16 %v815
      %v859 = vunpack.c.l.b16 %v816
      %v860 = vunpack.c.l.b16 %v817
      %v861 = vunpack.c.l.b16 %v818
      %v862 = vpack.c.b16 %v845, %v844
      %v863 = vpack.c.b16 %v847, %v846
      %v864 = vpack.c.b16 %v849, %v848
      %v865 = vpack.c.b16 %v851, %v850
      %v866 = vpack.c.b16 %v853, %v852
      %v867 = vpack.c.b16 %v855, %v854
      %v868 = vpack.c.b16 %v857, %v856
      %v869 = vpack.c.b16 %v859, %v858
      %v870 = vpack.c.b16 %v861, %v860
      %v881 = vsel %vm730, %v658, 0
      %v884 = vsel %vm730, %v659, 0
      %v887 = vsel %vm730, %v660, 0
      %v890 = vsel %vm730, %v729, 0
      %892 = vmatprep.subr.bf16.mxu0 0
      %893 = vmatpush1.bf16.msra.mxu0 %v869
      %894 = vmatprep.subr.bf16.mxu0 0
      %895 = vmatpush1.bf16.msra.mxu0 %v868
      %896 = vmatprep.subr.bf16.mxu0 0
      %897 = vmatpush1.bf16.msra.mxu0 %v867
      %898 = vmatprep.subr.bf16.mxu0 0
      %899 = vmatpush1.bf16.msra.mxu0 %v866
      %900 = vmatprep.subr.bf16.mxu0 0
      %901 = vmatpush1.bf16.msra.mxu0 %v865
      %902 = vmatprep.subr.bf16.mxu0 0
      %903 = vmatpush1.bf16.msra.mxu0 %v864
      %904 = vmatprep.subr.bf16.mxu0 0
      %905 = vmatpush1.bf16.msra.mxu0 %v863
      %906 = vmatprep.subr.bf16.mxu0 0
      %907 = vmatpush1.bf16.msra.mxu0 %v862
      %908 = vmatprep.subr.bf16.mxu0 0
      %909 = vmatpush2.bf16.msra.mxu0 0
      %910 = vmatprep.subr.bf16.mxu0 0
      %911 = vmatpush2.bf16.msra.mxu0 0
      %912 = vmatprep.subr.bf16.mxu0 0
      %913 = vmatpush2.bf16.msra.mxu0 0
      %914 = vmatprep.subr.bf16.mxu0 0
      %915 = vmatpush2.bf16.msra.mxu0 0
      %916 = vmatprep.subr.bf16.mxu0 0
      %917 = vmatpush2.bf16.msra.mxu0 0
      %918 = vmatprep.subr.bf16.mxu0 0
      %919 = vmatpush2.bf16.msra.mxu0 0
      %920 = vmatprep.subr.bf16.mxu0 0
      %921 = vmatpush2.bf16.msra.mxu0 0
      %922 = vmatprep.subr.bf16.mxu0 0
      %923 = vmatpush2.bf16.msra.mxu0 %v870
      %924 = vmatprep.mubr.bf16.mxu0 %v881
      %925 = vmatmul.mubr.bf16.gmra.mxu0 %v790
      %v926 = vpop.f32.mrf.mxu0
      %v927 = vadd.f32 %v824, %v926
      %v928 = vpop.f32.mrf.mxu0
      %v929 = vpop.f32.mrf.mxu0
      %v930 = vadd.f32 %v824, %v929
      %v931 = vpop.f32.mrf.mxu0
      %932 = vmatprep.mubr.bf16.mxu0 %v884
      %933 = vmatmul.mubr.bf16.gmra.mxu0 %v793
      %v934 = vpop.f32.mrf.mxu0
      %v935 = vadd.f32 %v824, %v934
      %v936 = vpop.f32.mrf.mxu0
      %v937 = vpop.f32.mrf.mxu0
      %v938 = vadd.f32 %v824, %v937
      %v939 = vpop.f32.mrf.mxu0
      %940 = vmatprep.mubr.bf16.mxu0 %v887
      %941 = vmatmul.mubr.bf16.gmra.mxu0 %v796
      %v942 = vpop.f32.mrf.mxu0
      %v943 = vadd.f32 %v824, %v942
      %v944 = vpop.f32.mrf.mxu0
      %v945 = vpop.f32.mrf.mxu0
      %v946 = vadd.f32 %v824, %v945
      %v947 = vpop.f32.mrf.mxu0
      %948 = vmatprep.mubr.bf16.mxu0 %v890
      %949 = vmatmul.mubr.bf16.gmra.mxu0 %v799
      %v950 = vpop.f32.mrf.mxu0
      %v951 = vadd.f32 %v824, %v950
      %v952 = vpop.f32.mrf.mxu0
      %v953 = vpop.f32.mrf.mxu0
      %v954 = vadd.f32 %v824, %v953
      %v955 = vpop.f32.mrf.mxu0
      %956 = vdwg.mxu0
      %v957 = vmax.f32 %v927, 0.0
      %v958 = vmax.f32 %v930, 0.0
      %v959 = vmax.f32 %v935, 0.0
      %v960 = vmax.f32 %v938, 0.0
      %v961 = vmax.f32 %v943, 0.0
      %v962 = vmax.f32 %v946, 0.0
      %v963 = vmax.f32 %v951, 0.0
      %v964 = vmax.f32 %v954, 0.0
      %v965 = vpack.c.bf16 %v957, %v957
      %v966 = vpack.c.bf16 %v958, %v958
      %v967 = vpack.c.bf16 %v959, %v959
      %v968 = vpack.c.bf16 %v960, %v960
      %v969 = vpack.c.bf16 %v961, %v961
      %v970 = vpack.c.bf16 %v962, %v962
      %v971 = vpack.c.bf16 %v963, %v963
      %v972 = vpack.c.bf16 %v964, %v964
      %v981 = vunpack.c.l.b16 %v965
      %v982 = vunpack.c.l.b16 %v966
      %v983 = vunpack.c.l.b16 %v967
      %v984 = vunpack.c.l.b16 %v968
      %v985 = vunpack.c.l.b16 %v969
      %v986 = vunpack.c.l.b16 %v970
      %v987 = vunpack.c.l.b16 %v971
      %v988 = vunpack.c.l.b16 %v972
      %v989 = vpack.c.b16 %v981, %v981
      %v990 = vpack.c.b16 %v982, %v982
      %v991 = vpack.c.b16 %v983, %v983
      %v992 = vpack.c.b16 %v984, %v984
      %v993 = vpack.c.b16 %v985, %v985
      %v994 = vpack.c.b16 %v986, %v986
      %v995 = vpack.c.b16 %v987, %v987
      %v996 = vpack.c.b16 %v988, %v988
      %v998 = vshrl.u32 %v989, 16
      %v1000 = vrot.slane %v998, 7
      %v1001 = vshll.u32 %v989, 16
      %v1003 = vor.u32 %v1000, %v1001
      %v1004 = vrot.slane %v1000, 4
      %v1006 = vshrl.u32 %v990, 16
      %v1008 = vrot.slane %v1006, 7
      %v1009 = vshll.u32 %v990, 16
      %v1011 = vor.u32 %v1008, %v1009
      %v1012 = vrot.slane %v1008, 4
      %v1014 = vshrl.u32 %v991, 16
      %v1016 = vrot.slane %v1014, 7
      %v1017 = vshll.u32 %v991, 16
      %v1019 = vor.u32 %v1016, %v1017
      %v1020 = vrot.slane %v1016, 4
      %v1022 = vshrl.u32 %v992, 16
      %v1024 = vrot.slane %v1022, 7
      %v1025 = vshll.u32 %v992, 16
      %v1027 = vor.u32 %v1024, %v1025
      %v1028 = vrot.slane %v1024, 4
      %v1030 = vshrl.u32 %v993, 16
      %v1032 = vrot.slane %v1030, 7
      %v1033 = vshll.u32 %v993, 16
      %v1035 = vor.u32 %v1032, %v1033
      %v1036 = vrot.slane %v1032, 4
      %v1038 = vshrl.u32 %v994, 16
      %v1040 = vrot.slane %v1038, 7
      %v1041 = vshll.u32 %v994, 16
      %v1043 = vor.u32 %v1040, %v1041
      %v1044 = vrot.slane %v1040, 4
      %v1046 = vshrl.u32 %v995, 16
      %v1048 = vrot.slane %v1046, 7
      %v1049 = vshll.u32 %v995, 16
      %v1051 = vor.u32 %v1048, %v1049
      %v1052 = vrot.slane %v1048, 4
      %v1054 = vshrl.u32 %v996, 16
      %v1056 = vrot.slane %v1054, 7
      %v1057 = vshll.u32 %v996, 16
      %v1059 = vor.u32 %v1056, %v1057
      %v1060 = vrot.slane %v1056, 4
      %vm1077 = vcmask 125952
      %vm1078 = vmand %vm1077, %vm338
      %v1079 = vld [vmem:[%s336] sm:$0xf]
      %v1080 = vsel %vm1078, %v1003, %v1079
      %1081 = vst [vmem:[%s336] sm:$0xf] %v1080
      %vm1082 = vcmask 122880
      %vm1083 = vmand %vm1082, %vm344
      %v1084 = vld [vmem:[%s336 + $0x4] sm:$0x1]
      %v1085 = vsel %vm1083, %v1004, %v1084
      %1086 = vst [vmem:[%s336 + $0x4] sm:$0x1] %v1085
      %v1087 = vld [vmem:[%s336 + $0x8] sm:$0xf]
      %v1088 = vsel %vm1078, %v1011, %v1087
      %1089 = vst [vmem:[%s336 + $0x8] sm:$0xf] %v1088
      %v1090 = vld [vmem:[%s336 + $0xc] sm:$0x1]
      %v1091 = vsel %vm1083, %v1012, %v1090
      %1092 = vst [vmem:[%s336 + $0xc] sm:$0x1] %v1091
      %v1093 = vld [vmem:[%s336 + $0x10] sm:$0xf]
      %v1094 = vsel %vm1078, %v1019, %v1093
      %1095 = vst [vmem:[%s336 + $0x10] sm:$0xf] %v1094
      %v1096 = vld [vmem:[%s336 + $0x14] sm:$0x1]
      %v1097 = vsel %vm1083, %v1020, %v1096
      %1098 = vst [vmem:[%s336 + $0x14] sm:$0x1] %v1097
      %v1099 = vld [vmem:[%s336 + $0x18] sm:$0xf]
      %v1100 = vsel %vm1078, %v1027, %v1099
      %1101 = vst [vmem:[%s336 + $0x18] sm:$0xf] %v1100
      %v1102 = vld [vmem:[%s336 + $0x1c] sm:$0x1]
      %v1103 = vsel %vm1083, %v1028, %v1102
      %1104 = vst [vmem:[%s336 + $0x1c] sm:$0x1] %v1103
      %v1105 = vld [vmem:[%s336 + $0x20] sm:$0xf]
      %v1106 = vsel %vm1078, %v1035, %v1105
      %1107 = vst [vmem:[%s336 + $0x20] sm:$0xf] %v1106
      %v1108 = vld [vmem:[%s336 + $0x24] sm:$0x1]
      %v1109 = vsel %vm1083, %v1036, %v1108
      %1110 = vst [vmem:[%s336 + $0x24] sm:$0x1] %v1109
      %v1111 = vld [vmem:[%s336 + $0x28] sm:$0xf]
      %v1112 = vsel %vm1078, %v1043, %v1111
      %1113 = vst [vmem:[%s336 + $0x28] sm:$0xf] %v1112
      %v1114 = vld [vmem:[%s336 + $0x2c] sm:$0x1]
      %v1115 = vsel %vm1083, %v1044, %v1114
      %1116 = vst [vmem:[%s336 + $0x2c] sm:$0x1] %v1115
      %v1117 = vld [vmem:[%s336 + $0x30] sm:$0xf]
      %v1118 = vsel %vm1078, %v1051, %v1117
      %1119 = vst [vmem:[%s336 + $0x30] sm:$0xf] %v1118
      %v1120 = vld [vmem:[%s336 + $0x34] sm:$0x1]
      %v1121 = vsel %vm1083, %v1052, %v1120
      %1122 = vst [vmem:[%s336 + $0x34] sm:$0x1] %v1121
      %v1123 = vld [vmem:[%s336 + $0x38] sm:$0xf]
      %v1124 = vsel %vm1078, %v1059, %v1123
      %1125 = vst [vmem:[%s336 + $0x38] sm:$0xf] %v1124
      %v1126 = vld [vmem:[%s336 + $0x3c] sm:$0x1]
      %v1127 = vsel %vm1083, %v1060, %v1126
      %1128 = vst [vmem:[%s336 + $0x3c] sm:$0x1] %v1127
      %v1129 = vld [vmem:[#allocation2] sm:$0xf]
      %v1130 = vld [vmem:[#allocation2 + $0x4] sm:$0x1]
      %v1131 = vld [vmem:[#allocation2 + $0x8] sm:$0xf]
      %v1132 = vld [vmem:[#allocation2 + $0xc] sm:$0x1]
      %v1133 = vld [vmem:[#allocation2 + $0x10] sm:$0xf]
      %v1134 = vld [vmem:[#allocation2 + $0x14] sm:$0x1]
      %v1135 = vld [vmem:[#allocation2 + $0x18] sm:$0xf]
      %v1136 = vld [vmem:[#allocation2 + $0x1c] sm:$0x1]
      %v1137 = vld [vmem:[#allocation2 + $0x20] sm:$0xf]
      %v1138 = vld [vmem:[#allocation2 + $0x24] sm:$0x1]
      %v1139 = vld [vmem:[#allocation2 + $0x28] sm:$0xf]
      %v1140 = vld [vmem:[#allocation2 + $0x2c] sm:$0x1]
      %v1141 = vld [vmem:[#allocation2 + $0x30] sm:$0xf]
      %v1142 = vld [vmem:[#allocation2 + $0x34] sm:$0x1]
      %v1143 = vld [vmem:[#allocation2 + $0x38] sm:$0xf]
      %v1144 = vld [vmem:[#allocation2 + $0x3c] sm:$0x1]
      %v1145 = vld [vmem:[#allocation2 + $0x40] sm:$0xf]
      %v1146 = vld [vmem:[#allocation2 + $0x44] sm:$0x1]
      %v1147 = vld [vmem:[#allocation2 + $0x48] sm:$0xf]
      %v1148 = vld [vmem:[#allocation2 + $0x4c] sm:$0x1]
      %v1150 = vshrl.u32 %v1129, 16
      %v1152 = vrot.slane %v1150, 4
      %v1153 = vshll.u32 %v1129, 16
      %v1155 = vrot.slane %v1153, 5
      %v1156 = vor.u32 %v1152, %v1155
      %v1157 = vrot.slane %v1156, 4
      %v1159 = vshll.u32 %v1130, 16
      %v1161 = vrot.slane %v1159, 5
      %v1162 = vsel %vm413, %v1157, %v1161
      %v1164 = vshrl.u32 %v1131, 16
      %v1166 = vrot.slane %v1164, 4
      %v1167 = vshll.u32 %v1131, 16
      %v1169 = vrot.slane %v1167, 5
      %v1170 = vor.u32 %v1166, %v1169
      %v1171 = vrot.slane %v1170, 4
      %v1173 = vshll.u32 %v1132, 16
      %v1175 = vrot.slane %v1173, 5
      %v1176 = vsel %vm413, %v1171, %v1175
      %v1178 = vshrl.u32 %v1133, 16
      %v1180 = vrot.slane %v1178, 4
      %v1181 = vshll.u32 %v1133, 16
      %v1183 = vrot.slane %v1181, 5
      %v1184 = vor.u32 %v1180, %v1183
      %v1185 = vrot.slane %v1184, 4
      %v1187 = vshll.u32 %v1134, 16
      %v1189 = vrot.slane %v1187, 5
      %v1190 = vsel %vm413, %v1185, %v1189
      %v1192 = vshrl.u32 %v1135, 16
      %v1194 = vrot.slane %v1192, 4
      %v1195 = vshll.u32 %v1135, 16
      %v1197 = vrot.slane %v1195, 5
      %v1198 = vor.u32 %v1194, %v1197
      %v1199 = vrot.slane %v1198, 4
      %v1201 = vshll.u32 %v1136, 16
      %v1203 = vrot.slane %v1201, 5
      %v1204 = vsel %vm413, %v1199, %v1203
      %v1206 = vshrl.u32 %v1137, 16
      %v1208 = vrot.slane %v1206, 4
      %v1209 = vshll.u32 %v1137, 16
      %v1211 = vrot.slane %v1209, 5
      %v1212 = vor.u32 %v1208, %v1211
      %v1213 = vrot.slane %v1212, 4
      %v1215 = vshll.u32 %v1138, 16
      %v1217 = vrot.slane %v1215, 5
      %v1218 = vsel %vm413, %v1213, %v1217
      %v1220 = vshrl.u32 %v1139, 16
      %v1222 = vrot.slane %v1220, 4
      %v1223 = vshll.u32 %v1139, 16
      %v1225 = vrot.slane %v1223, 5
      %v1226 = vor.u32 %v1222, %v1225
      %v1227 = vrot.slane %v1226, 4
      %v1229 = vshll.u32 %v1140, 16
      %v1231 = vrot.slane %v1229, 5
      %v1232 = vsel %vm413, %v1227, %v1231
      %v1234 = vshrl.u32 %v1141, 16
      %v1236 = vrot.slane %v1234, 4
      %v1237 = vshll.u32 %v1141, 16
      %v1239 = vrot.slane %v1237, 5
      %v1240 = vor.u32 %v1236, %v1239
      %v1241 = vrot.slane %v1240, 4
      %v1243 = vshll.u32 %v1142, 16
      %v1245 = vrot.slane %v1243, 5
      %v1246 = vsel %vm413, %v1241, %v1245
      %v1248 = vshrl.u32 %v1143, 16
      %v1250 = vrot.slane %v1248, 4
      %v1251 = vshll.u32 %v1143, 16
      %v1253 = vrot.slane %v1251, 5
      %v1254 = vor.u32 %v1250, %v1253
      %v1255 = vrot.slane %v1254, 4
      %v1257 = vshll.u32 %v1144, 16
      %v1259 = vrot.slane %v1257, 5
      %v1260 = vsel %vm413, %v1255, %v1259
      %v1277 = vrot.slane %v1129, 5
      %v1278 = vrot.slane %v1277, 4
      %v1279 = vrot.slane %v1130, 5
      %v1280 = vsel %vm544, %v1278, %v1279
      %v1281 = vrot.slane %v1131, 5
      %v1282 = vrot.slane %v1281, 4
      %v1283 = vrot.slane %v1132, 5
      %v1284 = vsel %vm544, %v1282, %v1283
      %v1285 = vrot.slane %v1133, 5
      %v1286 = vrot.slane %v1285, 4
      %v1287 = vrot.slane %v1134, 5
      %v1288 = vsel %vm544, %v1286, %v1287
      %v1289 = vrot.slane %v1135, 5
      %v1290 = vrot.slane %v1289, 4
      %v1291 = vrot.slane %v1136, 5
      %v1292 = vsel %vm544, %v1290, %v1291
      %v1293 = vrot.slane %v1137, 5
      %v1294 = vrot.slane %v1293, 4
      %v1295 = vrot.slane %v1138, 5
      %v1296 = vsel %vm544, %v1294, %v1295
      %v1297 = vrot.slane %v1139, 5
      %v1298 = vrot.slane %v1297, 4
      %v1299 = vrot.slane %v1140, 5
      %v1300 = vsel %vm544, %v1298, %v1299
      %v1301 = vrot.slane %v1141, 5
      %v1302 = vrot.slane %v1301, 4
      %v1303 = vrot.slane %v1142, 5
      %v1304 = vsel %vm544, %v1302, %v1303
      %v1305 = vrot.slane %v1143, 5
      %v1306 = vrot.slane %v1305, 4
      %v1307 = vrot.slane %v1144, 5
      %v1308 = vsel %vm544, %v1306, %v1307
      %v1310 = vshrl.u32 %v1145, 16
      %v1312 = vrot.slane %v1310, 4
      %v1313 = vshll.u32 %v1145, 16
      %v1315 = vrot.slane %v1313, 5
      %v1316 = vor.u32 %v1312, %v1315
      %v1317 = vrot.slane %v1316, 4
      %v1319 = vshll.u32 %v1146, 16
      %v1321 = vrot.slane %v1319, 5
      %v1322 = vsel %vm413, %v1317, %v1321
      %v1325 = vrot.slane %v1145, 5
      %v1326 = vrot.slane %v1325, 4
      %v1327 = vrot.slane %v1146, 5
      %v1328 = vsel %vm544, %v1326, %v1327
      %v1330 = vshrl.u32 %v1147, 16
      %v1332 = vrot.slane %v1330, 4
      %v1333 = vshll.u32 %v1147, 16
      %v1335 = vrot.slane %v1333, 5
      %v1336 = vor.u32 %v1332, %v1335
      %v1337 = vrot.slane %v1336, 4
      %v1339 = vshll.u32 %v1148, 16
      %v1341 = vrot.slane %v1339, 5
      %v1342 = vsel %vm413, %v1337, %v1341
      %v1345 = vrot.slane %v1147, 5
      %v1346 = vrot.slane %v1345, 4
      %v1347 = vrot.slane %v1148, 5
      %v1348 = vsel %vm544, %v1346, %v1347
      %v1349 = vunpack.c.l.b16 %v1129
      %v1350 = vunpack.c.l.b16 %v1131
      %v1351 = vunpack.c.l.b16 %v1133
      %v1352 = vunpack.c.l.b16 %v1135
      %v1353 = vunpack.c.l.b16 %v1137
      %v1354 = vunpack.c.l.b16 %v1139
      %v1355 = vunpack.c.l.b16 %v1141
      %v1356 = vunpack.c.l.b16 %v1143
      %v1357 = vpack.c.b16 %v1350, %v1349
      %v1358 = vpack.c.b16 %v1352, %v1351
      %v1359 = vpack.c.b16 %v1354, %v1353
      %v1360 = vpack.c.b16 %v1356, %v1355
      %v1361 = vunpack.c.l.b16 %v1162
      %v1362 = vunpack.c.l.b16 %v1176
      %v1363 = vunpack.c.l.b16 %v1190
      %v1364 = vunpack.c.l.b16 %v1204
      %v1365 = vunpack.c.l.b16 %v1218
      %v1366 = vunpack.c.l.b16 %v1232
      %v1367 = vunpack.c.l.b16 %v1246
      %v1368 = vunpack.c.l.b16 %v1260
      %v1369 = vpack.c.b16 %v1362, %v1361
      %v1370 = vpack.c.b16 %v1364, %v1363
      %v1371 = vpack.c.b16 %v1366, %v1365
      %v1372 = vpack.c.b16 %v1368, %v1367
      %1373 = vrot.lane.b32.xlu0 %v1369, 16
      %v1374 = vpop.permute.xlu0 %1373
      %1375 = vrot.lane.b32.xlu0 %v1370, 16
      %v1376 = vpop.permute.xlu0 %1375
      %1377 = vrot.lane.b32.xlu0 %v1371, 16
      %v1378 = vpop.permute.xlu0 %1377
      %1379 = vrot.lane.b32.xlu0 %v1372, 16
      %v1380 = vpop.permute.xlu0 %1379
      %v1381 = vunpack.c.l.b16 %v1280
      %v1382 = vunpack.c.l.b16 %v1284
      %v1383 = vunpack.c.l.b16 %v1288
      %v1384 = vunpack.c.l.b16 %v1292
      %v1385 = vunpack.c.l.b16 %v1296
      %v1386 = vunpack.c.l.b16 %v1300
      %v1387 = vunpack.c.l.b16 %v1304
      %v1388 = vunpack.c.l.b16 %v1308
      %v1389 = vpack.c.b16 %v1382, %v1381
      %v1390 = vpack.c.b16 %v1384, %v1383
      %v1391 = vpack.c.b16 %v1386, %v1385
      %v1392 = vpack.c.b16 %v1388, %v1387
      %1393 = vrot.lane.b32.xlu0 %v1389, 32
      %v1394 = vpop.permute.xlu0 %1393
      %1395 = vrot.lane.b32.xlu0 %v1390, 32
      %v1396 = vpop.permute.xlu0 %1395
      %1397 = vrot.lane.b32.xlu0 %v1391, 32
      %v1398 = vpop.permute.xlu0 %1397
      %1399 = vrot.lane.b32.xlu0 %v1392, 32
      %v1400 = vpop.permute.xlu0 %1399
      %v1401 = vunpack.c.l.b16 %v1145
      %v1402 = vpack.c.b16 %v1351, %v1350
      %v1403 = vpack.c.b16 %v1353, %v1352
      %v1404 = vpack.c.b16 %v1355, %v1354
      %v1405 = vpack.c.b16 %v1401, %v1356
      %1406 = vrot.lane.b32.xlu0 %v1402, 48
      %v1407 = vpop.permute.xlu0 %1406
      %1408 = vrot.lane.b32.xlu0 %v1403, 48
      %v1409 = vpop.permute.xlu0 %1408
      %1410 = vrot.lane.b32.xlu0 %v1404, 48
      %v1411 = vpop.permute.xlu0 %1410
      %1412 = vrot.lane.b32.xlu0 %v1405, 48
      %v1413 = vpop.permute.xlu0 %1412
      %v1414 = vunpack.c.l.b16 %v1322
      %v1415 = vpack.c.b16 %v1363, %v1362
      %v1416 = vpack.c.b16 %v1365, %v1364
      %v1417 = vpack.c.b16 %v1367, %v1366
      %v1418 = vpack.c.b16 %v1414, %v1368
      %1419 = vrot.lane.b32.xlu0 %v1415, 64
      %v1420 = vpop.permute.xlu0 %1419
      %1421 = vrot.lane.b32.xlu0 %v1416, 64
      %v1422 = vpop.permute.xlu0 %1421
      %1423 = vrot.lane.b32.xlu0 %v1417, 64
      %v1424 = vpop.permute.xlu0 %1423
      %1425 = vrot.lane.b32.xlu0 %v1418, 64
      %v1426 = vpop.permute.xlu0 %1425
      %v1427 = vunpack.c.l.b16 %v1328
      %v1428 = vpack.c.b16 %v1383, %v1382
      %v1429 = vpack.c.b16 %v1385, %v1384
      %v1430 = vpack.c.b16 %v1387, %v1386
      %v1431 = vpack.c.b16 %v1427, %v1388
      %1432 = vrot.lane.b32.xlu0 %v1428, 80
      %v1433 = vpop.permute.xlu0 %1432
      %1434 = vrot.lane.b32.xlu0 %v1429, 80
      %v1435 = vpop.permute.xlu0 %1434
      %1436 = vrot.lane.b32.xlu0 %v1430, 80
      %v1437 = vpop.permute.xlu0 %1436
      %1438 = vrot.lane.b32.xlu0 %v1431, 80
      %v1439 = vpop.permute.xlu0 %1438
      %v1440 = vunpack.c.l.b16 %v1147
      %v1441 = vpack.c.b16 %v1440, %v1401
      %1442 = vrot.lane.b32.xlu0 %v1358, 96
      %v1443 = vpop.permute.xlu0 %1442
      %1444 = vrot.lane.b32.xlu0 %v1359, 96
      %v1445 = vpop.permute.xlu0 %1444
      %1446 = vrot.lane.b32.xlu0 %v1360, 96
      %v1447 = vpop.permute.xlu0 %1446
      %1448 = vrot.lane.b32.xlu0 %v1441, 96
      %v1449 = vpop.permute.xlu0 %1448
      %v1450 = vunpack.c.l.b16 %v1342
      %v1451 = vpack.c.b16 %v1450, %v1414
      %1452 = vrot.lane.b32.xlu0 %v1370, 112
      %v1453 = vpop.permute.xlu0 %1452
      %1454 = vrot.lane.b32.xlu0 %v1371, 112
      %v1455 = vpop.permute.xlu0 %1454
      %1456 = vrot.lane.b32.xlu0 %v1372, 112
      %v1457 = vpop.permute.xlu0 %1456
      %1458 = vrot.lane.b32.xlu0 %v1451, 112
      %v1459 = vpop.permute.xlu0 %1458
      %v1460 = vunpack.c.l.b16 %v1348
      %v1461 = vpack.c.b16 %v1460, %v1427
      %v1464 = vsel %vm730, %v1357, %v1374
      %v1467 = vsel %vm730, %v1358, %v1376
      %v1470 = vsel %vm730, %v1359, %v1378
      %v1473 = vsel %vm730, %v1360, %v1380
      %v1475 = vsel %vm743, %v1464, %v1394
      %v1477 = vsel %vm743, %v1467, %v1396
      %v1479 = vsel %vm743, %v1470, %v1398
      %v1481 = vsel %vm743, %v1473, %v1400
      %v1483 = vsel %vm752, %v1475, %v1407
      %v1485 = vsel %vm752, %v1477, %v1409
      %v1487 = vsel %vm752, %v1479, %v1411
      %v1489 = vsel %vm752, %v1481, %v1413
      %v1491 = vsel %vm761, %v1483, %v1420
      %v1493 = vsel %vm761, %v1485, %v1422
      %v1495 = vsel %vm761, %v1487, %v1424
      %v1497 = vsel %vm761, %v1489, %v1426
      %v1499 = vsel %vm770, %v1491, %v1433
      %v1501 = vsel %vm770, %v1493, %v1435
      %v1503 = vsel %vm770, %v1495, %v1437
      %v1505 = vsel %vm770, %v1497, %v1439
      %v1507 = vsel %vm779, %v1499, %v1443
      %v1509 = vsel %vm779, %v1501, %v1445
      %v1511 = vsel %vm779, %v1503, %v1447
      %v1513 = vsel %vm779, %v1505, %v1449
      %v1515 = vsel %vm788, %v1507, %v1453
      %v1518 = vsel %vm788, %v1509, %v1455
      %v1521 = vsel %vm788, %v1511, %v1457
      %v1524 = vsel %vm788, %v1513, %v1459
      %v1526 = vld [vmem:[%s3] sm:$0xf]
      %v1527 = vld [vmem:[%s3 + $0x4] sm:$0xf]
      %v1528 = vld [vmem:[%s3 + $0x8] sm:$0xf]
      %v1529 = vld [vmem:[%s3 + $0xc] sm:$0xf]
      %v1530 = vld [vmem:[%s3 + $0x10] sm:$0xf]
      %v1531 = vld [vmem:[%s3 + $0x14] sm:$0xf]
      %v1532 = vld [vmem:[%s3 + $0x18] sm:$0xf]
      %v1533 = vld [vmem:[%s3 + $0x1c] sm:$0xf]
      %v1534 = vld [vmem:[%s3 + $0x20] sm:$0xf]
      %v1535 = vld [vmem:[%s3 + $0x24] sm:$0xf]
      %v1536 = vld [vmem:[%s3 + $0x28] sm:$0xf]
      %v1537 = vld [vmem:[%s3 + $0x2c] sm:$0xf]
      %v1538 = vld [vmem:[%s3 + $0x30] sm:$0xf]
      %v1539 = vld [vmem:[%s3 + $0x34] sm:$0xf]
      %v1540 = vld [vmem:[%s3 + $0x38] sm:$0xf]
      %v1541 = vld [vmem:[%s3 + $0x3c] sm:$0xf]
      %v1542 = vld [vmem:[%s3 + $0x40] sm:$0xf]
      %v1543 = vld [vmem:[%s3 + $0x44] sm:$0xf]
      %v1544 = vld [vmem:[%s4] sm:$0x1]
      %v1546 = vlaneseq
      %v1547 = vshrl.u32 %v1546, 7
      %v1548 = vsub.s32 0, %v1547
      %v1549 = vrot.slane %v1544, %v1548
      %v1569 = vunpack.c.l.b16 %v1526
      %v1570 = vunpack.c.l.b16 %v1527
      %v1571 = vunpack.c.l.b16 %v1528
      %v1572 = vunpack.c.l.b16 %v1529
      %v1573 = vunpack.c.l.b16 %v1530
      %v1574 = vunpack.c.l.b16 %v1531
      %v1575 = vunpack.c.l.b16 %v1532
      %v1576 = vunpack.c.l.b16 %v1533
      %v1577 = vunpack.c.l.b16 %v1534
      %v1578 = vunpack.c.l.b16 %v1535
      %v1579 = vunpack.c.l.b16 %v1536
      %v1580 = vunpack.c.l.b16 %v1537
      %v1581 = vunpack.c.l.b16 %v1538
      %v1582 = vunpack.c.l.b16 %v1539
      %v1583 = vunpack.c.l.b16 %v1540
      %v1584 = vunpack.c.l.b16 %v1541
      %v1585 = vunpack.c.l.b16 %v1542
      %v1586 = vunpack.c.l.b16 %v1543
      %v1587 = vpack.c.b16 %v1570, %v1569
      %v1588 = vpack.c.b16 %v1572, %v1571
      %v1589 = vpack.c.b16 %v1574, %v1573
      %v1590 = vpack.c.b16 %v1576, %v1575
      %v1591 = vpack.c.b16 %v1578, %v1577
      %v1592 = vpack.c.b16 %v1580, %v1579
      %v1593 = vpack.c.b16 %v1582, %v1581
      %v1594 = vpack.c.b16 %v1584, %v1583
      %v1595 = vpack.c.b16 %v1586, %v1585
      %v1606 = vsel %vm730, %v1390, 0
      %v1609 = vsel %vm730, %v1391, 0
      %v1612 = vsel %vm730, %v1392, 0
      %v1615 = vsel %vm730, %v1461, 0
      %1617 = vmatprep.subr.bf16.mxu0 0
      %1618 = vmatpush1.bf16.msra.mxu0 %v1594
      %1619 = vmatprep.subr.bf16.mxu0 0
      %1620 = vmatpush1.bf16.msra.mxu0 %v1593
      %1621 = vmatprep.subr.bf16.mxu0 0
      %1622 = vmatpush1.bf16.msra.mxu0 %v1592
      %1623 = vmatprep.subr.bf16.mxu0 0
      %1624 = vmatpush1.bf16.msra.mxu0 %v1591
      %1625 = vmatprep.subr.bf16.mxu0 0
      %1626 = vmatpush1.bf16.msra.mxu0 %v1590
      %1627 = vmatprep.subr.bf16.mxu0 0
      %1628 = vmatpush1.bf16.msra.mxu0 %v1589
      %1629 = vmatprep.subr.bf16.mxu0 0
      %1630 = vmatpush1.bf16.msra.mxu0 %v1588
      %1631 = vmatprep.subr.bf16.mxu0 0
      %1632 = vmatpush1.bf16.msra.mxu0 %v1587
      %1633 = vmatprep.subr.bf16.mxu0 0
      %1634 = vmatpush2.bf16.msra.mxu0 0
      %1635 = vmatprep.subr.bf16.mxu0 0
      %1636 = vmatpush2.bf16.msra.mxu0 0
      %1637 = vmatprep.subr.bf16.mxu0 0
      %1638 = vmatpush2.bf16.msra.mxu0 0
      %1639 = vmatprep.subr.bf16.mxu0 0
      %1640 = vmatpush2.bf16.msra.mxu0 0
      %1641 = vmatprep.subr.bf16.mxu0 0
      %1642 = vmatpush2.bf16.msra.mxu0 0
      %1643 = vmatprep.subr.bf16.mxu0 0
      %1644 = vmatpush2.bf16.msra.mxu0 0
      %1645 = vmatprep.subr.bf16.mxu0 0
      %1646 = vmatpush2.bf16.msra.mxu0 0
      %1647 = vmatprep.subr.bf16.mxu0 0
      %1648 = vmatpush2.bf16.msra.mxu0 %v1595
      %1649 = vmatprep.mubr.bf16.mxu0 %v1606
      %1650 = vmatmul.mubr.bf16.gmra.mxu0 %v1515
      %v1651 = vpop.f32.mrf.mxu0
      %v1652 = vadd.f32 %v1549, %v1651
      %v1653 = vpop.f32.mrf.mxu0
      %v1654 = vpop.f32.mrf.mxu0
      %v1655 = vadd.f32 %v1549, %v1654
      %v1656 = vpop.f32.mrf.mxu0
      %1657 = vmatprep.mubr.bf16.mxu0 %v1609
      %1658 = vmatmul.mubr.bf16.gmra.mxu0 %v1518
      %v1659 = vpop.f32.mrf.mxu0
      %v1660 = vadd.f32 %v1549, %v1659
      %v1661 = vpop.f32.mrf.mxu0
      %v1662 = vpop.f32.mrf.mxu0
      %v1663 = vadd.f32 %v1549, %v1662
      %v1664 = vpop.f32.mrf.mxu0
      %1665 = vmatprep.mubr.bf16.mxu0 %v1612
      %1666 = vmatmul.mubr.bf16.gmra.mxu0 %v1521
      %v1667 = vpop.f32.mrf.mxu0
      %v1668 = vadd.f32 %v1549, %v1667
      %v1669 = vpop.f32.mrf.mxu0
      %v1670 = vpop.f32.mrf.mxu0
      %v1671 = vadd.f32 %v1549, %v1670
      %v1672 = vpop.f32.mrf.mxu0
      %1673 = vmatprep.mubr.bf16.mxu0 %v1615
      %1674 = vmatmul.mubr.bf16.gmra.mxu0 %v1524
      %v1675 = vpop.f32.mrf.mxu0
      %v1676 = vadd.f32 %v1549, %v1675
      %v1677 = vpop.f32.mrf.mxu0
      %v1678 = vpop.f32.mrf.mxu0
      %v1679 = vadd.f32 %v1549, %v1678
      %v1680 = vpop.f32.mrf.mxu0
      %1681 = vdwg.mxu0
      %v1682 = vmax.f32 %v1652, 0.0
      %v1683 = vmax.f32 %v1655, 0.0
      %v1684 = vmax.f32 %v1660, 0.0
      %v1685 = vmax.f32 %v1663, 0.0
      %v1686 = vmax.f32 %v1668, 0.0
      %v1687 = vmax.f32 %v1671, 0.0
      %v1688 = vmax.f32 %v1676, 0.0
      %v1689 = vmax.f32 %v1679, 0.0
      %v1690 = vpack.c.bf16 %v1682, %v1682
      %v1691 = vpack.c.bf16 %v1683, %v1683
      %v1692 = vpack.c.bf16 %v1684, %v1684
      %v1693 = vpack.c.bf16 %v1685, %v1685
      %v1694 = vpack.c.bf16 %v1686, %v1686
      %v1695 = vpack.c.bf16 %v1687, %v1687
      %v1696 = vpack.c.bf16 %v1688, %v1688
      %v1697 = vpack.c.bf16 %v1689, %v1689
      %1698 = vst.msk [vmem:[%s224] sm:$0xf] %vm226, %v1690
      %1699 = vst.msk [vmem:[%s224 + $0x4] sm:$0xf] %vm226, %v1691
      %1700 = vst.msk [vmem:[%s224 + $0x8] sm:$0xf] %vm226, %v1692
      %1701 = vst.msk [vmem:[%s224 + $0xc] sm:$0xf] %vm226, %v1693
      %1702 = vst.msk [vmem:[%s224 + $0x10] sm:$0xf] %vm226, %v1694
      %1703 = vst.msk [vmem:[%s224 + $0x14] sm:$0xf] %vm226, %v1695
      %1704 = vst.msk [vmem:[%s224 + $0x18] sm:$0xf] %vm226, %v1696
      %1705 = vst.msk [vmem:[%s224 + $0x1c] sm:$0xf] %vm226, %v1697
      %p1706 = scmp.lt.s32.totalorder %s16, 1
      %s1707 = scalar_select %p1706, %s16, 1
      %s1708 = smul.addr %s1707, 8
      %s1709 = smul.addr %s1708, 4
      %s1710 = scalar_lea.vmem %s5, %s1709
      // Predicated region
      $region41: #{encoder_forward.3} parent=39 // pred_check
        %p1711 = pneg %p144
      $region42: #{encoder_forward.3} parent=39 // pred_check_branch
        %1713 = sbr.rel (%p1711) target = $region44
      $region43: #{encoder_forward.3} parent=39 // pred_region
        _
      $region44: #{encoder_forward.3} parent=39 // pred_fallthru
        _
    $region40: #{encoder_forward.3} parent=5 // pred_fallthru
      _
    %p1714 = scmp.le.s32.totalorder 2, %s11
    // Predicated region
    $region45: #{encoder_forward.3} parent=5 // pred_check
      %p1715 = pneg %p1714
    $region46: #{encoder_forward.3} parent=5 // pred_check_branch
      %1717 = sbr.rel (%p1715) target = $region48
    $region47: #{encoder_forward.3} parent=5 // pred_region
      %s1718 = ssub.s32 %s11, 2
      // Predicated region
      $region49: #{encoder_forward.3} parent=47 // pred_check
        %p1719 = pneg %p150
      $region50: #{encoder_forward.3} parent=47 // pred_check_branch
        %1721 = sbr.rel (%p1719) target = $region52
      $region51: #{encoder_forward.3} parent=47 // pred_region
        %p1722 = scmp.lt.s32.totalorder %s17, 1
        %s1723 = scalar_select %p1722, %s17, 1
        %s1724 = smul.addr %s1723, 8
        %s1725 = smul.addr %s1724, 4
        %s1726 = scalar_lea.vmem %s5, %s1725
      $region52: #{encoder_forward.3} parent=47 // pred_fallthru
        _
    $region48: #{encoder_forward.3} parent=5 // pred_fallthru
      _
  $region6: #{encoder_forward.3} parent=0 // loop_footer
    %s15 = sadd.s32 1, %s11
  $region7: #{encoder_forward.3} parent=0 // loop_footer_branch
    %10 = sbr.rel target = $region3
  $region8: #{encoder_forward.3} parent=0 // loop_exit
    _

// kernel: encoder_forward.2
$region0: #{encoder_forward.2}
  #allocation0 [shape = 'u32[]', space=smem, size = 0x4, offset = 0x4, fixed_abs, tag = 'smem constant byte address 0x4 - core index']
  #allocation1 [shape = 'u32[144,128]{1,0:T(1,128)}', space=vmem, size = 0x12000, scoped, tag = 'internal scratch']
  #allocation2 [shape = 'bf16[18,18,8]{2,1,0:T(8,128)(2,1)}', space=vmem, size = 0x1b000, scoped, tag = 'scratch operand']
  %s0 = inlined_call_operand.vmem [shape: bf16[2,16,16,4], index: 0, kind: input, shape index: {}]
  %s1 = inlined_call_operand.vmem [shape: bf16[72,8], index: 1, kind: input, shape index: {}]
  %s2 = inlined_call_operand.vmem [shape: f32[1,8], index: 2, kind: input, shape index: {}]
  %s3 = inlined_call_operand.vmem [shape: bf16[72,8], index: 3, kind: input, shape index: {}]
  %s4 = inlined_call_operand.vmem [shape: f32[1,8], index: 4, kind: input, shape index: {}]
  %s5 = inlined_call_operand.vmem [shape: bf16[2,8,8,8], index: 5, kind: output, shape index: {}]
  %s6 = sld [smem:[#allocation0]]
  $region53: #{encoder_forward.2} parent=0
    _
  %s8 = ssub.s32 1, %s6
  %s9 = scalar_select 0, %s8, %s6
  loop: start=0, step=1, limit=4
  $region2: #{encoder_forward.2} parent=0 // loop_pre_header
    _
  $region3: #{encoder_forward.2} parent=0 // loop_header
    %s11 = sphi 0, %s15
    %p12 = scmp.ge.s32.totalorder %s11, 4
    %s21 = sphi 0, %s23
    %s24 = sphi 0, %s21
    %s25 = sphi 0, %s24
    %s41 = sphi 0, %s25
    %s45 = sphi 0, %s45
    %s47 = sphi 0, %s45
    %s48 = sphi 0, %s47
    %s62 = sphi 0, %s48
    %s66 = sphi 0, %s66
    %s68 = sphi 0, %s66
    %s69 = sphi 0, %s68
    %s83 = sphi 0, %s69
    %s87 = sphi 0, %s87
    %s89 = sphi 0, %s87
    %s90 = sphi 0, %s89
    %s104 = sphi 0, %s90
    %s108 = sphi 0, %s108
    %s110 = sphi 0, %s108
    %s111 = sphi 0, %s110
    %s125 = sphi 0, %s111
    %s131 = sphi 0, %s133
    %s134 = sphi 0, %s131
    %s135 = sphi 0, %s134
    %s151 = sphi 0, %s135
  $region4: #{encoder_forward.2} parent=0 // loop_header_branch
    %14 = sbr.rel (%p12) target = $region8
  $region5: #{encoder_forward.2} parent=0 // loop_body
    %s16 = ssub.s32 %s11, 1
    %s17 = ssub.s32 %s11, 2
    %s18 = sadd.s32 %s11, 1
    %s19 = ssub.s32 %s11, %s18
    %p20 = scmp.eq.s32.totalorder %s19, 0
    %s22 = sadd.s32 %s21, 1
    %s23 = scalar_select %p20, %s21, %s22
    %p26 = pneg %p20
    %p27 = scmp.eq.s32.totalorder %s11, 1
    %p28 = por %p26, %p27
    %p29 = scmp.ne.s32.totalorder %s21, %s24
    %p30 = scmp.eq.s32.totalorder %s11, 0
    %p31 = por %p29, %p30
    %p32 = scmp.ne.s32.totalorder %s21, %s24
    %p33 = scmp.eq.s32.totalorder %s16, 1
    %p34 = por %p32, %p33
    %p35 = scmp.ne.s32.totalorder %s24, %s25
    %p36 = scmp.eq.s32.totalorder %s16, 0
    %p37 = por %p35, %p36
    %p38 = scmp.ne.s32.totalorder %s24, %s25
    %p39 = scmp.eq.s32.totalorder %s17, 1
    %p40 = por %p38, %p39
    %p42 = scmp.ne.s32.totalorder %s25, %s41
    %p43 = scmp.eq.s32.totalorder %s17, 0
    %p44 = por %p42, %p43
    %s46 = sadd.s32 %s45, 1
    %p49 = scmp.eq.s32.totalorder %s11, 1
    %p50 = scmp.ne.s32.totalorder %s45, %s47
    %p51 = scmp.eq.s32.totalorder %s11, 0
    %p52 = por %p50, %p51
    %p53 = scmp.ne.s32.totalorder %s45, %s47
    %p54 = scmp.eq.s32.totalorder %s16, 1
    %p55 = por %p53, %p54
    %p56 = scmp.ne.s32.totalorder %s47, %s48
    %p57 = scmp.eq.s32.totalorder %s16, 0
    %p58 = por %p56, %p57
    %p59 = scmp.ne.s32.totalorder %s47, %s48
    %p60 = scmp.eq.s32.totalorder %s17, 1
    %p61 = por %p59, %p60
    %p63 = scmp.ne.s32.totalorder %s48, %s62
    %p64 = scmp.eq.s32.totalorder %s17, 0
    %p65 = por %p63, %p64
    %s67 = sadd.s32 %s66, 1
    %p70 = scmp.eq.s32.totalorder %s11, 1
    %p71 = scmp.ne.s32.totalorder %s66, %s68
    %p72 = scmp.eq.s32.totalorder %s11, 0
    %p73 = por %p71, %p72
    %p74 = scmp.ne.s32.totalorder %s66, %s68
    %p75 = scmp.eq.s32.totalorder %s16, 1
    %p76 = por %p74, %p75
    %p77 = scmp.ne.s32.totalorder %s68, %s69
    %p78 = scmp.eq.s32.totalorder %s16, 0
    %p79 = por %p77, %p78
    %p80 = scmp.ne.s32.totalorder %s68, %s69
    %p81 = scmp.eq.s32.totalorder %s17, 1
    %p82 = por %p80, %p81
    %p84 = scmp.ne.s32.totalorder %s69, %s83
    %p85 = scmp.eq.s32.totalorder %s17, 0
    %p86 = por %p84, %p85
    %s88 = sadd.s32 %s87, 1
    %p91 = scmp.eq.s32.totalorder %s11, 1
    %p92 = scmp.ne.s32.totalorder %s87, %s89
    %p93 = scmp.eq.s32.totalorder %s11, 0
    %p94 = por %p92, %p93
    %p95 = scmp.ne.s32.totalorder %s87, %s89
    %p96 = scmp.eq.s32.totalorder %s16, 1
    %p97 = por %p95, %p96
    %p98 = scmp.ne.s32.totalorder %s89, %s90
    %p99 = scmp.eq.s32.totalorder %s16, 0
    %p100 = por %p98, %p99
    %p101 = scmp.ne.s32.totalorder %s89, %s90
    %p102 = scmp.eq.s32.totalorder %s17, 1
    %p103 = por %p101, %p102
    %p105 = scmp.ne.s32.totalorder %s90, %s104
    %p106 = scmp.eq.s32.totalorder %s17, 0
    %p107 = por %p105, %p106
    %s109 = sadd.s32 %s108, 1
    %p112 = scmp.eq.s32.totalorder %s11, 1
    %p113 = scmp.ne.s32.totalorder %s108, %s110
    %p114 = scmp.eq.s32.totalorder %s11, 0
    %p115 = por %p113, %p114
    %p116 = scmp.ne.s32.totalorder %s108, %s110
    %p117 = scmp.eq.s32.totalorder %s16, 1
    %p118 = por %p116, %p117
    %p119 = scmp.ne.s32.totalorder %s110, %s111
    %p120 = scmp.eq.s32.totalorder %s16, 0
    %p121 = por %p119, %p120
    %p122 = scmp.ne.s32.totalorder %s110, %s111
    %p123 = scmp.eq.s32.totalorder %s17, 1
    %p124 = por %p122, %p123
    %p126 = scmp.ne.s32.totalorder %s111, %s125
    %p127 = scmp.eq.s32.totalorder %s17, 0
    %p128 = por %p126, %p127
    %s129 = ssub.s32 %s11, %s18
    %p130 = scmp.eq.s32.totalorder %s129, 0
    %s132 = sadd.s32 %s131, 1
    %s133 = scalar_select %p130, %s131, %s132
    %p136 = pneg %p130
    %p137 = scmp.eq.s32.totalorder %s11, 1
    %p138 = por %p136, %p137
    %p139 = scmp.ne.s32.totalorder %s131, %s134
    %p140 = scmp.eq.s32.totalorder %s11, 0
    %p141 = por %p139, %p140
    %p142 = scmp.ne.s32.totalorder %s131, %s134
    %p143 = scmp.eq.s32.totalorder %s16, 1
    %p144 = por %p142, %p143
    %p145 = scmp.ne.s32.totalorder %s134, %s135
    %p146 = scmp.eq.s32.totalorder %s16, 0
    %p147 = por %p145, %p146
    %p148 = scmp.ne.s32.totalorder %s134, %s135
    %p149 = scmp.eq.s32.totalorder %s17, 1
    %p150 = por %p148, %p149
    %p152 = scmp.ne.s32.totalorder %s135, %s151
    %p153 = scmp.eq.s32.totalorder %s17, 0
    %p154 = por %p152, %p153
    %p155 = scmp.le.s32.totalorder 1, %s11
    %p156 = scmp.lt.s32.totalorder %s11, 3
    %p157 = pnand %p155, %p156
    %p158 = pneg %p157
    // Predicated region
    $region9: #{encoder_forward.2} parent=5 // pred_check
      _
    $region10: #{encoder_forward.2} parent=5 // pred_check_branch
      %160 = sbr.rel (%p157) target = $region12
    $region11: #{encoder_forward.2} parent=5 // pred_region
      %s161 = ssub.s32 %s11, 1
      // Predicated region
      $region13: #{encoder_forward.2} parent=11 // pred_check
        %p162 = pneg %p58
      $region14: #{encoder_forward.2} parent=11 // pred_check_branch
        %164 = sbr.rel (%p162) target = $region16
      $region15: #{encoder_forward.2} parent=11 // pred_region
        _
      $region16: #{encoder_forward.2} parent=11 // pred_fallthru
        _
      // Predicated region
      $region17: #{encoder_forward.2} parent=11 // pred_check
        %p165 = pneg %p79
      $region18: #{encoder_forward.2} parent=11 // pred_check_branch
        %167 = sbr.rel (%p165) target = $region20
      $region19: #{encoder_forward.2} parent=11 // pred_region
        _
      $region20: #{encoder_forward.2} parent=11 // pred_fallthru
        _
      // Predicated region
      $region21: #{encoder_forward.2} parent=11 // pred_check
        %p168 = pneg %p100
      $region22: #{encoder_forward.2} parent=11 // pred_check_branch
        %170 = sbr.rel (%p168) target = $region24
      $region23: #{encoder_forward.2} parent=11 // pred_region
        _
      $region24: #{encoder_forward.2} parent=11 // pred_fallthru
        _
      // Predicated region
      $region25: #{encoder_forward.2} parent=11 // pred_check
        %p171 = pneg %p121
      $region26: #{encoder_forward.2} parent=11 // pred_check_branch
        %173 = sbr.rel (%p171) target = $region28
      $region27: #{encoder_forward.2} parent=11 // pred_region
        _
      $region28: #{encoder_forward.2} parent=11 // pred_fallthru
        _
    $region12: #{encoder_forward.2} parent=5 // pred_fallthru
      _
    %p174 = scmp.lt.s32.totalorder %s11, 2
    // Predicated region
    $region29: #{encoder_forward.2} parent=5 // pred_check
      %p175 = pneg %p174
    $region30: #{encoder_forward.2} parent=5 // pred_check_branch
      %177 = sbr.rel (%p175) target = $region32
    $region31: #{encoder_forward.2} parent=5 // pred_region
      // Predicated region
      $region33: #{encoder_forward.2} parent=31 // pred_check
        %p178 = pneg %p31
      $region34: #{encoder_forward.2} parent=31 // pred_check_branch
        %180 = sbr.rel (%p178) target = $region36
      $region35: #{encoder_forward.2} parent=31 // pred_region
        %p181 = scmp.lt.s32.totalorder %s11, 1
        %s182 = scalar_select %p181, %s11, 1
        %s183 = smul.addr %s182, 32
        %s184 = smul.addr %s183, 4
        %s185 = scalar_lea.vmem %s0, %s184
      $region36: #{encoder_forward.2} parent=31 // pred_fallthru
        _
    $region32: #{encoder_forward.2} parent=5 // pred_fallthru
      _
    %p186 = scmp.le.s32.totalorder 1, %s11
    %p187 = scmp.lt.s32.totalorder %s11, 3
    %p188 = pnand %p186, %p187
    %p189 = pneg %p188
    // Predicated region
    $region37: #{encoder_forward.2} parent=5 // pred_check
      _
    $region38: #{encoder_forward.2} parent=5 // pred_check_branch
      %191 = sbr.rel (%p188) target = $region40
    $region39: #{encoder_forward.2} parent=5 // pred_region
      %s192 = ssub.s32 %s11, 1
      %p193 = scmp.lt.s32.totalorder %s16, 1
      %s194 = scalar_select %p193, %s16, 1
      %s195 = smul.addr %s194, 32
      %s196 = smul.addr %s195, 4
      %s197 = scalar_lea.vmem %s0, %s196
      %p198 = pneg %p37
      %p199 = pneg %p34
      %p200 = pneg %p58
      %p201 = pneg %p55
      %p202 = pneg %p79
      %p203 = pneg %p76
      %p204 = pneg %p100
      %p205 = pneg %p97
      %p206 = pneg %p121
      %p207 = pneg %p118
      %p208 = pneg %p147
      %p209 = pneg %p144
      %p210 = scmp.lt.s32.totalorder %s16, 1
      %s211 = scalar_select %p210, %s16, 1
      %s212 = smul.addr %s211, 8
      %s213 = smul.addr %s212, 4
      %s214 = scalar_lea.vmem %s5, %s213
      %p215 = scmp.lt.s32.totalorder %s16, 1
      %s216 = scalar_select %p215, %s16, 1
      %s217 = smul.addr %s216, 32
      %s218 = smul.addr %s217, 4
      %s219 = scalar_lea.vmem %s0, %s218
      %p220 = scmp.lt.s32.totalorder %s16, 1
      %s221 = scalar_select %p220, %s16, 1
      %s222 = smul.addr %s221, 8
      %s223 = smul.addr %s222, 4
      %s224 = scalar_lea.vmem %s5, %s223
      %vm226 = vcmask 60416
      %227 = vst.msk [vmem:[#allocation2] sm:$0xf] %vm226, 0
      %228 = vst.msk [vmem:[#allocation2 + $0x4] sm:$0xf] %vm226, 0
      %vm229 = vcmask 57344
      %230 = vst.msk [vmem:[#allocation2 + $0x8] sm:$0x1] %vm229, 0
      %231 = vst.msk [vmem:[#allocation2 + $0xc] sm:$0xf] %vm226, 0
      %232 = vst.msk [vmem:[#allocation2 + $0x10] sm:$0xf] %vm226, 0
      %233 = vst.msk [vmem:[#allocation2 + $0x14] sm:$0x1] %vm229, 0
      %234 = vst.msk [vmem:[#allocation2 + $0x18] sm:$0xf] %vm226, 0
      %235 = vst.msk [vmem:[#allocation2 + $0x1c] sm:$0xf] %vm226, 0
      %236 = vst.msk [vmem:[#allocation2 + $0x20] sm:$0x1] %vm229, 0
      %237 = vst.msk [vmem:[#allocation2 + $0x24] sm:$0xf] %vm226, 0
      %238 = vst.msk [vmem:[#allocation2 + $0x28] sm:$0xf] %vm226, 0
      %239 = vst.msk [vmem:[#allocation2 + $0x2c] sm:$0x1] %vm229, 0
      %240 = vst.msk [vmem:[#allocation2 + $0x30] sm:$0xf] %vm226, 0
      %241 = vst.msk [vmem:[#allocation2 + $0x34] sm:$0xf] %vm226, 0
      %242 = vst.msk [vmem:[#allocation2 + $0x38] sm:$0x1] %vm229, 0
      %243 = vst.msk [vmem:[#allocation2 + $0x3c] sm:$0xf] %vm226, 0
      %244 = vst.msk [vmem:[#allocation2 + $0x40] sm:$0xf] %vm226, 0
      %245 = vst.msk [vmem:[#allocation2 + $0x44] sm:$0x1] %vm229, 0
      %246 = vst.msk [vmem:[#allocation2 + $0x48] sm:$0xf] %vm226, 0
      %247 = vst.msk [vmem:[#allocation2 + $0x4c] sm:$0xf] %vm226, 0
      %248 = vst.msk [vmem:[#allocation2 + $0x50] sm:$0x1] %vm229, 0
      %249 = vst.msk [vmem:[#allocation2 + $0x54] sm:$0xf] %vm226, 0
      %250 = vst.msk [vmem:[#allocation2 + $0x58] sm:$0xf] %vm226, 0
      %251 = vst.msk [vmem:[#allocation2 + $0x5c] sm:$0x1] %vm229, 0
      %252 = vst.msk [vmem:[#allocation2 + $0x60] sm:$0xf] %vm226, 0
      %253 = vst.msk [vmem:[#allocation2 + $0x64] sm:$0xf] %vm226, 0
      %254 = vst.msk [vmem:[#allocation2 + $0x68] sm:$0x1] %vm229, 0
      %255 = vst.msk [vmem:[#allocation2 + $0x6c] sm:$0xf] %vm226, 0
      %256 = vst.msk [vmem:[#allocation2 + $0x70] sm:$0xf] %vm226, 0
      %257 = vst.msk [vmem:[#allocation2 + $0x74] sm:$0x1] %vm229, 0
      %258 = vst.msk [vmem:[#allocation2 + $0x78] sm:$0xf] %vm226, 0
      %259 = vst.msk [vmem:[#allocation2 + $0x7c] sm:$0xf] %vm226, 0
      %260 = vst.msk [vmem:[#allocation2 + $0x80] sm:$0x1] %vm229, 0
      %261 = vst.msk [vmem:[#allocation2 + $0x84] sm:$0xf] %vm226, 0
      %262 = vst.msk [vmem:[#allocation2 + $0x88] sm:$0xf] %vm226, 0
      %263 = vst.msk [vmem:[#allocation2 + $0x8c] sm:$0x1] %vm229, 0
      %264 = vst.msk [vmem:[#allocation2 + $0x90] sm:$0xf] %vm226, 0
      %265 = vst.msk [vmem:[#allocation2 + $0x94] sm:$0xf] %vm226, 0
      %266 = vst.msk [vmem:[#allocation2 + $0x98] sm:$0x1] %vm229, 0
      %267 = vst.msk [vmem:[#allocation2 + $0x9c] sm:$0xf] %vm226, 0
      %268 = vst.msk [vmem:[#allocation2 + $0xa0] sm:$0xf] %vm226, 0
      %269 = vst.msk [vmem:[#allocation2 + $0xa4] sm:$0x1] %vm229, 0
      %270 = vst.msk [vmem:[#allocation2 + $0xa8] sm:$0xf] %vm226, 0
      %271 = vst.msk [vmem:[#allocation2 + $0xac] sm:$0xf] %vm226, 0
      %272 = vst.msk [vmem:[#allocation2 + $0xb0] sm:$0x1] %vm229, 0
      %273 = vst.msk [vmem:[#allocation2 + $0xb4] sm:$0xf] %vm226, 0
      %274 = vst.msk [vmem:[#allocation2 + $0xb8] sm:$0xf] %vm226, 0
      %275 = vst.msk [vmem:[#allocation2 + $0xbc] sm:$0x1] %vm229, 0
      %276 = vst.msk [vmem:[#allocation2 + $0xc0] sm:$0xf] %vm226, 0
      %277 = vst.msk [vmem:[#allocation2 + $0xc4] sm:$0xf] %vm226, 0
      %278 = vst.msk [vmem:[#allocation2 + $0xc8] sm:$0x1] %vm229, 0
      %279 = vst.msk [vmem:[#allocation2 + $0xcc] sm:$0xf] %vm226, 0
      %280 = vst.msk [vmem:[#allocation2 + $0xd0] sm:$0xf] %vm226, 0
      %281 = vst.msk [vmem:[#allocation2 + $0xd4] sm:$0x1] %vm229, 0
      %v282 = vld [vmem:[%s219] sm:$0xf]
      %v283 = vld [vmem:[%s219 + $0x4] sm:$0xf]
      %v284 = vld [vmem:[%s219 + $0x8] sm:$0xf]
      %v285 = vld [vmem:[%s219 + $0xc] sm:$0xf]
      %v286 = vld [vmem:[%s219 + $0x10] sm:$0xf]
      %v287 = vld [vmem:[%s219 + $0x14] sm:$0xf]
      %v288 = vld [vmem:[%s219 + $0x18] sm:$0xf]
      %v289 = vld [vmem:[%s219 + $0x1c] sm:$0xf]
      %v290 = vld [vmem:[%s219 + $0x20] sm:$0xf]
      %v291 = vld [vmem:[%s219 + $0x24] sm:$0xf]
      %v292 = vld [vmem:[%s219 + $0x28] sm:$0xf]
      %v293 = vld [vmem:[%s219 + $0x2c] sm:$0xf]
      %v294 = vld [vmem:[%s219 + $0x30] sm:$0xf]
      %v295 = vld [vmem:[%s219 + $0x34] sm:$0xf]
      %v296 = vld [vmem:[%s219 + $0x38] sm:$0xf]
      %v297 = vld [vmem:[%s219 + $0x3c] sm:$0xf]
      %v298 = vld [vmem:[%s219 + $0x40] sm:$0xf]
      %v299 = vld [vmem:[%s219 + $0x44] sm:$0xf]
      %v300 = vld [vmem:[%s219 + $0x48] sm:$0xf]
      %v301 = vld [vmem:[%s219 + $0x4c] sm:$0xf]
      %v302 = vld [vmem:[%s219 + $0x50] sm:$0xf]
      %v303 = vld [vmem:[%s219 + $0x54] sm:$0xf]
      %v304 = vld [vmem:[%s219 + $0x58] sm:$0xf]
      %v305 = vld [vmem:[%s219 + $0x5c] sm:$0xf]
      %v306 = vld [vmem:[%s219 + $0x60] sm:$0xf]
      %v307 = vld [vmem:[%s219 + $0x64] sm:$0xf]
      %v308 = vld [vmem:[%s219 + $0x68] sm:$0xf]
      %v309 = vld [vmem:[%s219 + $0x6c] sm:$0xf]
      %v310 = vld [vmem:[%s219 + $0x70] sm:$0xf]
      %v311 = vld [vmem:[%s219 + $0x74] sm:$0xf]
      %v312 = vld [vmem:[%s219 + $0x78] sm:$0xf]
      %v313 = vld [vmem:[%s219 + $0x7c] sm:$0xf]
      %vm314 = vsmask.f32 256
      %vm315 = vsmask.f32 4368
      %vm316 = vmor %vm314, %vm315
      %v318 = vshrl.u32 %v282, 16
      %v320 = vrot.slane %v318, 7
      %v321 = vshll.u32 %v282, 16
      %v323 = vor.u32 %v320, %v321
      %v324 = vrot.slane %v320, 4
      %v326 = vshrl.u32 %v283, 16
      %v328 = vrot.slane %v326, 7
      %v329 = vshll.u32 %v283, 16
      %v331 = vor.u32 %v328, %v329
      %v332 = vsel %vm316, %v324, %v331
      %v333 = vrot.slane %v328, 4
      %v335 = vshrl.u32 %v284, 16
      %v337 = vrot.slane %v335, 7
      %v338 = vshll.u32 %v284, 16
      %v340 = vor.u32 %v337, %v338
      %v341 = vrot.slane %v337, 4
      %v343 = vshrl.u32 %v285, 16
      %v345 = vrot.slane %v343, 7
      %v346 = vshll.u32 %v285, 16
      %v348 = vor.u32 %v345, %v346
      %v349 = vsel %vm316, %v341, %v348
      %v350 = vrot.slane %v345, 4
      %v352 = vshrl.u32 %v286, 16
      %v354 = vrot.slane %v352, 7
      %v355 = vshll.u32 %v286, 16
      %v357 = vor.u32 %v354, %v355
      %v358 = vrot.slane %v354, 4
      %v360 = vshrl.u32 %v287, 16
      %v362 = vrot.slane %v360, 7
      %v363 = vshll.u32 %v287, 16
      %v365 = vor.u32 %v362, %v363
      %v366 = vsel %vm316, %v358, %v365
      %v367 = vrot.slane %v362, 4
      %v369 = vshrl.u32 %v288, 16
      %v371 = vrot.slane %v369, 7
      %v372 = vshll.u32 %v288, 16
      %v374 = vor.u32 %v371, %v372
      %v375 = vrot.slane %v371, 4
      %v377 = vshrl.u32 %v289, 16
      %v379 = vrot.slane %v377, 7
      %v380 = vshll.u32 %v289, 16
      %v382 = vor.u32 %v379, %v380
      %v383 = vsel %vm316, %v375, %v382
      %v384 = vrot.slane %v379, 4
      %v386 = vshrl.u32 %v290, 16
      %v388 = vrot.slane %v386, 7
      %v389 = vshll.u32 %v290, 16
      %v391 = vor.u32 %v388, %v389
      %v392 = vrot.slane %v388, 4
      %v394 = vshrl.u32 %v291, 16
      %v396 = vrot.slane %v394, 7
      %v397 = vshll.u32 %v291, 16
      %v399 = vor.u32 %v396, %v397
      %v400 = vsel %vm316, %v392, %v399
      %v401 = vrot.slane %v396, 4
      %v403 = vshrl.u32 %v292, 16
      %v405 = vrot.slane %v403, 7
      %v406 = vshll.u32 %v292, 16
      %v408 = vor.u32 %v405, %v406
      %v409 = vrot.slane %v405, 4
      %v411 = vshrl.u32 %v293, 16
      %v413 = vrot.slane %v411, 7
      %v414 = vshll.u32 %v293, 16
      %v416 = vor.u32 %v413, %v414
      %v417 = vsel %vm316, %v409, %v416
      %v418 = vrot.slane %v413, 4
      %v420 = vshrl.u32 %v294, 16
      %v422 = vrot.slane %v420, 7
      %v423 = vshll.u32 %v294, 16
      %v425 = vor.u32 %v422, %v423
      %v426 = vrot.slane %v422, 4
      %v428 = vshrl.u32 %v295, 16
      %v430 = vrot.slane %v428, 7
      %v431 = vshll.u32 %v295, 16
      %v433 = vor.u32 %v430, %v431
      %v434 = vsel %vm316, %v426, %v433
      %v435 = vrot.slane %v430, 4
      %v437 = vshrl.u32 %v296, 16
      %v439 = vrot.slane %v437, 7
      %v440 = vshll.u32 %v296, 16
      %v442 = vor.u32 %v439, %v440
      %v443 = vrot.slane %v439, 4
      %v445 = vshrl.u32 %v297, 16
      %v447 = vrot.slane %v445, 7
      %v448 = vshll.u32 %v297, 16
      %v450 = vor.u32 %v447, %v448
      %v451 = vsel %vm316, %v443, %v450
      %v452 = vrot.slane %v447, 4
      %v454 = vshrl.u32 %v298, 16
      %v456 = vrot.slane %v454, 7
      %v457 = vshll.u32 %v298, 16
      %v459 = vor.u32 %v456, %v457
      %v460 = vrot.slane %v456, 4
      %v462 = vshrl.u32 %v299, 16
      %v464 = vrot.slane %v462, 7
      %v465 = vshll.u32 %v299, 16
      %v467 = vor.u32 %v464, %v465
      %v468 = vsel %vm316, %v460, %v467
      %v469 = vrot.slane %v464, 4
      %v471 = vshrl.u32 %v300, 16
      %v473 = vrot.slane %v471, 7
      %v474 = vshll.u32 %v300, 16
      %v476 = vor.u32 %v473, %v474
      %v477 = vrot.slane %v473, 4
      %v479 = vshrl.u32 %v301, 16
      %v481 = vrot.slane %v479, 7
      %v482 = vshll.u32 %v301, 16
      %v484 = vor.u32 %v481, %v482
      %v485 = vsel %vm316, %v477, %v484
      %v486 = vrot.slane %v481, 4
      %v488 = vshrl.u32 %v302, 16
      %v490 = vrot.slane %v488, 7
      %v491 = vshll.u32 %v302, 16
      %v493 = vor.u32 %v490, %v491
      %v494 = vrot.slane %v490, 4
      %v496 = vshrl.u32 %v303, 16
      %v498 = vrot.slane %v496, 7
      %v499 = vshll.u32 %v303, 16
      %v501 = vor.u32 %v498, %v499
      %v502 = vsel %vm316, %v494, %v501
      %v503 = vrot.slane %v498, 4
      %v505 = vshrl.u32 %v304, 16
      %v507 = vrot.slane %v505, 7
      %v508 = vshll.u32 %v304, 16
      %v510 = vor.u32 %v507, %v508
      %v511 = vrot.slane %v507, 4
      %v513 = vshrl.u32 %v305, 16
      %v515 = vrot.slane %v513, 7
      %v516 = vshll.u32 %v305, 16
      %v518 = vor.u32 %v515, %v516
      %v519 = vsel %vm316, %v511, %v518
      %v520 = vrot.slane %v515, 4
      %v522 = vshrl.u32 %v306, 16
      %v524 = vrot.slane %v522, 7
      %v525 = vshll.u32 %v306, 16
      %v527 = vor.u32 %v524, %v525
      %v528 = vrot.slane %v524, 4
      %v530 = vshrl.u32 %v307, 16
      %v532 = vrot.slane %v530, 7
      %v533 = vshll.u32 %v307, 16
      %v535 = vor.u32 %v532, %v533
      %v536 = vsel %vm316, %v528, %v535
      %v537 = vrot.slane %v532, 4
      %v539 = vshrl.u32 %v308, 16
      %v541 = vrot.slane %v539, 7
      %v542 = vshll.u32 %v308, 16
      %v544 = vor.u32 %v541, %v542
      %v545 = vrot.slane %v541, 4
      %v547 = vshrl.u32 %v309, 16
      %v549 = vrot.slane %v547, 7
      %v550 = vshll.u32 %v309, 16
      %v552 = vor.u32 %v549, %v550
      %v553 = vsel %vm316, %v545, %v552
      %v554 = vrot.slane %v549, 4
      %v556 = vshrl.u32 %v310, 16
      %v558 = vrot.slane %v556, 7
      %v559 = vshll.u32 %v310, 16
      %v561 = vor.u32 %v558, %v559
      %v562 = vrot.slane %v558, 4
      %v564 = vshrl.u32 %v311, 16
      %v566 = vrot.slane %v564, 7
      %v567 = vshll.u32 %v311, 16
      %v569 = vor.u32 %v566, %v567
      %v570 = vsel %vm316, %v562, %v569
      %v571 = vrot.slane %v566, 4
      %v573 = vshrl.u32 %v312, 16
      %v575 = vrot.slane %v573, 7
      %v576 = vshll.u32 %v312, 16
      %v578 = vor.u32 %v575, %v576
      %v579 = vrot.slane %v575, 4
      %v581 = vshrl.u32 %v313, 16
      %v583 = vrot.slane %v581, 7
      %v584 = vshll.u32 %v313, 16
      %v586 = vor.u32 %v583, %v584
      %v587 = vsel %vm316, %v579, %v586
      %v588 = vrot.slane %v583, 4
      %s637 = scalar_lea.vmem [#allocation2], 12
      %vm638 = vcmask 27648
      %vm639 = vsmask.f32 7938
      %vm640 = vmand %vm638, %vm639
      %v641 = vld [vmem:[%s637] sm:$0xf]
      %v642 = vsel %vm640, %v323, %v641
      %643 = vst [vmem:[%s637] sm:$0xf] %v642
      %vm644 = vcmask 27648
      %645 = vst.msk [vmem:[%s637 + $0x4] sm:$0xf] %vm644, %v332
      %vm646 = vcmask 24576
      %vm647 = vmand %vm646, %vm314
      %v648 = vld [vmem:[%s637 + $0x8] sm:$0x1]
      %v649 = vsel %vm647, %v333, %v648
      %650 = vst [vmem:[%s637 + $0x8] sm:$0x1] %v649
      %v651 = vld [vmem:[%s637 + $0xc] sm:$0xf]
      %v652 = vsel %vm640, %v340, %v651
      %653 = vst [vmem:[%s637 + $0xc] sm:$0xf] %v652
      %654 = vst.msk [vmem:[%s637 + $0x10] sm:$0xf] %vm644, %v349
      %v655 = vld [vmem:[%s637 + $0x14] sm:$0x1]
      %v656 = vsel %vm647, %v350, %v655
      %657 = vst [vmem:[%s637 + $0x14] sm:$0x1] %v656
      %v658 = vld [vmem:[%s637 + $0x18] sm:$0xf]
      %v659 = vsel %vm640, %v357, %v658
      %660 = vst [vmem:[%s637 + $0x18] sm:$0xf] %v659
      %661 = vst.msk [vmem:[%s637 + $0x1c] sm:$0xf] %vm644, %v366
      %v662 = vld [vmem:[%s637 + $0x20] sm:$0x1]
      %v663 = vsel %vm647, %v367, %v662
      %664 = vst [vmem:[%s637 + $0x20] sm:$0x1] %v663
      %v665 = vld [vmem:[%s637 + $0x24] sm:$0xf]
      %v666 = vsel %vm640, %v374, %v665
      %667 = vst [vmem:[%s637 + $0x24] sm:$0xf] %v666
      %668 = vst.msk [vmem:[%s637 + $0x28] sm:$0xf] %vm644, %v383
      %v669 = vld [vmem:[%s637 + $0x2c] sm:$0x1]
      %v670 = vsel %vm647, %v384, %v669
      %671 = vst [vmem:[%s637 + $0x2c] sm:$0x1] %v670
      %v672 = vld [vmem:[%s637 + $0x30] sm:$0xf]
      %v673 = vsel %vm640, %v391, %v672
      %674 = vst [vmem:[%s637 + $0x30] sm:$0xf] %v673
      %675 = vst.msk [vmem:[%s637 + $0x34] sm:$0xf] %vm644, %v400
      %v676 = vld [vmem:[%s637 + $0x38] sm:$0x1]
      %v677 = vsel %vm647, %v401, %v676
      %678 = vst [vmem:[%s637 + $0x38] sm:$0x1] %v677
      %v679 = vld [vmem:[%s637 + $0x3c] sm:$0xf]
      %v680 = vsel %vm640, %v408, %v679
      %681 = vst [vmem:[%s637 + $0x3c] sm:$0xf] %v680
      %682 = vst.msk [vmem:[%s637 + $0x40] sm:$0xf] %vm644, %v417
      %v683 = vld [vmem:[%s637 + $0x44] sm:$0x1]
      %v684 = vsel %vm647, %v418, %v683
      %685 = vst [vmem:[%s637 + $0x44] sm:$0x1] %v684
      %v686 = vld [vmem:[%s637 + $0x48] sm:$0xf]
      %v687 = vsel %vm640, %v425, %v686
      %688 = vst [vmem:[%s637 + $0x48] sm:$0xf] %v687
      %689 = vst.msk [vmem:[%s637 + $0x4c] sm:$0xf] %vm644, %v434
      %v690 = vld [vmem:[%s637 + $0x50] sm:$0x1]
      %v691 = vsel %vm647, %v435, %v690
      %692 = vst [vmem:[%s637 + $0x50] sm:$0x1] %v691
      %v693 = vld [vmem:[%s637 + $0x54] sm:$0xf]
      %v694 = vsel %vm640, %v442, %v693
      %695 = vst [vmem:[%s637 + $0x54] sm:$0xf] %v694
      %696 = vst.msk [vmem:[%s637 + $0x58] sm:$0xf] %vm644, %v451
      %v697 = vld [vmem:[%s637 + $0x5c] sm:$0x1]
      %v698 = vsel %vm647, %v452, %v697
      %699 = vst [vmem:[%s637 + $0x5c] sm:$0x1] %v698
      %v700 = vld [vmem:[%s637 + $0x60] sm:$0xf]
      %v701 = vsel %vm640, %v459, %v700
      %702 = vst [vmem:[%s637 + $0x60] sm:$0xf] %v701
      %703 = vst.msk [vmem:[%s637 + $0x64] sm:$0xf] %vm644, %v468
      %v704 = vld [vmem:[%s637 + $0x68] sm:$0x1]
      %v705 = vsel %vm647, %v469, %v704
      %706 = vst [vmem:[%s637 + $0x68] sm:$0x1] %v705
      %v707 = vld [vmem:[%s637 + $0x6c] sm:$0xf]
      %v708 = vsel %vm640, %v476, %v707
      %709 = vst [vmem:[%s637 + $0x6c] sm:$0xf] %v708
      %710 = vst.msk [vmem:[%s637 + $0x70] sm:$0xf] %vm644, %v485
      %v711 = vld [vmem:[%s637 + $0x74] sm:$0x1]
      %v712 = vsel %vm647, %v486, %v711
      %713 = vst [vmem:[%s637 + $0x74] sm:$0x1] %v712
      %v714 = vld [vmem:[%s637 + $0x78] sm:$0xf]
      %v715 = vsel %vm640, %v493, %v714
      %716 = vst [vmem:[%s637 + $0x78] sm:$0xf] %v715
      %717 = vst.msk [vmem:[%s637 + $0x7c] sm:$0xf] %vm644, %v502
      %v718 = vld [vmem:[%s637 + $0x80] sm:$0x1]
      %v719 = vsel %vm647, %v503, %v718
      %720 = vst [vmem:[%s637 + $0x80] sm:$0x1] %v719
      %v721 = vld [vmem:[%s637 + $0x84] sm:$0xf]
      %v722 = vsel %vm640, %v510, %v721
      %723 = vst [vmem:[%s637 + $0x84] sm:$0xf] %v722
      %724 = vst.msk [vmem:[%s637 + $0x88] sm:$0xf] %vm644, %v519
      %v725 = vld [vmem:[%s637 + $0x8c] sm:$0x1]
      %v726 = vsel %vm647, %v520, %v725
      %727 = vst [vmem:[%s637 + $0x8c] sm:$0x1] %v726
      %v728 = vld [vmem:[%s637 + $0x90] sm:$0xf]
      %v729 = vsel %vm640, %v527, %v728
      %730 = vst [vmem:[%s637 + $0x90] sm:$0xf] %v729
      %731 = vst.msk [vmem:[%s637 + $0x94] sm:$0xf] %vm644, %v536
      %v732 = vld [vmem:[%s637 + $0x98] sm:$0x1]
      %v733 = vsel %vm647, %v537, %v732
      %734 = vst [vmem:[%s637 + $0x98] sm:$0x1] %v733
      %v735 = vld [vmem:[%s637 + $0x9c] sm:$0xf]
      %v736 = vsel %vm640, %v544, %v735
      %737 = vst [vmem:[%s637 + $0x9c] sm:$0xf] %v736
      %738 = vst.msk [vmem:[%s637 + $0xa0] sm:$0xf] %vm644, %v553
      %v739 = vld [vmem:[%s637 + $0xa4] sm:$0x1]
      %v740 = vsel %vm647, %v554, %v739
      %741 = vst [vmem:[%s637 + $0xa4] sm:$0x1] %v740
      %v742 = vld [vmem:[%s637 + $0xa8] sm:$0xf]
      %v743 = vsel %vm640, %v561, %v742
      %744 = vst [vmem:[%s637 + $0xa8] sm:$0xf] %v743
      %745 = vst.msk [vmem:[%s637 + $0xac] sm:$0xf] %vm644, %v570
      %v746 = vld [vmem:[%s637 + $0xb0] sm:$0x1]
      %v747 = vsel %vm647, %v571, %v746
      %748 = vst [vmem:[%s637 + $0xb0] sm:$0x1] %v747
      %v749 = vld [vmem:[%s637 + $0xb4] sm:$0xf]
      %v750 = vsel %vm640, %v578, %v749
      %751 = vst [vmem:[%s637 + $0xb4] sm:$0xf] %v750
      %752 = vst.msk [vmem:[%s637 + $0xb8] sm:$0xf] %vm644, %v587
      %v753 = vld [vmem:[%s637 + $0xbc] sm:$0x1]
      %v754 = vsel %vm647, %v588, %v753
      %755 = vst [vmem:[%s637 + $0xbc] sm:$0x1] %v754
      %v756 = vld [vmem:[#allocation2] sm:$0xf]
      %v757 = vld [vmem:[#allocation2 + $0x4] sm:$0xf]
      %v758 = vld [vmem:[#allocation2 + $0x8] sm:$0x1]
      %v759 = vld [vmem:[#allocation2 + $0xc] sm:$0xf]
      %v760 = vld [vmem:[#allocation2 + $0x10] sm:$0xf]
      %v761 = vld [vmem:[#allocation2 + $0x14] sm:$0x1]
      %v762 = vld [vmem:[#allocation2 + $0x18] sm:$0xf]
      %v763 = vld [vmem:[#allocation2 + $0x1c] sm:$0xf]
      %v764 = vld [vmem:[#allocation2 + $0x20] sm:$0x1]
      %v765 = vld [vmem:[#allocation2 + $0x24] sm:$0xf]
      %v766 = vld [vmem:[#allocation2 + $0x28] sm:$0xf]
      %v767 = vld [vmem:[#allocation2 + $0x2c] sm:$0x1]
      %v768 = vld [vmem:[#allocation2 + $0x30] sm:$0xf]
      %v769 = vld [vmem:[#allocation2 + $0x34] sm:$0xf]
      %v770 = vld [vmem:[#allocation2 + $0x38] sm:$0x1]
      %v771 = vld [vmem:[#allocation2 + $0x3c] sm:$0xf]
      %v772 = vld [vmem:[#allocation2 + $0x40] sm:$0xf]
      %v773 = vld [vmem:[#allocation2 + $0x44] sm:$0x1]
      %v774 = vld [vmem:[#allocation2 + $0x48] sm:$0xf]
      %v775 = vld [vmem:[#allocation2 + $0x4c] sm:$0xf]
      %v776 = vld [vmem:[#allocation2 + $0x50] sm:$0x1]
      %v777 = vld [vmem:[#allocation2 + $0x54] sm:$0xf]
      %v778 = vld [vmem:[#allocation2 + $0x58] sm:$0xf]
      %v779 = vld [vmem:[#allocation2 + $0x5c] sm:$0x1]
      %v780 = vld [vmem:[#allocation2 + $0x60] sm:$0xf]
      %v781 = vld [vmem:[#allocation2 + $0x64] sm:$0xf]
      %v782 = vld [vmem:[#allocation2 + $0x68] sm:$0x1]
      %v783 = vld [vmem:[#allocation2 + $0x6c] sm:$0xf]
      %v784 = vld [vmem:[#allocation2 + $0x70] sm:$0xf]
      %v785 = vld [vmem:[#allocation2 + $0x74] sm:$0x1]
      %v786 = vld [vmem:[#allocation2 + $0x78] sm:$0xf]
      %v787 = vld [vmem:[#allocation2 + $0x7c] sm:$0xf]
      %v788 = vld [vmem:[#allocation2 + $0x80] sm:$0x1]
      %v789 = vld [vmem:[#allocation2 + $0x84] sm:$0xf]
      %v790 = vld [vmem:[#allocation2 + $0x88] sm:$0xf]
      %v791 = vld [vmem:[#allocation2 + $0x8c] sm:$0x1]
      %v792 = vld [vmem:[#allocation2 + $0x90] sm:$0xf]
      %v793 = vld [vmem:[#allocation2 + $0x94] sm:$0xf]
      %v794 = vld [vmem:[#allocation2 + $0x98] sm:$0x1]
      %v795 = vld [vmem:[#allocation2 + $0x9c] sm:$0xf]
      %v796 = vld [vmem:[#allocation2 + $0xa0] sm:$0xf]
      %v797 = vld [vmem:[#allocation2 + $0xa4] sm:$0x1]
      %v798 = vld [vmem:[#allocation2 + $0xa8] sm:$0xf]
      %v799 = vld [vmem:[#allocation2 + $0xac] sm:$0xf]
      %v800 = vld [vmem:[#allocation2 + $0xb0] sm:$0x1]
      %v801 = vld [vmem:[#allocation2 + $0xb4] sm:$0xf]
      %v802 = vld [vmem:[#allocation2 + $0xb8] sm:$0xf]
      %v803 = vld [vmem:[#allocation2 + $0xbc] sm:$0x1]
      %v804 = vld [vmem:[#allocation2 + $0xc0] sm:$0xf]
      %v805 = vld [vmem:[#allocation2 + $0xc4] sm:$0xf]
      %v806 = vld [vmem:[#allocation2 + $0xc8] sm:$0x1]
      %v807 = vld [vmem:[#allocation2 + $0xcc] sm:$0xf]
      %v808 = vld [vmem:[#allocation2 + $0xd0] sm:$0xf]
      %v809 = vld [vmem:[#allocation2 + $0xd4] sm:$0x1]
      %vm810 = vsmask.f32 3328
      %vm811 = vsmask.f32 7440
      %vm812 = vmor %vm810, %vm811
      %v814 = vshrl.u32 %v756, 16
      %v816 = vrot.slane %v814, 4
      %v817 = vshll.u32 %v756, 16
      %v819 = vrot.slane %v817, 5
      %v820 = vor.u32 %v816, %v819
      %v821 = vrot.slane %v820, 4
      %v823 = vshll.u32 %v757, 16
      %v825 = vrot.slane %v823, 5
      %v826 = vsel %vm812, %v821, %v825
      %v827 = vshrl.u32 %v757, 16
      %v829 = vrot.slane %v827, 4
      %v830 = vor.u32 %v829, %v825
      %v831 = vrot.slane %v830, 4
      %v833 = vshll.u32 %v758, 16
      %v835 = vrot.slane %v833, 5
      %v836 = vsel %vm812, %v831, %v835
      %v838 = vshrl.u32 %v759, 16
      %v840 = vrot.slane %v838, 4
      %v841 = vshll.u32 %v759, 16
      %v843 = vrot.slane %v841, 5
      %v844 = vor.u32 %v840, %v843
      %v845 = vrot.slane %v844, 4
      %v847 = vshll.u32 %v760, 16
      %v849 = vrot.slane %v847, 5
      %v850 = vsel %vm812, %v845, %v849
      %v851 = vshrl.u32 %v760, 16
      %v853 = vrot.slane %v851, 4
      %v854 = vor.u32 %v853, %v849
      %v855 = vrot.slane %v854, 4
      %v857 = vshll.u32 %v761, 16
      %v859 = vrot.slane %v857, 5
      %v860 = vsel %vm812, %v855, %v859
      %v862 = vshrl.u32 %v762, 16
      %v864 = vrot.slane %v862, 4
      %v865 = vshll.u32 %v762, 16
      %v867 = vrot.slane %v865, 5
      %v868 = vor.u32 %v864, %v867
      %v869 = vrot.slane %v868, 4
      %v871 = vshll.u32 %v763, 16
      %v873 = vrot.slane %v871, 5
      %v874 = vsel %vm812, %v869, %v873
      %v875 = vshrl.u32 %v763, 16
      %v877 = vrot.slane %v875, 4
      %v878 = vor.u32 %v877, %v873
      %v879 = vrot.slane %v878, 4
      %v881 = vshll.u32 %v764, 16
      %v883 = vrot.slane %v881, 5
      %v884 = vsel %vm812, %v879, %v883
      %v886 = vshrl.u32 %v765, 16
      %v888 = vrot.slane %v886, 4
      %v889 = vshll.u32 %v765, 16
      %v891 = vrot.slane %v889, 5
      %v892 = vor.u32 %v888, %v891
      %v893 = vrot.slane %v892, 4
      %v895 = vshll.u32 %v766, 16
      %v897 = vrot.slane %v895, 5
      %v898 = vsel %vm812, %v893, %v897
      %v899 = vshrl.u32 %v766, 16
      %v901 = vrot.slane %v899, 4
      %v902 = vor.u32 %v901, %v897
      %v903 = vrot.slane %v902, 4
      %v905 = vshll.u32 %v767, 16
      %v907 = vrot.slane %v905, 5
      %v908 = vsel %vm812, %v903, %v907
      %v910 = vshrl.u32 %v768, 16
      %v912 = vrot.slane %v910, 4
      %v913 = vshll.u32 %v768, 16
      %v915 = vrot.slane %v913, 5
      %v916 = vor.u32 %v912, %v915
      %v917 = vrot.slane %v916, 4
      %v919 = vshll.u32 %v769, 16
      %v921 = vrot.slane %v919, 5
      %v922 = vsel %vm812, %v917, %v921
      %v923 = vshrl.u32 %v769, 16
      %v925 = vrot.slane %v923, 4
      %v926 = vor.u32 %v925, %v921
      %v927 = vrot.slane %v926, 4
      %v929 = vshll.u32 %v770, 16
      %v931 = vrot.slane %v929, 5
      %v932 = vsel %vm812, %v927, %v931
      %v934 = vshrl.u32 %v771, 16
      %v936 = vrot.slane %v934, 4
      %v937 = vshll.u32 %v771, 16
      %v939 = vrot.slane %v937, 5
      %v940 = vor.u32 %v936, %v939
      %v941 = vrot.slane %v940, 4
      %v943 = vshll.u32 %v772, 16
      %v945 = vrot.slane %v943, 5
      %v946 = vsel %vm812, %v941, %v945
      %v947 = vshrl.u32 %v772, 16
      %v949 = vrot.slane %v947, 4
      %v950 = vor.u32 %v949, %v945
      %v951 = vrot.slane %v950, 4
      %v953 = vshll.u32 %v773, 16
      %v955 = vrot.slane %v953, 5
      %v956 = vsel %vm812, %v951, %v955
      %v958 = vshrl.u32 %v774, 16
      %v960 = vrot.slane %v958, 4
      %v961 = vshll.u32 %v774, 16
      %v963 = vrot.slane %v961, 5
      %v964 = vor.u32 %v960, %v963
      %v965 = vrot.slane %v964, 4
      %v967 = vshll.u32 %v775, 16
      %v969 = vrot.slane %v967, 5
      %v970 = vsel %vm812, %v965, %v969
      %v971 = vshrl.u32 %v775, 16
      %v973 = vrot.slane %v971, 4
      %v974 = vor.u32 %v973, %v969
      %v975 = vrot.slane %v974, 4
      %v977 = vshll.u32 %v776, 16
      %v979 = vrot.slane %v977, 5
      %v980 = vsel %vm812, %v975, %v979
      %v982 = vshrl.u32 %v777, 16
      %v984 = vrot.slane %v982, 4
      %v985 = vshll.u32 %v777, 16
      %v987 = vrot.slane %v985, 5
      %v988 = vor.u32 %v984, %v987
      %v989 = vrot.slane %v988, 4
      %v991 = vshll.u32 %v778, 16
      %v993 = vrot.slane %v991, 5
      %v994 = vsel %vm812, %v989, %v993
      %v995 = vshrl.u32 %v778, 16
      %v997 = vrot.slane %v995, 4
      %v998 = vor.u32 %v997, %v993
      %v999 = vrot.slane %v998, 4
      %v1001 = vshll.u32 %v779, 16
      %v1003 = vrot.slane %v1001, 5
      %v1004 = vsel %vm812, %v999, %v1003
      %v1006 = vshrl.u32 %v780, 16
      %v1008 = vrot.slane %v1006, 4
      %v1009 = vshll.u32 %v780, 16
      %v1011 = vrot.slane %v1009, 5
      %v1012 = vor.u32 %v1008, %v1011
      %v1013 = vrot.slane %v1012, 4
      %v1015 = vshll.u32 %v781, 16
      %v1017 = vrot.slane %v1015, 5
      %v1018 = vsel %vm812, %v1013, %v1017
      %v1019 = vshrl.u32 %v781, 16
      %v1021 = vrot.slane %v1019, 4
      %v1022 = vor.u32 %v1021, %v1017
      %v1023 = vrot.slane %v1022, 4
      %v1025 = vshll.u32 %v782, 16
      %v1027 = vrot.slane %v1025, 5
      %v1028 = vsel %vm812, %v1023, %v1027
      %v1030 = vshrl.u32 %v783, 16
      %v1032 = vrot.slane %v1030, 4
      %v1033 = vshll.u32 %v783, 16
      %v1035 = vrot.slane %v1033, 5
      %v1036 = vor.u32 %v1032, %v1035
      %v1037 = vrot.slane %v1036, 4
      %v1039 = vshll.u32 %v784, 16
      %v1041 = vrot.slane %v1039, 5
      %v1042 = vsel %vm812, %v1037, %v1041
      %v1043 = vshrl.u32 %v784, 16
      %v1045 = vrot.slane %v1043, 4
      %v1046 = vor.u32 %v1045, %v1041
      %v1047 = vrot.slane %v1046, 4
      %v1049 = vshll.u32 %v785, 16
      %v1051 = vrot.slane %v1049, 5
      %v1052 = vsel %vm812, %v1047, %v1051
      %v1054 = vshrl.u32 %v786, 16
      %v1056 = vrot.slane %v1054, 4
      %v1057 = vshll.u32 %v786, 16
      %v1059 = vrot.slane %v1057, 5
      %v1060 = vor.u32 %v1056, %v1059
      %v1061 = vrot.slane %v1060, 4
      %v1063 = vshll.u32 %v787, 16
      %v1065 = vrot.slane %v1063, 5
      %v1066 = vsel %vm812, %v1061, %v1065
      %v1067 = vshrl.u32 %v787, 16
      %v1069 = vrot.slane %v1067, 4
      %v1070 = vor.u32 %v1069, %v1065
      %v1071 = vrot.slane %v1070, 4
      %v1073 = vshll.u32 %v788, 16
      %v1075 = vrot.slane %v1073, 5
      %v1076 = vsel %vm812, %v1071, %v1075
      %v1078 = vshrl.u32 %v789, 16
      %v1080 = vrot.slane %v1078, 4
      %v1081 = vshll.u32 %v789, 16
      %v1083 = vrot.slane %v1081, 5
      %v1084 = vor.u32 %v1080, %v1083
      %v1085 = vrot.slane %v1084, 4
      %v1087 = vshll.u32 %v790, 16
      %v1089 = vrot.slane %v1087, 5
      %v1090 = vsel %vm812, %v1085, %v1089
      %v1091 = vshrl.u32 %v790, 16
      %v1093 = vrot.slane %v1091, 4
      %v1094 = vor.u32 %v1093, %v1089
      %v1095 = vrot.slane %v1094, 4
      %v1097 = vshll.u32 %v791, 16
      %v1099 = vrot.slane %v1097, 5
      %v1100 = vsel %vm812, %v1095, %v1099
      %v1102 = vshrl.u32 %v792, 16
      %v1104 = vrot.slane %v1102, 4
      %v1105 = vshll.u32 %v792, 16
      %v1107 = vrot.slane %v1105, 5
      %v1108 = vor.u32 %v1104, %v1107
      %v1109 = vrot.slane %v1108, 4
      %v1111 = vshll.u32 %v793, 16
      %v1113 = vrot.slane %v1111, 5
      %v1114 = vsel %vm812, %v1109, %v1113
      %v1115 = vshrl.u32 %v793, 16
      %v1117 = vrot.slane %v1115, 4
      %v1118 = vor.u32 %v1117, %v1113
      %v1119 = vrot.slane %v1118, 4
      %v1121 = vshll.u32 %v794, 16
      %v1123 = vrot.slane %v1121, 5
      %v1124 = vsel %vm812, %v1119, %v1123
      %v1126 = vshrl.u32 %v795, 16
      %v1128 = vrot.slane %v1126, 4
      %v1129 = vshll.u32 %v795, 16
      %v1131 = vrot.slane %v1129, 5
      %v1132 = vor.u32 %v1128, %v1131
      %v1133 = vrot.slane %v1132, 4
      %v1135 = vshll.u32 %v796, 16
      %v1137 = vrot.slane %v1135, 5
      %v1138 = vsel %vm812, %v1133, %v1137
      %v1139 = vshrl.u32 %v796, 16
      %v1141 = vrot.slane %v1139, 4
      %v1142 = vor.u32 %v1141, %v1137
      %v1143 = vrot.slane %v1142, 4
      %v1145 = vshll.u32 %v797, 16
      %v1147 = vrot.slane %v1145, 5
      %v1148 = vsel %vm812, %v1143, %v1147
      %v1150 = vshrl.u32 %v798, 16
      %v1152 = vrot.slane %v1150, 4
      %v1153 = vshll.u32 %v798, 16
      %v1155 = vrot.slane %v1153, 5
      %v1156 = vor.u32 %v1152, %v1155
      %v1157 = vrot.slane %v1156, 4
      %v1159 = vshll.u32 %v799, 16
      %v1161 = vrot.slane %v1159, 5
      %v1162 = vsel %vm812, %v1157, %v1161
      %v1163 = vshrl.u32 %v799, 16
      %v1165 = vrot.slane %v1163, 4
      %v1166 = vor.u32 %v1165, %v1161
      %v1167 = vrot.slane %v1166, 4
      %v1169 = vshll.u32 %v800, 16
      %v1171 = vrot.slane %v1169, 5
      %v1172 = vsel %vm812, %v1167, %v1171
      %v1174 = vshrl.u32 %v801, 16
      %v1176 = vrot.slane %v1174, 4
      %v1177 = vshll.u32 %v801, 16
      %v1179 = vrot.slane %v1177, 5
      %v1180 = vor.u32 %v1176, %v1179
      %v1181 = vrot.slane %v1180, 4
      %v1183 = vshll.u32 %v802, 16
      %v1185 = vrot.slane %v1183, 5
      %v1186 = vsel %vm812, %v1181, %v1185
      %v1187 = vshrl.u32 %v802, 16
      %v1189 = vrot.slane %v1187, 4
      %v1190 = vor.u32 %v1189, %v1185
      %v1191 = vrot.slane %v1190, 4
      %v1193 = vshll.u32 %v803, 16
      %v1195 = vrot.slane %v1193, 5
      %v1196 = vsel %vm812, %v1191, %v1195
      %vm1245 = vcmask 1042432
      %vm1246 = vcmask 1046532
      %vm1247 = vmor %vm1245, %vm1246
      %v1248 = vrot.slane %v756, 5
      %v1249 = vrot.slane %v1248, 4
      %v1250 = vrot.slane %v757, 5
      %v1251 = vsel %vm1247, %v1249, %v1250
      %v1252 = vrot.slane %v1250, 4
      %v1253 = vrot.slane %v758, 5
      %v1254 = vsel %vm1247, %v1252, %v1253
      %v1255 = vrot.slane %v759, 5
      %v1256 = vrot.slane %v1255, 4
      %v1257 = vrot.slane %v760, 5
      %v1258 = vsel %vm1247, %v1256, %v1257
      %v1259 = vrot.slane %v1257, 4
      %v1260 = vrot.slane %v761, 5
      %v1261 = vsel %vm1247, %v1259, %v1260
      %v1262 = vrot.slane %v762, 5
      %v1263 = vrot.slane %v1262, 4
      %v1264 = vrot.slane %v763, 5
      %v1265 = vsel %vm1247, %v1263, %v1264
      %v1266 = vrot.slane %v1264, 4
      %v1267 = vrot.slane %v764, 5
      %v1268 = vsel %vm1247, %v1266, %v1267
      %v1269 = vrot.slane %v765, 5
      %v1270 = vrot.slane %v1269, 4
      %v1271 = vrot.slane %v766, 5
      %v1272 = vsel %vm1247, %v1270, %v1271
      %v1273 = vrot.slane %v1271, 4
      %v1274 = vrot.slane %v767, 5
      %v1275 = vsel %vm1247, %v1273, %v1274
      %v1276 = vrot.slane %v768, 5
      %v1277 = vrot.slane %v1276, 4
      %v1278 = vrot.slane %v769, 5
      %v1279 = vsel %vm1247, %v1277, %v1278
      %v1280 = vrot.slane %v1278, 4
      %v1281 = vrot.slane %v770, 5
      %v1282 = vsel %vm1247, %v1280, %v1281
      %v1283 = vrot.slane %v771, 5
      %v1284 = vrot.slane %v1283, 4
      %v1285 = vrot.slane %v772, 5
      %v1286 = vsel %vm1247, %v1284, %v1285
      %v1287 = vrot.slane %v1285, 4
      %v1288 = vrot.slane %v773, 5
      %v1289 = vsel %vm1247, %v1287, %v1288
      %v1290 = vrot.slane %v774, 5
      %v1291 = vrot.slane %v1290, 4
      %v1292 = vrot.slane %v775, 5
      %v1293 = vsel %vm1247, %v1291, %v1292
      %v1294 = vrot.slane %v1292, 4
      %v1295 = vrot.slane %v776, 5
      %v1296 = vsel %vm1247, %v1294, %v1295
      %v1297 = vrot.slane %v777, 5
      %v1298 = vrot.slane %v1297, 4
      %v1299 = vrot.slane %v778, 5
      %v1300 = vsel %vm1247, %v1298, %v1299
      %v1301 = vrot.slane %v1299, 4
      %v1302 = vrot.slane %v779, 5
      %v1303 = vsel %vm1247, %v1301, %v1302
      %v1304 = vrot.slane %v780, 5
      %v1305 = vrot.slane %v1304, 4
      %v1306 = vrot.slane %v781, 5
      %v1307 = vsel %vm1247, %v1305, %v1306
      %v1308 = vrot.slane %v1306, 4
      %v1309 = vrot.slane %v782, 5
      %v1310 = vsel %vm1247, %v1308, %v1309
      %v1311 = vrot.slane %v783, 5
      %v1312 = vrot.slane %v1311, 4
      %v1313 = vrot.slane %v784, 5
      %v1314 = vsel %vm1247, %v1312, %v1313
      %v1315 = vrot.slane %v1313, 4
      %v1316 = vrot.slane %v785, 5
      %v1317 = vsel %vm1247, %v1315, %v1316
      %v1318 = vrot.slane %v786, 5
      %v1319 = vrot.slane %v1318, 4
      %v1320 = vrot.slane %v787, 5
      %v1321 = vsel %vm1247, %v1319, %v1320
      %v1322 = vrot.slane %v1320, 4
      %v1323 = vrot.slane %v788, 5
      %v1324 = vsel %vm1247, %v1322, %v1323
      %v1325 = vrot.slane %v789, 5
      %v1326 = vrot.slane %v1325, 4
      %v1327 = vrot.slane %v790, 5
      %v1328 = vsel %vm1247, %v1326, %v1327
      %v1329 = vrot.slane %v1327, 4
      %v1330 = vrot.slane %v791, 5
      %v1331 = vsel %vm1247, %v1329, %v1330
      %v1332 = vrot.slane %v792, 5
      %v1333 = vrot.slane %v1332, 4
      %v1334 = vrot.slane %v793, 5
      %v1335 = vsel %vm1247, %v1333, %v1334
      %v1336 = vrot.slane %v1334, 4
      %v1337 = vrot.slane %v794, 5
      %v1338 = vsel %vm1247, %v1336, %v1337
      %v1339 = vrot.slane %v795, 5
      %v1340 = vrot.slane %v1339, 4
      %v1341 = vrot.slane %v796, 5
      %v1342 = vsel %vm1247, %v1340, %v1341
      %v1343 = vrot.slane %v1341, 4
      %v1344 = vrot.slane %v797, 5
      %v1345 = vsel %vm1247, %v1343, %v1344
      %v1346 = vrot.slane %v798, 5
      %v1347 = vrot.slane %v1346, 4
      %v1348 = vrot.slane %v799, 5
      %v1349 = vsel %vm1247, %v1347, %v1348
      %v1350 = vrot.slane %v1348, 4
      %v1351 = vrot.slane %v800, 5
      %v1352 = vsel %vm1247, %v1350, %v1351
      %v1353 = vrot.slane %v801, 5
      %v1354 = vrot.slane %v1353, 4
      %v1355 = vrot.slane %v802, 5
      %v1356 = vsel %vm1247, %v1354, %v1355
      %v1357 = vrot.slane %v1355, 4
      %v1358 = vrot.slane %v803, 5
      %v1359 = vsel %vm1247, %v1357, %v1358
      %v1361 = vshrl.u32 %v804, 16
      %v1363 = vrot.slane %v1361, 4
      %v1364 = vshll.u32 %v804, 16
      %v1366 = vrot.slane %v1364, 5
      %v1367 = vor.u32 %v1363, %v1366
      %v1368 = vrot.slane %v1367, 4
      %v1370 = vshll.u32 %v805, 16
      %v1372 = vrot.slane %v1370, 5
      %v1373 = vsel %vm812, %v1368, %v1372
      %v1374 = vshrl.u32 %v805, 16
      %v1376 = vrot.slane %v1374, 4
      %v1377 = vor.u32 %v1376, %v1372
      %v1378 = vrot.slane %v1377, 4
      %v1380 = vshll.u32 %v806, 16
      %v1382 = vrot.slane %v1380, 5
      %v1383 = vsel %vm812, %v1378, %v1382
      %v1387 = vrot.slane %v804, 5
      %v1388 = vrot.slane %v1387, 4
      %v1389 = vrot.slane %v805, 5
      %v1390 = vsel %vm1247, %v1388, %v1389
      %v1391 = vrot.slane %v1389, 4
      %v1392 = vrot.slane %v806, 5
      %v1393 = vsel %vm1247, %v1391, %v1392
      %v1395 = vshrl.u32 %v807, 16
      %v1397 = vrot.slane %v1395, 4
      %v1398 = vshll.u32 %v807, 16
      %v1400 = vrot.slane %v1398, 5
      %v1401 = vor.u32 %v1397, %v1400
      %v1402 = vrot.slane %v1401, 4
      %v1404 = vshll.u32 %v808, 16
      %v1406 = vrot.slane %v1404, 5
      %v1407 = vsel %vm812, %v1402, %v1406
      %v1408 = vshrl.u32 %v808, 16
      %v1410 = vrot.slane %v1408, 4
      %v1411 = vor.u32 %v1410, %v1406
      %v1412 = vrot.slane %v1411, 4
      %v1414 = vshll.u32 %v809, 16
      %v1416 = vrot.slane %v1414, 5
      %v1417 = vsel %vm812, %v1412, %v1416
      %v1421 = vrot.slane %v807, 5
      %v1422 = vrot.slane %v1421, 4
      %v1423 = vrot.slane %v808, 5
      %v1424 = vsel %vm1247, %v1422, %v1423
      %v1425 = vrot.slane %v1423, 4
      %v1426 = vrot.slane %v809, 5
      %v1427 = vsel %vm1247, %v1425, %v1426
      %v1428 = vunpack.c.l.b16 %v756
      %v1429 = vunpack.c.l.b16 %v757
      %v1430 = vunpack.c.l.b16 %v759
      %v1431 = vunpack.c.l.b16 %v760
      %v1432 = vunpack.c.l.b16 %v762
      %v1433 = vunpack.c.l.b16 %v763
      %v1434 = vunpack.c.l.b16 %v765
      %v1435 = vunpack.c.l.b16 %v766
      %v1436 = vunpack.c.l.b16 %v768
      %v1437 = vunpack.c.l.b16 %v769
      %v1438 = vunpack.c.l.b16 %v771
      %v1439 = vunpack.c.l.b16 %v772
      %v1440 = vunpack.c.l.b16 %v774
      %v1441 = vunpack.c.l.b16 %v775
      %v1442 = vunpack.c.l.b16 %v777
      %v1443 = vunpack.c.l.b16 %v778
      %v1444 = vunpack.c.l.b16 %v780
      %v1445 = vunpack.c.l.b16 %v781
      %v1446 = vunpack.c.l.b16 %v783
      %v1447 = vunpack.c.l.b16 %v784
      %v1448 = vunpack.c.l.b16 %v786
      %v1449 = vunpack.c.l.b16 %v787
      %v1450 = vunpack.c.l.b16 %v789
      %v1451 = vunpack.c.l.b16 %v790
      %v1452 = vunpack.c.l.b16 %v792
      %v1453 = vunpack.c.l.b16 %v793
      %v1454 = vunpack.c.l.b16 %v795
      %v1455 = vunpack.c.l.b16 %v796
      %v1456 = vunpack.c.l.b16 %v798
      %v1457 = vunpack.c.l.b16 %v799
      %v1458 = vunpack.c.l.b16 %v801
      %v1459 = vunpack.c.l.b16 %v802
      %v1460 = vpack.c.b16 %v1429, %v1428
      %v1461 = vpack.c.b16 %v1431, %v1430
      %v1462 = vpack.c.b16 %v1433, %v1432
      %v1463 = vpack.c.b16 %v1435, %v1434
      %v1464 = vpack.c.b16 %v1437, %v1436
      %v1465 = vpack.c.b16 %v1439, %v1438
      %v1466 = vpack.c.b16 %v1441, %v1440
      %v1467 = vpack.c.b16 %v1443, %v1442
      %v1468 = vpack.c.b16 %v1445, %v1444
      %v1469 = vpack.c.b16 %v1447, %v1446
      %v1470 = vpack.c.b16 %v1449, %v1448
      %v1471 = vpack.c.b16 %v1451, %v1450
      %v1472 = vpack.c.b16 %v1453, %v1452
      %v1473 = vpack.c.b16 %v1455, %v1454
      %v1474 = vpack.c.b16 %v1457, %v1456
      %v1475 = vpack.c.b16 %v1459, %v1458
      %v1476 = vunpack.c.l.b16 %v826
      %v1477 = vunpack.c.l.b16 %v836
      %v1478 = vunpack.c.l.b16 %v850
      %v1479 = vunpack.c.l.b16 %v860
      %v1480 = vunpack.c.l.b16 %v874
      %v1481 = vunpack.c.l.b16 %v884
      %v1482 = vunpack.c.l.b16 %v898
      %v1483 = vunpack.c.l.b16 %v908
      %v1484 = vunpack.c.l.b16 %v922
      %v1485 = vunpack.c.l.b16 %v932
      %v1486 = vunpack.c.l.b16 %v946
      %v1487 = vunpack.c.l.b16 %v956
      %v1488 = vunpack.c.l.b16 %v970
      %v1489 = vunpack.c.l.b16 %v980
      %v1490 = vunpack.c.l.b16 %v994
      %v1491 = vunpack.c.l.b16 %v1004
      %v1492 = vunpack.c.l.b16 %v1018
      %v1493 = vunpack.c.l.b16 %v1028
      %v1494 = vunpack.c.l.b16 %v1042
      %v1495 = vunpack.c.l.b16 %v1052
      %v1496 = vunpack.c.l.b16 %v1066
      %v1497 = vunpack.c.l.b16 %v1076
      %v1498 = vunpack.c.l.b16 %v1090
      %v1499 = vunpack.c.l.b16 %v1100
      %v1500 = vunpack.c.l.b16 %v1114
      %v1501 = vunpack.c.l.b16 %v1124
      %v1502 = vunpack.c.l.b16 %v1138
      %v1503 = vunpack.c.l.b16 %v1148
      %v1504 = vunpack.c.l.b16 %v1162
      %v1505 = vunpack.c.l.b16 %v1172
      %v1506 = vunpack.c.l.b16 %v1186
      %v1507 = vunpack.c.l.b16 %v1196
      %v1508 = vpack.c.b16 %v1477, %v1476
      %v1509 = vpack.c.b16 %v1479, %v1478
      %v1510 = vpack.c.b16 %v1481, %v1480
      %v1511 = vpack.c.b16 %v1483, %v1482
      %v1512 = vpack.c.b16 %v1485, %v1484
      %v1513 = vpack.c.b16 %v1487, %v1486
      %v1514 = vpack.c.b16 %v1489, %v1488
      %v1515 = vpack.c.b16 %v1491, %v1490
      %v1516 = vpack.c.b16 %v1493, %v1492
      %v1517 = vpack.c.b16 %v1495, %v1494
      %v1518 = vpack.c.b16 %v1497, %v1496
      %v1519 = vpack.c.b16 %v1499, %v1498
      %v1520 = vpack.c.b16 %v1501, %v1500
      %v1521 = vpack.c.b16 %v1503, %v1502
      %v1522 = vpack.c.b16 %v1505, %v1504
      %v1523 = vpack.c.b16 %v1507, %v1506
      %1524 = vrot.lane.b32.xlu0 %v1508, 8
      %v1525 = vpop.permute.xlu0 %1524
      %1526 = vrot.lane.b32.xlu0 %v1509, 8
      %v1527 = vpop.permute.xlu0 %1526
      %1528 = vrot.lane.b32.xlu0 %v1510, 8
      %v1529 = vpop.permute.xlu0 %1528
      %1530 = vrot.lane.b32.xlu0 %v1511, 8
      %v1531 = vpop.permute.xlu0 %1530
      %1532 = vrot.lane.b32.xlu0 %v1512, 8
      %v1533 = vpop.permute.xlu0 %1532
      %1534 = vrot.lane.b32.xlu0 %v1513, 8
      %v1535 = vpop.permute.xlu0 %1534
      %1536 = vrot.lane.b32.xlu0 %v1514, 8
      %v1537 = vpop.permute.xlu0 %1536
      %1538 = vrot.lane.b32.xlu0 %v1515, 8
      %v1539 = vpop.permute.xlu0 %1538
      %1540 = vrot.lane.b32.xlu0 %v1516, 8
      %v1541 = vpop.permute.xlu0 %1540
      %1542 = vrot.lane.b32.xlu0 %v1517, 8
      %v1543 = vpop.permute.xlu0 %1542
      %1544 = vrot.lane.b32.xlu0 %v1518, 8
      %v1545 = vpop.permute.xlu0 %1544
      %1546 = vrot.lane.b32.xlu0 %v1519, 8
      %v1547 = vpop.permute.xlu0 %1546
      %1548 = vrot.lane.b32.xlu0 %v1520, 8
      %v1549 = vpop.permute.xlu0 %1548
      %1550 = vrot.lane.b32.xlu0 %v1521, 8
      %v1551 = vpop.permute.xlu0 %1550
      %1552 = vrot.lane.b32.xlu0 %v1522, 8
      %v1553 = vpop.permute.xlu0 %1552
      %1554 = vrot.lane.b32.xlu0 %v1523, 8
      %v1555 = vpop.permute.xlu0 %1554
      %v1556 = vunpack.c.l.b16 %v1251
      %v1557 = vunpack.c.l.b16 %v1254
      %v1558 = vunpack.c.l.b16 %v1258
      %v1559 = vunpack.c.l.b16 %v1261
      %v1560 = vunpack.c.l.b16 %v1265
      %v1561 = vunpack.c.l.b16 %v1268
      %v1562 = vunpack.c.l.b16 %v1272
      %v1563 = vunpack.c.l.b16 %v1275
      %v1564 = vunpack.c.l.b16 %v1279
      %v1565 = vunpack.c.l.b16 %v1282
      %v1566 = vunpack.c.l.b16 %v1286
      %v1567 = vunpack.c.l.b16 %v1289
      %v1568 = vunpack.c.l.b16 %v1293
      %v1569 = vunpack.c.l.b16 %v1296
      %v1570 = vunpack.c.l.b16 %v1300
      %v1571 = vunpack.c.l.b16 %v1303
      %v1572 = vunpack.c.l.b16 %v1307
      %v1573 = vunpack.c.l.b16 %v1310
      %v1574 = vunpack.c.l.b16 %v1314
      %v1575 = vunpack.c.l.b16 %v1317
      %v1576 = vunpack.c.l.b16 %v1321
      %v1577 = vunpack.c.l.b16 %v1324
      %v1578 = vunpack.c.l.b16 %v1328
      %v1579 = vunpack.c.l.b16 %v1331
      %v1580 = vunpack.c.l.b16 %v1335
      %v1581 = vunpack.c.l.b16 %v1338
      %v1582 = vunpack.c.l.b16 %v1342
      %v1583 = vunpack.c.l.b16 %v1345
      %v1584 = vunpack.c.l.b16 %v1349
      %v1585 = vunpack.c.l.b16 %v1352
      %v1586 = vunpack.c.l.b16 %v1356
      %v1587 = vunpack.c.l.b16 %v1359
      %v1588 = vpack.c.b16 %v1557, %v1556
      %v1589 = vpack.c.b16 %v1559, %v1558
      %v1590 = vpack.c.b16 %v1561, %v1560
      %v1591 = vpack.c.b16 %v1563, %v1562
      %v1592 = vpack.c.b16 %v1565, %v1564
      %v1593 = vpack.c.b16 %v1567, %v1566
      %v1594 = vpack.c.b16 %v1569, %v1568
      %v1595 = vpack.c.b16 %v1571, %v1570
      %v1596 = vpack.c.b16 %v1573, %v1572
      %v1597 = vpack.c.b16 %v1575, %v1574
      %v1598 = vpack.c.b16 %v1577, %v1576
      %v1599 = vpack.c.b16 %v1579, %v1578
      %v1600 = vpack.c.b16 %v1581, %v1580
      %v1601 = vpack.c.b16 %v1583, %v1582
      %v1602 = vpack.c.b16 %v1585, %v1584
      %v1603 = vpack.c.b16 %v1587, %v1586
      %1604 = vrot.lane.b32.xlu0 %v1588, 16
      %v1605 = vpop.permute.xlu0 %1604
      %1606 = vrot.lane.b32.xlu0 %v1589, 16
      %v1607 = vpop.permute.xlu0 %1606
      %1608 = vrot.lane.b32.xlu0 %v1590, 16
      %v1609 = vpop.permute.xlu0 %1608
      %1610 = vrot.lane.b32.xlu0 %v1591, 16
      %v1611 = vpop.permute.xlu0 %1610
      %1612 = vrot.lane.b32.xlu0 %v1592, 16
      %v1613 = vpop.permute.xlu0 %1612
      %1614 = vrot.lane.b32.xlu0 %v1593, 16
      %v1615 = vpop.permute.xlu0 %1614
      %1616 = vrot.lane.b32.xlu0 %v1594, 16
      %v1617 = vpop.permute.xlu0 %1616
      %1618 = vrot.lane.b32.xlu0 %v1595, 16
      %v1619 = vpop.permute.xlu0 %1618
      %1620 = vrot.lane.b32.xlu0 %v1596, 16
      %v1621 = vpop.permute.xlu0 %1620
      %1622 = vrot.lane.b32.xlu0 %v1597, 16
      %v1623 = vpop.permute.xlu0 %1622
      %1624 = vrot.lane.b32.xlu0 %v1598, 16
      %v1625 = vpop.permute.xlu0 %1624
      %1626 = vrot.lane.b32.xlu0 %v1599, 16
      %v1627 = vpop.permute.xlu0 %1626
      %1628 = vrot.lane.b32.xlu0 %v1600, 16
      %v1629 = vpop.permute.xlu0 %1628
      %1630 = vrot.lane.b32.xlu0 %v1601, 16
      %v1631 = vpop.permute.xlu0 %1630
      %1632 = vrot.lane.b32.xlu0 %v1602, 16
      %v1633 = vpop.permute.xlu0 %1632
      %1634 = vrot.lane.b32.xlu0 %v1603, 16
      %v1635 = vpop.permute.xlu0 %1634
      %v1636 = vunpack.c.l.b16 %v804
      %v1637 = vunpack.c.l.b16 %v805
      %v1638 = vpack.c.b16 %v1637, %v1636
      %1639 = vrot.lane.b32.xlu0 %v1461, 24
      %v1640 = vpop.permute.xlu0 %1639
      %1641 = vrot.lane.b32.xlu0 %v1462, 24
      %v1642 = vpop.permute.xlu0 %1641
      %1643 = vrot.lane.b32.xlu0 %v1463, 24
      %v1644 = vpop.permute.xlu0 %1643
      %1645 = vrot.lane.b32.xlu0 %v1464, 24
      %v1646 = vpop.permute.xlu0 %1645
      %1647 = vrot.lane.b32.xlu0 %v1465, 24
      %v1648 = vpop.permute.xlu0 %1647
      %1649 = vrot.lane.b32.xlu0 %v1466, 24
      %v1650 = vpop.permute.xlu0 %1649
      %1651 = vrot.lane.b32.xlu0 %v1467, 24
      %v1652 = vpop.permute.xlu0 %1651
      %1653 = vrot.lane.b32.xlu0 %v1468, 24
      %v1654 = vpop.permute.xlu0 %1653
      %1655 = vrot.lane.b32.xlu0 %v1469, 24
      %v1656 = vpop.permute.xlu0 %1655
      %1657 = vrot.lane.b32.xlu0 %v1470, 24
      %v1658 = vpop.permute.xlu0 %1657
      %1659 = vrot.lane.b32.xlu0 %v1471, 24
      %v1660 = vpop.permute.xlu0 %1659
      %1661 = vrot.lane.b32.xlu0 %v1472, 24
      %v1662 = vpop.permute.xlu0 %1661
      %1663 = vrot.lane.b32.xlu0 %v1473, 24
      %v1664 = vpop.permute.xlu0 %1663
      %1665 = vrot.lane.b32.xlu0 %v1474, 24
      %v1666 = vpop.permute.xlu0 %1665
      %1667 = vrot.lane.b32.xlu0 %v1475, 24
      %v1668 = vpop.permute.xlu0 %1667
      %1669 = vrot.lane.b32.xlu0 %v1638, 24
      %v1670 = vpop.permute.xlu0 %1669
      %v1671 = vunpack.c.l.b16 %v1373
      %v1672 = vunpack.c.l.b16 %v1383
      %v1673 = vpack.c.b16 %v1672, %v1671
      %1674 = vrot.lane.b32.xlu0 %v1509, 32
      %v1675 = vpop.permute.xlu0 %1674
      %1676 = vrot.lane.b32.xlu0 %v1510, 32
      %v1677 = vpop.permute.xlu0 %1676
      %1678 = vrot.lane.b32.xlu0 %v1511, 32
      %v1679 = vpop.permute.xlu0 %1678
      %1680 = vrot.lane.b32.xlu0 %v1512, 32
      %v1681 = vpop.permute.xlu0 %1680
      %1682 = vrot.lane.b32.xlu0 %v1513, 32
      %v1683 = vpop.permute.xlu0 %1682
      %1684 = vrot.lane.b32.xlu0 %v1514, 32
      %v1685 = vpop.permute.xlu0 %1684
      %1686 = vrot.lane.b32.xlu0 %v1515, 32
      %v1687 = vpop.permute.xlu0 %1686
      %1688 = vrot.lane.b32.xlu0 %v1516, 32
      %v1689 = vpop.permute.xlu0 %1688
      %1690 = vrot.lane.b32.xlu0 %v1517, 32
      %v1691 = vpop.permute.xlu0 %1690
      %1692 = vrot.lane.b32.xlu0 %v1518, 32
      %v1693 = vpop.permute.xlu0 %1692
      %1694 = vrot.lane.b32.xlu0 %v1519, 32
      %v1695 = vpop.permute.xlu0 %1694
      %1696 = vrot.lane.b32.xlu0 %v1520, 32
      %v1697 = vpop.permute.xlu0 %1696
      %1698 = vrot.lane.b32.xlu0 %v1521, 32
      %v1699 = vpop.permute.xlu0 %1698
      %1700 = vrot.lane.b32.xlu0 %v1522, 32
      %v1701 = vpop.permute.xlu0 %1700
      %1702 = vrot.lane.b32.xlu0 %v1523, 32
      %v1703 = vpop.permute.xlu0 %1702
      %1704 = vrot.lane.b32.xlu0 %v1673, 32
      %v1705 = vpop.permute.xlu0 %1704
      %v1706 = vunpack.c.l.b16 %v1390
      %v1707 = vunpack.c.l.b16 %v1393
      %v1708 = vpack.c.b16 %v1707, %v1706
      %1709 = vrot.lane.b32.xlu0 %v1589, 40
      %v1710 = vpop.permute.xlu0 %1709
      %1711 = vrot.lane.b32.xlu0 %v1590, 40
      %v1712 = vpop.permute.xlu0 %1711
      %1713 = vrot.lane.b32.xlu0 %v1591, 40
      %v1714 = vpop.permute.xlu0 %1713
      %1715 = vrot.lane.b32.xlu0 %v1592, 40
      %v1716 = vpop.permute.xlu0 %1715
      %1717 = vrot.lane.b32.xlu0 %v1593, 40
      %v1718 = vpop.permute.xlu0 %1717
      %1719 = vrot.lane.b32.xlu0 %v1594, 40
      %v1720 = vpop.permute.xlu0 %1719
      %1721 = vrot.lane.b32.xlu0 %v1595, 40
      %v1722 = vpop.permute.xlu0 %1721
      %1723 = vrot.lane.b32.xlu0 %v1596, 40
      %v1724 = vpop.permute.xlu0 %1723
      %1725 = vrot.lane.b32.xlu0 %v1597, 40
      %v1726 = vpop.permute.xlu0 %1725
      %1727 = vrot.lane.b32.xlu0 %v1598, 40
      %v1728 = vpop.permute.xlu0 %1727
      %1729 = vrot.lane.b32.xlu0 %v1599, 40
      %v1730 = vpop.permute.xlu0 %1729
      %1731 = vrot.lane.b32.xlu0 %v1600, 40
      %v1732 = vpop.permute.xlu0 %1731
      %1733 = vrot.lane.b32.xlu0 %v1601, 40
      %v1734 = vpop.permute.xlu0 %1733
      %1735 = vrot.lane.b32.xlu0 %v1602, 40
      %v1736 = vpop.permute.xlu0 %1735
      %1737 = vrot.lane.b32.xlu0 %v1603, 40
      %v1738 = vpop.permute.xlu0 %1737
      %1739 = vrot.lane.b32.xlu0 %v1708, 40
      %v1740 = vpop.permute.xlu0 %1739
      %v1741 = vunpack.c.l.b16 %v807
      %v1742 = vunpack.c.l.b16 %v808
      %v1743 = vpack.c.b16 %v1742, %v1741
      %1744 = vrot.lane.b32.xlu0 %v1462, 48
      %v1745 = vpop.permute.xlu0 %1744
      %1746 = vrot.lane.b32.xlu0 %v1463, 48
      %v1747 = vpop.permute.xlu0 %1746
      %1748 = vrot.lane.b32.xlu0 %v1464, 48
      %v1749 = vpop.permute.xlu0 %1748
      %1750 = vrot.lane.b32.xlu0 %v1465, 48
      %v1751 = vpop.permute.xlu0 %1750
      %1752 = vrot.lane.b32.xlu0 %v1466, 48
      %v1753 = vpop.permute.xlu0 %1752
      %1754 = vrot.lane.b32.xlu0 %v1467, 48
      %v1755 = vpop.permute.xlu0 %1754
      %1756 = vrot.lane.b32.xlu0 %v1468, 48
      %v1757 = vpop.permute.xlu0 %1756
      %1758 = vrot.lane.b32.xlu0 %v1469, 48
      %v1759 = vpop.permute.xlu0 %1758
      %1760 = vrot.lane.b32.xlu0 %v1470, 48
      %v1761 = vpop.permute.xlu0 %1760
      %1762 = vrot.lane.b32.xlu0 %v1471, 48
      %v1763 = vpop.permute.xlu0 %1762
      %1764 = vrot.lane.b32.xlu0 %v1472, 48
      %v1765 = vpop.permute.xlu0 %1764
      %1766 = vrot.lane.b32.xlu0 %v1473, 48
      %v1767 = vpop.permute.xlu0 %1766
      %1768 = vrot.lane.b32.xlu0 %v1474, 48
      %v1769 = vpop.permute.xlu0 %1768
      %1770 = vrot.lane.b32.xlu0 %v1475, 48
      %v1771 = vpop.permute.xlu0 %1770
      %1772 = vrot.lane.b32.xlu0 %v1638, 48
      %v1773 = vpop.permute.xlu0 %1772
      %1774 = vrot.lane.b32.xlu0 %v1743, 48
      %v1775 = vpop.permute.xlu0 %1774
      %v1776 = vunpack.c.l.b16 %v1407
      %v1777 = vunpack.c.l.b16 %v1417
      %v1778 = vpack.c.b16 %v1777, %v1776
      %1779 = vrot.lane.b32.xlu0 %v1510, 56
      %v1780 = vpop.permute.xlu0 %1779
      %1781 = vrot.lane.b32.xlu0 %v1511, 56
      %v1782 = vpop.permute.xlu0 %1781
      %1783 = vrot.lane.b32.xlu0 %v1512, 56
      %v1784 = vpop.permute.xlu0 %1783
      %1785 = vrot.lane.b32.xlu0 %v1513, 56
      %v1786 = vpop.permute.xlu0 %1785
      %1787 = vrot.lane.b32.xlu0 %v1514, 56
      %v1788 = vpop.permute.xlu0 %1787
      %1789 = vrot.lane.b32.xlu0 %v1515, 56
      %v1790 = vpop.permute.xlu0 %1789
      %1791 = vrot.lane.b32.xlu0 %v1516, 56
      %v1792 = vpop.permute.xlu0 %1791
      %1793 = vrot.lane.b32.xlu0 %v1517, 56
      %v1794 = vpop.permute.xlu0 %1793
      %1795 = vrot.lane.b32.xlu0 %v1518, 56
      %v1796 = vpop.permute.xlu0 %1795
      %1797 = vrot.lane.b32.xlu0 %v1519, 56
      %v1798 = vpop.permute.xlu0 %1797
      %1799 = vrot.lane.b32.xlu0 %v1520, 56
      %v1800 = vpop.permute.xlu0 %1799
      %1801 = vrot.lane.b32.xlu0 %v1521, 56
      %v1802 = vpop.permute.xlu0 %1801
      %1803 = vrot.lane.b32.xlu0 %v1522, 56
      %v1804 = vpop.permute.xlu0 %1803
      %1805 = vrot.lane.b32.xlu0 %v1523, 56
      %v1806 = vpop.permute.xlu0 %1805
      %1807 = vrot.lane.b32.xlu0 %v1673, 56
      %v1808 = vpop.permute.xlu0 %1807
      %1809 = vrot.lane.b32.xlu0 %v1778, 56
      %v1810 = vpop.permute.xlu0 %1809
      %v1811 = vunpack.c.l.b16 %v1424
      %v1812 = vunpack.c.l.b16 %v1427
      %v1813 = vpack.c.b16 %v1812, %v1811
      %1814 = vrot.lane.b32.xlu0 %v1590, 64
      %v1815 = vpop.permute.xlu0 %1814
      %1816 = vrot.lane.b32.xlu0 %v1591, 64
      %v1817 = vpop.permute.xlu0 %1816
      %1818 = vrot.lane.b32.xlu0 %v1592, 64
      %v1819 = vpop.permute.xlu0 %1818
      %1820 = vrot.lane.b32.xlu0 %v1593, 64
      %v1821 = vpop.permute.xlu0 %1820
      %1822 = vrot.lane.b32.xlu0 %v1594, 64
      %v1823 = vpop.permute.xlu0 %1822
      %1824 = vrot.lane.b32.xlu0 %v1595, 64
      %v1825 = vpop.permute.xlu0 %1824
      %1826 = vrot.lane.b32.xlu0 %v1596, 64
      %v1827 = vpop.permute.xlu0 %1826
      %1828 = vrot.lane.b32.xlu0 %v1597, 64
      %v1829 = vpop.permute.xlu0 %1828
      %1830 = vrot.lane.b32.xlu0 %v1598, 64
      %v1831 = vpop.permute.xlu0 %1830
      %1832 = vrot.lane.b32.xlu0 %v1599, 64
      %v1833 = vpop.permute.xlu0 %1832
      %1834 = vrot.lane.b32.xlu0 %v1600, 64
      %v1835 = vpop.permute.xlu0 %1834
      %1836 = vrot.lane.b32.xlu0 %v1601, 64
      %v1837 = vpop.permute.xlu0 %1836
      %1838 = vrot.lane.b32.xlu0 %v1602, 64
      %v1839 = vpop.permute.xlu0 %1838
      %1840 = vrot.lane.b32.xlu0 %v1603, 64
      %v1841 = vpop.permute.xlu0 %1840
      %1842 = vrot.lane.b32.xlu0 %v1708, 64
      %v1843 = vpop.permute.xlu0 %1842
      %1844 = vrot.lane.b32.xlu0 %v1813, 64
      %v1845 = vpop.permute.xlu0 %1844
      %vm1846 = vcmask 64512
      %v1849 = vsel %vm1846, %v1460, %v1525
      %v1852 = vsel %vm1846, %v1461, %v1527
      %v1855 = vsel %vm1846, %v1462, %v1529
      %v1858 = vsel %vm1846, %v1463, %v1531
      %v1861 = vsel %vm1846, %v1464, %v1533
      %v1864 = vsel %vm1846, %v1465, %v1535
      %v1867 = vsel %vm1846, %v1466, %v1537
      %v1870 = vsel %vm1846, %v1467, %v1539
      %v1873 = vsel %vm1846, %v1468, %v1541
      %v1876 = vsel %vm1846, %v1469, %v1543
      %v1879 = vsel %vm1846, %v1470, %v1545
      %v1882 = vsel %vm1846, %v1471, %v1547
      %v1885 = vsel %vm1846, %v1472, %v1549
      %v1888 = vsel %vm1846, %v1473, %v1551
      %v1891 = vsel %vm1846, %v1474, %v1553
      %v1894 = vsel %vm1846, %v1475, %v1555
      %vm1895 = vcmask 130048
      %v1897 = vsel %vm1895, %v1849, %v1605
      %v1899 = vsel %vm1895, %v1852, %v1607
      %v1901 = vsel %vm1895, %v1855, %v1609
      %v1903 = vsel %vm1895, %v1858, %v1611
      %v1905 = vsel %vm1895, %v1861, %v1613
      %v1907 = vsel %vm1895, %v1864, %v1615
      %v1909 = vsel %vm1895, %v1867, %v1617
      %v1911 = vsel %vm1895, %v1870, %v1619
      %v1913 = vsel %vm1895, %v1873, %v1621
      %v1915 = vsel %vm1895, %v1876, %v1623
      %v1917 = vsel %vm1895, %v1879, %v1625
      %v1919 = vsel %vm1895, %v1882, %v1627
      %v1921 = vsel %vm1895, %v1885, %v1629
      %v1923 = vsel %vm1895, %v1888, %v1631
      %v1925 = vsel %vm1895, %v1891, %v1633
      %v1927 = vsel %vm1895, %v1894, %v1635
      %vm1928 = vcmask 195584
      %v1930 = vsel %vm1928, %v1897, %v1640
      %v1932 = vsel %vm1928, %v1899, %v1642
      %v1934 = vsel %vm1928, %v1901, %v1644
      %v1936 = vsel %vm1928, %v1903, %v1646
      %v1938 = vsel %vm1928, %v1905, %v1648
      %v1940 = vsel %vm1928, %v1907, %v1650
      %v1942 = vsel %vm1928, %v1909, %v1652
      %v1944 = vsel %vm1928, %v1911, %v1654
      %v1946 = vsel %vm1928, %v1913, %v1656
      %v1948 = vsel %vm1928, %v1915, %v1658
      %v1950 = vsel %vm1928, %v1917, %v1660
      %v1952 = vsel %vm1928, %v1919, %v1662
      %v1954 = vsel %vm1928, %v1921, %v1664
      %v1956 = vsel %vm1928, %v1923, %v1666
      %v1958 = vsel %vm1928, %v1925, %v1668
      %v1960 = vsel %vm1928, %v1927, %v1670
      %vm1961 = vcmask 261120
      %v1963 = vsel %vm1961, %v1930, %v1675
      %v1965 = vsel %vm1961, %v1932, %v1677
      %v1967 = vsel %vm1961, %v1934, %v1679
      %v1969 = vsel %vm1961, %v1936, %v1681
      %v1971 = vsel %vm1961, %v1938, %v1683
      %v1973 = vsel %vm1961, %v1940, %v1685
      %v1975 = vsel %vm1961, %v1942, %v1687
      %v1977 = vsel %vm1961, %v1944, %v1689
      %v1979 = vsel %vm1961, %v1946, %v1691
      %v1981 = vsel %vm1961, %v1948, %v1693
      %v1983 = vsel %vm1961, %v1950, %v1695
      %v1985 = vsel %vm1961, %v1952, %v1697
      %v1987 = vsel %vm1961, %v1954, %v1699
      %v1989 = vsel %vm1961, %v1956, %v1701
      %v1991 = vsel %vm1961, %v1958, %v1703
      %v1993 = vsel %vm1961, %v1960, %v1705
      %vm1994 = vcmask 326656
      %v1996 = vsel %vm1994, %v1963, %v1710
      %v1998 = vsel %vm1994, %v1965, %v1712
      %v2000 = vsel %vm1994, %v1967, %v1714
      %v2002 = vsel %vm1994, %v1969, %v1716
      %v2004 = vsel %vm1994, %v1971, %v1718
      %v2006 = vsel %vm1994, %v1973, %v1720
      %v2008 = vsel %vm1994, %v1975, %v1722
      %v2010 = vsel %vm1994, %v1977, %v1724
      %v2012 = vsel %vm1994, %v1979, %v1726
      %v2014 = vsel %vm1994, %v1981, %v1728
      %v2016 = vsel %vm1994, %v1983, %v1730
      %v2018 = vsel %vm1994, %v1985, %v1732
      %v2020 = vsel %vm1994, %v1987, %v1734
      %v2022 = vsel %vm1994, %v1989, %v1736
      %v2024 = vsel %vm1994, %v1991, %v1738
      %v2026 = vsel %vm1994, %v1993, %v1740
      %vm2027 = vcmask 392192
      %v2029 = vsel %vm2027, %v1996, %v1745
      %v2031 = vsel %vm2027, %v1998, %v1747
      %v2033 = vsel %vm2027, %v2000, %v1749
      %v2035 = vsel %vm2027, %v2002, %v1751
      %v2037 = vsel %vm2027, %v2004, %v1753
      %v2039 = vsel %vm2027, %v2006, %v1755
      %v2041 = vsel %vm2027, %v2008, %v1757
      %v2043 = vsel %vm2027, %v2010, %v1759
      %v2045 = vsel %vm2027, %v2012, %v1761
      %v2047 = vsel %vm2027, %v2014, %v1763
      %v2049 = vsel %vm2027, %v2016, %v1765
      %v2051 = vsel %vm2027, %v2018, %v1767
      %v2053 = vsel %vm2027, %v2020, %v1769
      %v2055 = vsel %vm2027, %v2022, %v1771
      %v2057 = vsel %vm2027, %v2024, %v1773
      %v2059 = vsel %vm2027, %v2026, %v1775
      %vm2060 = vcmask 457728
      %v2062 = vsel %vm2060, %v2029, %v1780
      %v2064 = vsel %vm2060, %v2031, %v1782
      %v2066 = vsel %vm2060, %v2033, %v1784
      %v2068 = vsel %vm2060, %v2035, %v1786
      %v2070 = vsel %vm2060, %v2037, %v1788
      %v2072 = vsel %vm2060, %v2039, %v1790
      %v2074 = vsel %vm2060, %v2041, %v1792
      %v2076 = vsel %vm2060, %v2043, %v1794
      %v2078 = vsel %vm2060, %v2045, %v1796
      %v2080 = vsel %vm2060, %v2047, %v1798
      %v2082 = vsel %vm2060, %v2049, %v1800
      %v2084 = vsel %vm2060, %v2051, %v1802
      %v2086 = vsel %vm2060, %v2053, %v1804
      %v2088 = vsel %vm2060, %v2055, %v1806
      %v2090 = vsel %vm2060, %v2057, %v1808
      %v2092 = vsel %vm2060, %v2059, %v1810
      %vm2093 = vcmask 523264
      %v2095 = vsel %vm2093, %v2062, %v1815
      %v2097 = vsel %vm2093, %v2064, %v1817
      %v2099 = vsel %vm2093, %v2066, %v1819
      %v2101 = vsel %vm2093, %v2068, %v1821
      %v2103 = vsel %vm2093, %v2070, %v1823
      %v2105 = vsel %vm2093, %v2072, %v1825
      %v2107 = vsel %vm2093, %v2074, %v1827
      %v2109 = vsel %vm2093, %v2076, %v1829
      %v2111 = vsel %vm2093, %v2078, %v1831
      %v2113 = vsel %vm2093, %v2080, %v1833
      %v2115 = vsel %vm2093, %v2082, %v1835
      %v2117 = vsel %vm2093, %v2084, %v1837
      %v2119 = vsel %vm2093, %v2086, %v1839
      %v2121 = vsel %vm2093, %v2088, %v1841
      %v2123 = vsel %vm2093, %v2090, %v1843
      %v2125 = vsel %vm2093, %v2092, %v1845
      %v2126 = vld [vmem:[%s1] sm:$0xf]
      %v2127 = vld [vmem:[%s1 + $0x4] sm:$0xf]
      %v2128 = vld [vmem:[%s1 + $0x8] sm:$0xf]
      %v2129 = vld [vmem:[%s1 + $0xc] sm:$0xf]
      %v2130 = vld [vmem:[%s1 + $0x10] sm:$0xf]
      %v2131 = vld [vmem:[%s1 + $0x14] sm:$0xf]
      %v2132 = vld [vmem:[%s1 + $0x18] sm:$0xf]
      %v2133 = vld [vmem:[%s1 + $0x1c] sm:$0xf]
      %v2134 = vld [vmem:[%s1 + $0x20] sm:$0xf]
      %v2135 = vld [vmem:[%s2] sm:$0x1]
      %v2137 = vlaneseq
      %v2138 = vshrl.u32 %v2137, 7
      %v2139 = vsub.s32 0, %v2138
      %v2140 = vrot.slane %v2135, %v2139
      %v2151 = vunpack.c.l.b16 %v2126
      %v2152 = vunpack.c.l.b16 %v2127
      %v2153 = vunpack.c.l.b16 %v2128
      %v2154 = vunpack.c.l.b16 %v2129
      %v2155 = vunpack.c.l.b16 %v2130
      %v2156 = vunpack.c.l.b16 %v2131
      %v2157 = vunpack.c.l.b16 %v2132
      %v2158 = vunpack.c.l.b16 %v2133
      %v2159 = vunpack.c.l.b16 %v2134
      %v2160 = vpack.c.b16 %v2152, %v2151
      %v2161 = vpack.c.b16 %v2154, %v2153
      %v2162 = vpack.c.b16 %v2156, %v2155
      %v2163 = vpack.c.b16 %v2158, %v2157
      %v2164 = vpack.c.b16 %v2159, %v2159
      %vm2169 = vcmask 588800
      %v2170 = vsel %vm2169, %v2095, 0
      %v2172 = vsel %vm2169, %v2097, 0
      %v2174 = vsel %vm2169, %v2099, 0
      %v2176 = vsel %vm2169, %v2101, 0
      %v2178 = vsel %vm2169, %v2103, 0
      %v2180 = vsel %vm2169, %v2105, 0
      %v2182 = vsel %vm2169, %v2107, 0
      %v2184 = vsel %vm2169, %v2109, 0
      %v2186 = vsel %vm2169, %v2111, 0
      %v2188 = vsel %vm2169, %v2113, 0
      %v2190 = vsel %vm2169, %v2115, 0
      %v2192 = vsel %vm2169, %v2117, 0
      %v2194 = vsel %vm2169, %v2119, 0
      %v2196 = vsel %vm2169, %v2121, 0
      %v2198 = vsel %vm2169, %v2123, 0
      %v2200 = vsel %vm2169, %v2125, 0
      %vm2202 = vcmask 1043456
      %v2204 = vsel %vm2202, %v2164, 0
      %2206 = vmatprep.subr.bf16.mxu0 0
      %2207 = vmatpush1.bf16.msra.mxu0 0
      %2208 = vmatprep.subr.bf16.mxu0 0
      %2209 = vmatpush1.bf16.msra.mxu0 0
      %2210 = vmatprep.subr.bf16.mxu0 0
      %2211 = vmatpush1.bf16.msra.mxu0 0
      %2212 = vmatprep.subr.bf16.mxu0 0
      %2213 = vmatpush1.bf16.msra.mxu0 %v2204
      %2214 = vmatprep.subr.bf16.mxu0 0
      %2215 = vmatpush1.bf16.msra.mxu0 %v2163
      %2216 = vmatprep.subr.bf16.mxu0 0
      %2217 = vmatpush1.bf16.msra.mxu0 %v2162
      %2218 = vmatprep.subr.bf16.mxu0 0
      %2219 = vmatpush1.bf16.msra.mxu0 %v2161
      %2220 = vmatprep.subr.bf16.mxu0 0
      %2221 = vmatpush1.bf16.msra.mxu0 %v2160
      %2222 = vmatprep.subr.bf16.mxu0 0
      %2223 = vmatpush2.bf16.msra.mxu0 0
      %2224 = vmatprep.subr.bf16.mxu0 0
      %2225 = vmatpush2.bf16.msra.mxu0 0
      %2226 = vmatprep.subr.bf16.mxu0 0
      %2227 = vmatpush2.bf16.msra.mxu0 0
      %2228 = vmatprep.subr.bf16.mxu0 0
      %2229 = vmatpush2.bf16.msra.mxu0 0
      %2230 = vmatprep.subr.bf16.mxu0 0
      %2231 = vmatpush2.bf16.msra.mxu0 0
      %2232 = vmatprep.subr.bf16.mxu0 0
      %2233 = vmatpush2.bf16.msra.mxu0 0
      %2234 = vmatprep.subr.bf16.mxu0 0
      %2235 = vmatpush2.bf16.msra.mxu0 0
      %2236 = vmatprep.subr.bf16.mxu0 0
      %2237 = vmatpush2.bf16.msra.mxu0 0
      %2238 = vmatprep.mubr.bf16.mxu0 0
      %2239 = vmatmul.mubr.bf16.gmra.mxu0 %v2170
      %v2240 = vpop.f32.mrf.mxu0
      %v2241 = vadd.f32 %v2140, %v2240
      %v2242 = vpop.f32.mrf.mxu0
      %v2243 = vpop.f32.mrf.mxu0
      %v2244 = vadd.f32 %v2140, %v2243
      %v2245 = vpop.f32.mrf.mxu0
      %2246 = vmatprep.mubr.bf16.mxu0 0
      %2247 = vmatmul.mubr.bf16.gmra.mxu0 %v2172
      %v2248 = vpop.f32.mrf.mxu0
      %v2249 = vadd.f32 %v2140, %v2248
      %v2250 = vpop.f32.mrf.mxu0
      %v2251 = vpop.f32.mrf.mxu0
      %v2252 = vadd.f32 %v2140, %v2251
      %v2253 = vpop.f32.mrf.mxu0
      %2254 = vmatprep.mubr.bf16.mxu0 0
      %2255 = vmatmul.mubr.bf16.gmra.mxu0 %v2174
      %v2256 = vpop.f32.mrf.mxu0
      %v2257 = vadd.f32 %v2140, %v2256
      %v2258 = vpop.f32.mrf.mxu0
      %v2259 = vpop.f32.mrf.mxu0
      %v2260 = vadd.f32 %v2140, %v2259
      %v2261 = vpop.f32.mrf.mxu0
      %2262 = vmatprep.mubr.bf16.mxu0 0
      %2263 = vmatmul.mubr.bf16.gmra.mxu0 %v2176
      %v2264 = vpop.f32.mrf.mxu0
      %v2265 = vadd.f32 %v2140, %v2264
      %v2266 = vpop.f32.mrf.mxu0
      %v2267 = vpop.f32.mrf.mxu0
      %v2268 = vadd.f32 %v2140, %v2267
      %v2269 = vpop.f32.mrf.mxu0
      %2270 = vmatprep.mubr.bf16.mxu0 0
      %2271 = vmatmul.mubr.bf16.gmra.mxu0 %v2178
      %v2272 = vpop.f32.mrf.mxu0
      %v2273 = vadd.f32 %v2140, %v2272
      %v2274 = vpop.f32.mrf.mxu0
      %v2275 = vpop.f32.mrf.mxu0
      %v2276 = vadd.f32 %v2140, %v2275
      %v2277 = vpop.f32.mrf.mxu0
      %2278 = vmatprep.mubr.bf16.mxu0 0
      %2279 = vmatmul.mubr.bf16.gmra.mxu0 %v2180
      %v2280 = vpop.f32.mrf.mxu0
      %v2281 = vadd.f32 %v2140, %v2280
      %v2282 = vpop.f32.mrf.mxu0
      %v2283 = vpop.f32.mrf.mxu0
      %v2284 = vadd.f32 %v2140, %v2283
      %v2285 = vpop.f32.mrf.mxu0
      %2286 = vmatprep.mubr.bf16.mxu0 0
      %2287 = vmatmul.mubr.bf16.gmra.mxu0 %v2182
      %v2288 = vpop.f32.mrf.mxu0
      %v2289 = vadd.f32 %v2140, %v2288
      %v2290 = vpop.f32.mrf.mxu0
      %v2291 = vpop.f32.mrf.mxu0
      %v2292 = vadd.f32 %v2140, %v2291
      %v2293 = vpop.f32.mrf.mxu0
      %2294 = vmatprep.mubr.bf16.mxu0 0
      %2295 = vmatmul.mubr.bf16.gmra.mxu0 %v2184
      %v2296 = vpop.f32.mrf.mxu0
      %v2297 = vadd.f32 %v2140, %v2296
      %v2298 = vpop.f32.mrf.mxu0
      %v2299 = vpop.f32.mrf.mxu0
      %v2300 = vadd.f32 %v2140, %v2299
      %v2301 = vpop.f32.mrf.mxu0
      %2302 = vmatprep.mubr.bf16.mxu0 0
      %2303 = vmatmul.mubr.bf16.gmra.mxu0 %v2186
      %v2304 = vpop.f32.mrf.mxu0
      %v2305 = vadd.f32 %v2140, %v2304
      %v2306 = vpop.f32.mrf.mxu0
      %v2307 = vpop.f32.mrf.mxu0
      %v2308 = vadd.f32 %v2140, %v2307
      %v2309 = vpop.f32.mrf.mxu0
      %2310 = vmatprep.mubr.bf16.mxu0 0
      %2311 = vmatmul.mubr.bf16.gmra.mxu0 %v2188
      %v2312 = vpop.f32.mrf.mxu0
      %v2313 = vadd.f32 %v2140, %v2312
      %v2314 = vpop.f32.mrf.mxu0
      %v2315 = vpop.f32.mrf.mxu0
      %v2316 = vadd.f32 %v2140, %v2315
      %v2317 = vpop.f32.mrf.mxu0
      %2318 = vmatprep.mubr.bf16.mxu0 0
      %2319 = vmatmul.mubr.bf16.gmra.mxu0 %v2190
      %v2320 = vpop.f32.mrf.mxu0
      %v2321 = vadd.f32 %v2140, %v2320
      %v2322 = vpop.f32.mrf.mxu0
      %v2323 = vpop.f32.mrf.mxu0
      %v2324 = vadd.f32 %v2140, %v2323
      %v2325 = vpop.f32.mrf.mxu0
      %2326 = vmatprep.mubr.bf16.mxu0 0
      %2327 = vmatmul.mubr.bf16.gmra.mxu0 %v2192
      %v2328 = vpop.f32.mrf.mxu0
      %v2329 = vadd.f32 %v2140, %v2328
      %v2330 = vpop.f32.mrf.mxu0
      %v2331 = vpop.f32.mrf.mxu0
      %v2332 = vadd.f32 %v2140, %v2331
      %v2333 = vpop.f32.mrf.mxu0
      %2334 = vmatprep.mubr.bf16.mxu0 0
      %2335 = vmatmul.mubr.bf16.gmra.mxu0 %v2194
      %v2336 = vpop.f32.mrf.mxu0
      %v2337 = vadd.f32 %v2140, %v2336
      %v2338 = vpop.f32.mrf.mxu0
      %v2339 = vpop.f32.mrf.mxu0
      %v2340 = vadd.f32 %v2140, %v2339
      %v2341 = vpop.f32.mrf.mxu0
      %2342 = vmatprep.mubr.bf16.mxu0 0
      %2343 = vmatmul.mubr.bf16.gmra.mxu0 %v2196
      %v2344 = vpop.f32.mrf.mxu0
      %v2345 = vadd.f32 %v2140, %v2344
      %v2346 = vpop.f32.mrf.mxu0
      %v2347 = vpop.f32.mrf.mxu0
      %v2348 = vadd.f32 %v2140, %v2347
      %v2349 = vpop.f32.mrf.mxu0
      %2350 = vmatprep.mubr.bf16.mxu0 0
      %2351 = vmatmul.mubr.bf16.gmra.mxu0 %v2198
      %v2352 = vpop.f32.mrf.mxu0
      %v2353 = vadd.f32 %v2140, %v2352
      %v2354 = vpop.f32.mrf.mxu0
      %v2355 = vpop.f32.mrf.mxu0
      %v2356 = vadd.f32 %v2140, %v2355
      %v2357 = vpop.f32.mrf.mxu0
      %2358 = vmatprep.mubr.bf16.mxu0 0
      %2359 = vmatmul.mubr.bf16.gmra.mxu0 %v2200
      %v2360 = vpop.f32.mrf.mxu0
      %v2361 = vadd.f32 %v2140, %v2360
      %v2362 = vpop.f32.mrf.mxu0
      %v2363 = vpop.f32.mrf.mxu0
      %v2364 = vadd.f32 %v2140, %v2363
      %v2365 = vpop.f32.mrf.mxu0
      %2366 = vdwg.mxu0
      %v2367 = vmax.f32 %v2241, 0.0
      %v2368 = vmax.f32 %v2244, 0.0
      %v2369 = vmax.f32 %v2249, 0.0
      %v2370 = vmax.f32 %v2252, 0.0
      %v2371 = vmax.f32 %v2257, 0.0
      %v2372 = vmax.f32 %v2260, 0.0
      %v2373 = vmax.f32 %v2265, 0.0
      %v2374 = vmax.f32 %v2268, 0.0
      %v2375 = vmax.f32 %v2273, 0.0
      %v2376 = vmax.f32 %v2276, 0.0
      %v2377 = vmax.f32 %v2281, 0.0
      %v2378 = vmax.f32 %v2284, 0.0
      %v2379 = vmax.f32 %v2289, 0.0
      %v2380 = vmax.f32 %v2292, 0.0
      %v2381 = vmax.f32 %v2297, 0.0
      %v2382 = vmax.f32 %v2300, 0.0
      %v2383 = vmax.f32 %v2305, 0.0
      %v2384 = vmax.f32 %v2308, 0.0
      %v2385 = vmax.f32 %v2313, 0.0
      %v2386 = vmax.f32 %v2316, 0.0
      %v2387 = vmax.f32 %v2321, 0.0
      %v2388 = vmax.f32 %v2324, 0.0
      %v2389 = vmax.f32 %v2329, 0.0
      %v2390 = vmax.f32 %v2332, 0.0
      %v2391 = vmax.f32 %v2337, 0.0
      %v2392 = vmax.f32 %v2340, 0.0
      %v2393 = vmax.f32 %v2345, 0.0
      %v2394 = vmax.f32 %v2348, 0.0
      %v2395 = vmax.f32 %v2353, 0.0
      %v2396 = vmax.f32 %v2356, 0.0
      %v2397 = vmax.f32 %v2361, 0.0
      %v2398 = vmax.f32 %v2364, 0.0
      %v2399 = vpack.c.bf16 %v2368, %v2367
      %v2400 = vpack.c.bf16 %v2370, %v2369
      %v2401 = vpack.c.bf16 %v2372, %v2371
      %v2402 = vpack.c.bf16 %v2374, %v2373
      %v2403 = vpack.c.bf16 %v2376, %v2375
      %v2404 = vpack.c.bf16 %v2378, %v2377
      %v2405 = vpack.c.bf16 %v2380, %v2379
      %v2406 = vpack.c.bf16 %v2382, %v2381
      %v2407 = vpack.c.bf16 %v2384, %v2383
      %v2408 = vpack.c.bf16 %v2386, %v2385
      %v2409 = vpack.c.bf16 %v2388, %v2387
      %v2410 = vpack.c.bf16 %v2390, %v2389
      %v2411 = vpack.c.bf16 %v2392, %v2391
      %v2412 = vpack.c.bf16 %v2394, %v2393
      %v2413 = vpack.c.bf16 %v2396, %v2395
      %v2414 = vpack.c.bf16 %v2398, %v2397
      %v2431 = vunpack.c.l.b16 %v2399
      %v2432 = vunpack.c.h.b16 %v2399
      %v2433 = vunpack.c.l.b16 %v2400
      %v2434 = vunpack.c.h.b16 %v2400
      %v2435 = vunpack.c.l.b16 %v2401
      %v2436 = vunpack.c.h.b16 %v2401
      %v2437 = vunpack.c.l.b16 %v2402
      %v2438 = vunpack.c.h.b16 %v2402
      %v2439 = vunpack.c.l.b16 %v2403
      %v2440 = vunpack.c.h.b16 %v2403
      %v2441 = vunpack.c.l.b16 %v2404
      %v2442 = vunpack.c.h.b16 %v2404
      %v2443 = vunpack.c.l.b16 %v2405
      %v2444 = vunpack.c.h.b16 %v2405
      %v2445 = vunpack.c.l.b16 %v2406
      %v2446 = vunpack.c.h.b16 %v2406
      %v2447 = vunpack.c.l.b16 %v2407
      %v2448 = vunpack.c.h.b16 %v2407
      %v2449 = vunpack.c.l.b16 %v2408
      %v2450 = vunpack.c.h.b16 %v2408
      %v2451 = vunpack.c.l.b16 %v2409
      %v2452 = vunpack.c.h.b16 %v2409
      %v2453 = vunpack.c.l.b16 %v2410
      %v2454 = vunpack.c.h.b16 %v2410
      %v2455 = vunpack.c.l.b16 %v2411
      %v2456 = vunpack.c.h.b16 %v2411
      %v2457 = vunpack.c.l.b16 %v2412
      %v2458 = vunpack.c.h.b16 %v2412
      %v2459 = vunpack.c.l.b16 %v2413
      %v2460 = vunpack.c.h.b16 %v2413
      %v2461 = vunpack.c.l.b16 %v2414
      %v2462 = vunpack.c.h.b16 %v2414
      %v2463 = vpack.c.b16 %v2431, %v2431
      %v2464 = vpack.c.b16 %v2432, %v2432
      %v2465 = vpack.c.b16 %v2433, %v2433
      %v2466 = vpack.c.b16 %v2434, %v2434
      %v2467 = vpack.c.b16 %v2435, %v2435
      %v2468 = vpack.c.b16 %v2436, %v2436
      %v2469 = vpack.c.b16 %v2437, %v2437
      %v2470 = vpack.c.b16 %v2438, %v2438
      %v2471 = vpack.c.b16 %v2439, %v2439
      %v2472 = vpack.c.b16 %v2440, %v2440
      %v2473 = vpack.c.b16 %v2441, %v2441
      %v2474 = vpack.c.b16 %v2442, %v2442
      %v2475 = vpack.c.b16 %v2443, %v2443
      %v2476 = vpack.c.b16 %v2444, %v2444
      %v2477 = vpack.c.b16 %v2445, %v2445
      %v2478 = vpack.c.b16 %v2446, %v2446
      %v2479 = vpack.c.b16 %v2447, %v2447
      %v2480 = vpack.c.b16 %v2448, %v2448
      %v2481 = vpack.c.b16 %v2449, %v2449
      %v2482 = vpack.c.b16 %v2450, %v2450
      %v2483 = vpack.c.b16 %v2451, %v2451
      %v2484 = vpack.c.b16 %v2452, %v2452
      %v2485 = vpack.c.b16 %v2453, %v2453
      %v2486 = vpack.c.b16 %v2454, %v2454
      %v2487 = vpack.c.b16 %v2455, %v2455
      %v2488 = vpack.c.b16 %v2456, %v2456
      %v2489 = vpack.c.b16 %v2457, %v2457
      %v2490 = vpack.c.b16 %v2458, %v2458
      %v2491 = vpack.c.b16 %v2459, %v2459
      %v2492 = vpack.c.b16 %v2460, %v2460
      %v2493 = vpack.c.b16 %v2461, %v2461
      %v2494 = vpack.c.b16 %v2462, %v2462
      %v2496 = vshrl.u32 %v2463, 16
      %v2498 = vrot.slane %v2496, 7
      %v2499 = vshll.u32 %v2463, 16
      %v2501 = vor.u32 %v2498, %v2499
      %v2502 = vrot.slane %v2498, 4
      %v2504 = vshrl.u32 %v2464, 16
      %v2506 = vrot.slane %v2504, 7
      %v2507 = vshll.u32 %v2464, 16
      %v2509 = vor.u32 %v2506, %v2507
      %v2510 = vsel %vm316, %v2502, %v2509
      %v2511 = vrot.slane %v2506, 4
      %v2513 = vshrl.u32 %v2465, 16
      %v2515 = vrot.slane %v2513, 7
      %v2516 = vshll.u32 %v2465, 16
      %v2518 = vor.u32 %v2515, %v2516
      %v2519 = vrot.slane %v2515, 4
      %v2521 = vshrl.u32 %v2466, 16
      %v2523 = vrot.slane %v2521, 7
      %v2524 = vshll.u32 %v2466, 16
      %v2526 = vor.u32 %v2523, %v2524
      %v2527 = vsel %vm316, %v2519, %v2526
      %v2528 = vrot.slane %v2523, 4
      %v2530 = vshrl.u32 %v2467, 16
      %v2532 = vrot.slane %v2530, 7
      %v2533 = vshll.u32 %v2467, 16
      %v2535 = vor.u32 %v2532, %v2533
      %v2536 = vrot.slane %v2532, 4
      %v2538 = vshrl.u32 %v2468, 16
      %v2540 = vrot.slane %v2538, 7
      %v2541 = vshll.u32 %v2468, 16
      %v2543 = vor.u32 %v2540, %v2541
      %v2544 = vsel %vm316, %v2536, %v2543
      %v2545 = vrot.slane %v2540, 4
      %v2547 = vshrl.u32 %v2469, 16
      %v2549 = vrot.slane %v2547, 7
      %v2550 = vshll.u32 %v2469, 16
      %v2552 = vor.u32 %v2549, %v2550
      %v2553 = vrot.slane %v2549, 4
      %v2555 = vshrl.u32 %v2470, 16
      %v2557 = vrot.slane %v2555, 7
      %v2558 = vshll.u32 %v2470, 16
      %v2560 = vor.u32 %v2557, %v2558
      %v2561 = vsel %vm316, %v2553, %v2560
      %v2562 = vrot.slane %v2557, 4
      %v2564 = vshrl.u32 %v2471, 16
      %v2566 = vrot.slane %v2564, 7
      %v2567 = vshll.u32 %v2471, 16
      %v2569 = vor.u32 %v2566, %v2567
      %v2570 = vrot.slane %v2566, 4
      %v2572 = vshrl.u32 %v2472, 16
      %v2574 = vrot.slane %v2572, 7
      %v2575 = vshll.u32 %v2472, 16
      %v2577 = vor.u32 %v2574, %v2575
      %v2578 = vsel %vm316, %v2570, %v2577
      %v2579 = vrot.slane %v2574, 4
      %v2581 = vshrl.u32 %v2473, 16
      %v2583 = vrot.slane %v2581, 7
      %v2584 = vshll.u32 %v2473, 16
      %v2586 = vor.u32 %v2583, %v2584
      %v2587 = vrot.slane %v2583, 4
      %v2589 = vshrl.u32 %v2474, 16
      %v2591 = vrot.slane %v2589, 7
      %v2592 = vshll.u32 %v2474, 16
      %v2594 = vor.u32 %v2591, %v2592
      %v2595 = vsel %vm316, %v2587, %v2594
      %v2596 = vrot.slane %v2591, 4
      %v2598 = vshrl.u32 %v2475, 16
      %v2600 = vrot.slane %v2598, 7
      %v2601 = vshll.u32 %v2475, 16
      %v2603 = vor.u32 %v2600, %v2601
      %v2604 = vrot.slane %v2600, 4
      %v2606 = vshrl.u32 %v2476, 16
      %v2608 = vrot.slane %v2606, 7
      %v2609 = vshll.u32 %v2476, 16
      %v2611 = vor.u32 %v2608, %v2609
      %v2612 = vsel %vm316, %v2604, %v2611
      %v2613 = vrot.slane %v2608, 4
      %v2615 = vshrl.u32 %v2477, 16
      %v2617 = vrot.slane %v2615, 7
      %v2618 = vshll.u32 %v2477, 16
      %v2620 = vor.u32 %v2617, %v2618
      %v2621 = vrot.slane %v2617, 4
      %v2623 = vshrl.u32 %v2478, 16
      %v2625 = vrot.slane %v2623, 7
      %v2626 = vshll.u32 %v2478, 16
      %v2628 = vor.u32 %v2625, %v2626
      %v2629 = vsel %vm316, %v2621, %v2628
      %v2630 = vrot.slane %v2625, 4
      %v2632 = vshrl.u32 %v2479, 16
      %v2634 = vrot.slane %v2632, 7
      %v2635 = vshll.u32 %v2479, 16
      %v2637 = vor.u32 %v2634, %v2635
      %v2638 = vrot.slane %v2634, 4
      %v2640 = vshrl.u32 %v2480, 16
      %v2642 = vrot.slane %v2640, 7
      %v2643 = vshll.u32 %v2480, 16
      %v2645 = vor.u32 %v2642, %v2643
      %v2646 = vsel %vm316, %v2638, %v2645
      %v2647 = vrot.slane %v2642, 4
      %v2649 = vshrl.u32 %v2481, 16
      %v2651 = vrot.slane %v2649, 7
      %v2652 = vshll.u32 %v2481, 16
      %v2654 = vor.u32 %v2651, %v2652
      %v2655 = vrot.slane %v2651, 4
      %v2657 = vshrl.u32 %v2482, 16
      %v2659 = vrot.slane %v2657, 7
      %v2660 = vshll.u32 %v2482, 16
      %v2662 = vor.u32 %v2659, %v2660
      %v2663 = vsel %vm316, %v2655, %v2662
      %v2664 = vrot.slane %v2659, 4
      %v2666 = vshrl.u32 %v2483, 16
      %v2668 = vrot.slane %v2666, 7
      %v2669 = vshll.u32 %v2483, 16
      %v2671 = vor.u32 %v2668, %v2669
      %v2672 = vrot.slane %v2668, 4
      %v2674 = vshrl.u32 %v2484, 16
      %v2676 = vrot.slane %v2674, 7
      %v2677 = vshll.u32 %v2484, 16
      %v2679 = vor.u32 %v2676, %v2677
      %v2680 = vsel %vm316, %v2672, %v2679
      %v2681 = vrot.slane %v2676, 4
      %v2683 = vshrl.u32 %v2485, 16
      %v2685 = vrot.slane %v2683, 7
      %v2686 = vshll.u32 %v2485, 16
      %v2688 = vor.u32 %v2685, %v2686
      %v2689 = vrot.slane %v2685, 4
      %v2691 = vshrl.u32 %v2486, 16
      %v2693 = vrot.slane %v2691, 7
      %v2694 = vshll.u32 %v2486, 16
      %v2696 = vor.u32 %v2693, %v2694
      %v2697 = vsel %vm316, %v2689, %v2696
      %v2698 = vrot.slane %v2693, 4
      %v2700 = vshrl.u32 %v2487, 16
      %v2702 = vrot.slane %v2700, 7
      %v2703 = vshll.u32 %v2487, 16
      %v2705 = vor.u32 %v2702, %v2703
      %v2706 = vrot.slane %v2702, 4
      %v2708 = vshrl.u32 %v2488, 16
      %v2710 = vrot.slane %v2708, 7
      %v2711 = vshll.u32 %v2488, 16
      %v2713 = vor.u32 %v2710, %v2711
      %v2714 = vsel %vm316, %v2706, %v2713
      %v2715 = vrot.slane %v2710, 4
      %v2717 = vshrl.u32 %v2489, 16
      %v2719 = vrot.slane %v2717, 7
      %v2720 = vshll.u32 %v2489, 16
      %v2722 = vor.u32 %v2719, %v2720
      %v2723 = vrot.slane %v2719, 4
      %v2725 = vshrl.u32 %v2490, 16
      %v2727 = vrot.slane %v2725, 7
      %v2728 = vshll.u32 %v2490, 16
      %v2730 = vor.u32 %v2727, %v2728
      %v2731 = vsel %vm316, %v2723, %v2730
      %v2732 = vrot.slane %v2727, 4
      %v2734 = vshrl.u32 %v2491, 16
      %v2736 = vrot.slane %v2734, 7
      %v2737 = vshll.u32 %v2491, 16
      %v2739 = vor.u32 %v2736, %v2737
      %v2740 = vrot.slane %v2736, 4
      %v2742 = vshrl.u32 %v2492, 16
      %v2744 = vrot.slane %v2742, 7
      %v2745 = vshll.u32 %v2492, 16
      %v2747 = vor.u32 %v2744, %v2745
      %v2748 = vsel %vm316, %v2740, %v2747
      %v2749 = vrot.slane %v2744, 4
      %v2751 = vshrl.u32 %v2493, 16
      %v2753 = vrot.slane %v2751, 7
      %v2754 = vshll.u32 %v2493, 16
      %v2756 = vor.u32 %v2753, %v2754
      %v2757 = vrot.slane %v2753, 4
      %v2759 = vshrl.u32 %v2494, 16
      %v2761 = vrot.slane %v2759, 7
      %v2762 = vshll.u32 %v2494, 16
      %v2764 = vor.u32 %v2761, %v2762
      %v2765 = vsel %vm316, %v2757, %v2764
      %v2766 = vrot.slane %v2761, 4
      %vm2815 = vcmask 60416
      %vm2816 = vmand %vm2815, %vm639
      %v2817 = vld [vmem:[%s637] sm:$0xf]
      %v2818 = vsel %vm2816, %v2501, %v2817
      %2819 = vst [vmem:[%s637] sm:$0xf] %v2818
      %2820 = vst.msk [vmem:[%s637 + $0x4] sm:$0xf] %vm226, %v2510
      %vm2821 = vcmask 57344
      %vm2822 = vmand %vm2821, %vm314
      %v2823 = vld [vmem:[%s637 + $0x8] sm:$0x1]
      %v2824 = vsel %vm2822, %v2511, %v2823
      %2825 = vst [vmem:[%s637 + $0x8] sm:$0x1] %v2824
      %v2826 = vld [vmem:[%s637 + $0xc] sm:$0xf]
      %v2827 = vsel %vm2816, %v2518, %v2826
      %2828 = vst [vmem:[%s637 + $0xc] sm:$0xf] %v2827
      %2829 = vst.msk [vmem:[%s637 + $0x10] sm:$0xf] %vm226, %v2527
      %v2830 = vld [vmem:[%s637 + $0x14] sm:$0x1]
      %v2831 = vsel %vm2822, %v2528, %v2830
      %2832 = vst [vmem:[%s637 + $0x14] sm:$0x1] %v2831
      %v2833 = vld [vmem:[%s637 + $0x18] sm:$0xf]
      %v2834 = vsel %vm2816, %v2535, %v2833
      %2835 = vst [vmem:[%s637 + $0x18] sm:$0xf] %v2834
      %2836 = vst.msk [vmem:[%s637 + $0x1c] sm:$0xf] %vm226, %v2544
      %v2837 = vld [vmem:[%s637 + $0x20] sm:$0x1]
      %v2838 = vsel %vm2822, %v2545, %v2837
      %2839 = vst [vmem:[%s637 + $0x20] sm:$0x1] %v2838
      %v2840 = vld [vmem:[%s637 + $0x24] sm:$0xf]
      %v2841 = vsel %vm2816, %v2552, %v2840
      %2842 = vst [vmem:[%s637 + $0x24] sm:$0xf] %v2841
      %2843 = vst.msk [vmem:[%s637 + $0x28] sm:$0xf] %vm226, %v2561
      %v2844 = vld [vmem:[%s637 + $0x2c] sm:$0x1]
      %v2845 = vsel %vm2822, %v2562, %v2844
      %2846 = vst [vmem:[%s637 + $0x2c] sm:$0x1] %v2845
      %v2847 = vld [vmem:[%s637 + $0x30] sm:$0xf]
      %v2848 = vsel %vm2816, %v2569, %v2847
      %2849 = vst [vmem:[%s637 + $0x30] sm:$0xf] %v2848
      %2850 = vst.msk [vmem:[%s637 + $0x34] sm:$0xf] %vm226, %v2578
      %v2851 = vld [vmem:[%s637 + $0x38] sm:$0x1]
      %v2852 = vsel %vm2822, %v2579, %v2851
      %2853 = vst [vmem:[%s637 + $0x38] sm:$0x1] %v2852
      %v2854 = vld [vmem:[%s637 + $0x3c] sm:$0xf]
      %v2855 = vsel %vm2816, %v2586, %v2854
      %2856 = vst [vmem:[%s637 + $0x3c] sm:$0xf] %v2855
      %2857 = vst.msk [vmem:[%s637 + $0x40] sm:$0xf] %vm226, %v2595
      %v2858 = vld [vmem:[%s637 + $0x44] sm:$0x1]
      %v2859 = vsel %vm2822, %v2596, %v2858
      %2860 = vst [vmem:[%s637 + $0x44] sm:$0x1] %v2859
      %v2861 = vld [vmem:[%s637 + $0x48] sm:$0xf]
      %v2862 = vsel %vm2816, %v2603, %v2861
      %2863 = vst [vmem:[%s637 + $0x48] sm:$0xf] %v2862
      %2864 = vst.msk [vmem:[%s637 + $0x4c] sm:$0xf] %vm226, %v2612
      %v2865 = vld [vmem:[%s637 + $0x50] sm:$0x1]
      %v2866 = vsel %vm2822, %v2613, %v2865
      %2867 = vst [vmem:[%s637 + $0x50] sm:$0x1] %v2866
      %v2868 = vld [vmem:[%s637 + $0x54] sm:$0xf]
      %v2869 = vsel %vm2816, %v2620, %v2868
      %2870 = vst [vmem:[%s637 + $0x54] sm:$0xf] %v2869
      %2871 = vst.msk [vmem:[%s637 + $0x58] sm:$0xf] %vm226, %v2629
      %v2872 = vld [vmem:[%s637 + $0x5c] sm:$0x1]
      %v2873 = vsel %vm2822, %v2630, %v2872
      %2874 = vst [vmem:[%s637 + $0x5c] sm:$0x1] %v2873
      %v2875 = vld [vmem:[%s637 + $0x60] sm:$0xf]
      %v2876 = vsel %vm2816, %v2637, %v2875
      %2877 = vst [vmem:[%s637 + $0x60] sm:$0xf] %v2876
      %2878 = vst.msk [vmem:[%s637 + $0x64] sm:$0xf] %vm226, %v2646
      %v2879 = vld [vmem:[%s637 + $0x68] sm:$0x1]
      %v2880 = vsel %vm2822, %v2647, %v2879
      %2881 = vst [vmem:[%s637 + $0x68] sm:$0x1] %v2880
      %v2882 = vld [vmem:[%s637 + $0x6c] sm:$0xf]
      %v2883 = vsel %vm2816, %v2654, %v2882
      %2884 = vst [vmem:[%s637 + $0x6c] sm:$0xf] %v2883
      %2885 = vst.msk [vmem:[%s637 + $0x70] sm:$0xf] %vm226, %v2663
      %v2886 = vld [vmem:[%s637 + $0x74] sm:$0x1]
      %v2887 = vsel %vm2822, %v2664, %v2886
      %2888 = vst [vmem:[%s637 + $0x74] sm:$0x1] %v2887
      %v2889 = vld [vmem:[%s637 + $0x78] sm:$0xf]
      %v2890 = vsel %vm2816, %v2671, %v2889
      %2891 = vst [vmem:[%s637 + $0x78] sm:$0xf] %v2890
      %2892 = vst.msk [vmem:[%s637 + $0x7c] sm:$0xf] %vm226, %v2680
      %v2893 = vld [vmem:[%s637 + $0x80] sm:$0x1]
      %v2894 = vsel %vm2822, %v2681, %v2893
      %2895 = vst [vmem:[%s637 + $0x80] sm:$0x1] %v2894
      %v2896 = vld [vmem:[%s637 + $0x84] sm:$0xf]
      %v2897 = vsel %vm2816, %v2688, %v2896
      %2898 = vst [vmem:[%s637 + $0x84] sm:$0xf] %v2897
      %2899 = vst.msk [vmem:[%s637 + $0x88] sm:$0xf] %vm226, %v2697
      %v2900 = vld [vmem:[%s637 + $0x8c] sm:$0x1]
      %v2901 = vsel %vm2822, %v2698, %v2900
      %2902 = vst [vmem:[%s637 + $0x8c] sm:$0x1] %v2901
      %v2903 = vld [vmem:[%s637 + $0x90] sm:$0xf]
      %v2904 = vsel %vm2816, %v2705, %v2903
      %2905 = vst [vmem:[%s637 + $0x90] sm:$0xf] %v2904
      %2906 = vst.msk [vmem:[%s637 + $0x94] sm:$0xf] %vm226, %v2714
      %v2907 = vld [vmem:[%s637 + $0x98] sm:$0x1]
      %v2908 = vsel %vm2822, %v2715, %v2907
      %2909 = vst [vmem:[%s637 + $0x98] sm:$0x1] %v2908
      %v2910 = vld [vmem:[%s637 + $0x9c] sm:$0xf]
      %v2911 = vsel %vm2816, %v2722, %v2910
      %2912 = vst [vmem:[%s637 + $0x9c] sm:$0xf] %v2911
      %2913 = vst.msk [vmem:[%s637 + $0xa0] sm:$0xf] %vm226, %v2731
      %v2914 = vld [vmem:[%s637 + $0xa4] sm:$0x1]
      %v2915 = vsel %vm2822, %v2732, %v2914
      %2916 = vst [vmem:[%s637 + $0xa4] sm:$0x1] %v2915
      %v2917 = vld [vmem:[%s637 + $0xa8] sm:$0xf]
      %v2918 = vsel %vm2816, %v2739, %v2917
      %2919 = vst [vmem:[%s637 + $0xa8] sm:$0xf] %v2918
      %2920 = vst.msk [vmem:[%s637 + $0xac] sm:$0xf] %vm226, %v2748
      %v2921 = vld [vmem:[%s637 + $0xb0] sm:$0x1]
      %v2922 = vsel %vm2822, %v2749, %v2921
      %2923 = vst [vmem:[%s637 + $0xb0] sm:$0x1] %v2922
      %v2924 = vld [vmem:[%s637 + $0xb4] sm:$0xf]
      %v2925 = vsel %vm2816, %v2756, %v2924
      %2926 = vst [vmem:[%s637 + $0xb4] sm:$0xf] %v2925
      %2927 = vst.msk [vmem:[%s637 + $0xb8] sm:$0xf] %vm226, %v2765
      %v2928 = vld [vmem:[%s637 + $0xbc] sm:$0x1]
      %v2929 = vsel %vm2822, %v2766, %v2928
      %2930 = vst [vmem:[%s637 + $0xbc] sm:$0x1] %v2929
      %v2931 = vld [vmem:[#allocation2] sm:$0xf]
      %v2932 = vld [vmem:[#allocation2 + $0x4] sm:$0xf]
      %v2933 = vld [vmem:[#allocation2 + $0x8] sm:$0x1]
      %v2934 = vld [vmem:[#allocation2 + $0xc] sm:$0xf]
      %v2935 = vld [vmem:[#allocation2 + $0x10] sm:$0xf]
      %v2936 = vld [vmem:[#allocation2 + $0x14] sm:$0x1]
      %v2937 = vld [vmem:[#allocation2 + $0x18] sm:$0xf]
      %v2938 = vld [vmem:[#allocation2 + $0x1c] sm:$0xf]
      %v2939 = vld [vmem:[#allocation2 + $0x20] sm:$0x1]
      %v2940 = vld [vmem:[#allocation2 + $0x24] sm:$0xf]
      %v2941 = vld [vmem:[#allocation2 + $0x28] sm:$0xf]
      %v2942 = vld [vmem:[#allocation2 + $0x2c] sm:$0x1]
      %v2943 = vld [vmem:[#allocation2 + $0x30] sm:$0xf]
      %v2944 = vld [vmem:[#allocation2 + $0x34] sm:$0xf]
      %v2945 = vld [vmem:[#allocation2 + $0x38] sm:$0x1]
      %v2946 = vld [vmem:[#allocation2 + $0x3c] sm:$0xf]
      %v2947 = vld [vmem:[#allocation2 + $0x40] sm:$0xf]
      %v2948 = vld [vmem:[#allocation2 + $0x44] sm:$0x1]
      %v2949 = vld [vmem:[#allocation2 + $0x48] sm:$0xf]
      %v2950 = vld [vmem:[#allocation2 + $0x4c] sm:$0xf]
      %v2951 = vld [vmem:[#allocation2 + $0x50] sm:$0x1]
      %v2952 = vld [vmem:[#allocation2 + $0x54] sm:$0xf]
      %v2953 = vld [vmem:[#allocation2 + $0x58] sm:$0xf]
      %v2954 = vld [vmem:[#allocation2 + $0x5c] sm:$0x1]
      %v2955 = vld [vmem:[#allocation2 + $0x60] sm:$0xf]
      %v2956 = vld [vmem:[#allocation2 + $0x64] sm:$0xf]
      %v2957 = vld [vmem:[#allocation2 + $0x68] sm:$0x1]
      %v2958 = vld [vmem:[#allocation2 + $0x6c] sm:$0xf]
      %v2959 = vld [vmem:[#allocation2 + $0x70] sm:$0xf]
      %v2960 = vld [vmem:[#allocation2 + $0x74] sm:$0x1]
      %v2961 = vld [vmem:[#allocation2 + $0x78] sm:$0xf]
      %v2962 = vld [vmem:[#allocation2 + $0x7c] sm:$0xf]
      %v2963 = vld [vmem:[#allocation2 + $0x80] sm:$0x1]
      %v2964 = vld [vmem:[#allocation2 + $0x84] sm:$0xf]
      %v2965 = vld [vmem:[#allocation2 + $0x88] sm:$0xf]
      %v2966 = vld [vmem:[#allocation2 + $0x8c] sm:$0x1]
      %v2967 = vld [vmem:[#allocation2 + $0x90] sm:$0xf]
      %v2968 = vld [vmem:[#allocation2 + $0x94] sm:$0xf]
      %v2969 = vld [vmem:[#allocation2 + $0x98] sm:$0x1]
      %v2970 = vld [vmem:[#allocation2 + $0x9c] sm:$0xf]
      %v2971 = vld [vmem:[#allocation2 + $0xa0] sm:$0xf]
      %v2972 = vld [vmem:[#allocation2 + $0xa4] sm:$0x1]
      %v2973 = vld [vmem:[#allocation2 + $0xa8] sm:$0xf]
      %v2974 = vld [vmem:[#allocation2 + $0xac] sm:$0xf]
      %v2975 = vld [vmem:[#allocation2 + $0xb0] sm:$0x1]
      %v2976 = vld [vmem:[#allocation2 + $0xb4] sm:$0xf]
      %v2977 = vld [vmem:[#allocation2 + $0xb8] sm:$0xf]
      %v2978 = vld [vmem:[#allocation2 + $0xbc] sm:$0x1]
      %v2979 = vld [vmem:[#allocation2 + $0xc0] sm:$0xf]
      %v2980 = vld [vmem:[#allocation2 + $0xc4] sm:$0xf]
      %v2981 = vld [vmem:[#allocation2 + $0xc8] sm:$0x1]
      %v2982 = vld [vmem:[#allocation2 + $0xcc] sm:$0xf]
      %v2983 = vld [vmem:[#allocation2 + $0xd0] sm:$0xf]
      %v2984 = vld [vmem:[#allocation2 + $0xd4] sm:$0x1]
      %v2986 = vshrl.u32 %v2931, 16
      %v2988 = vrot.slane %v2986, 4
      %v2989 = vshll.u32 %v2931, 16
      %v2991 = vrot.slane %v2989, 5
      %v2992 = vor.u32 %v2988, %v2991
      %v2993 = vrot.slane %v2992, 4
      %v2995 = vshll.u32 %v2932, 16
      %v2997 = vrot.slane %v2995, 5
      %v2998 = vsel %vm812, %v2993, %v2997
      %v2999 = vshrl.u32 %v2932, 16
      %v3001 = vrot.slane %v2999, 4
      %v3002 = vor.u32 %v3001, %v2997
      %v3003 = vrot.slane %v3002, 4
      %v3005 = vshll.u32 %v2933, 16
      %v3007 = vrot.slane %v3005, 5
      %v3008 = vsel %vm812, %v3003, %v3007
      %v3010 = vshrl.u32 %v2934, 16
      %v3012 = vrot.slane %v3010, 4
      %v3013 = vshll.u32 %v2934, 16
      %v3015 = vrot.slane %v3013, 5
      %v3016 = vor.u32 %v3012, %v3015
      %v3017 = vrot.slane %v3016, 4
      %v3019 = vshll.u32 %v2935, 16
      %v3021 = vrot.slane %v3019, 5
      %v3022 = vsel %vm812, %v3017, %v3021
      %v3023 = vshrl.u32 %v2935, 16
      %v3025 = vrot.slane %v3023, 4
      %v3026 = vor.u32 %v3025, %v3021
      %v3027 = vrot.slane %v3026, 4
      %v3029 = vshll.u32 %v2936, 16
      %v3031 = vrot.slane %v3029, 5
      %v3032 = vsel %vm812, %v3027, %v3031
      %v3034 = vshrl.u32 %v2937, 16
      %v3036 = vrot.slane %v3034, 4
      %v3037 = vshll.u32 %v2937, 16
      %v3039 = vrot.slane %v3037, 5
      %v3040 = vor.u32 %v3036, %v3039
      %v3041 = vrot.slane %v3040, 4
      %v3043 = vshll.u32 %v2938, 16
      %v3045 = vrot.slane %v3043, 5
      %v3046 = vsel %vm812, %v3041, %v3045
      %v3047 = vshrl.u32 %v2938, 16
      %v3049 = vrot.slane %v3047, 4
      %v3050 = vor.u32 %v3049, %v3045
      %v3051 = vrot.slane %v3050, 4
      %v3053 = vshll.u32 %v2939, 16
      %v3055 = vrot.slane %v3053, 5
      %v3056 = vsel %vm812, %v3051, %v3055
      %v3058 = vshrl.u32 %v2940, 16
      %v3060 = vrot.slane %v3058, 4
      %v3061 = vshll.u32 %v2940, 16
      %v3063 = vrot.slane %v3061, 5
      %v3064 = vor.u32 %v3060, %v3063
      %v3065 = vrot.slane %v3064, 4
      %v3067 = vshll.u32 %v2941, 16
      %v3069 = vrot.slane %v3067, 5
      %v3070 = vsel %vm812, %v3065, %v3069
      %v3071 = vshrl.u32 %v2941, 16
      %v3073 = vrot.slane %v3071, 4
      %v3074 = vor.u32 %v3073, %v3069
      %v3075 = vrot.slane %v3074, 4
      %v3077 = vshll.u32 %v2942, 16
      %v3079 = vrot.slane %v3077, 5
      %v3080 = vsel %vm812, %v3075, %v3079
      %v3082 = vshrl.u32 %v2943, 16
      %v3084 = vrot.slane %v3082, 4
      %v3085 = vshll.u32 %v2943, 16
      %v3087 = vrot.slane %v3085, 5
      %v3088 = vor.u32 %v3084, %v3087
      %v3089 = vrot.slane %v3088, 4
      %v3091 = vshll.u32 %v2944, 16
      %v3093 = vrot.slane %v3091, 5
      %v3094 = vsel %vm812, %v3089, %v3093
      %v3095 = vshrl.u32 %v2944, 16
      %v3097 = vrot.slane %v3095, 4
      %v3098 = vor.u32 %v3097, %v3093
      %v3099 = vrot.slane %v3098, 4
      %v3101 = vshll.u32 %v2945, 16
      %v3103 = vrot.slane %v3101, 5
      %v3104 = vsel %vm812, %v3099, %v3103
      %v3106 = vshrl.u32 %v2946, 16
      %v3108 = vrot.slane %v3106, 4
      %v3109 = vshll.u32 %v2946, 16
      %v3111 = vrot.slane %v3109, 5
      %v3112 = vor.u32 %v3108, %v3111
      %v3113 = vrot.slane %v3112, 4
      %v3115 = vshll.u32 %v2947, 16
      %v3117 = vrot.slane %v3115, 5
      %v3118 = vsel %vm812, %v3113, %v3117
      %v3119 = vshrl.u32 %v2947, 16
      %v3121 = vrot.slane %v3119, 4
      %v3122 = vor.u32 %v3121, %v3117
      %v3123 = vrot.slane %v3122, 4
      %v3125 = vshll.u32 %v2948, 16
      %v3127 = vrot.slane %v3125, 5
      %v3128 = vsel %vm812, %v3123, %v3127
      %v3130 = vshrl.u32 %v2949, 16
      %v3132 = vrot.slane %v3130, 4
      %v3133 = vshll.u32 %v2949, 16
      %v3135 = vrot.slane %v3133, 5
      %v3136 = vor.u32 %v3132, %v3135
      %v3137 = vrot.slane %v3136, 4
      %v3139 = vshll.u32 %v2950, 16
      %v3141 = vrot.slane %v3139, 5
      %v3142 = vsel %vm812, %v3137, %v3141
      %v3143 = vshrl.u32 %v2950, 16
      %v3145 = vrot.slane %v3143, 4
      %v3146 = vor.u32 %v3145, %v3141
      %v3147 = vrot.slane %v3146, 4
      %v3149 = vshll.u32 %v2951, 16
      %v3151 = vrot.slane %v3149, 5
      %v3152 = vsel %vm812, %v3147, %v3151
      %v3154 = vshrl.u32 %v2952, 16
      %v3156 = vrot.slane %v3154, 4
      %v3157 = vshll.u32 %v2952, 16
      %v3159 = vrot.slane %v3157, 5
      %v3160 = vor.u32 %v3156, %v3159
      %v3161 = vrot.slane %v3160, 4
      %v3163 = vshll.u32 %v2953, 16
      %v3165 = vrot.slane %v3163, 5
      %v3166 = vsel %vm812, %v3161, %v3165
      %v3167 = vshrl.u32 %v2953, 16
      %v3169 = vrot.slane %v3167, 4
      %v3170 = vor.u32 %v3169, %v3165
      %v3171 = vrot.slane %v3170, 4
      %v3173 = vshll.u32 %v2954, 16
      %v3175 = vrot.slane %v3173, 5
      %v3176 = vsel %vm812, %v3171, %v3175
      %v3178 = vshrl.u32 %v2955, 16
      %v3180 = vrot.slane %v3178, 4
      %v3181 = vshll.u32 %v2955, 16
      %v3183 = vrot.slane %v3181, 5
      %v3184 = vor.u32 %v3180, %v3183
      %v3185 = vrot.slane %v3184, 4
      %v3187 = vshll.u32 %v2956, 16
      %v3189 = vrot.slane %v3187, 5
      %v3190 = vsel %vm812, %v3185, %v3189
      %v3191 = vshrl.u32 %v2956, 16
      %v3193 = vrot.slane %v3191, 4
      %v3194 = vor.u32 %v3193, %v3189
      %v3195 = vrot.slane %v3194, 4
      %v3197 = vshll.u32 %v2957, 16
      %v3199 = vrot.slane %v3197, 5
      %v3200 = vsel %vm812, %v3195, %v3199
      %v3202 = vshrl.u32 %v2958, 16
      %v3204 = vrot.slane %v3202, 4
      %v3205 = vshll.u32 %v2958, 16
      %v3207 = vrot.slane %v3205, 5
      %v3208 = vor.u32 %v3204, %v3207
      %v3209 = vrot.slane %v3208, 4
      %v3211 = vshll.u32 %v2959, 16
      %v3213 = vrot.slane %v3211, 5
      %v3214 = vsel %vm812, %v3209, %v3213
      %v3215 = vshrl.u32 %v2959, 16
      %v3217 = vrot.slane %v3215, 4
      %v3218 = vor.u32 %v3217, %v3213
      %v3219 = vrot.slane %v3218, 4
      %v3221 = vshll.u32 %v2960, 16
      %v3223 = vrot.slane %v3221, 5
      %v3224 = vsel %vm812, %v3219, %v3223
      %v3226 = vshrl.u32 %v2961, 16
      %v3228 = vrot.slane %v3226, 4
      %v3229 = vshll.u32 %v2961, 16
      %v3231 = vrot.slane %v3229, 5
      %v3232 = vor.u32 %v3228, %v3231
      %v3233 = vrot.slane %v3232, 4
      %v3235 = vshll.u32 %v2962, 16
      %v3237 = vrot.slane %v3235, 5
      %v3238 = vsel %vm812, %v3233, %v3237
      %v3239 = vshrl.u32 %v2962, 16
      %v3241 = vrot.slane %v3239, 4
      %v3242 = vor.u32 %v3241, %v3237
      %v3243 = vrot.slane %v3242, 4
      %v3245 = vshll.u32 %v2963, 16
      %v3247 = vrot.slane %v3245, 5
      %v3248 = vsel %vm812, %v3243, %v3247
      %v3250 = vshrl.u32 %v2964, 16
      %v3252 = vrot.slane %v3250, 4
      %v3253 = vshll.u32 %v2964, 16
      %v3255 = vrot.slane %v3253, 5
      %v3256 = vor.u32 %v3252, %v3255
      %v3257 = vrot.slane %v3256, 4
      %v3259 = vshll.u32 %v2965, 16
      %v3261 = vrot.slane %v3259, 5
      %v3262 = vsel %vm812, %v3257, %v3261
      %v3263 = vshrl.u32 %v2965, 16
      %v3265 = vrot.slane %v3263, 4
      %v3266 = vor.u32 %v3265, %v3261
      %v3267 = vrot.slane %v3266, 4
      %v3269 = vshll.u32 %v2966, 16
      %v3271 = vrot.slane %v3269, 5
      %v3272 = vsel %vm812, %v3267, %v3271
      %v3274 = vshrl.u32 %v2967, 16
      %v3276 = vrot.slane %v3274, 4
      %v3277 = vshll.u32 %v2967, 16
      %v3279 = vrot.slane %v3277, 5
      %v3280 = vor.u32 %v3276, %v3279
      %v3281 = vrot.slane %v3280, 4
      %v3283 = vshll.u32 %v2968, 16
      %v3285 = vrot.slane %v3283, 5
      %v3286 = vsel %vm812, %v3281, %v3285
      %v3287 = vshrl.u32 %v2968, 16
      %v3289 = vrot.slane %v3287, 4
      %v3290 = vor.u32 %v3289, %v3285
      %v3291 = vrot.slane %v3290, 4
      %v3293 = vshll.u32 %v2969, 16
      %v3295 = vrot.slane %v3293, 5
      %v3296 = vsel %vm812, %v3291, %v3295
      %v3298 = vshrl.u32 %v2970, 16
      %v3300 = vrot.slane %v3298, 4
      %v3301 = vshll.u32 %v2970, 16
      %v3303 = vrot.slane %v3301, 5
      %v3304 = vor.u32 %v3300, %v3303
      %v3305 = vrot.slane %v3304, 4
      %v3307 = vshll.u32 %v2971, 16
      %v3309 = vrot.slane %v3307, 5
      %v3310 = vsel %vm812, %v3305, %v3309
      %v3311 = vshrl.u32 %v2971, 16
      %v3313 = vrot.slane %v3311, 4
      %v3314 = vor.u32 %v3313, %v3309
      %v3315 = vrot.slane %v3314, 4
      %v3317 = vshll.u32 %v2972, 16
      %v3319 = vrot.slane %v3317, 5
      %v3320 = vsel %vm812, %v3315, %v3319
      %v3322 = vshrl.u32 %v2973, 16
      %v3324 = vrot.slane %v3322, 4
      %v3325 = vshll.u32 %v2973, 16
      %v3327 = vrot.slane %v3325, 5
      %v3328 = vor.u32 %v3324, %v3327
      %v3329 = vrot.slane %v3328, 4
      %v3331 = vshll.u32 %v2974, 16
      %v3333 = vrot.slane %v3331, 5
      %v3334 = vsel %vm812, %v3329, %v3333
      %v3335 = vshrl.u32 %v2974, 16
      %v3337 = vrot.slane %v3335, 4
      %v3338 = vor.u32 %v3337, %v3333
      %v3339 = vrot.slane %v3338, 4
      %v3341 = vshll.u32 %v2975, 16
      %v3343 = vrot.slane %v3341, 5
      %v3344 = vsel %vm812, %v3339, %v3343
      %v3346 = vshrl.u32 %v2976, 16
      %v3348 = vrot.slane %v3346, 4
      %v3349 = vshll.u32 %v2976, 16
      %v3351 = vrot.slane %v3349, 5
      %v3352 = vor.u32 %v3348, %v3351
      %v3353 = vrot.slane %v3352, 4
      %v3355 = vshll.u32 %v2977, 16
      %v3357 = vrot.slane %v3355, 5
      %v3358 = vsel %vm812, %v3353, %v3357
      %v3359 = vshrl.u32 %v2977, 16
      %v3361 = vrot.slane %v3359, 4
      %v3362 = vor.u32 %v3361, %v3357
      %v3363 = vrot.slane %v3362, 4
      %v3365 = vshll.u32 %v2978, 16
      %v3367 = vrot.slane %v3365, 5
      %v3368 = vsel %vm812, %v3363, %v3367
      %v3417 = vrot.slane %v2931, 5
      %v3418 = vrot.slane %v3417, 4
      %v3419 = vrot.slane %v2932, 5
      %v3420 = vsel %vm1247, %v3418, %v3419
      %v3421 = vrot.slane %v3419, 4
      %v3422 = vrot.slane %v2933, 5
      %v3423 = vsel %vm1247, %v3421, %v3422
      %v3424 = vrot.slane %v2934, 5
      %v3425 = vrot.slane %v3424, 4
      %v3426 = vrot.slane %v2935, 5
      %v3427 = vsel %vm1247, %v3425, %v3426
      %v3428 = vrot.slane %v3426, 4
      %v3429 = vrot.slane %v2936, 5
      %v3430 = vsel %vm1247, %v3428, %v3429
      %v3431 = vrot.slane %v2937, 5
      %v3432 = vrot.slane %v3431, 4
      %v3433 = vrot.slane %v2938, 5
      %v3434 = vsel %vm1247, %v3432, %v3433
      %v3435 = vrot.slane %v3433, 4
      %v3436 = vrot.slane %v2939, 5
      %v3437 = vsel %vm1247, %v3435, %v3436
      %v3438 = vrot.slane %v2940, 5
      %v3439 = vrot.slane %v3438, 4
      %v3440 = vrot.slane %v2941, 5
      %v3441 = vsel %vm1247, %v3439, %v3440
      %v3442 = vrot.slane %v3440, 4
      %v3443 = vrot.slane %v2942, 5
      %v3444 = vsel %vm1247, %v3442, %v3443
      %v3445 = vrot.slane %v2943, 5
      %v3446 = vrot.slane %v3445, 4
      %v3447 = vrot.slane %v2944, 5
      %v3448 = vsel %vm1247, %v3446, %v3447
      %v3449 = vrot.slane %v3447, 4
      %v3450 = vrot.slane %v2945, 5
      %v3451 = vsel %vm1247, %v3449, %v3450
      %v3452 = vrot.slane %v2946, 5
      %v3453 = vrot.slane %v3452, 4
      %v3454 = vrot.slane %v2947, 5
      %v3455 = vsel %vm1247, %v3453, %v3454
      %v3456 = vrot.slane %v3454, 4
      %v3457 = vrot.slane %v2948, 5
      %v3458 = vsel %vm1247, %v3456, %v3457
      %v3459 = vrot.slane %v2949, 5
      %v3460 = vrot.slane %v3459, 4
      %v3461 = vrot.slane %v2950, 5
      %v3462 = vsel %vm1247, %v3460, %v3461
      %v3463 = vrot.slane %v3461, 4
      %v3464 = vrot.slane %v2951, 5
      %v3465 = vsel %vm1247, %v3463, %v3464
      %v3466 = vrot.slane %v2952, 5
      %v3467 = vrot.slane %v3466, 4
      %v3468 = vrot.slane %v2953, 5
      %v3469 = vsel %vm1247, %v3467, %v3468
      %v3470 = vrot.slane %v3468, 4
      %v3471 = vrot.slane %v2954, 5
      %v3472 = vsel %vm1247, %v3470, %v3471
      %v3473 = vrot.slane %v2955, 5
      %v3474 = vrot.slane %v3473, 4
      %v3475 = vrot.slane %v2956, 5
      %v3476 = vsel %vm1247, %v3474, %v3475
      %v3477 = vrot.slane %v3475, 4
      %v3478 = vrot.slane %v2957, 5
      %v3479 = vsel %vm1247, %v3477, %v3478
      %v3480 = vrot.slane %v2958, 5
      %v3481 = vrot.slane %v3480, 4
      %v3482 = vrot.slane %v2959, 5
      %v3483 = vsel %vm1247, %v3481, %v3482
      %v3484 = vrot.slane %v3482, 4
      %v3485 = vrot.slane %v2960, 5
      %v3486 = vsel %vm1247, %v3484, %v3485
      %v3487 = vrot.slane %v2961, 5
      %v3488 = vrot.slane %v3487, 4
      %v3489 = vrot.slane %v2962, 5
      %v3490 = vsel %vm1247, %v3488, %v3489
      %v3491 = vrot.slane %v3489, 4
      %v3492 = vrot.slane %v2963, 5
      %v3493 = vsel %vm1247, %v3491, %v3492
      %v3494 = vrot.slane %v2964, 5
      %v3495 = vrot.slane %v3494, 4
      %v3496 = vrot.slane %v2965, 5
      %v3497 = vsel %vm1247, %v3495, %v3496
      %v3498 = vrot.slane %v3496, 4
      %v3499 = vrot.slane %v2966, 5
      %v3500 = vsel %vm1247, %v3498, %v3499
      %v3501 = vrot.slane %v2967, 5
      %v3502 = vrot.slane %v3501, 4
      %v3503 = vrot.slane %v2968, 5
      %v3504 = vsel %vm1247, %v3502, %v3503
      %v3505 = vrot.slane %v3503, 4
      %v3506 = vrot.slane %v2969, 5
      %v3507 = vsel %vm1247, %v3505, %v3506
      %v3508 = vrot.slane %v2970, 5
      %v3509 = vrot.slane %v3508, 4
      %v3510 = vrot.slane %v2971, 5
      %v3511 = vsel %vm1247, %v3509, %v3510
      %v3512 = vrot.slane %v3510, 4
      %v3513 = vrot.slane %v2972, 5
      %v3514 = vsel %vm1247, %v3512, %v3513
      %v3515 = vrot.slane %v2973, 5
      %v3516 = vrot.slane %v3515, 4
      %v3517 = vrot.slane %v2974, 5
      %v3518 = vsel %vm1247, %v3516, %v3517
      %v3519 = vrot.slane %v3517, 4
      %v3520 = vrot.slane %v2975, 5
      %v3521 = vsel %vm1247, %v3519, %v3520
      %v3522 = vrot.slane %v2976, 5
      %v3523 = vrot.slane %v3522, 4
      %v3524 = vrot.slane %v2977, 5
      %v3525 = vsel %vm1247, %v3523, %v3524
      %v3526 = vrot.slane %v3524, 4
      %v3527 = vrot.slane %v2978, 5
      %v3528 = vsel %vm1247, %v3526, %v3527
      %v3530 = vshrl.u32 %v2979, 16
      %v3532 = vrot.slane %v3530, 4
      %v3533 = vshll.u32 %v2979, 16
      %v3535 = vrot.slane %v3533, 5
      %v3536 = vor.u32 %v3532, %v3535
      %v3537 = vrot.slane %v3536, 4
      %v3539 = vshll.u32 %v2980, 16
      %v3541 = vrot.slane %v3539, 5
      %v3542 = vsel %vm812, %v3537, %v3541
      %v3543 = vshrl.u32 %v2980, 16
      %v3545 = vrot.slane %v3543, 4
      %v3546 = vor.u32 %v3545, %v3541
      %v3547 = vrot.slane %v3546, 4
      %v3549 = vshll.u32 %v2981, 16
      %v3551 = vrot.slane %v3549, 5
      %v3552 = vsel %vm812, %v3547, %v3551
      %v3556 = vrot.slane %v2979, 5
      %v3557 = vrot.slane %v3556, 4
      %v3558 = vrot.slane %v2980, 5
      %v3559 = vsel %vm1247, %v3557, %v3558
      %v3560 = vrot.slane %v3558, 4
      %v3561 = vrot.slane %v2981, 5
      %v3562 = vsel %vm1247, %v3560, %v3561
      %v3564 = vshrl.u32 %v2982, 16
      %v3566 = vrot.slane %v3564, 4
      %v3567 = vshll.u32 %v2982, 16
      %v3569 = vrot.slane %v3567, 5
      %v3570 = vor.u32 %v3566, %v3569
      %v3571 = vrot.slane %v3570, 4
      %v3573 = vshll.u32 %v2983, 16
      %v3575 = vrot.slane %v3573, 5
      %v3576 = vsel %vm812, %v3571, %v3575
      %v3577 = vshrl.u32 %v2983, 16
      %v3579 = vrot.slane %v3577, 4
      %v3580 = vor.u32 %v3579, %v3575
      %v3581 = vrot.slane %v3580, 4
      %v3583 = vshll.u32 %v2984, 16
      %v3585 = vrot.slane %v3583, 5
      %v3586 = vsel %vm812, %v3581, %v3585
      %v3590 = vrot.slane %v2982, 5
      %v3591 = vrot.slane %v3590, 4
      %v3592 = vrot.slane %v2983, 5
      %v3593 = vsel %vm1247, %v3591, %v3592
      %v3594 = vrot.slane %v3592, 4
      %v3595 = vrot.slane %v2984, 5
      %v3596 = vsel %vm1247, %v3594, %v3595
      %v3597 = vunpack.c.l.b16 %v2931
      %v3598 = vunpack.c.l.b16 %v2932
      %v3599 = vunpack.c.l.b16 %v2934
      %v3600 = vunpack.c.l.b16 %v2935
      %v3601 = vunpack.c.l.b16 %v2937
      %v3602 = vunpack.c.l.b16 %v2938
      %v3603 = vunpack.c.l.b16 %v2940
      %v3604 = vunpack.c.l.b16 %v2941
      %v3605 = vunpack.c.l.b16 %v2943
      %v3606 = vunpack.c.l.b16 %v2944
      %v3607 = vunpack.c.l.b16 %v2946
      %v3608 = vunpack.c.l.b16 %v2947
      %v3609 = vunpack.c.l.b16 %v2949
      %v3610 = vunpack.c.l.b16 %v2950
      %v3611 = vunpack.c.l.b16 %v2952
      %v3612 = vunpack.c.l.b16 %v2953
      %v3613 = vunpack.c.l.b16 %v2955
      %v3614 = vunpack.c.l.b16 %v2956
      %v3615 = vunpack.c.l.b16 %v2958
      %v3616 = vunpack.c.l.b16 %v2959
      %v3617 = vunpack.c.l.b16 %v2961
      %v3618 = vunpack.c.l.b16 %v2962
      %v3619 = vunpack.c.l.b16 %v2964
      %v3620 = vunpack.c.l.b16 %v2965
      %v3621 = vunpack.c.l.b16 %v2967
      %v3622 = vunpack.c.l.b16 %v2968
      %v3623 = vunpack.c.l.b16 %v2970
      %v3624 = vunpack.c.l.b16 %v2971
      %v3625 = vunpack.c.l.b16 %v2973
      %v3626 = vunpack.c.l.b16 %v2974
      %v3627 = vunpack.c.l.b16 %v2976
      %v3628 = vunpack.c.l.b16 %v2977
      %v3629 = vpack.c.b16 %v3598, %v3597
      %v3630 = vpack.c.b16 %v3600, %v3599
      %v3631 = vpack.c.b16 %v3602, %v3601
      %v3632 = vpack.c.b16 %v3604, %v3603
      %v3633 = vpack.c.b16 %v3606, %v3605
      %v3634 = vpack.c.b16 %v3608, %v3607
      %v3635 = vpack.c.b16 %v3610, %v3609
      %v3636 = vpack.c.b16 %v3612, %v3611
      %v3637 = vpack.c.b16 %v3614, %v3613
      %v3638 = vpack.c.b16 %v3616, %v3615
      %v3639 = vpack.c.b16 %v3618, %v3617
      %v3640 = vpack.c.b16 %v3620, %v3619
      %v3641 = vpack.c.b16 %v3622, %v3621
      %v3642 = vpack.c.b16 %v3624, %v3623
      %v3643 = vpack.c.b16 %v3626, %v3625
      %v3644 = vpack.c.b16 %v3628, %v3627
      %v3645 = vunpack.c.l.b16 %v2998
      %v3646 = vunpack.c.l.b16 %v3008
      %v3647 = vunpack.c.l.b16 %v3022
      %v3648 = vunpack.c.l.b16 %v3032
      %v3649 = vunpack.c.l.b16 %v3046
      %v3650 = vunpack.c.l.b16 %v3056
      %v3651 = vunpack.c.l.b16 %v3070
      %v3652 = vunpack.c.l.b16 %v3080
      %v3653 = vunpack.c.l.b16 %v3094
      %v3654 = vunpack.c.l.b16 %v3104
      %v3655 = vunpack.c.l.b16 %v3118
      %v3656 = vunpack.c.l.b16 %v3128
      %v3657 = vunpack.c.l.b16 %v3142
      %v3658 = vunpack.c.l.b16 %v3152
      %v3659 = vunpack.c.l.b16 %v3166
      %v3660 = vunpack.c.l.b16 %v3176
      %v3661 = vunpack.c.l.b16 %v3190
      %v3662 = vunpack.c.l.b16 %v3200
      %v3663 = vunpack.c.l.b16 %v3214
      %v3664 = vunpack.c.l.b16 %v3224
      %v3665 = vunpack.c.l.b16 %v3238
      %v3666 = vunpack.c.l.b16 %v3248
      %v3667 = vunpack.c.l.b16 %v3262
      %v3668 = vunpack.c.l.b16 %v3272
      %v3669 = vunpack.c.l.b16 %v3286
      %v3670 = vunpack.c.l.b16 %v3296
      %v3671 = vunpack.c.l.b16 %v3310
      %v3672 = vunpack.c.l.b16 %v3320
      %v3673 = vunpack.c.l.b16 %v3334
      %v3674 = vunpack.c.l.b16 %v3344
      %v3675 = vunpack.c.l.b16 %v3358
      %v3676 = vunpack.c.l.b16 %v3368
      %v3677 = vpack.c.b16 %v3646, %v3645
      %v3678 = vpack.c.b16 %v3648, %v3647
      %v3679 = vpack.c.b16 %v3650, %v3649
      %v3680 = vpack.c.b16 %v3652, %v3651
      %v3681 = vpack.c.b16 %v3654, %v3653
      %v3682 = vpack.c.b16 %v3656, %v3655
      %v3683 = vpack.c.b16 %v3658, %v3657
      %v3684 = vpack.c.b16 %v3660, %v3659
      %v3685 = vpack.c.b16 %v3662, %v3661
      %v3686 = vpack.c.b16 %v3664, %v3663
      %v3687 = vpack.c.b16 %v3666, %v3665
      %v3688 = vpack.c.b16 %v3668, %v3667
      %v3689 = vpack.c.b16 %v3670, %v3669
      %v3690 = vpack.c.b16 %v3672, %v3671
      %v3691 = vpack.c.b16 %v3674, %v3673
      %v3692 = vpack.c.b16 %v3676, %v3675
      %3693 = vrot.lane.b32.xlu0 %v3677, 8
      %v3694 = vpop.permute.xlu0 %3693
      %3695 = vrot.lane.b32.xlu0 %v3678, 8
      %v3696 = vpop.permute.xlu0 %3695
      %3697 = vrot.lane.b32.xlu0 %v3679, 8
      %v3698 = vpop.permute.xlu0 %3697
      %3699 = vrot.lane.b32.xlu0 %v3680, 8
      %v3700 = vpop.permute.xlu0 %3699
      %3701 = vrot.lane.b32.xlu0 %v3681, 8
      %v3702 = vpop.permute.xlu0 %3701
      %3703 = vrot.lane.b32.xlu0 %v3682, 8
      %v3704 = vpop.permute.xlu0 %3703
      %3705 = vrot.lane.b32.xlu0 %v3683, 8
      %v3706 = vpop.permute.xlu0 %3705
      %3707 = vrot.lane.b32.xlu0 %v3684, 8
      %v3708 = vpop.permute.xlu0 %3707
      %3709 = vrot.lane.b32.xlu0 %v3685, 8
      %v3710 = vpop.permute.xlu0 %3709
      %3711 = vrot.lane.b32.xlu0 %v3686, 8
      %v3712 = vpop.permute.xlu0 %3711
      %3713 = vrot.lane.b32.xlu0 %v3687, 8
      %v3714 = vpop.permute.xlu0 %3713
      %3715 = vrot.lane.b32.xlu0 %v3688, 8
      %v3716 = vpop.permute.xlu0 %3715
      %3717 = vrot.lane.b32.xlu0 %v3689, 8
      %v3718 = vpop.permute.xlu0 %3717
      %3719 = vrot.lane.b32.xlu0 %v3690, 8
      %v3720 = vpop.permute.xlu0 %3719
      %3721 = vrot.lane.b32.xlu0 %v3691, 8
      %v3722 = vpop.permute.xlu0 %3721
      %3723 = vrot.lane.b32.xlu0 %v3692, 8
      %v3724 = vpop.permute.xlu0 %3723
      %v3725 = vunpack.c.l.b16 %v3420
      %v3726 = vunpack.c.l.b16 %v3423
      %v3727 = vunpack.c.l.b16 %v3427
      %v3728 = vunpack.c.l.b16 %v3430
      %v3729 = vunpack.c.l.b16 %v3434
      %v3730 = vunpack.c.l.b16 %v3437
      %v3731 = vunpack.c.l.b16 %v3441
      %v3732 = vunpack.c.l.b16 %v3444
      %v3733 = vunpack.c.l.b16 %v3448
      %v3734 = vunpack.c.l.b16 %v3451
      %v3735 = vunpack.c.l.b16 %v3455
      %v3736 = vunpack.c.l.b16 %v3458
      %v3737 = vunpack.c.l.b16 %v3462
      %v3738 = vunpack.c.l.b16 %v3465
      %v3739 = vunpack.c.l.b16 %v3469
      %v3740 = vunpack.c.l.b16 %v3472
      %v3741 = vunpack.c.l.b16 %v3476
      %v3742 = vunpack.c.l.b16 %v3479
      %v3743 = vunpack.c.l.b16 %v3483
      %v3744 = vunpack.c.l.b16 %v3486
      %v3745 = vunpack.c.l.b16 %v3490
      %v3746 = vunpack.c.l.b16 %v3493
      %v3747 = vunpack.c.l.b16 %v3497
      %v3748 = vunpack.c.l.b16 %v3500
      %v3749 = vunpack.c.l.b16 %v3504
      %v3750 = vunpack.c.l.b16 %v3507
      %v3751 = vunpack.c.l.b16 %v3511
      %v3752 = vunpack.c.l.b16 %v3514
      %v3753 = vunpack.c.l.b16 %v3518
      %v3754 = vunpack.c.l.b16 %v3521
      %v3755 = vunpack.c.l.b16 %v3525
      %v3756 = vunpack.c.l.b16 %v3528
      %v3757 = vpack.c.b16 %v3726, %v3725
      %v3758 = vpack.c.b16 %v3728, %v3727
      %v3759 = vpack.c.b16 %v3730, %v3729
      %v3760 = vpack.c.b16 %v3732, %v3731
      %v3761 = vpack.c.b16 %v3734, %v3733
      %v3762 = vpack.c.b16 %v3736, %v3735
      %v3763 = vpack.c.b16 %v3738, %v3737
      %v3764 = vpack.c.b16 %v3740, %v3739
      %v3765 = vpack.c.b16 %v3742, %v3741
      %v3766 = vpack.c.b16 %v3744, %v3743
      %v3767 = vpack.c.b16 %v3746, %v3745
      %v3768 = vpack.c.b16 %v3748, %v3747
      %v3769 = vpack.c.b16 %v3750, %v3749
      %v3770 = vpack.c.b16 %v3752, %v3751
      %v3771 = vpack.c.b16 %v3754, %v3753
      %v3772 = vpack.c.b16 %v3756, %v3755
      %3773 = vrot.lane.b32.xlu0 %v3757, 16
      %v3774 = vpop.permute.xlu0 %3773
      %3775 = vrot.lane.b32.xlu0 %v3758, 16
      %v3776 = vpop.permute.xlu0 %3775
      %3777 = vrot.lane.b32.xlu0 %v3759, 16
      %v3778 = vpop.permute.xlu0 %3777
      %3779 = vrot.lane.b32.xlu0 %v3760, 16
      %v3780 = vpop.permute.xlu0 %3779
      %3781 = vrot.lane.b32.xlu0 %v3761, 16
      %v3782 = vpop.permute.xlu0 %3781
      %3783 = vrot.lane.b32.xlu0 %v3762, 16
      %v3784 = vpop.permute.xlu0 %3783
      %3785 = vrot.lane.b32.xlu0 %v3763, 16
      %v3786 = vpop.permute.xlu0 %3785
      %3787 = vrot.lane.b32.xlu0 %v3764, 16
      %v3788 = vpop.permute.xlu0 %3787
      %3789 = vrot.lane.b32.xlu0 %v3765, 16
      %v3790 = vpop.permute.xlu0 %3789
      %3791 = vrot.lane.b32.xlu0 %v3766, 16
      %v3792 = vpop.permute.xlu0 %3791
      %3793 = vrot.lane.b32.xlu0 %v3767, 16
      %v3794 = vpop.permute.xlu0 %3793
      %3795 = vrot.lane.b32.xlu0 %v3768, 16
      %v3796 = vpop.permute.xlu0 %3795
      %3797 = vrot.lane.b32.xlu0 %v3769, 16
      %v3798 = vpop.permute.xlu0 %3797
      %3799 = vrot.lane.b32.xlu0 %v3770, 16
      %v3800 = vpop.permute.xlu0 %3799
      %3801 = vrot.lane.b32.xlu0 %v3771, 16
      %v3802 = vpop.permute.xlu0 %3801
      %3803 = vrot.lane.b32.xlu0 %v3772, 16
      %v3804 = vpop.permute.xlu0 %3803
      %v3805 = vunpack.c.l.b16 %v2979
      %v3806 = vunpack.c.l.b16 %v2980
      %v3807 = vpack.c.b16 %v3806, %v3805
      %3808 = vrot.lane.b32.xlu0 %v3630, 24
      %v3809 = vpop.permute.xlu0 %3808
      %3810 = vrot.lane.b32.xlu0 %v3631, 24
      %v3811 = vpop.permute.xlu0 %3810
      %3812 = vrot.lane.b32.xlu0 %v3632, 24
      %v3813 = vpop.permute.xlu0 %3812
      %3814 = vrot.lane.b32.xlu0 %v3633, 24
      %v3815 = vpop.permute.xlu0 %3814
      %3816 = vrot.lane.b32.xlu0 %v3634, 24
      %v3817 = vpop.permute.xlu0 %3816
      %3818 = vrot.lane.b32.xlu0 %v3635, 24
      %v3819 = vpop.permute.xlu0 %3818
      %3820 = vrot.lane.b32.xlu0 %v3636, 24
      %v3821 = vpop.permute.xlu0 %3820
      %3822 = vrot.lane.b32.xlu0 %v3637, 24
      %v3823 = vpop.permute.xlu0 %3822
      %3824 = vrot.lane.b32.xlu0 %v3638, 24
      %v3825 = vpop.permute.xlu0 %3824
      %3826 = vrot.lane.b32.xlu0 %v3639, 24
      %v3827 = vpop.permute.xlu0 %3826
      %3828 = vrot.lane.b32.xlu0 %v3640, 24
      %v3829 = vpop.permute.xlu0 %3828
      %3830 = vrot.lane.b32.xlu0 %v3641, 24
      %v3831 = vpop.permute.xlu0 %3830
      %3832 = vrot.lane.b32.xlu0 %v3642, 24
      %v3833 = vpop.permute.xlu0 %3832
      %3834 = vrot.lane.b32.xlu0 %v3643, 24
      %v3835 = vpop.permute.xlu0 %3834
      %3836 = vrot.lane.b32.xlu0 %v3644, 24
      %v3837 = vpop.permute.xlu0 %3836
      %3838 = vrot.lane.b32.xlu0 %v3807, 24
      %v3839 = vpop.permute.xlu0 %3838
      %v3840 = vunpack.c.l.b16 %v3542
      %v3841 = vunpack.c.l.b16 %v3552
      %v3842 = vpack.c.b16 %v3841, %v3840
      %3843 = vrot.lane.b32.xlu0 %v3678, 32
      %v3844 = vpop.permute.xlu0 %3843
      %3845 = vrot.lane.b32.xlu0 %v3679, 32
      %v3846 = vpop.permute.xlu0 %3845
      %3847 = vrot.lane.b32.xlu0 %v3680, 32
      %v3848 = vpop.permute.xlu0 %3847
      %3849 = vrot.lane.b32.xlu0 %v3681, 32
      %v3850 = vpop.permute.xlu0 %3849
      %3851 = vrot.lane.b32.xlu0 %v3682, 32
      %v3852 = vpop.permute.xlu0 %3851
      %3853 = vrot.lane.b32.xlu0 %v3683, 32
      %v3854 = vpop.permute.xlu0 %3853
      %3855 = vrot.lane.b32.xlu0 %v3684, 32
      %v3856 = vpop.permute.xlu0 %3855
      %3857 = vrot.lane.b32.xlu0 %v3685, 32
      %v3858 = vpop.permute.xlu0 %3857
      %3859 = vrot.lane.b32.xlu0 %v3686, 32
      %v3860 = vpop.permute.xlu0 %3859
      %3861 = vrot.lane.b32.xlu0 %v3687, 32
      %v3862 = vpop.permute.xlu0 %3861
      %3863 = vrot.lane.b32.xlu0 %v3688, 32
      %v3864 = vpop.permute.xlu0 %3863
      %3865 = vrot.lane.b32.xlu0 %v3689, 32
      %v3866 = vpop.permute.xlu0 %3865
      %3867 = vrot.lane.b32.xlu0 %v3690, 32
      %v3868 = vpop.permute.xlu0 %3867
      %3869 = vrot.lane.b32.xlu0 %v3691, 32
      %v3870 = vpop.permute.xlu0 %3869
      %3871 = vrot.lane.b32.xlu0 %v3692, 32
      %v3872 = vpop.permute.xlu0 %3871
      %3873 = vrot.lane.b32.xlu0 %v3842, 32
      %v3874 = vpop.permute.xlu0 %3873
      %v3875 = vunpack.c.l.b16 %v3559
      %v3876 = vunpack.c.l.b16 %v3562
      %v3877 = vpack.c.b16 %v3876, %v3875
      %3878 = vrot.lane.b32.xlu0 %v3758, 40
      %v3879 = vpop.permute.xlu0 %3878
      %3880 = vrot.lane.b32.xlu0 %v3759, 40
      %v3881 = vpop.permute.xlu0 %3880
      %3882 = vrot.lane.b32.xlu0 %v3760, 40
      %v3883 = vpop.permute.xlu0 %3882
      %3884 = vrot.lane.b32.xlu0 %v3761, 40
      %v3885 = vpop.permute.xlu0 %3884
      %3886 = vrot.lane.b32.xlu0 %v3762, 40
      %v3887 = vpop.permute.xlu0 %3886
      %3888 = vrot.lane.b32.xlu0 %v3763, 40
      %v3889 = vpop.permute.xlu0 %3888
      %3890 = vrot.lane.b32.xlu0 %v3764, 40
      %v3891 = vpop.permute.xlu0 %3890
      %3892 = vrot.lane.b32.xlu0 %v3765, 40
      %v3893 = vpop.permute.xlu0 %3892
      %3894 = vrot.lane.b32.xlu0 %v3766, 40
      %v3895 = vpop.permute.xlu0 %3894
      %3896 = vrot.lane.b32.xlu0 %v3767, 40
      %v3897 = vpop.permute.xlu0 %3896
      %3898 = vrot.lane.b32.xlu0 %v3768, 40
      %v3899 = vpop.permute.xlu0 %3898
      %3900 = vrot.lane.b32.xlu0 %v3769, 40
      %v3901 = vpop.permute.xlu0 %3900
      %3902 = vrot.lane.b32.xlu0 %v3770, 40
      %v3903 = vpop.permute.xlu0 %3902
      %3904 = vrot.lane.b32.xlu0 %v3771, 40
      %v3905 = vpop.permute.xlu0 %3904
      %3906 = vrot.lane.b32.xlu0 %v3772, 40
      %v3907 = vpop.permute.xlu0 %3906
      %3908 = vrot.lane.b32.xlu0 %v3877, 40
      %v3909 = vpop.permute.xlu0 %3908
      %v3910 = vunpack.c.l.b16 %v2982
      %v3911 = vunpack.c.l.b16 %v2983
      %v3912 = vpack.c.b16 %v3911, %v3910
      %3913 = vrot.lane.b32.xlu0 %v3631, 48
      %v3914 = vpop.permute.xlu0 %3913
      %3915 = vrot.lane.b32.xlu0 %v3632, 48
      %v3916 = vpop.permute.xlu0 %3915
      %3917 = vrot.lane.b32.xlu0 %v3633, 48
      %v3918 = vpop.permute.xlu0 %3917
      %3919 = vrot.lane.b32.xlu0 %v3634, 48
      %v3920 = vpop.permute.xlu0 %3919
      %3921 = vrot.lane.b32.xlu0 %v3635, 48
      %v3922 = vpop.permute.xlu0 %3921
      %3923 = vrot.lane.b32.xlu0 %v3636, 48
      %v3924 = vpop.permute.xlu0 %3923
      %3925 = vrot.lane.b32.xlu0 %v3637, 48
      %v3926 = vpop.permute.xlu0 %3925
      %3927 = vrot.lane.b32.xlu0 %v3638, 48
      %v3928 = vpop.permute.xlu0 %3927
      %3929 = vrot.lane.b32.xlu0 %v3639, 48
      %v3930 = vpop.permute.xlu0 %3929
      %3931 = vrot.lane.b32.xlu0 %v3640, 48
      %v3932 = vpop.permute.xlu0 %3931
      %3933 = vrot.lane.b32.xlu0 %v3641, 48
      %v3934 = vpop.permute.xlu0 %3933
      %3935 = vrot.lane.b32.xlu0 %v3642, 48
      %v3936 = vpop.permute.xlu0 %3935
      %3937 = vrot.lane.b32.xlu0 %v3643, 48
      %v3938 = vpop.permute.xlu0 %3937
      %3939 = vrot.lane.b32.xlu0 %v3644, 48
      %v3940 = vpop.permute.xlu0 %3939
      %3941 = vrot.lane.b32.xlu0 %v3807, 48
      %v3942 = vpop.permute.xlu0 %3941
      %3943 = vrot.lane.b32.xlu0 %v3912, 48
      %v3944 = vpop.permute.xlu0 %3943
      %v3945 = vunpack.c.l.b16 %v3576
      %v3946 = vunpack.c.l.b16 %v3586
      %v3947 = vpack.c.b16 %v3946, %v3945
      %3948 = vrot.lane.b32.xlu0 %v3679, 56
      %v3949 = vpop.permute.xlu0 %3948
      %3950 = vrot.lane.b32.xlu0 %v3680, 56
      %v3951 = vpop.permute.xlu0 %3950
      %3952 = vrot.lane.b32.xlu0 %v3681, 56
      %v3953 = vpop.permute.xlu0 %3952
      %3954 = vrot.lane.b32.xlu0 %v3682, 56
      %v3955 = vpop.permute.xlu0 %3954
      %3956 = vrot.lane.b32.xlu0 %v3683, 56
      %v3957 = vpop.permute.xlu0 %3956
      %3958 = vrot.lane.b32.xlu0 %v3684, 56
      %v3959 = vpop.permute.xlu0 %3958
      %3960 = vrot.lane.b32.xlu0 %v3685, 56
      %v3961 = vpop.permute.xlu0 %3960
      %3962 = vrot.lane.b32.xlu0 %v3686, 56
      %v3963 = vpop.permute.xlu0 %3962
      %3964 = vrot.lane.b32.xlu0 %v3687, 56
      %v3965 = vpop.permute.xlu0 %3964
      %3966 = vrot.lane.b32.xlu0 %v3688, 56
      %v3967 = vpop.permute.xlu0 %3966
      %3968 = vrot.lane.b32.xlu0 %v3689, 56
      %v3969 = vpop.permute.xlu0 %3968
      %3970 = vrot.lane.b32.xlu0 %v3690, 56
      %v3971 = vpop.permute.xlu0 %3970
      %3972 = vrot.lane.b32.xlu0 %v3691, 56
      %v3973 = vpop.permute.xlu0 %3972
      %3974 = vrot.lane.b32.xlu0 %v3692, 56
      %v3975 = vpop.permute.xlu0 %3974
      %3976 = vrot.lane.b32.xlu0 %v3842, 56
      %v3977 = vpop.permute.xlu0 %3976
      %3978 = vrot.lane.b32.xlu0 %v3947, 56
      %v3979 = vpop.permute.xlu0 %3978
      %v3980 = vunpack.c.l.b16 %v3593
      %v3981 = vunpack.c.l.b16 %v3596
      %v3982 = vpack.c.b16 %v3981, %v3980
      %3983 = vrot.lane.b32.xlu0 %v3759, 64
      %v3984 = vpop.permute.xlu0 %3983
      %3985 = vrot.lane.b32.xlu0 %v3760, 64
      %v3986 = vpop.permute.xlu0 %3985
      %3987 = vrot.lane.b32.xlu0 %v3761, 64
      %v3988 = vpop.permute.xlu0 %3987
      %3989 = vrot.lane.b32.xlu0 %v3762, 64
      %v3990 = vpop.permute.xlu0 %3989
      %3991 = vrot.lane.b32.xlu0 %v3763, 64
      %v3992 = vpop.permute.xlu0 %3991
      %3993 = vrot.lane.b32.xlu0 %v3764, 64
      %v3994 = vpop.permute.xlu0 %3993
      %3995 = vrot.lane.b32.xlu0 %v3765, 64
      %v3996 = vpop.permute.xlu0 %3995
      %3997 = vrot.lane.b32.xlu0 %v3766, 64
      %v3998 = vpop.permute.xlu0 %3997
      %3999 = vrot.lane.b32.xlu0 %v3767, 64
      %v4000 = vpop.permute.xlu0 %3999
      %4001 = vrot.lane.b32.xlu0 %v3768, 64
      %v4002 = vpop.permute.xlu0 %4001
      %4003 = vrot.lane.b32.xlu0 %v3769, 64
      %v4004 = vpop.permute.xlu0 %4003
      %4005 = vrot.lane.b32.xlu0 %v3770, 64
      %v4006 = vpop.permute.xlu0 %4005
      %4007 = vrot.lane.b32.xlu0 %v3771, 64
      %v4008 = vpop.permute.xlu0 %4007
      %4009 = vrot.lane.b32.xlu0 %v3772, 64
      %v4010 = vpop.permute.xlu0 %4009
      %4011 = vrot.lane.b32.xlu0 %v3877, 64
      %v4012 = vpop.permute.xlu0 %4011
      %4013 = vrot.lane.b32.xlu0 %v3982, 64
      %v4014 = vpop.permute.xlu0 %4013
      %v4017 = vsel %vm1846, %v3629, %v3694
      %v4020 = vsel %vm1846, %v3630, %v3696
      %v4023 = vsel %vm1846, %v3631, %v3698
      %v4026 = vsel %vm1846, %v3632, %v3700
      %v4029 = vsel %vm1846, %v3633, %v3702
      %v4032 = vsel %vm1846, %v3634, %v3704
      %v4035 = vsel %vm1846, %v3635, %v3706
      %v4038 = vsel %vm1846, %v3636, %v3708
      %v4041 = vsel %vm1846, %v3637, %v3710
      %v4044 = vsel %vm1846, %v3638, %v3712
      %v4047 = vsel %vm1846, %v3639, %v3714
      %v4050 = vsel %vm1846, %v3640, %v3716
      %v4053 = vsel %vm1846, %v3641, %v3718
      %v4056 = vsel %vm1846, %v3642, %v3720
      %v4059 = vsel %vm1846, %v3643, %v3722
      %v4062 = vsel %vm1846, %v3644, %v3724
      %v4064 = vsel %vm1895, %v4017, %v3774
      %v4066 = vsel %vm1895, %v4020, %v3776
      %v4068 = vsel %vm1895, %v4023, %v3778
      %v4070 = vsel %vm1895, %v4026, %v3780
      %v4072 = vsel %vm1895, %v4029, %v3782
      %v4074 = vsel %vm1895, %v4032, %v3784
      %v4076 = vsel %vm1895, %v4035, %v3786
      %v4078 = vsel %vm1895, %v4038, %v3788
      %v4080 = vsel %vm1895, %v4041, %v3790
      %v4082 = vsel %vm1895, %v4044, %v3792
      %v4084 = vsel %vm1895, %v4047, %v3794
      %v4086 = vsel %vm1895, %v4050, %v3796
      %v4088 = vsel %vm1895, %v4053, %v3798
      %v4090 = vsel %vm1895, %v4056, %v3800
      %v4092 = vsel %vm1895, %v4059, %v3802
      %v4094 = vsel %vm1895, %v4062, %v3804
      %v4096 = vsel %vm1928, %v4064, %v3809
      %v4098 = vsel %vm1928, %v4066, %v3811
      %v4100 = vsel %vm1928, %v4068, %v3813
      %v4102 = vsel %vm1928, %v4070, %v3815
      %v4104 = vsel %vm1928, %v4072, %v3817
      %v4106 = vsel %vm1928, %v4074, %v3819
      %v4108 = vsel %vm1928, %v4076, %v3821
      %v4110 = vsel %vm1928, %v4078, %v3823
      %v4112 = vsel %vm1928, %v4080, %v3825
      %v4114 = vsel %vm1928, %v4082, %v3827
      %v4116 = vsel %vm1928, %v4084, %v3829
      %v4118 = vsel %vm1928, %v4086, %v3831
      %v4120 = vsel %vm1928, %v4088, %v3833
      %v4122 = vsel %vm1928, %v4090, %v3835
      %v4124 = vsel %vm1928, %v4092, %v3837
      %v4126 = vsel %vm1928, %v4094, %v3839
      %v4128 = vsel %vm1961, %v4096, %v3844
      %v4130 = vsel %vm1961, %v4098, %v3846
      %v4132 = vsel %vm1961, %v4100, %v3848
      %v4134 = vsel %vm1961, %v4102, %v3850
      %v4136 = vsel %vm1961, %v4104, %v3852
      %v4138 = vsel %vm1961, %v4106, %v3854
      %v4140 = vsel %vm1961, %v4108, %v3856
      %v4142 = vsel %vm1961, %v4110, %v3858
      %v4144 = vsel %vm1961, %v4112, %v3860
      %v4146 = vsel %vm1961, %v4114, %v3862
      %v4148 = vsel %vm1961, %v4116, %v3864
      %v4150 = vsel %vm1961, %v4118, %v3866
      %v4152 = vsel %vm1961, %v4120, %v3868
      %v4154 = vsel %vm1961, %v4122, %v3870
      %v4156 = vsel %vm1961, %v4124, %v3872
      %v4158 = vsel %vm1961, %v4126, %v3874
      %v4160 = vsel %vm1994, %v4128, %v3879
      %v4162 = vsel %vm1994, %v4130, %v3881
      %v4164 = vsel %vm1994, %v4132, %v3883
      %v4166 = vsel %vm1994, %v4134, %v3885
      %v4168 = vsel %vm1994, %v4136, %v3887
      %v4170 = vsel %vm1994, %v4138, %v3889
      %v4172 = vsel %vm1994, %v4140, %v3891
      %v4174 = vsel %vm1994, %v4142, %v3893
      %v4176 = vsel %vm1994, %v4144, %v3895
      %v4178 = vsel %vm1994, %v4146, %v3897
      %v4180 = vsel %vm1994, %v4148, %v3899
      %v4182 = vsel %vm1994, %v4150, %v3901
      %v4184 = vsel %vm1994, %v4152, %v3903
      %v4186 = vsel %vm1994, %v4154, %v3905
      %v4188 = vsel %vm1994, %v4156, %v3907
      %v4190 = vsel %vm1994, %v4158, %v3909
      %v4192 = vsel %vm2027, %v4160, %v3914
      %v4194 = vsel %vm2027, %v4162, %v3916
      %v4196 = vsel %vm2027, %v4164, %v3918
      %v4198 = vsel %vm2027, %v4166, %v3920
      %v4200 = vsel %vm2027, %v4168, %v3922
      %v4202 = vsel %vm2027, %v4170, %v3924
      %v4204 = vsel %vm2027, %v4172, %v3926
      %v4206 = vsel %vm2027, %v4174, %v3928
      %v4208 = vsel %vm2027, %v4176, %v3930
      %v4210 = vsel %vm2027, %v4178, %v3932
      %v4212 = vsel %vm2027, %v4180, %v3934
      %v4214 = vsel %vm2027, %v4182, %v3936
      %v4216 = vsel %vm2027, %v4184, %v3938
      %v4218 = vsel %vm2027, %v4186, %v3940
      %v4220 = vsel %vm2027, %v4188, %v3942
      %v4222 = vsel %vm2027, %v4190, %v3944
      %v4224 = vsel %vm2060, %v4192, %v3949
      %v4226 = vsel %vm2060, %v4194, %v3951
      %v4228 = vsel %vm2060, %v4196, %v3953
      %v4230 = vsel %vm2060, %v4198, %v3955
      %v4232 = vsel %vm2060, %v4200, %v3957
      %v4234 = vsel %vm2060, %v4202, %v3959
      %v4236 = vsel %vm2060, %v4204, %v3961
      %v4238 = vsel %vm2060, %v4206, %v3963
      %v4240 = vsel %vm2060, %v4208, %v3965
      %v4242 = vsel %vm2060, %v4210, %v3967
      %v4244 = vsel %vm2060, %v4212, %v3969
      %v4246 = vsel %vm2060, %v4214, %v3971
      %v4248 = vsel %vm2060, %v4216, %v3973
      %v4250 = vsel %vm2060, %v4218, %v3975
      %v4252 = vsel %vm2060, %v4220, %v3977
      %v4254 = vsel %vm2060, %v4222, %v3979
      %v4256 = vsel %vm2093, %v4224, %v3984
      %v4258 = vsel %vm2093, %v4226, %v3986
      %v4260 = vsel %vm2093, %v4228, %v3988
      %v4262 = vsel %vm2093, %v4230, %v3990
      %v4264 = vsel %vm2093, %v4232, %v3992
      %v4266 = vsel %vm2093, %v4234, %v3994
      %v4268 = vsel %vm2093, %v4236, %v3996
      %v4270 = vsel %vm2093, %v4238, %v3998
      %v4272 = vsel %vm2093, %v4240, %v4000
      %v4274 = vsel %vm2093, %v4242, %v4002
      %v4276 = vsel %vm2093, %v4244, %v4004
      %v4278 = vsel %vm2093, %v4246, %v4006
      %v4280 = vsel %vm2093, %v4248, %v4008
      %v4282 = vsel %vm2093, %v4250, %v4010
      %v4284 = vsel %vm2093, %v4252, %v4012
      %v4286 = vsel %vm2093, %v4254, %v4014
      %v4287 = vld [vmem:[%s3] sm:$0xf]
      %v4288 = vld [vmem:[%s3 + $0x4] sm:$0xf]
      %v4289 = vld [vmem:[%s3 + $0x8] sm:$0xf]
      %v4290 = vld [vmem:[%s3 + $0xc] sm:$0xf]
      %v4291 = vld [vmem:[%s3 + $0x10] sm:$0xf]
      %v4292 = vld [vmem:[%s3 + $0x14] sm:$0xf]
      %v4293 = vld [vmem:[%s3 + $0x18] sm:$0xf]
      %v4294 = vld [vmem:[%s3 + $0x1c] sm:$0xf]
      %v4295 = vld [vmem:[%s3 + $0x20] sm:$0xf]
      %v4296 = vld [vmem:[%s4] sm:$0x1]
      %v4298 = vlaneseq
      %v4299 = vshrl.u32 %v4298, 7
      %v4300 = vsub.s32 0, %v4299
      %v4301 = vrot.slane %v4296, %v4300
      %v4312 = vunpack.c.l.b16 %v4287
      %v4313 = vunpack.c.l.b16 %v4288
      %v4314 = vunpack.c.l.b16 %v4289
      %v4315 = vunpack.c.l.b16 %v4290
      %v4316 = vunpack.c.l.b16 %v4291
      %v4317 = vunpack.c.l.b16 %v4292
      %v4318 = vunpack.c.l.b16 %v4293
      %v4319 = vunpack.c.l.b16 %v4294
      %v4320 = vunpack.c.l.b16 %v4295
      %v4321 = vpack.c.b16 %v4313, %v4312
      %v4322 = vpack.c.b16 %v4315, %v4314
      %v4323 = vpack.c.b16 %v4317, %v4316
      %v4324 = vpack.c.b16 %v4319, %v4318
      %v4325 = vpack.c.b16 %v4320, %v4320
      %v4330 = vsel %vm2169, %v4256, 0
      %v4332 = vsel %vm2169, %v4258, 0
      %v4334 = vsel %vm2169, %v4260, 0
      %v4336 = vsel %vm2169, %v4262, 0
      %v4338 = vsel %vm2169, %v4264, 0
      %v4340 = vsel %vm2169, %v4266, 0
      %v4342 = vsel %vm2169, %v4268, 0
      %v4344 = vsel %vm2169, %v4270, 0
      %v4346 = vsel %vm2169, %v4272, 0
      %v4348 = vsel %vm2169, %v4274, 0
      %v4350 = vsel %vm2169, %v4276, 0
      %v4352 = vsel %vm2169, %v4278, 0
      %v4354 = vsel %vm2169, %v4280, 0
      %v4356 = vsel %vm2169, %v4282, 0
      %v4358 = vsel %vm2169, %v4284, 0
      %v4360 = vsel %vm2169, %v4286, 0
      %v4363 = vsel %vm2202, %v4325, 0
      %4365 = vmatprep.subr.bf16.mxu0 0
      %4366 = vmatpush1.bf16.msra.mxu0 0
      %4367 = vmatprep.subr.bf16.mxu0 0
      %4368 = vmatpush1.bf16.msra.mxu0 0
      %4369 = vmatprep.subr.bf16.mxu0 0
      %4370 = vmatpush1.bf16.msra.mxu0 0
      %4371 = vmatprep.subr.bf16.mxu0 0
      %4372 = vmatpush1.bf16.msra.mxu0 %v4363
      %4373 = vmatprep.subr.bf16.mxu0 0
      %4374 = vmatpush1.bf16.msra.mxu0 %v4324
      %4375 = vmatprep.subr.bf16.mxu0 0
      %4376 = vmatpush1.bf16.msra.mxu0 %v4323
      %4377 = vmatprep.subr.bf16.mxu0 0
      %4378 = vmatpush1.bf16.msra.mxu0 %v4322
      %4379 = vmatprep.subr.bf16.mxu0 0
      %4380 = vmatpush1.bf16.msra.mxu0 %v4321
      %4381 = vmatprep.subr.bf16.mxu0 0
      %4382 = vmatpush2.bf16.msra.mxu0 0
      %4383 = vmatprep.subr.bf16.mxu0 0
      %4384 = vmatpush2.bf16.msra.mxu0 0
      %4385 = vmatprep.subr.bf16.mxu0 0
      %4386 = vmatpush2.bf16.msra.mxu0 0
      %4387 = vmatprep.subr.bf16.mxu0 0
      %4388 = vmatpush2.bf16.msra.mxu0 0
      %4389 = vmatprep.subr.bf16.mxu0 0
      %4390 = vmatpush2.bf16.msra.mxu0 0
      %4391 = vmatprep.subr.bf16.mxu0 0
      %4392 = vmatpush2.bf16.msra.mxu0 0
      %4393 = vmatprep.subr.bf16.mxu0 0
      %4394 = vmatpush2.bf16.msra.mxu0 0
      %4395 = vmatprep.subr.bf16.mxu0 0
      %4396 = vmatpush2.bf16.msra.mxu0 0
      %4397 = vmatprep.mubr.bf16.mxu0 0
      %4398 = vmatmul.mubr.bf16.gmra.mxu0 %v4330
      %v4399 = vpop.f32.mrf.mxu0
      %v4400 = vadd.f32 %v4301, %v4399
      %v4401 = vpop.f32.mrf.mxu0
      %v4402 = vpop.f32.mrf.mxu0
      %v4403 = vadd.f32 %v4301, %v4402
      %v4404 = vpop.f32.mrf.mxu0
      %4405 = vmatprep.mubr.bf16.mxu0 0
      %4406 = vmatmul.mubr.bf16.gmra.mxu0 %v4332
      %v4407 = vpop.f32.mrf.mxu0
      %v4408 = vadd.f32 %v4301, %v4407
      %v4409 = vpop.f32.mrf.mxu0
      %v4410 = vpop.f32.mrf.mxu0
      %v4411 = vadd.f32 %v4301, %v4410
      %v4412 = vpop.f32.mrf.mxu0
      %4413 = vmatprep.mubr.bf16.mxu0 0
      %4414 = vmatmul.mubr.bf16.gmra.mxu0 %v4334
      %v4415 = vpop.f32.mrf.mxu0
      %v4416 = vadd.f32 %v4301, %v4415
      %v4417 = vpop.f32.mrf.mxu0
      %v4418 = vpop.f32.mrf.mxu0
      %v4419 = vadd.f32 %v4301, %v4418
      %v4420 = vpop.f32.mrf.mxu0
      %4421 = vmatprep.mubr.bf16.mxu0 0
      %4422 = vmatmul.mubr.bf16.gmra.mxu0 %v4336
      %v4423 = vpop.f32.mrf.mxu0
      %v4424 = vadd.f32 %v4301, %v4423
      %v4425 = vpop.f32.mrf.mxu0
      %v4426 = vpop.f32.mrf.mxu0
      %v4427 = vadd.f32 %v4301, %v4426
      %v4428 = vpop.f32.mrf.mxu0
      %4429 = vmatprep.mubr.bf16.mxu0 0
      %4430 = vmatmul.mubr.bf16.gmra.mxu0 %v4338
      %v4431 = vpop.f32.mrf.mxu0
      %v4432 = vadd.f32 %v4301, %v4431
      %v4433 = vpop.f32.mrf.mxu0
      %v4434 = vpop.f32.mrf.mxu0
      %v4435 = vadd.f32 %v4301, %v4434
      %v4436 = vpop.f32.mrf.mxu0
      %4437 = vmatprep.mubr.bf16.mxu0 0
      %4438 = vmatmul.mubr.bf16.gmra.mxu0 %v4340
      %v4439 = vpop.f32.mrf.mxu0
      %v4440 = vadd.f32 %v4301, %v4439
      %v4441 = vpop.f32.mrf.mxu0
      %v4442 = vpop.f32.mrf.mxu0
      %v4443 = vadd.f32 %v4301, %v4442
      %v4444 = vpop.f32.mrf.mxu0
      %4445 = vmatprep.mubr.bf16.mxu0 0
      %4446 = vmatmul.mubr.bf16.gmra.mxu0 %v4342
      %v4447 = vpop.f32.mrf.mxu0
      %v4448 = vadd.f32 %v4301, %v4447
      %v4449 = vpop.f32.mrf.mxu0
      %v4450 = vpop.f32.mrf.mxu0
      %v4451 = vadd.f32 %v4301, %v4450
      %v4452 = vpop.f32.mrf.mxu0
      %4453 = vmatprep.mubr.bf16.mxu0 0
      %4454 = vmatmul.mubr.bf16.gmra.mxu0 %v4344
      %v4455 = vpop.f32.mrf.mxu0
      %v4456 = vadd.f32 %v4301, %v4455
      %v4457 = vpop.f32.mrf.mxu0
      %v4458 = vpop.f32.mrf.mxu0
      %v4459 = vadd.f32 %v4301, %v4458
      %v4460 = vpop.f32.mrf.mxu0
      %4461 = vmatprep.mubr.bf16.mxu0 0
      %4462 = vmatmul.mubr.bf16.gmra.mxu0 %v4346
      %v4463 = vpop.f32.mrf.mxu0
      %v4464 = vadd.f32 %v4301, %v4463
      %v4465 = vpop.f32.mrf.mxu0
      %v4466 = vpop.f32.mrf.mxu0
      %v4467 = vadd.f32 %v4301, %v4466
      %v4468 = vpop.f32.mrf.mxu0
      %4469 = vmatprep.mubr.bf16.mxu0 0
      %4470 = vmatmul.mubr.bf16.gmra.mxu0 %v4348
      %v4471 = vpop.f32.mrf.mxu0
      %v4472 = vadd.f32 %v4301, %v4471
      %v4473 = vpop.f32.mrf.mxu0
      %v4474 = vpop.f32.mrf.mxu0
      %v4475 = vadd.f32 %v4301, %v4474
      %v4476 = vpop.f32.mrf.mxu0
      %4477 = vmatprep.mubr.bf16.mxu0 0
      %4478 = vmatmul.mubr.bf16.gmra.mxu0 %v4350
      %v4479 = vpop.f32.mrf.mxu0
      %v4480 = vadd.f32 %v4301, %v4479
      %v4481 = vpop.f32.mrf.mxu0
      %v4482 = vpop.f32.mrf.mxu0
      %v4483 = vadd.f32 %v4301, %v4482
      %v4484 = vpop.f32.mrf.mxu0
      %4485 = vmatprep.mubr.bf16.mxu0 0
      %4486 = vmatmul.mubr.bf16.gmra.mxu0 %v4352
      %v4487 = vpop.f32.mrf.mxu0
      %v4488 = vadd.f32 %v4301, %v4487
      %v4489 = vpop.f32.mrf.mxu0
      %v4490 = vpop.f32.mrf.mxu0
      %v4491 = vadd.f32 %v4301, %v4490
      %v4492 = vpop.f32.mrf.mxu0
      %4493 = vmatprep.mubr.bf16.mxu0 0
      %4494 = vmatmul.mubr.bf16.gmra.mxu0 %v4354
      %v4495 = vpop.f32.mrf.mxu0
      %v4496 = vadd.f32 %v4301, %v4495
      %v4497 = vpop.f32.mrf.mxu0
      %v4498 = vpop.f32.mrf.mxu0
      %v4499 = vadd.f32 %v4301, %v4498
      %v4500 = vpop.f32.mrf.mxu0
      %4501 = vmatprep.mubr.bf16.mxu0 0
      %4502 = vmatmul.mubr.bf16.gmra.mxu0 %v4356
      %v4503 = vpop.f32.mrf.mxu0
      %v4504 = vadd.f32 %v4301, %v4503
      %v4505 = vpop.f32.mrf.mxu0
      %v4506 = vpop.f32.mrf.mxu0
      %v4507 = vadd.f32 %v4301, %v4506
      %v4508 = vpop.f32.mrf.mxu0
      %4509 = vmatprep.mubr.bf16.mxu0 0
      %4510 = vmatmul.mubr.bf16.gmra.mxu0 %v4358
      %v4511 = vpop.f32.mrf.mxu0
      %v4512 = vadd.f32 %v4301, %v4511
      %v4513 = vpop.f32.mrf.mxu0
      %v4514 = vpop.f32.mrf.mxu0
      %v4515 = vadd.f32 %v4301, %v4514
      %v4516 = vpop.f32.mrf.mxu0
      %4517 = vmatprep.mubr.bf16.mxu0 0
      %4518 = vmatmul.mubr.bf16.gmra.mxu0 %v4360
      %v4519 = vpop.f32.mrf.mxu0
      %v4520 = vadd.f32 %v4301, %v4519
      %v4521 = vpop.f32.mrf.mxu0
      %v4522 = vpop.f32.mrf.mxu0
      %v4523 = vadd.f32 %v4301, %v4522
      %v4524 = vpop.f32.mrf.mxu0
      %4525 = vdwg.mxu0
      %v4526 = vmax.f32 %v4400, 0.0
      %v4527 = vmax.f32 %v4403, 0.0
      %v4528 = vmax.f32 %v4408, 0.0
      %v4529 = vmax.f32 %v4411, 0.0
      %v4530 = vmax.f32 %v4416, 0.0
      %v4531 = vmax.f32 %v4419, 0.0
      %v4532 = vmax.f32 %v4424, 0.0
      %v4533 = vmax.f32 %v4427, 0.0
      %v4534 = vmax.f32 %v4432, 0.0
      %v4535 = vmax.f32 %v4435, 0.0
      %v4536 = vmax.f32 %v4440, 0.0
      %v4537 = vmax.f32 %v4443, 0.0
      %v4538 = vmax.f32 %v4448, 0.0
      %v4539 = vmax.f32 %v4451, 0.0
      %v4540 = vmax.f32 %v4456, 0.0
      %v4541 = vmax.f32 %v4459, 0.0
      %v4542 = vmax.f32 %v4464, 0.0
      %v4543 = vmax.f32 %v4467, 0.0
      %v4544 = vmax.f32 %v4472, 0.0
      %v4545 = vmax.f32 %v4475, 0.0
      %v4546 = vmax.f32 %v4480, 0.0
      %v4547 = vmax.f32 %v4483, 0.0
      %v4548 = vmax.f32 %v4488, 0.0
      %v4549 = vmax.f32 %v4491, 0.0
      %v4550 = vmax.f32 %v4496, 0.0
      %v4551 = vmax.f32 %v4499, 0.0
      %v4552 = vmax.f32 %v4504, 0.0
      %v4553 = vmax.f32 %v4507, 0.0
      %v4554 = vmax.f32 %v4512, 0.0
      %v4555 = vmax.f32 %v4515, 0.0
      %v4556 = vmax.f32 %v4520, 0.0
      %v4557 = vmax.f32 %v4523, 0.0
      %v4590 = vcombine.high %v4526, %v4526
      %v4592 = vunpack.c.l.s4 1983009808
      %v4593 = vunpack.c.0.s8 %v4592
      %v4594 = vlaneseq
      %v4595 = vshrl.u32 %v4594, 7
      %v4596 = vsub.s32 %v4593, %v4595
      %v4597 = vrot.slane %v4526, %v4596
      %v4599 = vunpack.c.l.s4 1983009808
      %v4600 = vunpack.c.0.s8 %v4599
      %v4601 = vlaneseq
      %v4602 = vshrl.u32 %v4601, 7
      %v4603 = vsub.s32 %v4600, %v4602
      %v4604 = vrot.slane %v4590, %v4603
      %v4605 = vcombine.high %v4597, %v4597
      %v4606 = vcombine.high %v4604, %v4604
      %v4607 = vcombine.high %v4527, %v4527
      %v4609 = vunpack.c.l.s4 1983009808
      %v4610 = vunpack.c.0.s8 %v4609
      %v4611 = vlaneseq
      %v4612 = vshrl.u32 %v4611, 7
      %v4613 = vsub.s32 %v4610, %v4612
      %v4614 = vrot.slane %v4527, %v4613
      %v4616 = vunpack.c.l.s4 1983009808
      %v4617 = vunpack.c.0.s8 %v4616
      %v4618 = vlaneseq
      %v4619 = vshrl.u32 %v4618, 7
      %v4620 = vsub.s32 %v4617, %v4619
      %v4621 = vrot.slane %v4607, %v4620
      %v4622 = vcombine.high %v4614, %v4614
      %v4623 = vcombine.high %v4621, %v4621
      %v4624 = vcombine.high %v4528, %v4528
      %v4626 = vunpack.c.l.s4 1983009808
      %v4627 = vunpack.c.0.s8 %v4626
      %v4628 = vlaneseq
      %v4629 = vshrl.u32 %v4628, 7
      %v4630 = vsub.s32 %v4627, %v4629
      %v4631 = vrot.slane %v4528, %v4630
      %v4633 = vunpack.c.l.s4 1983009808
      %v4634 = vunpack.c.0.s8 %v4633
      %v4635 = vlaneseq
      %v4636 = vshrl.u32 %v4635, 7
      %v4637 = vsub.s32 %v4634, %v4636
      %v4638 = vrot.slane %v4624, %v4637
      %v4639 = vcombine.high %v4631, %v4631
      %v4640 = vcombine.high %v4638, %v4638
      %v4641 = vcombine.high %v4529, %v4529
      %v4643 = vunpack.c.l.s4 1983009808
      %v4644 = vunpack.c.0.s8 %v4643
      %v4645 = vlaneseq
      %v4646 = vshrl.u32 %v4645, 7
      %v4647 = vsub.s32 %v4644, %v4646
      %v4648 = vrot.slane %v4529, %v4647
      %v4650 = vunpack.c.l.s4 1983009808
      %v4651 = vunpack.c.0.s8 %v4650
      %v4652 = vlaneseq
      %v4653 = vshrl.u32 %v4652, 7
      %v4654 = vsub.s32 %v4651, %v4653
      %v4655 = vrot.slane %v4641, %v4654
      %v4656 = vcombine.high %v4648, %v4648
      %v4657 = vcombine.high %v4655, %v4655
      %v4658 = vcombine.high %v4530, %v4530
      %v4660 = vunpack.c.l.s4 1983009808
      %v4661 = vunpack.c.0.s8 %v4660
      %v4662 = vlaneseq
      %v4663 = vshrl.u32 %v4662, 7
      %v4664 = vsub.s32 %v4661, %v4663
      %v4665 = vrot.slane %v4530, %v4664
      %v4667 = vunpack.c.l.s4 1983009808
      %v4668 = vunpack.c.0.s8 %v4667
      %v4669 = vlaneseq
      %v4670 = vshrl.u32 %v4669, 7
      %v4671 = vsub.s32 %v4668, %v4670
      %v4672 = vrot.slane %v4658, %v4671
      %v4673 = vcombine.high %v4665, %v4665
      %v4674 = vcombine.high %v4672, %v4672
      %v4675 = vcombine.high %v4531, %v4531
      %v4677 = vunpack.c.l.s4 1983009808
      %v4678 = vunpack.c.0.s8 %v4677
      %v4679 = vlaneseq
      %v4680 = vshrl.u32 %v4679, 7
      %v4681 = vsub.s32 %v4678, %v4680
      %v4682 = vrot.slane %v4531, %v4681
      %v4684 = vunpack.c.l.s4 1983009808
      %v4685 = vunpack.c.0.s8 %v4684
      %v4686 = vlaneseq
      %v4687 = vshrl.u32 %v4686, 7
      %v4688 = vsub.s32 %v4685, %v4687
      %v4689 = vrot.slane %v4675, %v4688
      %v4690 = vcombine.high %v4682, %v4682
      %v4691 = vcombine.high %v4689, %v4689
      %v4692 = vcombine.high %v4532, %v4532
      %v4694 = vunpack.c.l.s4 1983009808
      %v4695 = vunpack.c.0.s8 %v4694
      %v4696 = vlaneseq
      %v4697 = vshrl.u32 %v4696, 7
      %v4698 = vsub.s32 %v4695, %v4697
      %v4699 = vrot.slane %v4532, %v4698
      %v4701 = vunpack.c.l.s4 1983009808
      %v4702 = vunpack.c.0.s8 %v4701
      %v4703 = vlaneseq
      %v4704 = vshrl.u32 %v4703, 7
      %v4705 = vsub.s32 %v4702, %v4704
      %v4706 = vrot.slane %v4692, %v4705
      %v4707 = vcombine.high %v4699, %v4699
      %v4708 = vcombine.high %v4706, %v4706
      %v4709 = vcombine.high %v4533, %v4533
      %v4711 = vunpack.c.l.s4 1983009808
      %v4712 = vunpack.c.0.s8 %v4711
      %v4713 = vlaneseq
      %v4714 = vshrl.u32 %v4713, 7
      %v4715 = vsub.s32 %v4712, %v4714
      %v4716 = vrot.slane %v4533, %v4715
      %v4718 = vunpack.c.l.s4 1983009808
      %v4719 = vunpack.c.0.s8 %v4718
      %v4720 = vlaneseq
      %v4721 = vshrl.u32 %v4720, 7
      %v4722 = vsub.s32 %v4719, %v4721
      %v4723 = vrot.slane %v4709, %v4722
      %v4724 = vcombine.high %v4716, %v4716
      %v4725 = vcombine.high %v4723, %v4723
      %v4726 = vcombine.high %v4534, %v4534
      %v4728 = vunpack.c.l.s4 1983009808
      %v4729 = vunpack.c.0.s8 %v4728
      %v4730 = vlaneseq
      %v4731 = vshrl.u32 %v4730, 7
      %v4732 = vsub.s32 %v4729, %v4731
      %v4733 = vrot.slane %v4534, %v4732
      %v4735 = vunpack.c.l.s4 1983009808
      %v4736 = vunpack.c.0.s8 %v4735
      %v4737 = vlaneseq
      %v4738 = vshrl.u32 %v4737, 7
      %v4739 = vsub.s32 %v4736, %v4738
      %v4740 = vrot.slane %v4726, %v4739
      %v4741 = vcombine.high %v4733, %v4733
      %v4742 = vcombine.high %v4740, %v4740
      %v4743 = vcombine.high %v4535, %v4535
      %v4745 = vunpack.c.l.s4 1983009808
      %v4746 = vunpack.c.0.s8 %v4745
      %v4747 = vlaneseq
      %v4748 = vshrl.u32 %v4747, 7
      %v4749 = vsub.s32 %v4746, %v4748
      %v4750 = vrot.slane %v4535, %v4749
      %v4752 = vunpack.c.l.s4 1983009808
      %v4753 = vunpack.c.0.s8 %v4752
      %v4754 = vlaneseq
      %v4755 = vshrl.u32 %v4754, 7
      %v4756 = vsub.s32 %v4753, %v4755
      %v4757 = vrot.slane %v4743, %v4756
      %v4758 = vcombine.high %v4750, %v4750
      %v4759 = vcombine.high %v4757, %v4757
      %v4760 = vcombine.high %v4536, %v4536
      %v4762 = vunpack.c.l.s4 1983009808
      %v4763 = vunpack.c.0.s8 %v4762
      %v4764 = vlaneseq
      %v4765 = vshrl.u32 %v4764, 7
      %v4766 = vsub.s32 %v4763, %v4765
      %v4767 = vrot.slane %v4536, %v4766
      %v4769 = vunpack.c.l.s4 1983009808
      %v4770 = vunpack.c.0.s8 %v4769
      %v4771 = vlaneseq
      %v4772 = vshrl.u32 %v4771, 7
      %v4773 = vsub.s32 %v4770, %v4772
      %v4774 = vrot.slane %v4760, %v4773
      %v4775 = vcombine.high %v4767, %v4767
      %v4776 = vcombine.high %v4774, %v4774
      %v4777 = vcombine.high %v4537, %v4537
      %v4779 = vunpack.c.l.s4 1983009808
      %v4780 = vunpack.c.0.s8 %v4779
      %v4781 = vlaneseq
      %v4782 = vshrl.u32 %v4781, 7
      %v4783 = vsub.s32 %v4780, %v4782
      %v4784 = vrot.slane %v4537, %v4783
      %v4786 = vunpack.c.l.s4 1983009808
      %v4787 = vunpack.c.0.s8 %v4786
      %v4788 = vlaneseq
      %v4789 = vshrl.u32 %v4788, 7
      %v4790 = vsub.s32 %v4787, %v4789
      %v4791 = vrot.slane %v4777, %v4790
      %v4792 = vcombine.high %v4784, %v4784
      %v4793 = vcombine.high %v4791, %v4791
      %v4794 = vcombine.high %v4538, %v4538
      %v4796 = vunpack.c.l.s4 1983009808
      %v4797 = vunpack.c.0.s8 %v4796
      %v4798 = vlaneseq
      %v4799 = vshrl.u32 %v4798, 7
      %v4800 = vsub.s32 %v4797, %v4799
      %v4801 = vrot.slane %v4538, %v4800
      %v4803 = vunpack.c.l.s4 1983009808
      %v4804 = vunpack.c.0.s8 %v4803
      %v4805 = vlaneseq
      %v4806 = vshrl.u32 %v4805, 7
      %v4807 = vsub.s32 %v4804, %v4806
      %v4808 = vrot.slane %v4794, %v4807
      %v4809 = vcombine.high %v4801, %v4801
      %v4810 = vcombine.high %v4808, %v4808
      %v4811 = vcombine.high %v4539, %v4539
      %v4813 = vunpack.c.l.s4 1983009808
      %v4814 = vunpack.c.0.s8 %v4813
      %v4815 = vlaneseq
      %v4816 = vshrl.u32 %v4815, 7
      %v4817 = vsub.s32 %v4814, %v4816
      %v4818 = vrot.slane %v4539, %v4817
      %v4820 = vunpack.c.l.s4 1983009808
      %v4821 = vunpack.c.0.s8 %v4820
      %v4822 = vlaneseq
      %v4823 = vshrl.u32 %v4822, 7
      %v4824 = vsub.s32 %v4821, %v4823
      %v4825 = vrot.slane %v4811, %v4824
      %v4826 = vcombine.high %v4818, %v4818
      %v4827 = vcombine.high %v4825, %v4825
      %v4828 = vcombine.high %v4540, %v4540
      %v4830 = vunpack.c.l.s4 1983009808
      %v4831 = vunpack.c.0.s8 %v4830
      %v4832 = vlaneseq
      %v4833 = vshrl.u32 %v4832, 7
      %v4834 = vsub.s32 %v4831, %v4833
      %v4835 = vrot.slane %v4540, %v4834
      %v4837 = vunpack.c.l.s4 1983009808
      %v4838 = vunpack.c.0.s8 %v4837
      %v4839 = vlaneseq
      %v4840 = vshrl.u32 %v4839, 7
      %v4841 = vsub.s32 %v4838, %v4840
      %v4842 = vrot.slane %v4828, %v4841
      %v4843 = vcombine.high %v4835, %v4835
      %v4844 = vcombine.high %v4842, %v4842
      %v4845 = vcombine.high %v4541, %v4541
      %v4847 = vunpack.c.l.s4 1983009808
      %v4848 = vunpack.c.0.s8 %v4847
      %v4849 = vlaneseq
      %v4850 = vshrl.u32 %v4849, 7
      %v4851 = vsub.s32 %v4848, %v4850
      %v4852 = vrot.slane %v4541, %v4851
      %v4854 = vunpack.c.l.s4 1983009808
      %v4855 = vunpack.c.0.s8 %v4854
      %v4856 = vlaneseq
      %v4857 = vshrl.u32 %v4856, 7
      %v4858 = vsub.s32 %v4855, %v4857
      %v4859 = vrot.slane %v4845, %v4858
      %v4860 = vcombine.high %v4852, %v4852
      %v4861 = vcombine.high %v4859, %v4859
      %v4862 = vcombine.high %v4542, %v4542
      %v4864 = vunpack.c.l.s4 1983009808
      %v4865 = vunpack.c.0.s8 %v4864
      %v4866 = vlaneseq
      %v4867 = vshrl.u32 %v4866, 7
      %v4868 = vsub.s32 %v4865, %v4867
      %v4869 = vrot.slane %v4542, %v4868
      %v4871 = vunpack.c.l.s4 1983009808
      %v4872 = vunpack.c.0.s8 %v4871
      %v4873 = vlaneseq
      %v4874 = vshrl.u32 %v4873, 7
      %v4875 = vsub.s32 %v4872, %v4874
      %v4876 = vrot.slane %v4862, %v4875
      %v4877 = vcombine.high %v4869, %v4869
      %v4878 = vcombine.high %v4876, %v4876
      %v4879 = vcombine.high %v4543, %v4543
      %v4881 = vunpack.c.l.s4 1983009808
      %v4882 = vunpack.c.0.s8 %v4881
      %v4883 = vlaneseq
      %v4884 = vshrl.u32 %v4883, 7
      %v4885 = vsub.s32 %v4882, %v4884
      %v4886 = vrot.slane %v4543, %v4885
      %v4888 = vunpack.c.l.s4 1983009808
      %v4889 = vunpack.c.0.s8 %v4888
      %v4890 = vlaneseq
      %v4891 = vshrl.u32 %v4890, 7
      %v4892 = vsub.s32 %v4889, %v4891
      %v4893 = vrot.slane %v4879, %v4892
      %v4894 = vcombine.high %v4886, %v4886
      %v4895 = vcombine.high %v4893, %v4893
      %v4896 = vcombine.high %v4544, %v4544
      %v4898 = vunpack.c.l.s4 1983009808
      %v4899 = vunpack.c.0.s8 %v4898
      %v4900 = vlaneseq
      %v4901 = vshrl.u32 %v4900, 7
      %v4902 = vsub.s32 %v4899, %v4901
      %v4903 = vrot.slane %v4544, %v4902
      %v4905 = vunpack.c.l.s4 1983009808
      %v4906 = vunpack.c.0.s8 %v4905
      %v4907 = vlaneseq
      %v4908 = vshrl.u32 %v4907, 7
      %v4909 = vsub.s32 %v4906, %v4908
      %v4910 = vrot.slane %v4896, %v4909
      %v4911 = vcombine.high %v4903, %v4903
      %v4912 = vcombine.high %v4910, %v4910
      %v4913 = vcombine.high %v4545, %v4545
      %v4915 = vunpack.c.l.s4 1983009808
      %v4916 = vunpack.c.0.s8 %v4915
      %v4917 = vlaneseq
      %v4918 = vshrl.u32 %v4917, 7
      %v4919 = vsub.s32 %v4916, %v4918
      %v4920 = vrot.slane %v4545, %v4919
      %v4922 = vunpack.c.l.s4 1983009808
      %v4923 = vunpack.c.0.s8 %v4922
      %v4924 = vlaneseq
      %v4925 = vshrl.u32 %v4924, 7
      %v4926 = vsub.s32 %v4923, %v4925
      %v4927 = vrot.slane %v4913, %v4926
      %v4928 = vcombine.high %v4920, %v4920
      %v4929 = vcombine.high %v4927, %v4927
      %v4930 = vcombine.high %v4546, %v4546
      %v4932 = vunpack.c.l.s4 1983009808
      %v4933 = vunpack.c.0.s8 %v4932
      %v4934 = vlaneseq
      %v4935 = vshrl.u32 %v4934, 7
      %v4936 = vsub.s32 %v4933, %v4935
      %v4937 = vrot.slane %v4546, %v4936
      %v4939 = vunpack.c.l.s4 1983009808
      %v4940 = vunpack.c.0.s8 %v4939
      %v4941 = vlaneseq
      %v4942 = vshrl.u32 %v4941, 7
      %v4943 = vsub.s32 %v4940, %v4942
      %v4944 = vrot.slane %v4930, %v4943
      %v4945 = vcombine.high %v4937, %v4937
      %v4946 = vcombine.high %v4944, %v4944
      %v4947 = vcombine.high %v4547, %v4547
      %v4949 = vunpack.c.l.s4 1983009808
      %v4950 = vunpack.c.0.s8 %v4949
      %v4951 = vlaneseq
      %v4952 = vshrl.u32 %v4951, 7
      %v4953 = vsub.s32 %v4950, %v4952
      %v4954 = vrot.slane %v4547, %v4953
      %v4956 = vunpack.c.l.s4 1983009808
      %v4957 = vunpack.c.0.s8 %v4956
      %v4958 = vlaneseq
      %v4959 = vshrl.u32 %v4958, 7
      %v4960 = vsub.s32 %v4957, %v4959
      %v4961 = vrot.slane %v4947, %v4960
      %v4962 = vcombine.high %v4954, %v4954
      %v4963 = vcombine.high %v4961, %v4961
      %v4964 = vcombine.high %v4548, %v4548
      %v4966 = vunpack.c.l.s4 1983009808
      %v4967 = vunpack.c.0.s8 %v4966
      %v4968 = vlaneseq
      %v4969 = vshrl.u32 %v4968, 7
      %v4970 = vsub.s32 %v4967, %v4969
      %v4971 = vrot.slane %v4548, %v4970
      %v4973 = vunpack.c.l.s4 1983009808
      %v4974 = vunpack.c.0.s8 %v4973
      %v4975 = vlaneseq
      %v4976 = vshrl.u32 %v4975, 7
      %v4977 = vsub.s32 %v4974, %v4976
      %v4978 = vrot.slane %v4964, %v4977
      %v4979 = vcombine.high %v4971, %v4971
      %v4980 = vcombine.high %v4978, %v4978
      %v4981 = vcombine.high %v4549, %v4549
      %v4983 = vunpack.c.l.s4 1983009808
      %v4984 = vunpack.c.0.s8 %v4983
      %v4985 = vlaneseq
      %v4986 = vshrl.u32 %v4985, 7
      %v4987 = vsub.s32 %v4984, %v4986
      %v4988 = vrot.slane %v4549, %v4987
      %v4990 = vunpack.c.l.s4 1983009808
      %v4991 = vunpack.c.0.s8 %v4990
      %v4992 = vlaneseq
      %v4993 = vshrl.u32 %v4992, 7
      %v4994 = vsub.s32 %v4991, %v4993
      %v4995 = vrot.slane %v4981, %v4994
      %v4996 = vcombine.high %v4988, %v4988
      %v4997 = vcombine.high %v4995, %v4995
      %v4998 = vcombine.high %v4550, %v4550
      %v5000 = vunpack.c.l.s4 1983009808
      %v5001 = vunpack.c.0.s8 %v5000
      %v5002 = vlaneseq
      %v5003 = vshrl.u32 %v5002, 7
      %v5004 = vsub.s32 %v5001, %v5003
      %v5005 = vrot.slane %v4550, %v5004
      %v5007 = vunpack.c.l.s4 1983009808
      %v5008 = vunpack.c.0.s8 %v5007
      %v5009 = vlaneseq
      %v5010 = vshrl.u32 %v5009, 7
      %v5011 = vsub.s32 %v5008, %v5010
      %v5012 = vrot.slane %v4998, %v5011
      %v5013 = vcombine.high %v5005, %v5005
      %v5014 = vcombine.high %v5012, %v5012
      %v5015 = vcombine.high %v4551, %v4551
      %v5017 = vunpack.c.l.s4 1983009808
      %v5018 = vunpack.c.0.s8 %v5017
      %v5019 = vlaneseq
      %v5020 = vshrl.u32 %v5019, 7
      %v5021 = vsub.s32 %v5018, %v5020
      %v5022 = vrot.slane %v4551, %v5021
      %v5024 = vunpack.c.l.s4 1983009808
      %v5025 = vunpack.c.0.s8 %v5024
      %v5026 = vlaneseq
      %v5027 = vshrl.u32 %v5026, 7
      %v5028 = vsub.s32 %v5025, %v5027
      %v5029 = vrot.slane %v5015, %v5028
      %v5030 = vcombine.high %v5022, %v5022
      %v5031 = vcombine.high %v5029, %v5029
      %v5032 = vcombine.high %v4552, %v4552
      %v5034 = vunpack.c.l.s4 1983009808
      %v5035 = vunpack.c.0.s8 %v5034
      %v5036 = vlaneseq
      %v5037 = vshrl.u32 %v5036, 7
      %v5038 = vsub.s32 %v5035, %v5037
      %v5039 = vrot.slane %v4552, %v5038
      %v5041 = vunpack.c.l.s4 1983009808
      %v5042 = vunpack.c.0.s8 %v5041
      %v5043 = vlaneseq
      %v5044 = vshrl.u32 %v5043, 7
      %v5045 = vsub.s32 %v5042, %v5044
      %v5046 = vrot.slane %v5032, %v5045
      %v5047 = vcombine.high %v5039, %v5039
      %v5048 = vcombine.high %v5046, %v5046
      %v5049 = vcombine.high %v4553, %v4553
      %v5051 = vunpack.c.l.s4 1983009808
      %v5052 = vunpack.c.0.s8 %v5051
      %v5053 = vlaneseq
      %v5054 = vshrl.u32 %v5053, 7
      %v5055 = vsub.s32 %v5052, %v5054
      %v5056 = vrot.slane %v4553, %v5055
      %v5058 = vunpack.c.l.s4 1983009808
      %v5059 = vunpack.c.0.s8 %v5058
      %v5060 = vlaneseq
      %v5061 = vshrl.u32 %v5060, 7
      %v5062 = vsub.s32 %v5059, %v5061
      %v5063 = vrot.slane %v5049, %v5062
      %v5064 = vcombine.high %v5056, %v5056
      %v5065 = vcombine.high %v5063, %v5063
      %v5066 = vcombine.high %v4554, %v4554
      %v5068 = vunpack.c.l.s4 1983009808
      %v5069 = vunpack.c.0.s8 %v5068
      %v5070 = vlaneseq
      %v5071 = vshrl.u32 %v5070, 7
      %v5072 = vsub.s32 %v5069, %v5071
      %v5073 = vrot.slane %v4554, %v5072
      %v5075 = vunpack.c.l.s4 1983009808
      %v5076 = vunpack.c.0.s8 %v5075
      %v5077 = vlaneseq
      %v5078 = vshrl.u32 %v5077, 7
      %v5079 = vsub.s32 %v5076, %v5078
      %v5080 = vrot.slane %v5066, %v5079
      %v5081 = vcombine.high %v5073, %v5073
      %v5082 = vcombine.high %v5080, %v5080
      %v5083 = vcombine.high %v4555, %v4555
      %v5085 = vunpack.c.l.s4 1983009808
      %v5086 = vunpack.c.0.s8 %v5085
      %v5087 = vlaneseq
      %v5088 = vshrl.u32 %v5087, 7
      %v5089 = vsub.s32 %v5086, %v5088
      %v5090 = vrot.slane %v4555, %v5089
      %v5092 = vunpack.c.l.s4 1983009808
      %v5093 = vunpack.c.0.s8 %v5092
      %v5094 = vlaneseq
      %v5095 = vshrl.u32 %v5094, 7
      %v5096 = vsub.s32 %v5093, %v5095
      %v5097 = vrot.slane %v5083, %v5096
      %v5098 = vcombine.high %v5090, %v5090
      %v5099 = vcombine.high %v5097, %v5097
      %v5100 = vcombine.high %v4556, %v4556
      %v5102 = vunpack.c.l.s4 1983009808
      %v5103 = vunpack.c.0.s8 %v5102
      %v5104 = vlaneseq
      %v5105 = vshrl.u32 %v5104, 7
      %v5106 = vsub.s32 %v5103, %v5105
      %v5107 = vrot.slane %v4556, %v5106
      %v5109 = vunpack.c.l.s4 1983009808
      %v5110 = vunpack.c.0.s8 %v5109
      %v5111 = vlaneseq
      %v5112 = vshrl.u32 %v5111, 7
      %v5113 = vsub.s32 %v5110, %v5112
      %v5114 = vrot.slane %v5100, %v5113
      %v5115 = vcombine.high %v5107, %v5107
      %v5116 = vcombine.high %v5114, %v5114
      %v5117 = vcombine.high %v4557, %v4557
      %v5119 = vunpack.c.l.s4 1983009808
      %v5120 = vunpack.c.0.s8 %v5119
      %v5121 = vlaneseq
      %v5122 = vshrl.u32 %v5121, 7
      %v5123 = vsub.s32 %v5120, %v5122
      %v5124 = vrot.slane %v4557, %v5123
      %v5126 = vunpack.c.l.s4 1983009808
      %v5127 = vunpack.c.0.s8 %v5126
      %v5128 = vlaneseq
      %v5129 = vshrl.u32 %v5128, 7
      %v5130 = vsub.s32 %v5127, %v5129
      %v5131 = vrot.slane %v5117, %v5130
      %v5132 = vcombine.high %v5124, %v5124
      %v5133 = vcombine.high %v5131, %v5131
      %v5262 = vrot.slane %v4597, 7
      %v5263 = vrot.slane %v5262, 2
      %v5264 = vrot.slane %v4605, 7
      %v5265 = vrot.slane %v5264, 2
      %v5266 = vrot.slane %v4604, 7
      %v5267 = vrot.slane %v5266, 2
      %v5268 = vrot.slane %v4606, 7
      %v5269 = vrot.slane %v5268, 2
      %v5270 = vrot.slane %v4614, 7
      %v5271 = vrot.slane %v5270, 2
      %v5272 = vrot.slane %v4622, 7
      %v5273 = vrot.slane %v5272, 2
      %v5274 = vrot.slane %v4621, 7
      %v5275 = vrot.slane %v5274, 2
      %v5276 = vrot.slane %v4623, 7
      %v5277 = vrot.slane %v5276, 2
      %v5278 = vrot.slane %v4665, 7
      %v5279 = vrot.slane %v5278, 2
      %v5280 = vrot.slane %v4673, 7
      %v5281 = vrot.slane %v5280, 2
      %v5282 = vrot.slane %v4672, 7
      %v5283 = vrot.slane %v5282, 2
      %v5284 = vrot.slane %v4674, 7
      %v5285 = vrot.slane %v5284, 2
      %v5286 = vrot.slane %v4682, 7
      %v5287 = vrot.slane %v5286, 2
      %v5288 = vrot.slane %v4690, 7
      %v5289 = vrot.slane %v5288, 2
      %v5290 = vrot.slane %v4689, 7
      %v5291 = vrot.slane %v5290, 2
      %v5292 = vrot.slane %v4691, 7
      %v5293 = vrot.slane %v5292, 2
      %v5294 = vrot.slane %v4733, 7
      %v5295 = vrot.slane %v5294, 2
      %v5296 = vrot.slane %v4741, 7
      %v5297 = vrot.slane %v5296, 2
      %v5298 = vrot.slane %v4740, 7
      %v5299 = vrot.slane %v5298, 2
      %v5300 = vrot.slane %v4742, 7
      %v5301 = vrot.slane %v5300, 2
      %v5302 = vrot.slane %v4750, 7
      %v5303 = vrot.slane %v5302, 2
      %v5304 = vrot.slane %v4758, 7
      %v5305 = vrot.slane %v5304, 2
      %v5306 = vrot.slane %v4757, 7
      %v5307 = vrot.slane %v5306, 2
      %v5308 = vrot.slane %v4759, 7
      %v5309 = vrot.slane %v5308, 2
      %v5310 = vrot.slane %v4801, 7
      %v5311 = vrot.slane %v5310, 2
      %v5312 = vrot.slane %v4809, 7
      %v5313 = vrot.slane %v5312, 2
      %v5314 = vrot.slane %v4808, 7
      %v5315 = vrot.slane %v5314, 2
      %v5316 = vrot.slane %v4810, 7
      %v5317 = vrot.slane %v5316, 2
      %v5318 = vrot.slane %v4818, 7
      %v5319 = vrot.slane %v5318, 2
      %v5320 = vrot.slane %v4826, 7
      %v5321 = vrot.slane %v5320, 2
      %v5322 = vrot.slane %v4825, 7
      %v5323 = vrot.slane %v5322, 2
      %v5324 = vrot.slane %v4827, 7
      %v5325 = vrot.slane %v5324, 2
      %v5326 = vrot.slane %v4869, 7
      %v5327 = vrot.slane %v5326, 2
      %v5328 = vrot.slane %v4877, 7
      %v5329 = vrot.slane %v5328, 2
      %v5330 = vrot.slane %v4876, 7
      %v5331 = vrot.slane %v5330, 2
      %v5332 = vrot.slane %v4878, 7
      %v5333 = vrot.slane %v5332, 2
      %v5334 = vrot.slane %v4886, 7
      %v5335 = vrot.slane %v5334, 2
      %v5336 = vrot.slane %v4894, 7
      %v5337 = vrot.slane %v5336, 2
      %v5338 = vrot.slane %v4893, 7
      %v5339 = vrot.slane %v5338, 2
      %v5340 = vrot.slane %v4895, 7
      %v5341 = vrot.slane %v5340, 2
      %v5342 = vrot.slane %v4937, 7
      %v5343 = vrot.slane %v5342, 2
      %v5344 = vrot.slane %v4945, 7
      %v5345 = vrot.slane %v5344, 2
      %v5346 = vrot.slane %v4944, 7
      %v5347 = vrot.slane %v5346, 2
      %v5348 = vrot.slane %v4946, 7
      %v5349 = vrot.slane %v5348, 2
      %v5350 = vrot.slane %v4954, 7
      %v5351 = vrot.slane %v5350, 2
      %v5352 = vrot.slane %v4962, 7
      %v5353 = vrot.slane %v5352, 2
      %v5354 = vrot.slane %v4961, 7
      %v5355 = vrot.slane %v5354, 2
      %v5356 = vrot.slane %v4963, 7
      %v5357 = vrot.slane %v5356, 2
      %v5358 = vrot.slane %v5005, 7
      %v5359 = vrot.slane %v5358, 2
      %v5360 = vrot.slane %v5013, 7
      %v5361 = vrot.slane %v5360, 2
      %v5362 = vrot.slane %v5012, 7
      %v5363 = vrot.slane %v5362, 2
      %v5364 = vrot.slane %v5014, 7
      %v5365 = vrot.slane %v5364, 2
      %v5366 = vrot.slane %v5022, 7
      %v5367 = vrot.slane %v5366, 2
      %v5368 = vrot.slane %v5030, 7
      %v5369 = vrot.slane %v5368, 2
      %v5370 = vrot.slane %v5029, 7
      %v5371 = vrot.slane %v5370, 2
      %v5372 = vrot.slane %v5031, 7
      %v5373 = vrot.slane %v5372, 2
      %v5374 = vrot.slane %v5073, 7
      %v5375 = vrot.slane %v5374, 2
      %v5376 = vrot.slane %v5081, 7
      %v5377 = vrot.slane %v5376, 2
      %v5378 = vrot.slane %v5080, 7
      %v5379 = vrot.slane %v5378, 2
      %v5380 = vrot.slane %v5082, 7
      %v5381 = vrot.slane %v5380, 2
      %v5382 = vrot.slane %v5090, 7
      %v5383 = vrot.slane %v5382, 2
      %v5384 = vrot.slane %v5098, 7
      %v5385 = vrot.slane %v5384, 2
      %v5386 = vrot.slane %v5097, 7
      %v5387 = vrot.slane %v5386, 2
      %v5388 = vrot.slane %v5099, 7
      %v5389 = vrot.slane %v5388, 2
      %v5454 = vadd.f32 %v4597, %v5263
      %v5455 = vadd.f32 %v4605, %v5265
      %v5456 = vadd.f32 %v4604, %v5267
      %v5457 = vadd.f32 %v4606, %v5269
      %v5458 = vadd.f32 %v4614, %v5271
      %v5459 = vadd.f32 %v4622, %v5273
      %v5460 = vadd.f32 %v4621, %v5275
      %v5461 = vadd.f32 %v4623, %v5277
      %v5462 = vadd.f32 %v4665, %v5279
      %v5463 = vadd.f32 %v4673, %v5281
      %v5464 = vadd.f32 %v4672, %v5283
      %v5465 = vadd.f32 %v4674, %v5285
      %v5466 = vadd.f32 %v4682, %v5287
      %v5467 = vadd.f32 %v4690, %v5289
      %v5468 = vadd.f32 %v4689, %v5291
      %v5469 = vadd.f32 %v4691, %v5293
      %v5470 = vadd.f32 %v4733, %v5295
      %v5471 = vadd.f32 %v4741, %v5297
      %v5472 = vadd.f32 %v4740, %v5299
      %v5473 = vadd.f32 %v4742, %v5301
      %v5474 = vadd.f32 %v4750, %v5303
      %v5475 = vadd.f32 %v4758, %v5305
      %v5476 = vadd.f32 %v4757, %v5307
      %v5477 = vadd.f32 %v4759, %v5309
      %v5478 = vadd.f32 %v4801, %v5311
      %v5479 = vadd.f32 %v4809, %v5313
      %v5480 = vadd.f32 %v4808, %v5315
      %v5481 = vadd.f32 %v4810, %v5317
      %v5482 = vadd.f32 %v4818, %v5319
      %v5483 = vadd.f32 %v4826, %v5321
      %v5484 = vadd.f32 %v4825, %v5323
      %v5485 = vadd.f32 %v4827, %v5325
      %v5486 = vadd.f32 %v4869, %v5327
      %v5487 = vadd.f32 %v4877, %v5329
      %v5488 = vadd.f32 %v4876, %v5331
      %v5489 = vadd.f32 %v4878, %v5333
      %v5490 = vadd.f32 %v4886, %v5335
      %v5491 = vadd.f32 %v4894, %v5337
      %v5492 = vadd.f32 %v4893, %v5339
      %v5493 = vadd.f32 %v4895, %v5341
      %v5494 = vadd.f32 %v4937, %v5343
      %v5495 = vadd.f32 %v4945, %v5345
      %v5496 = vadd.f32 %v4944, %v5347
      %v5497 = vadd.f32 %v4946, %v5349
      %v5498 = vadd.f32 %v4954, %v5351
      %v5499 = vadd.f32 %v4962, %v5353
      %v5500 = vadd.f32 %v4961, %v5355
      %v5501 = vadd.f32 %v4963, %v5357
      %v5502 = vadd.f32 %v5005, %v5359
      %v5503 = vadd.f32 %v5013, %v5361
      %v5504 = vadd.f32 %v5012, %v5363
      %v5505 = vadd.f32 %v5014, %v5365
      %v5506 = vadd.f32 %v5022, %v5367
      %v5507 = vadd.f32 %v5030, %v5369
      %v5508 = vadd.f32 %v5029, %v5371
      %v5509 = vadd.f32 %v5031, %v5373
      %v5510 = vadd.f32 %v5073, %v5375
      %v5511 = vadd.f32 %v5081, %v5377
      %v5512 = vadd.f32 %v5080, %v5379
      %v5513 = vadd.f32 %v5082, %v5381
      %v5514 = vadd.f32 %v5090, %v5383
      %v5515 = vadd.f32 %v5098, %v5385
      %v5516 = vadd.f32 %v5097, %v5387
      %v5517 = vadd.f32 %v5099, %v5389
      %v5518 = vadd.f32 %v5454, %v4631
      %v5519 = vadd.f32 %v5455, %v4639
      %v5520 = vadd.f32 %v5456, %v4638
      %v5521 = vadd.f32 %v5457, %v4640
      %v5522 = vadd.f32 %v5458, %v4648
      %v5523 = vadd.f32 %v5459, %v4656
      %v5524 = vadd.f32 %v5460, %v4655
      %v5525 = vadd.f32 %v5461, %v4657
      %v5526 = vadd.f32 %v5462, %v4699
      %v5527 = vadd.f32 %v5463, %v4707
      %v5528 = vadd.f32 %v5464, %v4706
      %v5529 = vadd.f32 %v5465, %v4708
      %v5530 = vadd.f32 %v5466, %v4716
      %v5531 = vadd.f32 %v5467, %v4724
      %v5532 = vadd.f32 %v5468, %v4723
      %v5533 = vadd.f32 %v5469, %v4725
      %v5534 = vadd.f32 %v5470, %v4767
      %v5535 = vadd.f32 %v5471, %v4775
      %v5536 = vadd.f32 %v5472, %v4774
      %v5537 = vadd.f32 %v5473, %v4776
      %v5538 = vadd.f32 %v5474, %v4784
      %v5539 = vadd.f32 %v5475, %v4792
      %v5540 = vadd.f32 %v5476, %v4791
      %v5541 = vadd.f32 %v5477, %v4793
      %v5542 = vadd.f32 %v5478, %v4835
      %v5543 = vadd.f32 %v5479, %v4843
      %v5544 = vadd.f32 %v5480, %v4842
      %v5545 = vadd.f32 %v5481, %v4844
      %v5546 = vadd.f32 %v5482, %v4852
      %v5547 = vadd.f32 %v5483, %v4860
      %v5548 = vadd.f32 %v5484, %v4859
      %v5549 = vadd.f32 %v5485, %v4861
      %v5550 = vadd.f32 %v5486, %v4903
      %v5551 = vadd.f32 %v5487, %v4911
      %v5552 = vadd.f32 %v5488, %v4910
      %v5553 = vadd.f32 %v5489, %v4912
      %v5554 = vadd.f32 %v5490, %v4920
      %v5555 = vadd.f32 %v5491, %v4928
      %v5556 = vadd.f32 %v5492, %v4927
      %v5557 = vadd.f32 %v5493, %v4929
      %v5558 = vadd.f32 %v5494, %v4971
      %v5559 = vadd.f32 %v5495, %v4979
      %v5560 = vadd.f32 %v5496, %v4978
      %v5561 = vadd.f32 %v5497, %v4980
      %v5562 = vadd.f32 %v5498, %v4988
      %v5563 = vadd.f32 %v5499, %v4996
      %v5564 = vadd.f32 %v5500, %v4995
      %v5565 = vadd.f32 %v5501, %v4997
      %v5566 = vadd.f32 %v5502, %v5039
      %v5567 = vadd.f32 %v5503, %v5047
      %v5568 = vadd.f32 %v5504, %v5046
      %v5569 = vadd.f32 %v5505, %v5048
      %v5570 = vadd.f32 %v5506, %v5056
      %v5571 = vadd.f32 %v5507, %v5064
      %v5572 = vadd.f32 %v5508, %v5063
      %v5573 = vadd.f32 %v5509, %v5065
      %v5574 = vadd.f32 %v5510, %v5107
      %v5575 = vadd.f32 %v5511, %v5115
      %v5576 = vadd.f32 %v5512, %v5114
      %v5577 = vadd.f32 %v5513, %v5116
      %v5578 = vadd.f32 %v5514, %v5124
      %v5579 = vadd.f32 %v5515, %v5132
      %v5580 = vadd.f32 %v5516, %v5131
      %v5581 = vadd.f32 %v5517, %v5133
      %v5582 = vrot.slane %v4631, 7
      %v5583 = vrot.slane %v5582, 2
      %v5584 = vrot.slane %v4639, 7
      %v5585 = vrot.slane %v5584, 2
      %v5586 = vrot.slane %v4638, 7
      %v5587 = vrot.slane %v5586, 2
      %v5588 = vrot.slane %v4640, 7
      %v5589 = vrot.slane %v5588, 2
      %v5590 = vrot.slane %v4648, 7
      %v5591 = vrot.slane %v5590, 2
      %v5592 = vrot.slane %v4656, 7
      %v5593 = vrot.slane %v5592, 2
      %v5594 = vrot.slane %v4655, 7
      %v5595 = vrot.slane %v5594, 2
      %v5596 = vrot.slane %v4657, 7
      %v5597 = vrot.slane %v5596, 2
      %v5598 = vrot.slane %v4699, 7
      %v5599 = vrot.slane %v5598, 2
      %v5600 = vrot.slane %v4707, 7
      %v5601 = vrot.slane %v5600, 2
      %v5602 = vrot.slane %v4706, 7
      %v5603 = vrot.slane %v5602, 2
      %v5604 = vrot.slane %v4708, 7
      %v5605 = vrot.slane %v5604, 2
      %v5606 = vrot.slane %v4716, 7
      %v5607 = vrot.slane %v5606, 2
      %v5608 = vrot.slane %v4724, 7
      %v5609 = vrot.slane %v5608, 2
      %v5610 = vrot.slane %v4723, 7
      %v5611 = vrot.slane %v5610, 2
      %v5612 = vrot.slane %v4725, 7
      %v5613 = vrot.slane %v5612, 2
      %v5614 = vrot.slane %v4767, 7
      %v5615 = vrot.slane %v5614, 2
      %v5616 = vrot.slane %v4775, 7
      %v5617 = vrot.slane %v5616, 2
      %v5618 = vrot.slane %v4774, 7
      %v5619 = vrot.slane %v5618, 2
      %v5620 = vrot.slane %v4776, 7
      %v5621 = vrot.slane %v5620, 2
      %v5622 = vrot.slane %v4784, 7
      %v5623 = vrot.slane %v5622, 2
      %v5624 = vrot.slane %v4792, 7
      %v5625 = vrot.slane %v5624, 2
      %v5626 = vrot.slane %v4791, 7
      %v5627 = vrot.slane %v5626, 2
      %v5628 = vrot.slane %v4793, 7
      %v5629 = vrot.slane %v5628, 2
      %v5630 = vrot.slane %v4835, 7
      %v5631 = vrot.slane %v5630, 2
      %v5632 = vrot.slane %v4843, 7
      %v5633 = vrot.slane %v5632, 2
      %v5634 = vrot.slane %v4842, 7
      %v5635 = vrot.slane %v5634, 2
      %v5636 = vrot.slane %v4844, 7
      %v5637 = vrot.slane %v5636, 2
      %v5638 = vrot.slane %v4852, 7
      %v5639 = vrot.slane %v5638, 2
      %v5640 = vrot.slane %v4860, 7
      %v5641 = vrot.slane %v5640, 2
      %v5642 = vrot.slane %v4859, 7
      %v5643 = vrot.slane %v5642, 2
      %v5644 = vrot.slane %v4861, 7
      %v5645 = vrot.slane %v5644, 2
      %v5646 = vrot.slane %v4903, 7
      %v5647 = vrot.slane %v5646, 2
      %v5648 = vrot.slane %v4911, 7
      %v5649 = vrot.slane %v5648, 2
      %v5650 = vrot.slane %v4910, 7
      %v5651 = vrot.slane %v5650, 2
      %v5652 = vrot.slane %v4912, 7
      %v5653 = vrot.slane %v5652, 2
      %v5654 = vrot.slane %v4920, 7
      %v5655 = vrot.slane %v5654, 2
      %v5656 = vrot.slane %v4928, 7
      %v5657 = vrot.slane %v5656, 2
      %v5658 = vrot.slane %v4927, 7
      %v5659 = vrot.slane %v5658, 2
      %v5660 = vrot.slane %v4929, 7
      %v5661 = vrot.slane %v5660, 2
      %v5662 = vrot.slane %v4971, 7
      %v5663 = vrot.slane %v5662, 2
      %v5664 = vrot.slane %v4979, 7
      %v5665 = vrot.slane %v5664, 2
      %v5666 = vrot.slane %v4978, 7
      %v5667 = vrot.slane %v5666, 2
      %v5668 = vrot.slane %v4980, 7
      %v5669 = vrot.slane %v5668, 2
      %v5670 = vrot.slane %v4988, 7
      %v5671 = vrot.slane %v5670, 2
      %v5672 = vrot.slane %v4996, 7
      %v5673 = vrot.slane %v5672, 2
      %v5674 = vrot.slane %v4995, 7
      %v5675 = vrot.slane %v5674, 2
      %v5676 = vrot.slane %v4997, 7
      %v5677 = vrot.slane %v5676, 2
      %v5678 = vrot.slane %v5039, 7
      %v5679 = vrot.slane %v5678, 2
      %v5680 = vrot.slane %v5047, 7
      %v5681 = vrot.slane %v5680, 2
      %v5682 = vrot.slane %v5046, 7
      %v5683 = vrot.slane %v5682, 2
      %v5684 = vrot.slane %v5048, 7
      %v5685 = vrot.slane %v5684, 2
      %v5686 = vrot.slane %v5056, 7
      %v5687 = vrot.slane %v5686, 2
      %v5688 = vrot.slane %v5064, 7
      %v5689 = vrot.slane %v5688, 2
      %v5690 = vrot.slane %v5063, 7
      %v5691 = vrot.slane %v5690, 2
      %v5692 = vrot.slane %v5065, 7
      %v5693 = vrot.slane %v5692, 2
      %v5694 = vrot.slane %v5107, 7
      %v5695 = vrot.slane %v5694, 2
      %v5696 = vrot.slane %v5115, 7
      %v5697 = vrot.slane %v5696, 2
      %v5698 = vrot.slane %v5114, 7
      %v5699 = vrot.slane %v5698, 2
      %v5700 = vrot.slane %v5116, 7
      %v5701 = vrot.slane %v5700, 2
      %v5702 = vrot.slane %v5124, 7
      %v5703 = vrot.slane %v5702, 2
      %v5704 = vrot.slane %v5132, 7
      %v5705 = vrot.slane %v5704, 2
      %v5706 = vrot.slane %v5131, 7
      %v5707 = vrot.slane %v5706, 2
      %v5708 = vrot.slane %v5133, 7
      %v5709 = vrot.slane %v5708, 2
      %v5774 = vadd.f32 %v5518, %v5583
      %v5775 = vadd.f32 %v5519, %v5585
      %v5776 = vadd.f32 %v5520, %v5587
      %v5777 = vadd.f32 %v5521, %v5589
      %v5778 = vadd.f32 %v5522, %v5591
      %v5779 = vadd.f32 %v5523, %v5593
      %v5780 = vadd.f32 %v5524, %v5595
      %v5781 = vadd.f32 %v5525, %v5597
      %v5782 = vadd.f32 %v5526, %v5599
      %v5783 = vadd.f32 %v5527, %v5601
      %v5784 = vadd.f32 %v5528, %v5603
      %v5785 = vadd.f32 %v5529, %v5605
      %v5786 = vadd.f32 %v5530, %v5607
      %v5787 = vadd.f32 %v5531, %v5609
      %v5788 = vadd.f32 %v5532, %v5611
      %v5789 = vadd.f32 %v5533, %v5613
      %v5790 = vadd.f32 %v5534, %v5615
      %v5791 = vadd.f32 %v5535, %v5617
      %v5792 = vadd.f32 %v5536, %v5619
      %v5793 = vadd.f32 %v5537, %v5621
      %v5794 = vadd.f32 %v5538, %v5623
      %v5795 = vadd.f32 %v5539, %v5625
      %v5796 = vadd.f32 %v5540, %v5627
      %v5797 = vadd.f32 %v5541, %v5629
      %v5798 = vadd.f32 %v5542, %v5631
      %v5799 = vadd.f32 %v5543, %v5633
      %v5800 = vadd.f32 %v5544, %v5635
      %v5801 = vadd.f32 %v5545, %v5637
      %v5802 = vadd.f32 %v5546, %v5639
      %v5803 = vadd.f32 %v5547, %v5641
      %v5804 = vadd.f32 %v5548, %v5643
      %v5805 = vadd.f32 %v5549, %v5645
      %v5806 = vadd.f32 %v5550, %v5647
      %v5807 = vadd.f32 %v5551, %v5649
      %v5808 = vadd.f32 %v5552, %v5651
      %v5809 = vadd.f32 %v5553, %v5653
      %v5810 = vadd.f32 %v5554, %v5655
      %v5811 = vadd.f32 %v5555, %v5657
      %v5812 = vadd.f32 %v5556, %v5659
      %v5813 = vadd.f32 %v5557, %v5661
      %v5814 = vadd.f32 %v5558, %v5663
      %v5815 = vadd.f32 %v5559, %v5665
      %v5816 = vadd.f32 %v5560, %v5667
      %v5817 = vadd.f32 %v5561, %v5669
      %v5818 = vadd.f32 %v5562, %v5671
      %v5819 = vadd.f32 %v5563, %v5673
      %v5820 = vadd.f32 %v5564, %v5675
      %v5821 = vadd.f32 %v5565, %v5677
      %v5822 = vadd.f32 %v5566, %v5679
      %v5823 = vadd.f32 %v5567, %v5681
      %v5824 = vadd.f32 %v5568, %v5683
      %v5825 = vadd.f32 %v5569, %v5685
      %v5826 = vadd.f32 %v5570, %v5687
      %v5827 = vadd.f32 %v5571, %v5689
      %v5828 = vadd.f32 %v5572, %v5691
      %v5829 = vadd.f32 %v5573, %v5693
      %v5830 = vadd.f32 %v5574, %v5695
      %v5831 = vadd.f32 %v5575, %v5697
      %v5832 = vadd.f32 %v5576, %v5699
      %v5833 = vadd.f32 %v5577, %v5701
      %v5834 = vadd.f32 %v5578, %v5703
      %v5835 = vadd.f32 %v5579, %v5705
      %v5836 = vadd.f32 %v5580, %v5707
      %v5837 = vadd.f32 %v5581, %v5709
      %v5838 = vmul.f32 %v5774, 0.25
      %v5839 = vmul.f32 %v5775, 0.25
      %v5840 = vmul.f32 %v5776, 0.25
      %v5841 = vmul.f32 %v5777, 0.25
      %v5842 = vmul.f32 %v5778, 0.25
      %v5843 = vmul.f32 %v5779, 0.25
      %v5844 = vmul.f32 %v5780, 0.25
      %v5845 = vmul.f32 %v5781, 0.25
      %v5846 = vmul.f32 %v5782, 0.25
      %v5847 = vmul.f32 %v5783, 0.25
      %v5848 = vmul.f32 %v5784, 0.25
      %v5849 = vmul.f32 %v5785, 0.25
      %v5850 = vmul.f32 %v5786, 0.25
      %v5851 = vmul.f32 %v5787, 0.25
      %v5852 = vmul.f32 %v5788, 0.25
      %v5853 = vmul.f32 %v5789, 0.25
      %v5854 = vmul.f32 %v5790, 0.25
      %v5855 = vmul.f32 %v5791, 0.25
      %v5856 = vmul.f32 %v5792, 0.25
      %v5857 = vmul.f32 %v5793, 0.25
      %v5858 = vmul.f32 %v5794, 0.25
      %v5859 = vmul.f32 %v5795, 0.25
      %v5860 = vmul.f32 %v5796, 0.25
      %v5861 = vmul.f32 %v5797, 0.25
      %v5862 = vmul.f32 %v5798, 0.25
      %v5863 = vmul.f32 %v5799, 0.25
      %v5864 = vmul.f32 %v5800, 0.25
      %v5865 = vmul.f32 %v5801, 0.25
      %v5866 = vmul.f32 %v5802, 0.25
      %v5867 = vmul.f32 %v5803, 0.25
      %v5868 = vmul.f32 %v5804, 0.25
      %v5869 = vmul.f32 %v5805, 0.25
      %v5870 = vmul.f32 %v5806, 0.25
      %v5871 = vmul.f32 %v5807, 0.25
      %v5872 = vmul.f32 %v5808, 0.25
      %v5873 = vmul.f32 %v5809, 0.25
      %v5874 = vmul.f32 %v5810, 0.25
      %v5875 = vmul.f32 %v5811, 0.25
      %v5876 = vmul.f32 %v5812, 0.25
      %v5877 = vmul.f32 %v5813, 0.25
      %v5878 = vmul.f32 %v5814, 0.25
      %v5879 = vmul.f32 %v5815, 0.25
      %v5880 = vmul.f32 %v5816, 0.25
      %v5881 = vmul.f32 %v5817, 0.25
      %v5882 = vmul.f32 %v5818, 0.25
      %v5883 = vmul.f32 %v5819, 0.25
      %v5884 = vmul.f32 %v5820, 0.25
      %v5885 = vmul.f32 %v5821, 0.25
      %v5886 = vmul.f32 %v5822, 0.25
      %v5887 = vmul.f32 %v5823, 0.25
      %v5888 = vmul.f32 %v5824, 0.25
      %v5889 = vmul.f32 %v5825, 0.25
      %v5890 = vmul.f32 %v5826, 0.25
      %v5891 = vmul.f32 %v5827, 0.25
      %v5892 = vmul.f32 %v5828, 0.25
      %v5893 = vmul.f32 %v5829, 0.25
      %v5894 = vmul.f32 %v5830, 0.25
      %v5895 = vmul.f32 %v5831, 0.25
      %v5896 = vmul.f32 %v5832, 0.25
      %v5897 = vmul.f32 %v5833, 0.25
      %v5898 = vmul.f32 %v5834, 0.25
      %v5899 = vmul.f32 %v5835, 0.25
      %v5900 = vmul.f32 %v5836, 0.25
      %v5901 = vmul.f32 %v5837, 0.25
      %v5902 = vpack.c.bf16 %v5838, %v5838
      %v5903 = vpack.c.bf16 %v5839, %v5839
      %v5904 = vpack.c.bf16 %v5840, %v5840
      %v5905 = vpack.c.bf16 %v5841, %v5841
      %v5906 = vpack.c.bf16 %v5842, %v5842
      %v5907 = vpack.c.bf16 %v5843, %v5843
      %v5908 = vpack.c.bf16 %v5844, %v5844
      %v5909 = vpack.c.bf16 %v5845, %v5845
      %v5910 = vpack.c.bf16 %v5846, %v5846
      %v5911 = vpack.c.bf16 %v5847, %v5847
      %v5912 = vpack.c.bf16 %v5848, %v5848
      %v5913 = vpack.c.bf16 %v5849, %v5849
      %v5914 = vpack.c.bf16 %v5850, %v5850
      %v5915 = vpack.c.bf16 %v5851, %v5851
      %v5916 = vpack.c.bf16 %v5852, %v5852
      %v5917 = vpack.c.bf16 %v5853, %v5853
      %v5918 = vpack.c.bf16 %v5854, %v5854
      %v5919 = vpack.c.bf16 %v5855, %v5855
      %v5920 = vpack.c.bf16 %v5856, %v5856
      %v5921 = vpack.c.bf16 %v5857, %v5857
      %v5922 = vpack.c.bf16 %v5858, %v5858
      %v5923 = vpack.c.bf16 %v5859, %v5859
      %v5924 = vpack.c.bf16 %v5860, %v5860
      %v5925 = vpack.c.bf16 %v5861, %v5861
      %v5926 = vpack.c.bf16 %v5862, %v5862
      %v5927 = vpack.c.bf16 %v5863, %v5863
      %v5928 = vpack.c.bf16 %v5864, %v5864
      %v5929 = vpack.c.bf16 %v5865, %v5865
      %v5930 = vpack.c.bf16 %v5866, %v5866
      %v5931 = vpack.c.bf16 %v5867, %v5867
      %v5932 = vpack.c.bf16 %v5868, %v5868
      %v5933 = vpack.c.bf16 %v5869, %v5869
      %v5934 = vpack.c.bf16 %v5870, %v5870
      %v5935 = vpack.c.bf16 %v5871, %v5871
      %v5936 = vpack.c.bf16 %v5872, %v5872
      %v5937 = vpack.c.bf16 %v5873, %v5873
      %v5938 = vpack.c.bf16 %v5874, %v5874
      %v5939 = vpack.c.bf16 %v5875, %v5875
      %v5940 = vpack.c.bf16 %v5876, %v5876
      %v5941 = vpack.c.bf16 %v5877, %v5877
      %v5942 = vpack.c.bf16 %v5878, %v5878
      %v5943 = vpack.c.bf16 %v5879, %v5879
      %v5944 = vpack.c.bf16 %v5880, %v5880
      %v5945 = vpack.c.bf16 %v5881, %v5881
      %v5946 = vpack.c.bf16 %v5882, %v5882
      %v5947 = vpack.c.bf16 %v5883, %v5883
      %v5948 = vpack.c.bf16 %v5884, %v5884
      %v5949 = vpack.c.bf16 %v5885, %v5885
      %v5950 = vpack.c.bf16 %v5886, %v5886
      %v5951 = vpack.c.bf16 %v5887, %v5887
      %v5952 = vpack.c.bf16 %v5888, %v5888
      %v5953 = vpack.c.bf16 %v5889, %v5889
      %v5954 = vpack.c.bf16 %v5890, %v5890
      %v5955 = vpack.c.bf16 %v5891, %v5891
      %v5956 = vpack.c.bf16 %v5892, %v5892
      %v5957 = vpack.c.bf16 %v5893, %v5893
      %v5958 = vpack.c.bf16 %v5894, %v5894
      %v5959 = vpack.c.bf16 %v5895, %v5895
      %v5960 = vpack.c.bf16 %v5896, %v5896
      %v5961 = vpack.c.bf16 %v5897, %v5897
      %v5962 = vpack.c.bf16 %v5898, %v5898
      %v5963 = vpack.c.bf16 %v5899, %v5899
      %v5964 = vpack.c.bf16 %v5900, %v5900
      %v5965 = vpack.c.bf16 %v5901, %v5901
      %v6030 = vunpack.c.l.b16 %v5902
      %v6031 = vunpack.c.l.b16 %v5903
      %v6032 = vunpack.c.l.b16 %v5904
      %v6033 = vunpack.c.l.b16 %v5905
      %v6034 = vunpack.c.l.b16 %v5906
      %v6035 = vunpack.c.l.b16 %v5907
      %v6036 = vunpack.c.l.b16 %v5908
      %v6037 = vunpack.c.l.b16 %v5909
      %v6038 = vunpack.c.l.b16 %v5910
      %v6039 = vunpack.c.l.b16 %v5911
      %v6040 = vunpack.c.l.b16 %v5912
      %v6041 = vunpack.c.l.b16 %v5913
      %v6042 = vunpack.c.l.b16 %v5914
      %v6043 = vunpack.c.l.b16 %v5915
      %v6044 = vunpack.c.l.b16 %v5916
      %v6045 = vunpack.c.l.b16 %v5917
      %v6046 = vunpack.c.l.b16 %v5918
      %v6047 = vunpack.c.l.b16 %v5919
      %v6048 = vunpack.c.l.b16 %v5920
      %v6049 = vunpack.c.l.b16 %v5921
      %v6050 = vunpack.c.l.b16 %v5922
      %v6051 = vunpack.c.l.b16 %v5923
      %v6052 = vunpack.c.l.b16 %v5924
      %v6053 = vunpack.c.l.b16 %v5925
      %v6054 = vunpack.c.l.b16 %v5926
      %v6055 = vunpack.c.l.b16 %v5927
      %v6056 = vunpack.c.l.b16 %v5928
      %v6057 = vunpack.c.l.b16 %v5929
      %v6058 = vunpack.c.l.b16 %v5930
      %v6059 = vunpack.c.l.b16 %v5931
      %v6060 = vunpack.c.l.b16 %v5932
      %v6061 = vunpack.c.l.b16 %v5933
      %v6062 = vunpack.c.l.b16 %v5934
      %v6063 = vunpack.c.l.b16 %v5935
      %v6064 = vunpack.c.l.b16 %v5936
      %v6065 = vunpack.c.l.b16 %v5937
      %v6066 = vunpack.c.l.b16 %v5938
      %v6067 = vunpack.c.l.b16 %v5939
      %v6068 = vunpack.c.l.b16 %v5940
      %v6069 = vunpack.c.l.b16 %v5941
      %v6070 = vunpack.c.l.b16 %v5942
      %v6071 = vunpack.c.l.b16 %v5943
      %v6072 = vunpack.c.l.b16 %v5944
      %v6073 = vunpack.c.l.b16 %v5945
      %v6074 = vunpack.c.l.b16 %v5946
      %v6075 = vunpack.c.l.b16 %v5947
      %v6076 = vunpack.c.l.b16 %v5948
      %v6077 = vunpack.c.l.b16 %v5949
      %v6078 = vunpack.c.l.b16 %v5950
      %v6079 = vunpack.c.l.b16 %v5951
      %v6080 = vunpack.c.l.b16 %v5952
      %v6081 = vunpack.c.l.b16 %v5953
      %v6082 = vunpack.c.l.b16 %v5954
      %v6083 = vunpack.c.l.b16 %v5955
      %v6084 = vunpack.c.l.b16 %v5956
      %v6085 = vunpack.c.l.b16 %v5957
      %v6086 = vunpack.c.l.b16 %v5958
      %v6087 = vunpack.c.l.b16 %v5959
      %v6088 = vunpack.c.l.b16 %v5960
      %v6089 = vunpack.c.l.b16 %v5961
      %v6090 = vunpack.c.l.b16 %v5962
      %v6091 = vunpack.c.l.b16 %v5963
      %v6092 = vunpack.c.l.b16 %v5964
      %v6093 = vunpack.c.l.b16 %v5965
      %v6094 = vpack.c.b16 %v6030, %v6030
      %v6095 = vpack.c.b16 %v6031, %v6031
      %v6096 = vpack.c.b16 %v6032, %v6032
      %v6097 = vpack.c.b16 %v6033, %v6033
      %v6098 = vpack.c.b16 %v6034, %v6034
      %v6099 = vpack.c.b16 %v6035, %v6035
      %v6100 = vpack.c.b16 %v6036, %v6036
      %v6101 = vpack.c.b16 %v6037, %v6037
      %v6102 = vpack.c.b16 %v6038, %v6038
      %v6103 = vpack.c.b16 %v6039, %v6039
      %v6104 = vpack.c.b16 %v6040, %v6040
      %v6105 = vpack.c.b16 %v6041, %v6041
      %v6106 = vpack.c.b16 %v6042, %v6042
      %v6107 = vpack.c.b16 %v6043, %v6043
      %v6108 = vpack.c.b16 %v6044, %v6044
      %v6109 = vpack.c.b16 %v6045, %v6045
      %v6110 = vpack.c.b16 %v6046, %v6046
      %v6111 = vpack.c.b16 %v6047, %v6047
      %v6112 = vpack.c.b16 %v6048, %v6048
      %v6113 = vpack.c.b16 %v6049, %v6049
      %v6114 = vpack.c.b16 %v6050, %v6050
      %v6115 = vpack.c.b16 %v6051, %v6051
      %v6116 = vpack.c.b16 %v6052, %v6052
      %v6117 = vpack.c.b16 %v6053, %v6053
      %v6118 = vpack.c.b16 %v6054, %v6054
      %v6119 = vpack.c.b16 %v6055, %v6055
      %v6120 = vpack.c.b16 %v6056, %v6056
      %v6121 = vpack.c.b16 %v6057, %v6057
      %v6122 = vpack.c.b16 %v6058, %v6058
      %v6123 = vpack.c.b16 %v6059, %v6059
      %v6124 = vpack.c.b16 %v6060, %v6060
      %v6125 = vpack.c.b16 %v6061, %v6061
      %v6126 = vpack.c.b16 %v6062, %v6062
      %v6127 = vpack.c.b16 %v6063, %v6063
      %v6128 = vpack.c.b16 %v6064, %v6064
      %v6129 = vpack.c.b16 %v6065, %v6065
      %v6130 = vpack.c.b16 %v6066, %v6066
      %v6131 = vpack.c.b16 %v6067, %v6067
      %v6132 = vpack.c.b16 %v6068, %v6068
      %v6133 = vpack.c.b16 %v6069, %v6069
      %v6134 = vpack.c.b16 %v6070, %v6070
      %v6135 = vpack.c.b16 %v6071, %v6071
      %v6136 = vpack.c.b16 %v6072, %v6072
      %v6137 = vpack.c.b16 %v6073, %v6073
      %v6138 = vpack.c.b16 %v6074, %v6074
      %v6139 = vpack.c.b16 %v6075, %v6075
      %v6140 = vpack.c.b16 %v6076, %v6076
      %v6141 = vpack.c.b16 %v6077, %v6077
      %v6142 = vpack.c.b16 %v6078, %v6078
      %v6143 = vpack.c.b16 %v6079, %v6079
      %v6144 = vpack.c.b16 %v6080, %v6080
      %v6145 = vpack.c.b16 %v6081, %v6081
      %v6146 = vpack.c.b16 %v6082, %v6082
      %v6147 = vpack.c.b16 %v6083, %v6083
      %v6148 = vpack.c.b16 %v6084, %v6084
      %v6149 = vpack.c.b16 %v6085, %v6085
      %v6150 = vpack.c.b16 %v6086, %v6086
      %v6151 = vpack.c.b16 %v6087, %v6087
      %v6152 = vpack.c.b16 %v6088, %v6088
      %v6153 = vpack.c.b16 %v6089, %v6089
      %v6154 = vpack.c.b16 %v6090, %v6090
      %v6155 = vpack.c.b16 %v6091, %v6091
      %v6156 = vpack.c.b16 %v6092, %v6092
      %v6157 = vpack.c.b16 %v6093, %v6093
      %v6158 = vunpack.c.l.b16 %v6094
      %v6159 = vunpack.c.l.b16 %v6095
      %v6160 = vunpack.c.l.b16 %v6096
      %v6161 = vunpack.c.l.b16 %v6097
      %v6162 = vunpack.c.l.b16 %v6098
      %v6163 = vunpack.c.l.b16 %v6099
      %v6164 = vunpack.c.l.b16 %v6100
      %v6165 = vunpack.c.l.b16 %v6101
      %v6166 = vunpack.c.l.b16 %v6102
      %v6167 = vunpack.c.l.b16 %v6103
      %v6168 = vunpack.c.l.b16 %v6104
      %v6169 = vunpack.c.l.b16 %v6105
      %v6170 = vunpack.c.l.b16 %v6106
      %v6171 = vunpack.c.l.b16 %v6107
      %v6172 = vunpack.c.l.b16 %v6108
      %v6173 = vunpack.c.l.b16 %v6109
      %v6174 = vunpack.c.l.b16 %v6110
      %v6175 = vunpack.c.l.b16 %v6111
      %v6176 = vunpack.c.l.b16 %v6112
      %v6177 = vunpack.c.l.b16 %v6113
      %v6178 = vunpack.c.l.b16 %v6114
      %v6179 = vunpack.c.l.b16 %v6115
      %v6180 = vunpack.c.l.b16 %v6116
      %v6181 = vunpack.c.l.b16 %v6117
      %v6182 = vunpack.c.l.b16 %v6118
      %v6183 = vunpack.c.l.b16 %v6119
      %v6184 = vunpack.c.l.b16 %v6120
      %v6185 = vunpack.c.l.b16 %v6121
      %v6186 = vunpack.c.l.b16 %v6122
      %v6187 = vunpack.c.l.b16 %v6123
      %v6188 = vunpack.c.l.b16 %v6124
      %v6189 = vunpack.c.l.b16 %v6125
      %v6190 = vunpack.c.l.b16 %v6126
      %v6191 = vunpack.c.l.b16 %v6127
      %v6192 = vunpack.c.l.b16 %v6128
      %v6193 = vunpack.c.l.b16 %v6129
      %v6194 = vunpack.c.l.b16 %v6130
      %v6195 = vunpack.c.l.b16 %v6131
      %v6196 = vunpack.c.l.b16 %v6132
      %v6197 = vunpack.c.l.b16 %v6133
      %v6198 = vunpack.c.l.b16 %v6134
      %v6199 = vunpack.c.l.b16 %v6135
      %v6200 = vunpack.c.l.b16 %v6136
      %v6201 = vunpack.c.l.b16 %v6137
      %v6202 = vunpack.c.l.b16 %v6138
      %v6203 = vunpack.c.l.b16 %v6139
      %v6204 = vunpack.c.l.b16 %v6140
      %v6205 = vunpack.c.l.b16 %v6141
      %v6206 = vunpack.c.l.b16 %v6142
      %v6207 = vunpack.c.l.b16 %v6143
      %v6208 = vunpack.c.l.b16 %v6144
      %v6209 = vunpack.c.l.b16 %v6145
      %v6210 = vunpack.c.l.b16 %v6146
      %v6211 = vunpack.c.l.b16 %v6147
      %v6212 = vunpack.c.l.b16 %v6148
      %v6213 = vunpack.c.l.b16 %v6149
      %v6214 = vunpack.c.l.b16 %v6150
      %v6215 = vunpack.c.l.b16 %v6151
      %v6216 = vunpack.c.l.b16 %v6152
      %v6217 = vunpack.c.l.b16 %v6153
      %v6218 = vunpack.c.l.b16 %v6154
      %v6219 = vunpack.c.l.b16 %v6155
      %v6220 = vunpack.c.l.b16 %v6156
      %v6221 = vunpack.c.l.b16 %v6157
      %v6222 = vrot.slane %v6159, 7
      %vm6223 = vcmask 1041409
      %v6224 = vsel %vm6223, %v6222, %v6158
      %v6225 = vrot.slane %v6160, 6
      %vm6226 = vcmask 1042434
      %v6227 = vsel %vm6226, %v6225, %v6224
      %v6228 = vrot.slane %v6161, 5
      %vm6229 = vcmask 1043459
      %v6230 = vsel %vm6229, %v6228, %v6227
      %v6231 = vrot.slane %v6162, 4
      %vm6232 = vcmask 1044484
      %v6233 = vsel %vm6232, %v6231, %v6230
      %v6234 = vrot.slane %v6163, 3
      %vm6235 = vcmask 1045509
      %v6236 = vsel %vm6235, %v6234, %v6233
      %v6237 = vrot.slane %v6164, 2
      %vm6238 = vcmask 1046534
      %v6239 = vsel %vm6238, %v6237, %v6236
      %v6240 = vrot.slane %v6165, 1
      %vm6241 = vcmask 1047559
      %v6242 = vsel %vm6241, %v6240, %v6239
      %v6243 = vrot.slane %v6167, 7
      %v6244 = vsel %vm6223, %v6243, %v6166
      %v6245 = vrot.slane %v6168, 6
      %v6246 = vsel %vm6226, %v6245, %v6244
      %v6247 = vrot.slane %v6169, 5
      %v6248 = vsel %vm6229, %v6247, %v6246
      %v6249 = vrot.slane %v6170, 4
      %v6250 = vsel %vm6232, %v6249, %v6248
      %v6251 = vrot.slane %v6171, 3
      %v6252 = vsel %vm6235, %v6251, %v6250
      %v6253 = vrot.slane %v6172, 2
      %v6254 = vsel %vm6238, %v6253, %v6252
      %v6255 = vrot.slane %v6173, 1
      %v6256 = vsel %vm6241, %v6255, %v6254
      %v6257 = vrot.slane %v6175, 7
      %v6258 = vsel %vm6223, %v6257, %v6174
      %v6259 = vrot.slane %v6176, 6
      %v6260 = vsel %vm6226, %v6259, %v6258
      %v6261 = vrot.slane %v6177, 5
      %v6262 = vsel %vm6229, %v6261, %v6260
      %v6263 = vrot.slane %v6178, 4
      %v6264 = vsel %vm6232, %v6263, %v6262
      %v6265 = vrot.slane %v6179, 3
      %v6266 = vsel %vm6235, %v6265, %v6264
      %v6267 = vrot.slane %v6180, 2
      %v6268 = vsel %vm6238, %v6267, %v6266
      %v6269 = vrot.slane %v6181, 1
      %v6270 = vsel %vm6241, %v6269, %v6268
      %v6271 = vrot.slane %v6183, 7
      %v6272 = vsel %vm6223, %v6271, %v6182
      %v6273 = vrot.slane %v6184, 6
      %v6274 = vsel %vm6226, %v6273, %v6272
      %v6275 = vrot.slane %v6185, 5
      %v6276 = vsel %vm6229, %v6275, %v6274
      %v6277 = vrot.slane %v6186, 4
      %v6278 = vsel %vm6232, %v6277, %v6276
      %v6279 = vrot.slane %v6187, 3
      %v6280 = vsel %vm6235, %v6279, %v6278
      %v6281 = vrot.slane %v6188, 2
      %v6282 = vsel %vm6238, %v6281, %v6280
      %v6283 = vrot.slane %v6189, 1
      %v6284 = vsel %vm6241, %v6283, %v6282
      %v6285 = vrot.slane %v6191, 7
      %v6286 = vsel %vm6223, %v6285, %v6190
      %v6287 = vrot.slane %v6192, 6
      %v6288 = vsel %vm6226, %v6287, %v6286
      %v6289 = vrot.slane %v6193, 5
      %v6290 = vsel %vm6229, %v6289, %v6288
      %v6291 = vrot.slane %v6194, 4
      %v6292 = vsel %vm6232, %v6291, %v6290
      %v6293 = vrot.slane %v6195, 3
      %v6294 = vsel %vm6235, %v6293, %v6292
      %v6295 = vrot.slane %v6196, 2
      %v6296 = vsel %vm6238, %v6295, %v6294
      %v6297 = vrot.slane %v6197, 1
      %v6298 = vsel %vm6241, %v6297, %v6296
      %v6299 = vrot.slane %v6199, 7
      %v6300 = vsel %vm6223, %v6299, %v6198
      %v6301 = vrot.slane %v6200, 6
      %v6302 = vsel %vm6226, %v6301, %v6300
      %v6303 = vrot.slane %v6201, 5
      %v6304 = vsel %vm6229, %v6303, %v6302
      %v6305 = vrot.slane %v6202, 4
      %v6306 = vsel %vm6232, %v6305, %v6304
      %v6307 = vrot.slane %v6203, 3
      %v6308 = vsel %vm6235, %v6307, %v6306
      %v6309 = vrot.slane %v6204, 2
      %v6310 = vsel %vm6238, %v6309, %v6308
      %v6311 = vrot.slane %v6205, 1
      %v6312 = vsel %vm6241, %v6311, %v6310
      %v6313 = vrot.slane %v6207, 7
      %v6314 = vsel %vm6223, %v6313, %v6206
      %v6315 = vrot.slane %v6208, 6
      %v6316 = vsel %vm6226, %v6315, %v6314
      %v6317 = vrot.slane %v6209, 5
      %v6318 = vsel %vm6229, %v6317, %v6316
      %v6319 = vrot.slane %v6210, 4
      %v6320 = vsel %vm6232, %v6319, %v6318
      %v6321 = vrot.slane %v6211, 3
      %v6322 = vsel %vm6235, %v6321, %v6320
      %v6323 = vrot.slane %v6212, 2
      %v6324 = vsel %vm6238, %v6323, %v6322
      %v6325 = vrot.slane %v6213, 1
      %v6326 = vsel %vm6241, %v6325, %v6324
      %v6327 = vrot.slane %v6215, 7
      %v6328 = vsel %vm6223, %v6327, %v6214
      %v6329 = vrot.slane %v6216, 6
      %v6330 = vsel %vm6226, %v6329, %v6328
      %v6331 = vrot.slane %v6217, 5
      %v6332 = vsel %vm6229, %v6331, %v6330
      %v6333 = vrot.slane %v6218, 4
      %v6334 = vsel %vm6232, %v6333, %v6332
      %v6335 = vrot.slane %v6219, 3
      %v6336 = vsel %vm6235, %v6335, %v6334
      %v6337 = vrot.slane %v6220, 2
      %v6338 = vsel %vm6238, %v6337, %v6336
      %v6339 = vrot.slane %v6221, 1
      %v6340 = vsel %vm6241, %v6339, %v6338
      %v6341 = vpack.c.b16 %v6242, %v6242
      %v6342 = vpack.c.b16 %v6256, %v6256
      %v6343 = vpack.c.b16 %v6270, %v6270
      %v6344 = vpack.c.b16 %v6284, %v6284
      %v6345 = vpack.c.b16 %v6298, %v6298
      %v6346 = vpack.c.b16 %v6312, %v6312
      %v6347 = vpack.c.b16 %v6326, %v6326
      %v6348 = vpack.c.b16 %v6340, %v6340
      %6357 = vst.msk [vmem:[%s224] sm:$0xf] %vm226, %v6341
      %6358 = vst.msk [vmem:[%s224 + $0x4] sm:$0xf] %vm226, %v6342
      %6359 = vst.msk [vmem:[%s224 + $0x8] sm:$0xf] %vm226, %v6343
      %6360 = vst.msk [vmem:[%s224 + $0xc] sm:$0xf] %vm226, %v6344
      %6361 = vst.msk [vmem:[%s224 + $0x10] sm:$0xf] %vm226, %v6345
      %6362 = vst.msk [vmem:[%s224 + $0x14] sm:$0xf] %vm226, %v6346
      %6363 = vst.msk [vmem:[%s224 + $0x18] sm:$0xf] %vm226, %v6347
      %6364 = vst.msk [vmem:[%s224 + $0x1c] sm:$0xf] %vm226, %v6348
      %p6365 = scmp.lt.s32.totalorder %s16, 1
      %s6366 = scalar_select %p6365, %s16, 1
      %s6367 = smul.addr %s6366, 8
      %s6368 = smul.addr %s6367, 4
      %s6369 = scalar_lea.vmem %s5, %s6368
      // Predicated region
      $region41: #{encoder_forward.2} parent=39 // pred_check
        %p6370 = pneg %p144
      $region42: #{encoder_forward.2} parent=39 // pred_check_branch
        %6372 = sbr.rel (%p6370) target = $region44
      $region43: #{encoder_forward.2} parent=39 // pred_region
        _
      $region44: #{encoder_forward.2} parent=39 // pred_fallthru
        _
    $region40: #{encoder_forward.2} parent=5 // pred_fallthru
      _
    %p6373 = scmp.le.s32.totalorder 2, %s11
    // Predicated region
    $region45: #{encoder_forward.2} parent=5 // pred_check
      %p6374 = pneg %p6373
    $region46: #{encoder_forward.2} parent=5 // pred_check_branch
      %6376 = sbr.rel (%p6374) target = $region48
    $region47: #{encoder_forward.2} parent=5 // pred_region
      %s6377 = ssub.s32 %s11, 2
      // Predicated region
      $region49: #{encoder_forward.2} parent=47 // pred_check
        %p6378 = pneg %p150
      $region50: #{encoder_forward.2} parent=47 // pred_check_branch
        %6380 = sbr.rel (%p6378) target = $region52
      $region51: #{encoder_forward.2} parent=47 // pred_region
        %p6381 = scmp.lt.s32.totalorder %s17, 1
        %s6382 = scalar_select %p6381, %s17, 1
        %s6383 = smul.addr %s6382, 8
        %s6384 = smul.addr %s6383, 4
        %s6385 = scalar_lea.vmem %s5, %s6384
      $region52: #{encoder_forward.2} parent=47 // pred_fallthru
        _
    $region48: #{encoder_forward.2} parent=5 // pred_fallthru
      _
  $region6: #{encoder_forward.2} parent=0 // loop_footer
    %s15 = sadd.s32 1, %s11
  $region7: #{encoder_forward.2} parent=0 // loop_footer_branch
    %10 = sbr.rel target = $region3
  $region8: #{encoder_forward.2} parent=0 // loop_exit
    _

</llo_original>
